<compile_context>
chip_gen: v5e
topology: v5e:2x2
jax: 0.10.0
libtpu: 0.0.40
codegen_flags: <defaults>
</compile_context>

<pallas_src>
import math

import jax
import jax.numpy as jnp
from jax.experimental import pallas as pl
from jax.experimental.pallas import tpu as pltpu

# ---- hyperparameters (module-level globals in the PyTorch source) ----------
TIME_D_MODEL = 128      # time_d_model (= d_model)
IN_DIM       = 128      # src_emb input features
N_HEADS      = 4
D_K          = 32
D_V          = 32
D_FF         = 256
N_LAYERS     = 2
N_CLS        = 4        # cls_token has 4 tokens
POS_LEN      = 444      # pos_emb length
LN_EPS       = 1e-5
BN_EPS       = 1e-5
HD           = N_HEADS * D_K    # 128


# ---------------------------------------------------------------------------
# helpers (inside-kernel math, all f32)
# ---------------------------------------------------------------------------
def _layernorm(z):
    mu = jnp.mean(z, axis=-1, keepdims=True)
    zc = z - mu
    var = jnp.mean(zc * zc, axis=-1, keepdims=True)
    return zc * jax.lax.rsqrt(var + LN_EPS)


def _gelu_exact(x):
    # PyTorch nn.GELU() default (exact erf form).
    return 0.5 * x * (1.0 + jax.lax.erf(x * (1.0 / math.sqrt(2.0))))


# ---------------------------------------------------------------------------
# Fused kernel: src_emb + cls/pos + both EncoderLayers, BBLK batch elems/step
# ---------------------------------------------------------------------------
def _encoder_fused_kernel(xin_ref, wemb_ref, base_ref,
                          wqkv_ref, wo_ref, w1_ref, w2_ref,
                          out_ref, attn_ref):
    bblk, seq, in_dim = xin_ref.shape          # (BBLK, S, IN_DIM), cls rows zero
    m, d = base_ref.shape                      # (BBLK*S, D) additive base

    # src_emb + concat(cls, .) + pos, batch rows folded into the M dimension.
    # cls rows of xin are zero-padded; base carries (cls+pos) there, pos elsewhere.
    xin2d = xin_ref[...].reshape(m, in_dim)                          # bf16 [M, IN]
    x = jnp.dot(xin2d, wemb_ref[...],
                preferred_element_type=jnp.float32) + base_ref[...]  # [M, D] f32
    # dropout(0.2): identity in eval mode.

    p_all = []                                 # softmax maps, all layers/heads
    for l in range(N_LAYERS):                  # static unroll
        wqkv_l = wqkv_ref[l]                   # [D, 3*H*Dk] bf16 (W_Q pre-scaled)
        wo_l   = wo_ref[l]                     # [H*Dv, D]   bf16
        w1_l   = w1_ref[l]                     # [D, D_FF]   bf16
        w2_l   = w2_ref[l]                     # [D_FF, D]   bf16 (BN scale folded)

        xb = x.astype(jnp.bfloat16)
        qkv = jnp.dot(xb, wqkv_l, preferred_element_type=jnp.float32)  # [M, 3*HD]
        qkvb = qkv.astype(jnp.bfloat16)        # single cast, sliced per head

        ctx_list = []
        for h in range(N_HEADS):               # static unroll
            qh = qkvb[:, h * D_K:(h + 1) * D_K].reshape(bblk, seq, D_K)
            kh = qkvb[:, HD + h * D_K: HD + (h + 1) * D_K].reshape(bblk, seq, D_K)
            vh = qkvb[:, 2 * HD + h * D_V: 2 * HD + (h + 1) * D_V].reshape(
                bblk, seq, D_V)
            # scores (1/sqrt(d_k) already folded into W_Q); batched over BBLK
            s = jnp.einsum('bqd,bkd->bqk', qh, kh,
                           preferred_element_type=jnp.float32)       # [B, S, S]
            s = s - jnp.max(s, axis=-1, keepdims=True)
            e = jnp.exp(s)
            p = e * pl.reciprocal(jnp.sum(e, axis=-1, keepdims=True), approx=True)
            p_all.append(p)
            ctx_list.append(jnp.einsum('bqk,bkd->bqd', p.astype(jnp.bfloat16), vh,
                                       preferred_element_type=jnp.float32))

        # one K=128 output projection on the lane-concatenated heads
        ctx_all = jnp.concatenate(ctx_list, axis=-1).reshape(m, HD)   # [M, H*Dv]
        attn_out = jnp.dot(ctx_all.astype(jnp.bfloat16), wo_l,
                           preferred_element_type=jnp.float32)        # [M, D]

        y = _layernorm(attn_out + x)           # add & norm (f32)

        # Position-wise FFN: Linear -> GELU -> BatchNorm(eval) -> Linear
        h1 = jnp.dot(y.astype(jnp.bfloat16), w1_l,
                     preferred_element_type=jnp.float32)              # [M, d_ff]
        g = _gelu_exact(h1)
        ff = jnp.dot(g.astype(jnp.bfloat16), w2_l,
                     preferred_element_type=jnp.float32)              # [M, D]
        x = _layernorm(ff + y)

    out_ref[...] = x.reshape(bblk, seq, d)
    # single lane-dense bf16 store of all attention maps: [BBLK, S, L*H*S]
    # TODO(synk): for large S, write each (l,h) map incrementally instead.
    attn_ref[...] = jnp.concatenate(p_all, axis=-1).astype(attn_ref.dtype)


# ---------------------------------------------------------------------------
# Host-side one-time parameter packing (fold scales, pack, cast to bf16)
# ---------------------------------------------------------------------------
def pack_params(params):
    inv_sqrt_dk = 1.0 / math.sqrt(D_K)
    bn_scale = 1.0 / math.sqrt(1.0 + BN_EPS)   # BatchNorm1d eval, default stats
    wqkv, wo, w1, w2 = [], [], [], []
    for (wq_l, wk_l, wv_l, wo_l, w1_l, w2_l) in params["layers"]:
        wqkv.append(jnp.concatenate([wq_l * inv_sqrt_dk, wk_l, wv_l], axis=1))
        wo.append(wo_l)
        w1.append(w1_l)
        w2.append(w2_l * bn_scale)
    return {
        "w_emb": params["w_emb"].astype(jnp.bfloat16),       # [IN_DIM, D]
        "wqkv":  jnp.stack(wqkv).astype(jnp.bfloat16),       # [L, D, 3*H*Dk]
        "wo":    jnp.stack(wo).astype(jnp.bfloat16),         # [L, H*Dv, D]
        "w1":    jnp.stack(w1).astype(jnp.bfloat16),         # [L, D, D_FF]
        "w2":    jnp.stack(w2).astype(jnp.bfloat16),         # [L, D_FF, D]
        "cls_token": params["cls_token"].astype(jnp.float32),
        "pos_emb":   params["pos_emb"].astype(jnp.float32),
    }


def _choose_bblk(batch, seq, row_target=256):
    """Batch elements folded into one grid step.

    Targets BBLK*S >= 128 (v5e MXU height) and ~256 (v6e/v7x) while keeping
    the grid length >= 2 whenever B >= 2 so v7x's two TensorCores both get
    work under dimension_semantics=("parallel",).
    """
    bblk = max(1, min(batch, row_target // max(seq, 1)))
    if batch >= 2:
        bblk = min(bblk, -(-batch // 2))       # keep >= 2 grid steps
    return bblk


# ---------------------------------------------------------------------------
# Encoder forward: one fused, batch-blocked pallas_call + trivial layout glue
# ---------------------------------------------------------------------------
@jax.jit
def encoder_forward(enc_inputs, packed):
    B, src_len, _ = enc_inputs.shape
    S = src_len + N_CLS
    assert S <= POS_LEN, "sequence (src_len + 4) exceeds pos_emb length (444)"

    bblk = _choose_bblk(B, S)
    nb = -(-B // bblk)                         # grid length
    b_pad = nb * bblk

    # Zero-pad the cls rows (and any batch padding) so the embedding matmul
    # leaves them 0; `base` carries (cls_token + pos) there and pos elsewhere,
    # pre-tiled over the BBLK batch elements of one grid step.
    xin = jnp.pad(enc_inputs,
                  ((0, b_pad - B), (N_CLS, 0), (0, 0))).astype(jnp.bfloat16)
    pos = packed["pos_emb"][0, :S]                                     # [S, D]
    base = jnp.concatenate([packed["cls_token"][0] + pos[:N_CLS], pos[N_CLS:]],
                           axis=0)                                     # [S, D]
    base_tiled = jnp.tile(base, (bblk, 1))                             # [BBLK*S, D]

    out, attn_flat = pl.pallas_call(
        _encoder_fused_kernel,
        out_shape=(
            jax.ShapeDtypeStruct((b_pad, S, TIME_D_MODEL), jnp.float32),
            jax.ShapeDtypeStruct((b_pad, S, N_LAYERS * N_HEADS * S), jnp.bfloat16),
        ),
        grid=(nb,),
        in_specs=[
            pl.BlockSpec((bblk, S, IN_DIM), lambda b: (b, 0, 0)),
            pl.BlockSpec((IN_DIM, TIME_D_MODEL), lambda b: (0, 0)),
            pl.BlockSpec((bblk * S, TIME_D_MODEL), lambda b: (0, 0)),
            pl.BlockSpec((N_LAYERS, TIME_D_MODEL, 3 * HD), lambda b: (0, 0, 0)),
            pl.BlockSpec((N_LAYERS, HD, TIME_D_MODEL), lambda b: (0, 0, 0)),
            pl.BlockSpec((N_LAYERS, TIME_D_MODEL, D_FF), lambda b: (0, 0, 0)),
            pl.BlockSpec((N_LAYERS, D_FF, TIME_D_MODEL), lambda b: (0, 0, 0)),
        ],
        out_specs=(
            pl.BlockSpec((bblk, S, TIME_D_MODEL), lambda b: (b, 0, 0)),
            pl.BlockSpec((bblk, S, N_LAYERS * N_HEADS * S), lambda b: (b, 0, 0)),
        ),
        compiler_params=pltpu.CompilerParams(
            dimension_semantics=("parallel",),      # shard batch blocks over TCs
            vmem_limit_bytes=32 * 1024 * 1024),
    )(xin, packed["w_emb"], base_tiled, packed["wqkv"], packed["wo"],
      packed["w1"], packed["w2"])

    out = out[:B]
    # [B, S, L*H*S] -> list of L arrays [B, H, S, S] (attn maps kept in bf16)
    attn = attn_flat[:B].reshape(B, S, N_LAYERS, N_HEADS, S).transpose(2, 0, 3, 1, 4)
    return out, [attn[i] for i in range(N_LAYERS)]


# ---------------------------------------------------------------------------
# Pure-JAX f32 reference (for correctness check)
# ---------------------------------------------------------------------------
def _ref_layernorm(z):
    mu = jnp.mean(z, axis=-1, keepdims=True)
    var = jnp.mean((z - mu) ** 2, axis=-1, keepdims=True)
    return (z - mu) / jnp.sqrt(var + LN_EPS)


def encoder_forward_ref(enc_inputs, params):
    B, L, _ = enc_inputs.shape
    x = enc_inputs @ params["w_emb"]
    cls = jnp.broadcast_to(params["cls_token"], (B, N_CLS, TIME_D_MODEL))
    x = jnp.concatenate([cls, x], axis=1)
    x = x + params["pos_emb"][:, :x.shape[1]]
    attns = []
    for (wq, wk, wv, wo, w1, w2) in params["layers"]:
        q = (x @ wq).reshape(B, -1, N_HEADS, D_K).transpose(0, 2, 1, 3)
        k = (x @ wk).reshape(B, -1, N_HEADS, D_K).transpose(0, 2, 1, 3)
        v = (x @ wv).reshape(B, -1, N_HEADS, D_V).transpose(0, 2, 1, 3)
        s = jnp.einsum("bhqd,bhkd->bhqk", q, k) / math.sqrt(D_K)
        attn = jax.nn.softmax(s, axis=-1)
        ctx = jnp.einsum("bhqk,bhkd->bhqd", attn, v)
        ctx = ctx.transpose(0, 2, 1, 3).reshape(B, -1, N_HEADS * D_V)
        y = _ref_layernorm(ctx @ wo + x)
        h1 = jax.nn.gelu(y @ w1, approximate=False)
        bn = h1 / math.sqrt(1.0 + BN_EPS)
        x = _ref_layernorm(bn @ w2 + y)
        attns.append(attn)
    return x, attns


# ---------------------------------------------------------------------------
if __name__ == "__main__":
    key = jax.random.PRNGKey(0)
    ks = jax.random.split(key, 4 + 6 * N_LAYERS)

    B, SRC_LEN = 8, 12                         # seq after cls tokens: 16

    params = {
        "w_emb": 0.05 * jax.random.normal(ks[0], (IN_DIM, TIME_D_MODEL), jnp.float32),
        "pos_emb": jax.random.normal(ks[1], (1, POS_LEN, TIME_D_MODEL), jnp.float32),
        "cls_token": jax.random.normal(ks[2], (1, N_CLS, TIME_D_MODEL), jnp.float32),
        "layers": [],
    }
    for l in range(N_LAYERS):
        kk = ks[4 + 6 * l: 4 + 6 * (l + 1)]
        params["layers"].append((
            0.05 * jax.random.normal(kk[0], (TIME_D_MODEL, N_HEADS * D_K), jnp.float32),
            0.05 * jax.random.normal(kk[1], (TIME_D_MODEL, N_HEADS * D_K), jnp.float32),
            0.05 * jax.random.normal(kk[2], (TIME_D_MODEL, N_HEADS * D_V), jnp.float32),
            0.05 * jax.random.normal(kk[3], (N_HEADS * D_V, TIME_D_MODEL), jnp.float32),
            0.05 * jax.random.normal(kk[4], (TIME_D_MODEL, D_FF), jnp.float32),
            0.05 * jax.random.normal(kk[5], (D_FF, TIME_D_MODEL), jnp.float32),
        ))

    enc_inputs = jax.random.normal(ks[3], (B, SRC_LEN, IN_DIM), jnp.float32)

    packed = pack_params(params)
    out, attns = encoder_forward(enc_inputs, packed)
    out = jax.block_until_ready(out)
    attns = [jax.block_until_ready(a) for a in attns]

    ref_out, ref_attns = encoder_forward_ref(enc_inputs, params)

    S = SRC_LEN + N_CLS
    assert out.shape == (B, S, TIME_D_MODEL)
    assert len(attns) == N_LAYERS and attns[0].shape == (B, N_HEADS, S, S)
    assert jnp.allclose(out, ref_out, atol=5e-2, rtol=5e-2), "output mismatch"
    assert jnp.allclose(attns[-1].astype(jnp.float32), ref_attns[-1],
                        atol=5e-2, rtol=5e-2), "attn mismatch"

    print("KERNEL_OK")
</pallas_src>

<mosaic_0001>
module attributes {stable_mosaic.version = 11 : i64} {
  func.func @_encoder_fused_kernel(%arg0: i32, %arg1: memref<4x16x128xbf16, #tpu.memory_space<vmem>>, %arg2: memref<128x128xbf16, #tpu.memory_space<vmem>>, %arg3: memref<64x128xf32, #tpu.memory_space<vmem>>, %arg4: memref<2x128x384xbf16, #tpu.memory_space<vmem>>, %arg5: memref<2x128x128xbf16, #tpu.memory_space<vmem>>, %arg6: memref<2x128x256xbf16, #tpu.memory_space<vmem>>, %arg7: memref<2x256x128xbf16, #tpu.memory_space<vmem>>, %arg8: memref<4x16x128xf32, #tpu.memory_space<vmem>>, %arg9: memref<4x16x128xbf16, #tpu.memory_space<vmem>>) attributes {dimension_semantics = [#tpu.dimension_semantics<parallel>], iteration_bounds = array<i64: 2>, scalar_prefetch = 0 : i64, scratch_operands = 0 : i64, tpu.core_type = #tpu.core_type<tc>, window_params = [{transform_indices = @transform_0, window_bounds = array<i64: 4, 16, 128>}, {pipeline_mode = #tpu.pipeline_mode<synchronous>, transform_indices = @transform_1, window_bounds = array<i64: 128, 128>}, {pipeline_mode = #tpu.pipeline_mode<synchronous>, transform_indices = @transform_2, window_bounds = array<i64: 64, 128>}, {pipeline_mode = #tpu.pipeline_mode<synchronous>, transform_indices = @transform_3, window_bounds = array<i64: 2, 128, 384>}, {pipeline_mode = #tpu.pipeline_mode<synchronous>, transform_indices = @transform_4, window_bounds = array<i64: 2, 128, 128>}, {pipeline_mode = #tpu.pipeline_mode<synchronous>, transform_indices = @transform_5, window_bounds = array<i64: 2, 128, 256>}, {pipeline_mode = #tpu.pipeline_mode<synchronous>, transform_indices = @transform_6, window_bounds = array<i64: 2, 256, 128>}, {transform_indices = @transform_7, window_bounds = array<i64: 4, 16, 128>}, {transform_indices = @transform_8, window_bounds = array<i64: 4, 16, 128>}]} {
    %c0 = arith.constant 0 : index
    %c0_0 = arith.constant 0 : index
    %c0_1 = arith.constant 0 : index
    %0 = vector.load %arg1[%c0, %c0_0, %c0_1] : memref<4x16x128xbf16, #tpu.memory_space<vmem>>, vector<4x16x128xbf16>
    %1 = vector.shape_cast %0 : vector<4x16x128xbf16> to vector<64x128xbf16>
    %c0_2 = arith.constant 0 : index
    %c0_3 = arith.constant 0 : index
    %2 = vector.load %arg2[%c0_2, %c0_3] : memref<128x128xbf16, #tpu.memory_space<vmem>>, vector<128x128xbf16>
    %cst = arith.constant dense<0.000000e+00> : vector<64x128xf32>
    %3 = tpu.matmul %1, %2, %cst {dimension_numbers = #tpu.dot_dimension_numbers<[1], [0], [0], [1], [0, 0, 1, 1], [], []>} : vector<64x128xbf16>, vector<128x128xbf16>, vector<64x128xf32> -> vector<64x128xf32>
    %c0_4 = arith.constant 0 : index
    %c0_5 = arith.constant 0 : index
    %4 = vector.load %arg3[%c0_4, %c0_5] : memref<64x128xf32, #tpu.memory_space<vmem>>, vector<64x128xf32>
    %5 = arith.addf %3, %4 : vector<64x128xf32>
    %c0_6 = arith.constant 0 : index
    %c0_7 = arith.constant 0 : index
    %c0_8 = arith.constant 0 : index
    %6 = vector.load %arg4[%c0_6, %c0_7, %c0_8] : memref<2x128x384xbf16, #tpu.memory_space<vmem>>, vector<1x128x384xbf16>
    %7 = vector.shape_cast %6 : vector<1x128x384xbf16> to vector<128x384xbf16>
    %c0_9 = arith.constant 0 : index
    %c0_10 = arith.constant 0 : index
    %c0_11 = arith.constant 0 : index
    %8 = vector.load %arg5[%c0_9, %c0_10, %c0_11] : memref<2x128x128xbf16, #tpu.memory_space<vmem>>, vector<1x128x128xbf16>
    %9 = vector.shape_cast %8 : vector<1x128x128xbf16> to vector<128x128xbf16>
    %c0_12 = arith.constant 0 : index
    %c0_13 = arith.constant 0 : index
    %c0_14 = arith.constant 0 : index
    %10 = vector.load %arg6[%c0_12, %c0_13, %c0_14] : memref<2x128x256xbf16, #tpu.memory_space<vmem>>, vector<1x128x256xbf16>
    %11 = vector.shape_cast %10 : vector<1x128x256xbf16> to vector<128x256xbf16>
    %c0_15 = arith.constant 0 : index
    %c0_16 = arith.constant 0 : index
    %c0_17 = arith.constant 0 : index
    %12 = vector.load %arg7[%c0_15, %c0_16, %c0_17] : memref<2x256x128xbf16, #tpu.memory_space<vmem>>, vector<1x256x128xbf16>
    %13 = vector.shape_cast %12 : vector<1x256x128xbf16> to vector<256x128xbf16>
    %14 = arith.truncf %5 : vector<64x128xf32> to vector<64x128xbf16>
    %cst_18 = arith.constant dense<0.000000e+00> : vector<64x384xf32>
    %15 = tpu.matmul %14, %7, %cst_18 {dimension_numbers = #tpu.dot_dimension_numbers<[1], [0], [0], [1], [0, 0, 1, 1], [], []>} : vector<64x128xbf16>, vector<128x384xbf16>, vector<64x384xf32> -> vector<64x384xf32>
    %16 = arith.truncf %15 : vector<64x384xf32> to vector<64x384xbf16>
    %17 = vector.extract_strided_slice %16 {offsets = [0, 0], sizes = [64, 32], strides = [1, 1]} : vector<64x384xbf16> to vector<64x32xbf16>
    %18 = vector.shape_cast %17 : vector<64x32xbf16> to vector<4x16x32xbf16>
    %19 = vector.extract_strided_slice %16 {offsets = [0, 128], sizes = [64, 32], strides = [1, 1]} : vector<64x384xbf16> to vector<64x32xbf16>
    %20 = vector.shape_cast %19 : vector<64x32xbf16> to vector<4x16x32xbf16>
    %21 = vector.extract_strided_slice %16 {offsets = [0, 256], sizes = [64, 32], strides = [1, 1]} : vector<64x384xbf16> to vector<64x32xbf16>
    %22 = vector.shape_cast %21 : vector<64x32xbf16> to vector<4x16x32xbf16>
    "tpu.trace_start"() <{level = 10 : i32, message = "bqd,bkd->bqk"}> : () -> ()
    %cst_19 = arith.constant dense<0.000000e+00> : vector<4x16x16xf32>
    %23 = tpu.matmul %18, %20, %cst_19 {dimension_numbers = #tpu.dot_dimension_numbers<[2], [2], [1], [1], [0, 0, 0, 1, 1, 1], [0], [0]>} : vector<4x16x32xbf16>, vector<4x16x32xbf16>, vector<4x16x16xf32> -> vector<4x16x16xf32>
    "tpu.trace_stop"() : () -> ()
    %cst_20 = arith.constant dense<0xFF800000> : vector<4x16xf32>
    %24 = vector.multi_reduction <maximumf>, %23, %cst_20 [2] : vector<4x16x16xf32> to vector<4x16xf32>
    %25 = vector.shape_cast %24 : vector<4x16xf32> to vector<4x16x1xf32>
    %26 = vector.broadcast %25 : vector<4x16x1xf32> to vector<4x16x16xf32>
    %27 = arith.subf %23, %26 : vector<4x16x16xf32>
    %28 = math.exp %27 : vector<4x16x16xf32>
    %cst_21 = arith.constant dense<0.000000e+00> : vector<4x16xf32>
    %29 = vector.multi_reduction <add>, %28, %cst_21 [2] : vector<4x16x16xf32> to vector<4x16xf32>
    %30 = vector.shape_cast %29 : vector<4x16xf32> to vector<4x16x1xf32>
    %31 = tpu.reciprocal %30 {approx = true} : vector<4x16x1xf32> -> vector<4x16x1xf32>
    %32 = vector.broadcast %31 : vector<4x16x1xf32> to vector<4x16x16xf32>
    %33 = arith.mulf %28, %32 : vector<4x16x16xf32>
    %34 = arith.truncf %33 : vector<4x16x16xf32> to vector<4x16x16xbf16>
    "tpu.trace_start"() <{level = 10 : i32, message = "bqk,bkd->bqd"}> : () -> ()
    %cst_22 = arith.constant dense<0.000000e+00> : vector<4x16x32xf32>
    %35 = tpu.matmul %34, %22, %cst_22 {dimension_numbers = #tpu.dot_dimension_numbers<[2], [1], [1], [2], [0, 0, 0, 1, 1, 2], [0], [0]>} : vector<4x16x16xbf16>, vector<4x16x32xbf16>, vector<4x16x32xf32> -> vector<4x16x32xf32>
    "tpu.trace_stop"() : () -> ()
    %36 = vector.extract_strided_slice %16 {offsets = [0, 32], sizes = [64, 32], strides = [1, 1]} : vector<64x384xbf16> to vector<64x32xbf16>
    %37 = vector.shape_cast %36 : vector<64x32xbf16> to vector<4x16x32xbf16>
    %38 = vector.extract_strided_slice %16 {offsets = [0, 160], sizes = [64, 32], strides = [1, 1]} : vector<64x384xbf16> to vector<64x32xbf16>
    %39 = vector.shape_cast %38 : vector<64x32xbf16> to vector<4x16x32xbf16>
    %40 = vector.extract_strided_slice %16 {offsets = [0, 288], sizes = [64, 32], strides = [1, 1]} : vector<64x384xbf16> to vector<64x32xbf16>
    %41 = vector.shape_cast %40 : vector<64x32xbf16> to vector<4x16x32xbf16>
    "tpu.trace_start"() <{level = 10 : i32, message = "bqd,bkd->bqk"}> : () -> ()
    %cst_23 = arith.constant dense<0.000000e+00> : vector<4x16x16xf32>
    %42 = tpu.matmul %37, %39, %cst_23 {dimension_numbers = #tpu.dot_dimension_numbers<[2], [2], [1], [1], [0, 0, 0, 1, 1, 1], [0], [0]>} : vector<4x16x32xbf16>, vector<4x16x32xbf16>, vector<4x16x16xf32> -> vector<4x16x16xf32>
    "tpu.trace_stop"() : () -> ()
    %cst_24 = arith.constant dense<0xFF800000> : vector<4x16xf32>
    %43 = vector.multi_reduction <maximumf>, %42, %cst_24 [2] : vector<4x16x16xf32> to vector<4x16xf32>
    %44 = vector.shape_cast %43 : vector<4x16xf32> to vector<4x16x1xf32>
    %45 = vector.broadcast %44 : vector<4x16x1xf32> to vector<4x16x16xf32>
    %46 = arith.subf %42, %45 : vector<4x16x16xf32>
    %47 = math.exp %46 : vector<4x16x16xf32>
    %cst_25 = arith.constant dense<0.000000e+00> : vector<4x16xf32>
    %48 = vector.multi_reduction <add>, %47, %cst_25 [2] : vector<4x16x16xf32> to vector<4x16xf32>
    %49 = vector.shape_cast %48 : vector<4x16xf32> to vector<4x16x1xf32>
    %50 = tpu.reciprocal %49 {approx = true} : vector<4x16x1xf32> -> vector<4x16x1xf32>
    %51 = vector.broadcast %50 : vector<4x16x1xf32> to vector<4x16x16xf32>
    %52 = arith.mulf %47, %51 : vector<4x16x16xf32>
    %53 = arith.truncf %52 : vector<4x16x16xf32> to vector<4x16x16xbf16>
    "tpu.trace_start"() <{level = 10 : i32, message = "bqk,bkd->bqd"}> : () -> ()
    %cst_26 = arith.constant dense<0.000000e+00> : vector<4x16x32xf32>
    %54 = tpu.matmul %53, %41, %cst_26 {dimension_numbers = #tpu.dot_dimension_numbers<[2], [1], [1], [2], [0, 0, 0, 1, 1, 2], [0], [0]>} : vector<4x16x16xbf16>, vector<4x16x32xbf16>, vector<4x16x32xf32> -> vector<4x16x32xf32>
    "tpu.trace_stop"() : () -> ()
    %55 = vector.extract_strided_slice %16 {offsets = [0, 64], sizes = [64, 32], strides = [1, 1]} : vector<64x384xbf16> to vector<64x32xbf16>
    %56 = vector.shape_cast %55 : vector<64x32xbf16> to vector<4x16x32xbf16>
    %57 = vector.extract_strided_slice %16 {offsets = [0, 192], sizes = [64, 32], strides = [1, 1]} : vector<64x384xbf16> to vector<64x32xbf16>
    %58 = vector.shape_cast %57 : vector<64x32xbf16> to vector<4x16x32xbf16>
    %59 = vector.extract_strided_slice %16 {offsets = [0, 320], sizes = [64, 32], strides = [1, 1]} : vector<64x384xbf16> to vector<64x32xbf16>
    %60 = vector.shape_cast %59 : vector<64x32xbf16> to vector<4x16x32xbf16>
    "tpu.trace_start"() <{level = 10 : i32, message = "bqd,bkd->bqk"}> : () -> ()
    %cst_27 = arith.constant dense<0.000000e+00> : vector<4x16x16xf32>
    %61 = tpu.matmul %56, %58, %cst_27 {dimension_numbers = #tpu.dot_dimension_numbers<[2], [2], [1], [1], [0, 0, 0, 1, 1, 1], [0], [0]>} : vector<4x16x32xbf16>, vector<4x16x32xbf16>, vector<4x16x16xf32> -> vector<4x16x16xf32>
    "tpu.trace_stop"() : () -> ()
    %cst_28 = arith.constant dense<0xFF800000> : vector<4x16xf32>
    %62 = vector.multi_reduction <maximumf>, %61, %cst_28 [2] : vector<4x16x16xf32> to vector<4x16xf32>
    %63 = vector.shape_cast %62 : vector<4x16xf32> to vector<4x16x1xf32>
    %64 = vector.broadcast %63 : vector<4x16x1xf32> to vector<4x16x16xf32>
    %65 = arith.subf %61, %64 : vector<4x16x16xf32>
    %66 = math.exp %65 : vector<4x16x16xf32>
    %cst_29 = arith.constant dense<0.000000e+00> : vector<4x16xf32>
    %67 = vector.multi_reduction <add>, %66, %cst_29 [2] : vector<4x16x16xf32> to vector<4x16xf32>
    %68 = vector.shape_cast %67 : vector<4x16xf32> to vector<4x16x1xf32>
    %69 = tpu.reciprocal %68 {approx = true} : vector<4x16x1xf32> -> vector<4x16x1xf32>
    %70 = vector.broadcast %69 : vector<4x16x1xf32> to vector<4x16x16xf32>
    %71 = arith.mulf %66, %70 : vector<4x16x16xf32>
    %72 = arith.truncf %71 : vector<4x16x16xf32> to vector<4x16x16xbf16>
    "tpu.trace_start"() <{level = 10 : i32, message = "bqk,bkd->bqd"}> : () -> ()
    %cst_30 = arith.constant dense<0.000000e+00> : vector<4x16x32xf32>
    %73 = tpu.matmul %72, %60, %cst_30 {dimension_numbers = #tpu.dot_dimension_numbers<[2], [1], [1], [2], [0, 0, 0, 1, 1, 2], [0], [0]>} : vector<4x16x16xbf16>, vector<4x16x32xbf16>, vector<4x16x32xf32> -> vector<4x16x32xf32>
    "tpu.trace_stop"() : () -> ()
    %74 = vector.extract_strided_slice %16 {offsets = [0, 96], sizes = [64, 32], strides = [1, 1]} : vector<64x384xbf16> to vector<64x32xbf16>
    %75 = vector.shape_cast %74 : vector<64x32xbf16> to vector<4x16x32xbf16>
    %76 = vector.extract_strided_slice %16 {offsets = [0, 224], sizes = [64, 32], strides = [1, 1]} : vector<64x384xbf16> to vector<64x32xbf16>
    %77 = vector.shape_cast %76 : vector<64x32xbf16> to vector<4x16x32xbf16>
    %78 = vector.extract_strided_slice %16 {offsets = [0, 352], sizes = [64, 32], strides = [1, 1]} : vector<64x384xbf16> to vector<64x32xbf16>
    %79 = vector.shape_cast %78 : vector<64x32xbf16> to vector<4x16x32xbf16>
    "tpu.trace_start"() <{level = 10 : i32, message = "bqd,bkd->bqk"}> : () -> ()
    %cst_31 = arith.constant dense<0.000000e+00> : vector<4x16x16xf32>
    %80 = tpu.matmul %75, %77, %cst_31 {dimension_numbers = #tpu.dot_dimension_numbers<[2], [2], [1], [1], [0, 0, 0, 1, 1, 1], [0], [0]>} : vector<4x16x32xbf16>, vector<4x16x32xbf16>, vector<4x16x16xf32> -> vector<4x16x16xf32>
    "tpu.trace_stop"() : () -> ()
    %cst_32 = arith.constant dense<0xFF800000> : vector<4x16xf32>
    %81 = vector.multi_reduction <maximumf>, %80, %cst_32 [2] : vector<4x16x16xf32> to vector<4x16xf32>
    %82 = vector.shape_cast %81 : vector<4x16xf32> to vector<4x16x1xf32>
    %83 = vector.broadcast %82 : vector<4x16x1xf32> to vector<4x16x16xf32>
    %84 = arith.subf %80, %83 : vector<4x16x16xf32>
    %85 = math.exp %84 : vector<4x16x16xf32>
    %cst_33 = arith.constant dense<0.000000e+00> : vector<4x16xf32>
    %86 = vector.multi_reduction <add>, %85, %cst_33 [2] : vector<4x16x16xf32> to vector<4x16xf32>
    %87 = vector.shape_cast %86 : vector<4x16xf32> to vector<4x16x1xf32>
    %88 = tpu.reciprocal %87 {approx = true} : vector<4x16x1xf32> -> vector<4x16x1xf32>
    %89 = vector.broadcast %88 : vector<4x16x1xf32> to vector<4x16x16xf32>
    %90 = arith.mulf %85, %89 : vector<4x16x16xf32>
    %91 = arith.truncf %90 : vector<4x16x16xf32> to vector<4x16x16xbf16>
    "tpu.trace_start"() <{level = 10 : i32, message = "bqk,bkd->bqd"}> : () -> ()
    %cst_34 = arith.constant dense<0.000000e+00> : vector<4x16x32xf32>
    %92 = tpu.matmul %91, %79, %cst_34 {dimension_numbers = #tpu.dot_dimension_numbers<[2], [1], [1], [2], [0, 0, 0, 1, 1, 2], [0], [0]>} : vector<4x16x16xbf16>, vector<4x16x32xbf16>, vector<4x16x32xf32> -> vector<4x16x32xf32>
    "tpu.trace_stop"() : () -> ()
    %93 = tpu.concatenate %35, %54, %73, %92 in 2 : vector<4x16x32xf32>, vector<4x16x32xf32>, vector<4x16x32xf32>, vector<4x16x32xf32> -> vector<4x16x128xf32>
    %94 = vector.shape_cast %93 : vector<4x16x128xf32> to vector<64x128xf32>
    %95 = arith.truncf %94 : vector<64x128xf32> to vector<64x128xbf16>
    %cst_35 = arith.constant dense<0.000000e+00> : vector<64x128xf32>
    %96 = tpu.matmul %95, %9, %cst_35 {dimension_numbers = #tpu.dot_dimension_numbers<[1], [0], [0], [1], [0, 0, 1, 1], [], []>} : vector<64x128xbf16>, vector<128x128xbf16>, vector<64x128xf32> -> vector<64x128xf32>
    %97 = arith.addf %96, %5 : vector<64x128xf32>
    %cst_36 = arith.constant dense<0.000000e+00> : vector<64xf32>
    %98 = vector.multi_reduction <add>, %97, %cst_36 [1] : vector<64x128xf32> to vector<64xf32>
    %99 = vector.shape_cast %98 : vector<64xf32> to vector<64x1xf32>
    %cst_37 = arith.constant 1.280000e+02 : f32
    %100 = vector.broadcast %cst_37 : f32 to vector<64x1xf32>
    %101 = arith.divf %99, %100 : vector<64x1xf32>
    %102 = vector.broadcast %101 : vector<64x1xf32> to vector<64x128xf32>
    %103 = arith.subf %97, %102 : vector<64x128xf32>
    %104 = arith.mulf %103, %103 : vector<64x128xf32>
    %cst_38 = arith.constant dense<0.000000e+00> : vector<64xf32>
    %105 = vector.multi_reduction <add>, %104, %cst_38 [1] : vector<64x128xf32> to vector<64xf32>
    %106 = vector.shape_cast %105 : vector<64xf32> to vector<64x1xf32>
    %cst_39 = arith.constant 1.280000e+02 : f32
    %107 = vector.broadcast %cst_39 : f32 to vector<64x1xf32>
    %108 = arith.divf %106, %107 : vector<64x1xf32>
    %cst_40 = arith.constant 9.99999974E-6 : f32
    %109 = vector.broadcast %cst_40 : f32 to vector<64x1xf32>
    %110 = arith.addf %108, %109 : vector<64x1xf32>
    %111 = math.rsqrt %110 : vector<64x1xf32>
    %112 = vector.broadcast %111 : vector<64x1xf32> to vector<64x128xf32>
    %113 = arith.mulf %103, %112 : vector<64x128xf32>
    %114 = arith.truncf %113 : vector<64x128xf32> to vector<64x128xbf16>
    %cst_41 = arith.constant dense<0.000000e+00> : vector<64x256xf32>
    %115 = tpu.matmul %114, %11, %cst_41 {dimension_numbers = #tpu.dot_dimension_numbers<[1], [0], [0], [1], [0, 0, 1, 1], [], []>} : vector<64x128xbf16>, vector<128x256xbf16>, vector<64x256xf32> -> vector<64x256xf32>
    %cst_42 = arith.constant 5.000000e-01 : f32
    %116 = vector.broadcast %cst_42 : f32 to vector<64x256xf32>
    %117 = arith.mulf %116, %115 : vector<64x256xf32>
    %cst_43 = arith.constant 0.707106769 : f32
    %118 = vector.broadcast %cst_43 : f32 to vector<64x256xf32>
    %119 = arith.mulf %115, %118 : vector<64x256xf32>
    %120 = math.erf %119 : vector<64x256xf32>
    %cst_44 = arith.constant 1.000000e+00 : f32
    %121 = vector.broadcast %cst_44 : f32 to vector<64x256xf32>
    %122 = arith.addf %121, %120 : vector<64x256xf32>
    %123 = arith.mulf %117, %122 : vector<64x256xf32>
    %124 = arith.truncf %123 : vector<64x256xf32> to vector<64x256xbf16>
    %cst_45 = arith.constant dense<0.000000e+00> : vector<64x128xf32>
    %125 = tpu.matmul %124, %13, %cst_45 {dimension_numbers = #tpu.dot_dimension_numbers<[1], [0], [0], [1], [0, 0, 1, 1], [], []>} : vector<64x256xbf16>, vector<256x128xbf16>, vector<64x128xf32> -> vector<64x128xf32>
    %126 = arith.addf %125, %113 : vector<64x128xf32>
    %cst_46 = arith.constant dense<0.000000e+00> : vector<64xf32>
    %127 = vector.multi_reduction <add>, %126, %cst_46 [1] : vector<64x128xf32> to vector<64xf32>
    %128 = vector.shape_cast %127 : vector<64xf32> to vector<64x1xf32>
    %cst_47 = arith.constant 1.280000e+02 : f32
    %129 = vector.broadcast %cst_47 : f32 to vector<64x1xf32>
    %130 = arith.divf %128, %129 : vector<64x1xf32>
    %131 = vector.broadcast %130 : vector<64x1xf32> to vector<64x128xf32>
    %132 = arith.subf %126, %131 : vector<64x128xf32>
    %133 = arith.mulf %132, %132 : vector<64x128xf32>
    %cst_48 = arith.constant dense<0.000000e+00> : vector<64xf32>
    %134 = vector.multi_reduction <add>, %133, %cst_48 [1] : vector<64x128xf32> to vector<64xf32>
    %135 = vector.shape_cast %134 : vector<64xf32> to vector<64x1xf32>
    %cst_49 = arith.constant 1.280000e+02 : f32
    %136 = vector.broadcast %cst_49 : f32 to vector<64x1xf32>
    %137 = arith.divf %135, %136 : vector<64x1xf32>
    %cst_50 = arith.constant 9.99999974E-6 : f32
    %138 = vector.broadcast %cst_50 : f32 to vector<64x1xf32>
    %139 = arith.addf %137, %138 : vector<64x1xf32>
    %140 = math.rsqrt %139 : vector<64x1xf32>
    %141 = vector.broadcast %140 : vector<64x1xf32> to vector<64x128xf32>
    %142 = arith.mulf %132, %141 : vector<64x128xf32>
    %c1 = arith.constant 1 : index
    %c0_51 = arith.constant 0 : index
    %c0_52 = arith.constant 0 : index
    %143 = vector.load %arg4[%c1, %c0_51, %c0_52] : memref<2x128x384xbf16, #tpu.memory_space<vmem>>, vector<1x128x384xbf16>
    %144 = vector.shape_cast %143 : vector<1x128x384xbf16> to vector<128x384xbf16>
    %c1_53 = arith.constant 1 : index
    %c0_54 = arith.constant 0 : index
    %c0_55 = arith.constant 0 : index
    %145 = vector.load %arg5[%c1_53, %c0_54, %c0_55] : memref<2x128x128xbf16, #tpu.memory_space<vmem>>, vector<1x128x128xbf16>
    %146 = vector.shape_cast %145 : vector<1x128x128xbf16> to vector<128x128xbf16>
    %c1_56 = arith.constant 1 : index
    %c0_57 = arith.constant 0 : index
    %c0_58 = arith.constant 0 : index
    %147 = vector.load %arg6[%c1_56, %c0_57, %c0_58] : memref<2x128x256xbf16, #tpu.memory_space<vmem>>, vector<1x128x256xbf16>
    %148 = vector.shape_cast %147 : vector<1x128x256xbf16> to vector<128x256xbf16>
    %c1_59 = arith.constant 1 : index
    %c0_60 = arith.constant 0 : index
    %c0_61 = arith.constant 0 : index
    %149 = vector.load %arg7[%c1_59, %c0_60, %c0_61] : memref<2x256x128xbf16, #tpu.memory_space<vmem>>, vector<1x256x128xbf16>
    %150 = vector.shape_cast %149 : vector<1x256x128xbf16> to vector<256x128xbf16>
    %151 = arith.truncf %142 : vector<64x128xf32> to vector<64x128xbf16>
    %cst_62 = arith.constant dense<0.000000e+00> : vector<64x384xf32>
    %152 = tpu.matmul %151, %144, %cst_62 {dimension_numbers = #tpu.dot_dimension_numbers<[1], [0], [0], [1], [0, 0, 1, 1], [], []>} : vector<64x128xbf16>, vector<128x384xbf16>, vector<64x384xf32> -> vector<64x384xf32>
    %153 = arith.truncf %152 : vector<64x384xf32> to vector<64x384xbf16>
    %154 = vector.extract_strided_slice %153 {offsets = [0, 0], sizes = [64, 32], strides = [1, 1]} : vector<64x384xbf16> to vector<64x32xbf16>
    %155 = vector.shape_cast %154 : vector<64x32xbf16> to vector<4x16x32xbf16>
    %156 = vector.extract_strided_slice %153 {offsets = [0, 128], sizes = [64, 32], strides = [1, 1]} : vector<64x384xbf16> to vector<64x32xbf16>
    %157 = vector.shape_cast %156 : vector<64x32xbf16> to vector<4x16x32xbf16>
    %158 = vector.extract_strided_slice %153 {offsets = [0, 256], sizes = [64, 32], strides = [1, 1]} : vector<64x384xbf16> to vector<64x32xbf16>
    %159 = vector.shape_cast %158 : vector<64x32xbf16> to vector<4x16x32xbf16>
    "tpu.trace_start"() <{level = 10 : i32, message = "bqd,bkd->bqk"}> : () -> ()
    %cst_63 = arith.constant dense<0.000000e+00> : vector<4x16x16xf32>
    %160 = tpu.matmul %155, %157, %cst_63 {dimension_numbers = #tpu.dot_dimension_numbers<[2], [2], [1], [1], [0, 0, 0, 1, 1, 1], [0], [0]>} : vector<4x16x32xbf16>, vector<4x16x32xbf16>, vector<4x16x16xf32> -> vector<4x16x16xf32>
    "tpu.trace_stop"() : () -> ()
    %cst_64 = arith.constant dense<0xFF800000> : vector<4x16xf32>
    %161 = vector.multi_reduction <maximumf>, %160, %cst_64 [2] : vector<4x16x16xf32> to vector<4x16xf32>
    %162 = vector.shape_cast %161 : vector<4x16xf32> to vector<4x16x1xf32>
    %163 = vector.broadcast %162 : vector<4x16x1xf32> to vector<4x16x16xf32>
    %164 = arith.subf %160, %163 : vector<4x16x16xf32>
    %165 = math.exp %164 : vector<4x16x16xf32>
    %cst_65 = arith.constant dense<0.000000e+00> : vector<4x16xf32>
    %166 = vector.multi_reduction <add>, %165, %cst_65 [2] : vector<4x16x16xf32> to vector<4x16xf32>
    %167 = vector.shape_cast %166 : vector<4x16xf32> to vector<4x16x1xf32>
    %168 = tpu.reciprocal %167 {approx = true} : vector<4x16x1xf32> -> vector<4x16x1xf32>
    %169 = vector.broadcast %168 : vector<4x16x1xf32> to vector<4x16x16xf32>
    %170 = arith.mulf %165, %169 : vector<4x16x16xf32>
    %171 = arith.truncf %170 : vector<4x16x16xf32> to vector<4x16x16xbf16>
    "tpu.trace_start"() <{level = 10 : i32, message = "bqk,bkd->bqd"}> : () -> ()
    %cst_66 = arith.constant dense<0.000000e+00> : vector<4x16x32xf32>
    %172 = tpu.matmul %171, %159, %cst_66 {dimension_numbers = #tpu.dot_dimension_numbers<[2], [1], [1], [2], [0, 0, 0, 1, 1, 2], [0], [0]>} : vector<4x16x16xbf16>, vector<4x16x32xbf16>, vector<4x16x32xf32> -> vector<4x16x32xf32>
    "tpu.trace_stop"() : () -> ()
    %173 = vector.extract_strided_slice %153 {offsets = [0, 32], sizes = [64, 32], strides = [1, 1]} : vector<64x384xbf16> to vector<64x32xbf16>
    %174 = vector.shape_cast %173 : vector<64x32xbf16> to vector<4x16x32xbf16>
    %175 = vector.extract_strided_slice %153 {offsets = [0, 160], sizes = [64, 32], strides = [1, 1]} : vector<64x384xbf16> to vector<64x32xbf16>
    %176 = vector.shape_cast %175 : vector<64x32xbf16> to vector<4x16x32xbf16>
    %177 = vector.extract_strided_slice %153 {offsets = [0, 288], sizes = [64, 32], strides = [1, 1]} : vector<64x384xbf16> to vector<64x32xbf16>
    %178 = vector.shape_cast %177 : vector<64x32xbf16> to vector<4x16x32xbf16>
    "tpu.trace_start"() <{level = 10 : i32, message = "bqd,bkd->bqk"}> : () -> ()
    %cst_67 = arith.constant dense<0.000000e+00> : vector<4x16x16xf32>
    %179 = tpu.matmul %174, %176, %cst_67 {dimension_numbers = #tpu.dot_dimension_numbers<[2], [2], [1], [1], [0, 0, 0, 1, 1, 1], [0], [0]>} : vector<4x16x32xbf16>, vector<4x16x32xbf16>, vector<4x16x16xf32> -> vector<4x16x16xf32>
    "tpu.trace_stop"() : () -> ()
    %cst_68 = arith.constant dense<0xFF800000> : vector<4x16xf32>
    %180 = vector.multi_reduction <maximumf>, %179, %cst_68 [2] : vector<4x16x16xf32> to vector<4x16xf32>
    %181 = vector.shape_cast %180 : vector<4x16xf32> to vector<4x16x1xf32>
    %182 = vector.broadcast %181 : vector<4x16x1xf32> to vector<4x16x16xf32>
    %183 = arith.subf %179, %182 : vector<4x16x16xf32>
    %184 = math.exp %183 : vector<4x16x16xf32>
    %cst_69 = arith.constant dense<0.000000e+00> : vector<4x16xf32>
    %185 = vector.multi_reduction <add>, %184, %cst_69 [2] : vector<4x16x16xf32> to vector<4x16xf32>
    %186 = vector.shape_cast %185 : vector<4x16xf32> to vector<4x16x1xf32>
    %187 = tpu.reciprocal %186 {approx = true} : vector<4x16x1xf32> -> vector<4x16x1xf32>
    %188 = vector.broadcast %187 : vector<4x16x1xf32> to vector<4x16x16xf32>
    %189 = arith.mulf %184, %188 : vector<4x16x16xf32>
    %190 = arith.truncf %189 : vector<4x16x16xf32> to vector<4x16x16xbf16>
    "tpu.trace_start"() <{level = 10 : i32, message = "bqk,bkd->bqd"}> : () -> ()
    %cst_70 = arith.constant dense<0.000000e+00> : vector<4x16x32xf32>
    %191 = tpu.matmul %190, %178, %cst_70 {dimension_numbers = #tpu.dot_dimension_numbers<[2], [1], [1], [2], [0, 0, 0, 1, 1, 2], [0], [0]>} : vector<4x16x16xbf16>, vector<4x16x32xbf16>, vector<4x16x32xf32> -> vector<4x16x32xf32>
    "tpu.trace_stop"() : () -> ()
    %192 = vector.extract_strided_slice %153 {offsets = [0, 64], sizes = [64, 32], strides = [1, 1]} : vector<64x384xbf16> to vector<64x32xbf16>
    %193 = vector.shape_cast %192 : vector<64x32xbf16> to vector<4x16x32xbf16>
    %194 = vector.extract_strided_slice %153 {offsets = [0, 192], sizes = [64, 32], strides = [1, 1]} : vector<64x384xbf16> to vector<64x32xbf16>
    %195 = vector.shape_cast %194 : vector<64x32xbf16> to vector<4x16x32xbf16>
    %196 = vector.extract_strided_slice %153 {offsets = [0, 320], sizes = [64, 32], strides = [1, 1]} : vector<64x384xbf16> to vector<64x32xbf16>
    %197 = vector.shape_cast %196 : vector<64x32xbf16> to vector<4x16x32xbf16>
    "tpu.trace_start"() <{level = 10 : i32, message = "bqd,bkd->bqk"}> : () -> ()
    %cst_71 = arith.constant dense<0.000000e+00> : vector<4x16x16xf32>
    %198 = tpu.matmul %193, %195, %cst_71 {dimension_numbers = #tpu.dot_dimension_numbers<[2], [2], [1], [1], [0, 0, 0, 1, 1, 1], [0], [0]>} : vector<4x16x32xbf16>, vector<4x16x32xbf16>, vector<4x16x16xf32> -> vector<4x16x16xf32>
    "tpu.trace_stop"() : () -> ()
    %cst_72 = arith.constant dense<0xFF800000> : vector<4x16xf32>
    %199 = vector.multi_reduction <maximumf>, %198, %cst_72 [2] : vector<4x16x16xf32> to vector<4x16xf32>
    %200 = vector.shape_cast %199 : vector<4x16xf32> to vector<4x16x1xf32>
    %201 = vector.broadcast %200 : vector<4x16x1xf32> to vector<4x16x16xf32>
    %202 = arith.subf %198, %201 : vector<4x16x16xf32>
    %203 = math.exp %202 : vector<4x16x16xf32>
    %cst_73 = arith.constant dense<0.000000e+00> : vector<4x16xf32>
    %204 = vector.multi_reduction <add>, %203, %cst_73 [2] : vector<4x16x16xf32> to vector<4x16xf32>
    %205 = vector.shape_cast %204 : vector<4x16xf32> to vector<4x16x1xf32>
    %206 = tpu.reciprocal %205 {approx = true} : vector<4x16x1xf32> -> vector<4x16x1xf32>
    %207 = vector.broadcast %206 : vector<4x16x1xf32> to vector<4x16x16xf32>
    %208 = arith.mulf %203, %207 : vector<4x16x16xf32>
    %209 = arith.truncf %208 : vector<4x16x16xf32> to vector<4x16x16xbf16>
    "tpu.trace_start"() <{level = 10 : i32, message = "bqk,bkd->bqd"}> : () -> ()
    %cst_74 = arith.constant dense<0.000000e+00> : vector<4x16x32xf32>
    %210 = tpu.matmul %209, %197, %cst_74 {dimension_numbers = #tpu.dot_dimension_numbers<[2], [1], [1], [2], [0, 0, 0, 1, 1, 2], [0], [0]>} : vector<4x16x16xbf16>, vector<4x16x32xbf16>, vector<4x16x32xf32> -> vector<4x16x32xf32>
    "tpu.trace_stop"() : () -> ()
    %211 = vector.extract_strided_slice %153 {offsets = [0, 96], sizes = [64, 32], strides = [1, 1]} : vector<64x384xbf16> to vector<64x32xbf16>
    %212 = vector.shape_cast %211 : vector<64x32xbf16> to vector<4x16x32xbf16>
    %213 = vector.extract_strided_slice %153 {offsets = [0, 224], sizes = [64, 32], strides = [1, 1]} : vector<64x384xbf16> to vector<64x32xbf16>
    %214 = vector.shape_cast %213 : vector<64x32xbf16> to vector<4x16x32xbf16>
    %215 = vector.extract_strided_slice %153 {offsets = [0, 352], sizes = [64, 32], strides = [1, 1]} : vector<64x384xbf16> to vector<64x32xbf16>
    %216 = vector.shape_cast %215 : vector<64x32xbf16> to vector<4x16x32xbf16>
    "tpu.trace_start"() <{level = 10 : i32, message = "bqd,bkd->bqk"}> : () -> ()
    %cst_75 = arith.constant dense<0.000000e+00> : vector<4x16x16xf32>
    %217 = tpu.matmul %212, %214, %cst_75 {dimension_numbers = #tpu.dot_dimension_numbers<[2], [2], [1], [1], [0, 0, 0, 1, 1, 1], [0], [0]>} : vector<4x16x32xbf16>, vector<4x16x32xbf16>, vector<4x16x16xf32> -> vector<4x16x16xf32>
    "tpu.trace_stop"() : () -> ()
    %cst_76 = arith.constant dense<0xFF800000> : vector<4x16xf32>
    %218 = vector.multi_reduction <maximumf>, %217, %cst_76 [2] : vector<4x16x16xf32> to vector<4x16xf32>
    %219 = vector.shape_cast %218 : vector<4x16xf32> to vector<4x16x1xf32>
    %220 = vector.broadcast %219 : vector<4x16x1xf32> to vector<4x16x16xf32>
    %221 = arith.subf %217, %220 : vector<4x16x16xf32>
    %222 = math.exp %221 : vector<4x16x16xf32>
    %cst_77 = arith.constant dense<0.000000e+00> : vector<4x16xf32>
    %223 = vector.multi_reduction <add>, %222, %cst_77 [2] : vector<4x16x16xf32> to vector<4x16xf32>
    %224 = vector.shape_cast %223 : vector<4x16xf32> to vector<4x16x1xf32>
    %225 = tpu.reciprocal %224 {approx = true} : vector<4x16x1xf32> -> vector<4x16x1xf32>
    %226 = vector.broadcast %225 : vector<4x16x1xf32> to vector<4x16x16xf32>
    %227 = arith.mulf %222, %226 : vector<4x16x16xf32>
    %228 = arith.truncf %227 : vector<4x16x16xf32> to vector<4x16x16xbf16>
    "tpu.trace_start"() <{level = 10 : i32, message = "bqk,bkd->bqd"}> : () -> ()
    %cst_78 = arith.constant dense<0.000000e+00> : vector<4x16x32xf32>
    %229 = tpu.matmul %228, %216, %cst_78 {dimension_numbers = #tpu.dot_dimension_numbers<[2], [1], [1], [2], [0, 0, 0, 1, 1, 2], [0], [0]>} : vector<4x16x16xbf16>, vector<4x16x32xbf16>, vector<4x16x32xf32> -> vector<4x16x32xf32>
    "tpu.trace_stop"() : () -> ()
    %230 = tpu.concatenate %172, %191, %210, %229 in 2 : vector<4x16x32xf32>, vector<4x16x32xf32>, vector<4x16x32xf32>, vector<4x16x32xf32> -> vector<4x16x128xf32>
    %231 = vector.shape_cast %230 : vector<4x16x128xf32> to vector<64x128xf32>
    %232 = arith.truncf %231 : vector<64x128xf32> to vector<64x128xbf16>
    %cst_79 = arith.constant dense<0.000000e+00> : vector<64x128xf32>
    %233 = tpu.matmul %232, %146, %cst_79 {dimension_numbers = #tpu.dot_dimension_numbers<[1], [0], [0], [1], [0, 0, 1, 1], [], []>} : vector<64x128xbf16>, vector<128x128xbf16>, vector<64x128xf32> -> vector<64x128xf32>
    %234 = arith.addf %233, %142 : vector<64x128xf32>
    %cst_80 = arith.constant dense<0.000000e+00> : vector<64xf32>
    %235 = vector.multi_reduction <add>, %234, %cst_80 [1] : vector<64x128xf32> to vector<64xf32>
    %236 = vector.shape_cast %235 : vector<64xf32> to vector<64x1xf32>
    %cst_81 = arith.constant 1.280000e+02 : f32
    %237 = vector.broadcast %cst_81 : f32 to vector<64x1xf32>
    %238 = arith.divf %236, %237 : vector<64x1xf32>
    %239 = vector.broadcast %238 : vector<64x1xf32> to vector<64x128xf32>
    %240 = arith.subf %234, %239 : vector<64x128xf32>
    %241 = arith.mulf %240, %240 : vector<64x128xf32>
    %cst_82 = arith.constant dense<0.000000e+00> : vector<64xf32>
    %242 = vector.multi_reduction <add>, %241, %cst_82 [1] : vector<64x128xf32> to vector<64xf32>
    %243 = vector.shape_cast %242 : vector<64xf32> to vector<64x1xf32>
    %cst_83 = arith.constant 1.280000e+02 : f32
    %244 = vector.broadcast %cst_83 : f32 to vector<64x1xf32>
    %245 = arith.divf %243, %244 : vector<64x1xf32>
    %cst_84 = arith.constant 9.99999974E-6 : f32
    %246 = vector.broadcast %cst_84 : f32 to vector<64x1xf32>
    %247 = arith.addf %245, %246 : vector<64x1xf32>
    %248 = math.rsqrt %247 : vector<64x1xf32>
    %249 = vector.broadcast %248 : vector<64x1xf32> to vector<64x128xf32>
    %250 = arith.mulf %240, %249 : vector<64x128xf32>
    %251 = arith.truncf %250 : vector<64x128xf32> to vector<64x128xbf16>
    %cst_85 = arith.constant dense<0.000000e+00> : vector<64x256xf32>
    %252 = tpu.matmul %251, %148, %cst_85 {dimension_numbers = #tpu.dot_dimension_numbers<[1], [0], [0], [1], [0, 0, 1, 1], [], []>} : vector<64x128xbf16>, vector<128x256xbf16>, vector<64x256xf32> -> vector<64x256xf32>
    %cst_86 = arith.constant 5.000000e-01 : f32
    %253 = vector.broadcast %cst_86 : f32 to vector<64x256xf32>
    %254 = arith.mulf %253, %252 : vector<64x256xf32>
    %cst_87 = arith.constant 0.707106769 : f32
    %255 = vector.broadcast %cst_87 : f32 to vector<64x256xf32>
    %256 = arith.mulf %252, %255 : vector<64x256xf32>
    %257 = math.erf %256 : vector<64x256xf32>
    %cst_88 = arith.constant 1.000000e+00 : f32
    %258 = vector.broadcast %cst_88 : f32 to vector<64x256xf32>
    %259 = arith.addf %258, %257 : vector<64x256xf32>
    %260 = arith.mulf %254, %259 : vector<64x256xf32>
    %261 = arith.truncf %260 : vector<64x256xf32> to vector<64x256xbf16>
    %cst_89 = arith.constant dense<0.000000e+00> : vector<64x128xf32>
    %262 = tpu.matmul %261, %150, %cst_89 {dimension_numbers = #tpu.dot_dimension_numbers<[1], [0], [0], [1], [0, 0, 1, 1], [], []>} : vector<64x256xbf16>, vector<256x128xbf16>, vector<64x128xf32> -> vector<64x128xf32>
    %263 = arith.addf %262, %250 : vector<64x128xf32>
    %cst_90 = arith.constant dense<0.000000e+00> : vector<64xf32>
    %264 = vector.multi_reduction <add>, %263, %cst_90 [1] : vector<64x128xf32> to vector<64xf32>
    %265 = vector.shape_cast %264 : vector<64xf32> to vector<64x1xf32>
    %cst_91 = arith.constant 1.280000e+02 : f32
    %266 = vector.broadcast %cst_91 : f32 to vector<64x1xf32>
    %267 = arith.divf %265, %266 : vector<64x1xf32>
    %268 = vector.broadcast %267 : vector<64x1xf32> to vector<64x128xf32>
    %269 = arith.subf %263, %268 : vector<64x128xf32>
    %270 = arith.mulf %269, %269 : vector<64x128xf32>
    %cst_92 = arith.constant dense<0.000000e+00> : vector<64xf32>
    %271 = vector.multi_reduction <add>, %270, %cst_92 [1] : vector<64x128xf32> to vector<64xf32>
    %272 = vector.shape_cast %271 : vector<64xf32> to vector<64x1xf32>
    %cst_93 = arith.constant 1.280000e+02 : f32
    %273 = vector.broadcast %cst_93 : f32 to vector<64x1xf32>
    %274 = arith.divf %272, %273 : vector<64x1xf32>
    %cst_94 = arith.constant 9.99999974E-6 : f32
    %275 = vector.broadcast %cst_94 : f32 to vector<64x1xf32>
    %276 = arith.addf %274, %275 : vector<64x1xf32>
    %277 = math.rsqrt %276 : vector<64x1xf32>
    %278 = vector.broadcast %277 : vector<64x1xf32> to vector<64x128xf32>
    %279 = arith.mulf %269, %278 : vector<64x128xf32>
    %280 = vector.shape_cast %279 : vector<64x128xf32> to vector<4x16x128xf32>
    %c0_95 = arith.constant 0 : index
    %c0_96 = arith.constant 0 : index
    %c0_97 = arith.constant 0 : index
    %281 = vector.load %arg8[%c0_95, %c0_96, %c0_97] : memref<4x16x128xf32, #tpu.memory_space<vmem>>, vector<4x16x128xf32>
    tpu.vector_store %arg8[%c0_95, %c0_96, %c0_97], %280 {strides = array<i32>} : memref<4x16x128xf32, #tpu.memory_space<vmem>>, vector<4x16x128xf32>,
    %282 = tpu.concatenate %33, %52, %71, %90, %170, %189, %208, %227 in 2 : vector<4x16x16xf32>, vector<4x16x16xf32>, vector<4x16x16xf32>, vector<4x16x16xf32>, vector<4x16x16xf32>, vector<4x16x16xf32>, vector<4x16x16xf32>, vector<4x16x16xf32> -> vector<4x16x128xf32>
    %283 = arith.truncf %282 : vector<4x16x128xf32> to vector<4x16x128xbf16>
    %c0_98 = arith.constant 0 : index
    %c0_99 = arith.constant 0 : index
    %c0_100 = arith.constant 0 : index
    %284 = vector.load %arg9[%c0_98, %c0_99, %c0_100] : memref<4x16x128xbf16, #tpu.memory_space<vmem>>, vector<4x16x128xbf16>
    tpu.vector_store %arg9[%c0_98, %c0_99, %c0_100], %283 {strides = array<i32>} : memref<4x16x128xbf16, #tpu.memory_space<vmem>>, vector<4x16x128xbf16>,
    return
  }
  func.func @transform_0(%arg0: i32) -> (i32, i32, i32) {
    %c0_i32 = arith.constant 0 : i32
    %c0_i32_0 = arith.constant 0 : i32
    %c0_i32_1 = arith.constant 0 : i32
    return %arg0, %c0_i32, %c0_i32_0 : i32, i32, i32
  }
  func.func @transform_1(%arg0: i32) -> (i32, i32) {
    %c0_i32 = arith.constant 0 : i32
    %c0_i32_0 = arith.constant 0 : i32
    %c0_i32_1 = arith.constant 0 : i32
    return %c0_i32, %c0_i32_0 : i32, i32
  }
  func.func @transform_2(%arg0: i32) -> (i32, i32) {
    %c0_i32 = arith.constant 0 : i32
    %c0_i32_0 = arith.constant 0 : i32
    %c0_i32_1 = arith.constant 0 : i32
    return %c0_i32, %c0_i32_0 : i32, i32
  }
  func.func @transform_3(%arg0: i32) -> (i32, i32, i32) {
    %c0_i32 = arith.constant 0 : i32
    %c0_i32_0 = arith.constant 0 : i32
    %c0_i32_1 = arith.constant 0 : i32
    %c0_i32_2 = arith.constant 0 : i32
    return %c0_i32, %c0_i32_0, %c0_i32_1 : i32, i32, i32
  }
  func.func @transform_4(%arg0: i32) -> (i32, i32, i32) {
    %c0_i32 = arith.constant 0 : i32
    %c0_i32_0 = arith.constant 0 : i32
    %c0_i32_1 = arith.constant 0 : i32
    %c0_i32_2 = arith.constant 0 : i32
    return %c0_i32, %c0_i32_0, %c0_i32_1 : i32, i32, i32
  }
  func.func @transform_5(%arg0: i32) -> (i32, i32, i32) {
    %c0_i32 = arith.constant 0 : i32
    %c0_i32_0 = arith.constant 0 : i32
    %c0_i32_1 = arith.constant 0 : i32
    %c0_i32_2 = arith.constant 0 : i32
    return %c0_i32, %c0_i32_0, %c0_i32_1 : i32, i32, i32
  }
  func.func @transform_6(%arg0: i32) -> (i32, i32, i32) {
    %c0_i32 = arith.constant 0 : i32
    %c0_i32_0 = arith.constant 0 : i32
    %c0_i32_1 = arith.constant 0 : i32
    %c0_i32_2 = arith.constant 0 : i32
    return %c0_i32, %c0_i32_0, %c0_i32_1 : i32, i32, i32
  }
  func.func @transform_7(%arg0: i32) -> (i32, i32, i32) {
    %c0_i32 = arith.constant 0 : i32
    %c0_i32_0 = arith.constant 0 : i32
    %c0_i32_1 = arith.constant 0 : i32
    return %arg0, %c0_i32, %c0_i32_0 : i32, i32, i32
  }
  func.func @transform_8(%arg0: i32) -> (i32, i32, i32) {
    %c0_i32 = arith.constant 0 : i32
    %c0_i32_0 = arith.constant 0 : i32
    %c0_i32_1 = arith.constant 0 : i32
    return %arg0, %c0_i32, %c0_i32_0 : i32, i32, i32
  }
}

</mosaic_0001>

<llo_original>
// kernel: encoder_forward.1
$region0: #{encoder_forward.1}
  #allocation0 [shape = 'u32[]', space=smem, size = 0x4, offset = 0x4, fixed_abs, tag = 'smem constant byte address 0x4 - core index']
  #allocation1 [shape = 'u32[72,128]{1,0:T(1,128)}', space=vmem, size = 0x9000, scoped, tag = 'internal scratch']
  %s0 = inlined_call_operand.vmem [shape: bf16[8,16,128], index: 0, kind: input, shape index: {}]
  %s1 = inlined_call_operand.vmem [shape: bf16[128,128], index: 1, kind: input, shape index: {}]
  %s2 = inlined_call_operand.vmem [shape: f32[64,128], index: 2, kind: input, shape index: {}]
  %s3 = inlined_call_operand.vmem [shape: bf16[2,128,384], index: 3, kind: input, shape index: {}]
  %s4 = inlined_call_operand.hbm [shape: bf16[2,128,128], index: 4, kind: input, shape index: {}]
  %s5 = inlined_call_operand.hbm [shape: bf16[2,128,256], index: 5, kind: input, shape index: {}]
  %s6 = inlined_call_operand.hbm [shape: bf16[2,256,128], index: 6, kind: input, shape index: {}]
  %s7 = inlined_call_operand.hbm [shape: f32[8,16,128], index: 7, kind: output, shape index: {0}]
  %s8 = inlined_call_operand.vmem [shape: bf16[8,16,128], index: 8, kind: output, shape index: {1}]
  %9 = xla_tuple %s7, %s8
  %s10 = sld [smem:[#allocation0]]
  $region81: #{encoder_forward.1} parent=0
    _
  %s12 = ssub.s32 1, %s10
  %s13 = scalar_select 0, %s12, %s10
  $region1: #{encoder_forward.1} parent=0
    #allocation2 [shape = 'u8[65536]{0}', space=vmem, size = 0x10000, scoped, tag = 'input window, operand 4, single buffered']
    #allocation3 [shape = 's32[2]{0}', space=sflag, size = 0x8, scoped, tag = 'scoped memory for encoder_forward.1']
    #allocation4 [shape = 's32[2]{0}', space=sflag, size = 0x8, scoped, tag = 'scoped memory for encoder_forward.1']
    #allocation5 [shape = 'u8[131072]{0}', space=vmem, size = 0x20000, scoped, tag = 'input window, operand 5, single buffered']
    #allocation6 [shape = 's32[1]{0}', space=sflag, size = 0x4, scoped, tag = 'scoped memory for encoder_forward.1']
    #allocation7 [shape = 'u8[131072]{0}', space=vmem, size = 0x20000, scoped, tag = 'input window, operand 6, single buffered']
    #allocation8 [shape = 'u8[65536]{0}', space=vmem, size = 0x10000, scoped, tag = 'output window, operand 0']
    %14 = vsyncpa [#allocation3], 0
    %15 = vsyncpa [#allocation6], 0
    %16 = vsyncpa [#allocation4], 0
    %s17 = scalar_lea.sflag [#allocation4], 1
    %18 = vsyncpa %s17, 0
    loop: start=0, step=1, limit=4
    $region2: #{encoder_forward.1} parent=1 // loop_pre_header
      _
    $region3: #{encoder_forward.1} parent=1 // loop_header
      %s20 = sphi 0, %s24
      %p21 = scmp.ge.s32.totalorder %s20, 4
      %s30 = sphi 0, %s32
      %s33 = sphi 0, %s30
      %s34 = sphi 0, %s33
      %s50 = sphi 0, %s34
      %s54 = sphi 0, %s54
      %s56 = sphi 0, %s54
      %s57 = sphi 0, %s56
      %s71 = sphi 0, %s57
      %s75 = sphi 0, %s75
      %s77 = sphi 0, %s75
      %s78 = sphi 0, %s77
      %s92 = sphi 0, %s78
      %s96 = sphi 0, %s96
      %s98 = sphi 0, %s96
      %s99 = sphi 0, %s98
      %s113 = sphi 0, %s99
      %s117 = sphi 0, %s117
      %s119 = sphi 0, %s117
      %s120 = sphi 0, %s119
      %s134 = sphi 0, %s120
      %s138 = sphi 0, %s138
      %s140 = sphi 0, %s138
      %s141 = sphi 0, %s140
      %s155 = sphi 0, %s141
      %s159 = sphi 0, %s159
      %s161 = sphi 0, %s159
      %s162 = sphi 0, %s161
      %s176 = sphi 0, %s162
      %s182 = sphi 0, %s184
      %s185 = sphi 0, %s182
      %s186 = sphi 0, %s185
      %s202 = sphi 0, %s186
      %s208 = sphi 0, %s210
      %s211 = sphi 0, %s208
      %s212 = sphi 0, %s211
      %s228 = sphi 0, %s212
    $region4: #{encoder_forward.1} parent=1 // loop_header_branch
      %23 = sbr.rel (%p21) target = $region8
    $region5: #{encoder_forward.1} parent=1 // loop_body
      %s25 = ssub.s32 %s20, 1
      %s26 = ssub.s32 %s20, 2
      %s27 = sadd.s32 %s20, 1
      %s28 = ssub.s32 %s20, %s27
      %p29 = scmp.eq.s32.totalorder %s28, 0
      %s31 = sadd.s32 %s30, 1
      %s32 = scalar_select %p29, %s30, %s31
      %p35 = pneg %p29
      %p36 = scmp.eq.s32.totalorder %s20, 1
      %p37 = por %p35, %p36
      %p38 = scmp.ne.s32.totalorder %s30, %s33
      %p39 = scmp.eq.s32.totalorder %s20, 0
      %p40 = por %p38, %p39
      %p41 = scmp.ne.s32.totalorder %s30, %s33
      %p42 = scmp.eq.s32.totalorder %s25, 1
      %p43 = por %p41, %p42
      %p44 = scmp.ne.s32.totalorder %s33, %s34
      %p45 = scmp.eq.s32.totalorder %s25, 0
      %p46 = por %p44, %p45
      %p47 = scmp.ne.s32.totalorder %s33, %s34
      %p48 = scmp.eq.s32.totalorder %s26, 1
      %p49 = por %p47, %p48
      %p51 = scmp.ne.s32.totalorder %s34, %s50
      %p52 = scmp.eq.s32.totalorder %s26, 0
      %p53 = por %p51, %p52
      %s55 = sadd.s32 %s54, 1
      %p58 = scmp.eq.s32.totalorder %s20, 1
      %p59 = scmp.ne.s32.totalorder %s54, %s56
      %p60 = scmp.eq.s32.totalorder %s20, 0
      %p61 = por %p59, %p60
      %p62 = scmp.ne.s32.totalorder %s54, %s56
      %p63 = scmp.eq.s32.totalorder %s25, 1
      %p64 = por %p62, %p63
      %p65 = scmp.ne.s32.totalorder %s56, %s57
      %p66 = scmp.eq.s32.totalorder %s25, 0
      %p67 = por %p65, %p66
      %p68 = scmp.ne.s32.totalorder %s56, %s57
      %p69 = scmp.eq.s32.totalorder %s26, 1
      %p70 = por %p68, %p69
      %p72 = scmp.ne.s32.totalorder %s57, %s71
      %p73 = scmp.eq.s32.totalorder %s26, 0
      %p74 = por %p72, %p73
      %s76 = sadd.s32 %s75, 1
      %p79 = scmp.eq.s32.totalorder %s20, 1
      %p80 = scmp.ne.s32.totalorder %s75, %s77
      %p81 = scmp.eq.s32.totalorder %s20, 0
      %p82 = por %p80, %p81
      %p83 = scmp.ne.s32.totalorder %s75, %s77
      %p84 = scmp.eq.s32.totalorder %s25, 1
      %p85 = por %p83, %p84
      %p86 = scmp.ne.s32.totalorder %s77, %s78
      %p87 = scmp.eq.s32.totalorder %s25, 0
      %p88 = por %p86, %p87
      %p89 = scmp.ne.s32.totalorder %s77, %s78
      %p90 = scmp.eq.s32.totalorder %s26, 1
      %p91 = por %p89, %p90
      %p93 = scmp.ne.s32.totalorder %s78, %s92
      %p94 = scmp.eq.s32.totalorder %s26, 0
      %p95 = por %p93, %p94
      %s97 = sadd.s32 %s96, 1
      %p100 = scmp.eq.s32.totalorder %s20, 1
      %p101 = scmp.ne.s32.totalorder %s96, %s98
      %p102 = scmp.eq.s32.totalorder %s20, 0
      %p103 = por %p101, %p102
      %p104 = scmp.ne.s32.totalorder %s96, %s98
      %p105 = scmp.eq.s32.totalorder %s25, 1
      %p106 = por %p104, %p105
      %p107 = scmp.ne.s32.totalorder %s98, %s99
      %p108 = scmp.eq.s32.totalorder %s25, 0
      %p109 = por %p107, %p108
      %p110 = scmp.ne.s32.totalorder %s98, %s99
      %p111 = scmp.eq.s32.totalorder %s26, 1
      %p112 = por %p110, %p111
      %p114 = scmp.ne.s32.totalorder %s99, %s113
      %p115 = scmp.eq.s32.totalorder %s26, 0
      %p116 = por %p114, %p115
      %s118 = sadd.s32 %s117, 1
      %p121 = scmp.eq.s32.totalorder %s20, 1
      %p122 = scmp.ne.s32.totalorder %s117, %s119
      %p123 = scmp.eq.s32.totalorder %s20, 0
      %p124 = por %p122, %p123
      %p125 = scmp.ne.s32.totalorder %s117, %s119
      %p126 = scmp.eq.s32.totalorder %s25, 1
      %p127 = por %p125, %p126
      %p128 = scmp.ne.s32.totalorder %s119, %s120
      %p129 = scmp.eq.s32.totalorder %s25, 0
      %p130 = por %p128, %p129
      %p131 = scmp.ne.s32.totalorder %s119, %s120
      %p132 = scmp.eq.s32.totalorder %s26, 1
      %p133 = por %p131, %p132
      %p135 = scmp.ne.s32.totalorder %s120, %s134
      %p136 = scmp.eq.s32.totalorder %s26, 0
      %p137 = por %p135, %p136
      %s139 = sadd.s32 %s138, 1
      %p142 = scmp.eq.s32.totalorder %s20, 1
      %p143 = scmp.ne.s32.totalorder %s138, %s140
      %p144 = scmp.eq.s32.totalorder %s20, 0
      %p145 = por %p143, %p144
      %p146 = scmp.ne.s32.totalorder %s138, %s140
      %p147 = scmp.eq.s32.totalorder %s25, 1
      %p148 = por %p146, %p147
      %p149 = scmp.ne.s32.totalorder %s140, %s141
      %p150 = scmp.eq.s32.totalorder %s25, 0
      %p151 = por %p149, %p150
      %p152 = scmp.ne.s32.totalorder %s140, %s141
      %p153 = scmp.eq.s32.totalorder %s26, 1
      %p154 = por %p152, %p153
      %p156 = scmp.ne.s32.totalorder %s141, %s155
      %p157 = scmp.eq.s32.totalorder %s26, 0
      %p158 = por %p156, %p157
      %s160 = sadd.s32 %s159, 1
      %p163 = scmp.eq.s32.totalorder %s20, 1
      %p164 = scmp.ne.s32.totalorder %s159, %s161
      %p165 = scmp.eq.s32.totalorder %s20, 0
      %p166 = por %p164, %p165
      %p167 = scmp.ne.s32.totalorder %s159, %s161
      %p168 = scmp.eq.s32.totalorder %s25, 1
      %p169 = por %p167, %p168
      %p170 = scmp.ne.s32.totalorder %s161, %s162
      %p171 = scmp.eq.s32.totalorder %s25, 0
      %p172 = por %p170, %p171
      %p173 = scmp.ne.s32.totalorder %s161, %s162
      %p174 = scmp.eq.s32.totalorder %s26, 1
      %p175 = por %p173, %p174
      %p177 = scmp.ne.s32.totalorder %s162, %s176
      %p178 = scmp.eq.s32.totalorder %s26, 0
      %p179 = por %p177, %p178
      %s180 = ssub.s32 %s20, %s27
      %p181 = scmp.eq.s32.totalorder %s180, 0
      %s183 = sadd.s32 %s182, 1
      %s184 = scalar_select %p181, %s182, %s183
      %p187 = pneg %p181
      %p188 = scmp.eq.s32.totalorder %s20, 1
      %p189 = por %p187, %p188
      %p190 = scmp.ne.s32.totalorder %s182, %s185
      %p191 = scmp.eq.s32.totalorder %s20, 0
      %p192 = por %p190, %p191
      %p193 = scmp.ne.s32.totalorder %s182, %s185
      %p194 = scmp.eq.s32.totalorder %s25, 1
      %p195 = por %p193, %p194
      %p196 = scmp.ne.s32.totalorder %s185, %s186
      %p197 = scmp.eq.s32.totalorder %s25, 0
      %p198 = por %p196, %p197
      %p199 = scmp.ne.s32.totalorder %s185, %s186
      %p200 = scmp.eq.s32.totalorder %s26, 1
      %p201 = por %p199, %p200
      %p203 = scmp.ne.s32.totalorder %s186, %s202
      %p204 = scmp.eq.s32.totalorder %s26, 0
      %p205 = por %p203, %p204
      %s206 = ssub.s32 %s20, %s27
      %p207 = scmp.eq.s32.totalorder %s206, 0
      %s209 = sadd.s32 %s208, 1
      %s210 = scalar_select %p207, %s208, %s209
      %p213 = pneg %p207
      %p214 = scmp.eq.s32.totalorder %s20, 1
      %p215 = por %p213, %p214
      %p216 = scmp.ne.s32.totalorder %s208, %s211
      %p217 = scmp.eq.s32.totalorder %s20, 0
      %p218 = por %p216, %p217
      %p219 = scmp.ne.s32.totalorder %s208, %s211
      %p220 = scmp.eq.s32.totalorder %s25, 1
      %p221 = por %p219, %p220
      %p222 = scmp.ne.s32.totalorder %s211, %s212
      %p223 = scmp.eq.s32.totalorder %s25, 0
      %p224 = por %p222, %p223
      %p225 = scmp.ne.s32.totalorder %s211, %s212
      %p226 = scmp.eq.s32.totalorder %s26, 1
      %p227 = por %p225, %p226
      %p229 = scmp.ne.s32.totalorder %s212, %s228
      %p230 = scmp.eq.s32.totalorder %s26, 0
      %p231 = por %p229, %p230
      %p232 = scmp.le.s32.totalorder 1, %s20
      %p233 = scmp.lt.s32.totalorder %s20, 3
      %p234 = pnand %p232, %p233
      %p235 = pneg %p234
      // Predicated region
      $region9: #{encoder_forward.1} parent=5 // pred_check
        _
      $region10: #{encoder_forward.1} parent=5 // pred_check_branch
        %237 = sbr.rel (%p234) target = $region12
      $region11: #{encoder_forward.1} parent=5 // pred_region
        %s238 = ssub.s32 %s20, 1
        // Predicated region
        $region13: #{encoder_forward.1} parent=11 // pred_check
          %p239 = pneg %p67
        $region14: #{encoder_forward.1} parent=11 // pred_check_branch
          %241 = sbr.rel (%p239) target = $region16
        $region15: #{encoder_forward.1} parent=11 // pred_region
          _
        $region16: #{encoder_forward.1} parent=11 // pred_fallthru
          _
        // Predicated region
        $region17: #{encoder_forward.1} parent=11 // pred_check
          %p242 = pneg %p88
        $region18: #{encoder_forward.1} parent=11 // pred_check_branch
          %244 = sbr.rel (%p242) target = $region20
        $region19: #{encoder_forward.1} parent=11 // pred_region
          _
        $region20: #{encoder_forward.1} parent=11 // pred_fallthru
          _
        // Predicated region
        $region21: #{encoder_forward.1} parent=11 // pred_check
          %p245 = pneg %p109
        $region22: #{encoder_forward.1} parent=11 // pred_check_branch
          %247 = sbr.rel (%p245) target = $region24
        $region23: #{encoder_forward.1} parent=11 // pred_region
          _
        $region24: #{encoder_forward.1} parent=11 // pred_fallthru
          _
        // Predicated region
        $region25: #{encoder_forward.1} parent=11 // pred_check
          %p248 = pneg %p130
        $region26: #{encoder_forward.1} parent=11 // pred_check_branch
          %250 = sbr.rel (%p248) target = $region28
        $region27: #{encoder_forward.1} parent=11 // pred_region
          %252 = vsyncadd [#allocation3], 0
          %s253 = sshll.u32 %s4, 4
          %s254 = int_to_ptr.hbm [resolvable:$true] %s253
          %s255 = sshll.u32 [#allocation2], 4
          %s256 = int_to_ptr.vmem [resolvable:$true] %s255
          %261 = dma.hbm_to_vmem [thread:$0]  %s254, 2048, %s256, [#allocation3], 64, 64, 4
        $region28: #{encoder_forward.1} parent=11 // pred_fallthru
          _
        // Predicated region
        $region29: #{encoder_forward.1} parent=11 // pred_check
          %p262 = pneg %p151
        $region30: #{encoder_forward.1} parent=11 // pred_check_branch
          %264 = sbr.rel (%p262) target = $region32
        $region31: #{encoder_forward.1} parent=11 // pred_region
          %266 = vsyncadd [#allocation6], 0
          %s267 = sshll.u32 %s5, 4
          %s268 = int_to_ptr.hbm [resolvable:$true] %s267
          %s269 = sshll.u32 [#allocation5], 4
          %s270 = int_to_ptr.vmem [resolvable:$true] %s269
          %275 = dma.hbm_to_vmem [thread:$0]  %s268, 4096, %s270, [#allocation6], 128, 128, 8
        $region32: #{encoder_forward.1} parent=11 // pred_fallthru
          _
        // Predicated region
        $region33: #{encoder_forward.1} parent=11 // pred_check
          %p276 = pneg %p172
        $region34: #{encoder_forward.1} parent=11 // pred_check_branch
          %278 = sbr.rel (%p276) target = $region36
        $region35: #{encoder_forward.1} parent=11 // pred_region
          %280 = vsyncadd [#allocation6], 0
          %s281 = sshll.u32 %s6, 4
          %s282 = int_to_ptr.hbm [resolvable:$true] %s281
          %s283 = sshll.u32 [#allocation7], 4
          %s284 = int_to_ptr.vmem [resolvable:$true] %s283
          %289 = dma.hbm_to_vmem [thread:$0]  %s282, 4096, %s284, [#allocation6], 64, 64, 4
        $region36: #{encoder_forward.1} parent=11 // pred_fallthru
          _
      $region12: #{encoder_forward.1} parent=5 // pred_fallthru
        _
      %p290 = scmp.lt.s32.totalorder %s20, 2
      // Predicated region
      $region37: #{encoder_forward.1} parent=5 // pred_check
        %p291 = pneg %p290
      $region38: #{encoder_forward.1} parent=5 // pred_check_branch
        %293 = sbr.rel (%p291) target = $region40
      $region39: #{encoder_forward.1} parent=5 // pred_region
        // Predicated region
        $region41: #{encoder_forward.1} parent=39 // pred_check
          %p294 = pneg %p40
        $region42: #{encoder_forward.1} parent=39 // pred_check_branch
          %296 = sbr.rel (%p294) target = $region44
        $region43: #{encoder_forward.1} parent=39 // pred_region
          %s297 = smul.u32 4, %s20
          %p298 = scmp.lt.s32.totalorder %s297, 7
          %s299 = scalar_select %p298, %s297, 7
          %s300 = smul.addr %s299, 2
          %s301 = smul.addr %s300, 4
          %s302 = scalar_lea.vmem %s0, %s301
          %s303 = smul.u32 4, %s20
        $region44: #{encoder_forward.1} parent=39 // pred_fallthru
          _
      $region40: #{encoder_forward.1} parent=5 // pred_fallthru
        _
      %p304 = scmp.le.s32.totalorder 1, %s20
      %p305 = scmp.lt.s32.totalorder %s20, 3
      %p306 = pnand %p304, %p305
      %p307 = pneg %p306
      // Predicated region
      $region45: #{encoder_forward.1} parent=5 // pred_check
        _
      $region46: #{encoder_forward.1} parent=5 // pred_check_branch
        %309 = sbr.rel (%p306) target = $region48
      $region47: #{encoder_forward.1} parent=5 // pred_region
        %s310 = ssub.s32 %s20, 1
        // Predicated region
        $region49: #{encoder_forward.1} parent=47 // pred_check
          %p311 = pneg %p130
        $region50: #{encoder_forward.1} parent=47 // pred_check_branch
          %313 = sbr.rel (%p311) target = $region52
        $region51: #{encoder_forward.1} parent=47 // pred_region
          %315 = dma.done [#allocation3], 2048
        $region52: #{encoder_forward.1} parent=47 // pred_fallthru
          _
        // Predicated region
        $region53: #{encoder_forward.1} parent=47 // pred_check
          %p316 = pneg %p151
        $region54: #{encoder_forward.1} parent=47 // pred_check_branch
          %318 = sbr.rel (%p316) target = $region56
        $region55: #{encoder_forward.1} parent=47 // pred_region
          %320 = dma.done [#allocation6], 4096
        $region56: #{encoder_forward.1} parent=47 // pred_fallthru
          _
        // Predicated region
        $region57: #{encoder_forward.1} parent=47 // pred_check
          %p321 = pneg %p172
        $region58: #{encoder_forward.1} parent=47 // pred_check_branch
          %323 = sbr.rel (%p321) target = $region60
        $region59: #{encoder_forward.1} parent=47 // pred_region
          %325 = dma.done [#allocation6], 4096
        $region60: #{encoder_forward.1} parent=47 // pred_fallthru
          _
        %s326 = smul.u32 4, %s25
        %p327 = scmp.lt.s32.totalorder %s326, 7
        %s328 = scalar_select %p327, %s326, 7
        %s329 = smul.addr %s328, 2
        %s330 = smul.addr %s329, 4
        %s331 = scalar_lea.vmem %s0, %s330
        %p332 = pneg %p46
        %p333 = pneg %p43
        %p334 = pneg %p67
        %p335 = pneg %p64
        %p336 = pneg %p88
        %p337 = pneg %p85
        %p338 = pneg %p109
        %p339 = pneg %p106
        %p340 = pneg %p130
        %p341 = pneg %p127
        %p342 = pneg %p151
        %p343 = pneg %p148
        %p344 = pneg %p172
        %p345 = pneg %p169
        %p346 = pneg %p198
        %p347 = pneg %p195
        %s348 = sand.u32 %s185, 1
        %s349 = scalar_lea.sflag [#allocation4], %s348
        %s350 = sand.u32 %s185, 1
        %s351 = smul.addr %s350, 64
        %s352 = scalar_lea.vmem [#allocation8], %s351
        %p353 = pneg %p224
        %p354 = pneg %p221
        %s355 = smul.u32 4, %s25
        %p356 = scmp.lt.s32.totalorder %s355, 7
        %s357 = scalar_select %p356, %s355, 7
        %s358 = smul.addr %s357, 2
        %s359 = smul.addr %s358, 4
        %s360 = scalar_lea.vmem %s8, %s359
        %s361 = smul.u32 4, %s25
        %p362 = scmp.lt.s32.totalorder %s361, 7
        %s363 = scalar_select %p362, %s361, 7
        %s364 = smul.addr %s363, 2
        %s365 = smul.addr %s364, 4
        %s366 = scalar_lea.vmem %s0, %s365
        %s367 = smul.u32 4, %s25
        %s368 = smul.u32 4, %s25
        %s369 = smul.u32 4, %s25
        %p370 = scmp.lt.s32.totalorder %s369, 7
        %s371 = scalar_select %p370, %s369, 7
        %s372 = smul.addr %s371, 2
        %s373 = smul.addr %s372, 4
        %s374 = scalar_lea.vmem %s8, %s373
        %s375 = smul.u32 4, %s25
        %v377 = vld [vmem:[%s366] sm:$0xf]
        %v378 = vld [vmem:[%s366 + $0x4] sm:$0xf]
        %v379 = vld [vmem:[%s366 + $0x8] sm:$0xf]
        %v380 = vld [vmem:[%s366 + $0xc] sm:$0xf]
        %v381 = vld [vmem:[%s366 + $0x10] sm:$0xf]
        %v382 = vld [vmem:[%s366 + $0x14] sm:$0xf]
        %v383 = vld [vmem:[%s366 + $0x18] sm:$0xf]
        %v384 = vld [vmem:[%s366 + $0x1c] sm:$0xf]
        %v385 = vld [vmem:[%s1] sm:$0xf]
        %v386 = vld [vmem:[%s1 + $0x4] sm:$0xf]
        %v387 = vld [vmem:[%s1 + $0x8] sm:$0xf]
        %v388 = vld [vmem:[%s1 + $0xc] sm:$0xf]
        %v389 = vld [vmem:[%s1 + $0x10] sm:$0xf]
        %v390 = vld [vmem:[%s1 + $0x14] sm:$0xf]
        %v391 = vld [vmem:[%s1 + $0x18] sm:$0xf]
        %v392 = vld [vmem:[%s1 + $0x1c] sm:$0xf]
        %v393 = vld [vmem:[%s1 + $0x20] sm:$0xf]
        %v394 = vld [vmem:[%s1 + $0x24] sm:$0xf]
        %v395 = vld [vmem:[%s1 + $0x28] sm:$0xf]
        %v396 = vld [vmem:[%s1 + $0x2c] sm:$0xf]
        %v397 = vld [vmem:[%s1 + $0x30] sm:$0xf]
        %v398 = vld [vmem:[%s1 + $0x34] sm:$0xf]
        %v399 = vld [vmem:[%s1 + $0x38] sm:$0xf]
        %v400 = vld [vmem:[%s1 + $0x3c] sm:$0xf]
        %v401 = vld [vmem:[%s2] sm:$0xff]
        %v402 = vld [vmem:[%s2 + $0x8] sm:$0xff]
        %v403 = vld [vmem:[%s2 + $0x10] sm:$0xff]
        %v404 = vld [vmem:[%s2 + $0x18] sm:$0xff]
        %v405 = vld [vmem:[%s2 + $0x20] sm:$0xff]
        %v406 = vld [vmem:[%s2 + $0x28] sm:$0xff]
        %v407 = vld [vmem:[%s2 + $0x30] sm:$0xff]
        %v408 = vld [vmem:[%s2 + $0x38] sm:$0xff]
        %v417 = vunpack.c.l.b16 %v377
        %v418 = vunpack.c.l.b16 %v378
        %v419 = vunpack.c.l.b16 %v379
        %v420 = vunpack.c.l.b16 %v380
        %v421 = vunpack.c.l.b16 %v381
        %v422 = vunpack.c.l.b16 %v382
        %v423 = vunpack.c.l.b16 %v383
        %v424 = vunpack.c.l.b16 %v384
        %v425 = vpack.c.b16 %v418, %v417
        %v426 = vpack.c.b16 %v420, %v419
        %v427 = vpack.c.b16 %v422, %v421
        %v428 = vpack.c.b16 %v424, %v423
        %v449 = vunpack.c.l.b16 %v385
        %v450 = vunpack.c.l.b16 %v386
        %v451 = vunpack.c.l.b16 %v387
        %v452 = vunpack.c.l.b16 %v388
        %v453 = vunpack.c.l.b16 %v389
        %v454 = vunpack.c.l.b16 %v390
        %v455 = vunpack.c.l.b16 %v391
        %v456 = vunpack.c.l.b16 %v392
        %v457 = vunpack.c.l.b16 %v393
        %v458 = vunpack.c.l.b16 %v394
        %v459 = vunpack.c.l.b16 %v395
        %v460 = vunpack.c.l.b16 %v396
        %v461 = vunpack.c.l.b16 %v397
        %v462 = vunpack.c.l.b16 %v398
        %v463 = vunpack.c.l.b16 %v399
        %v464 = vunpack.c.l.b16 %v400
        %v465 = vpack.c.b16 %v450, %v449
        %v466 = vpack.c.b16 %v452, %v451
        %v467 = vpack.c.b16 %v454, %v453
        %v468 = vpack.c.b16 %v456, %v455
        %v469 = vpack.c.b16 %v458, %v457
        %v470 = vpack.c.b16 %v460, %v459
        %v471 = vpack.c.b16 %v462, %v461
        %v472 = vpack.c.b16 %v464, %v463
        %481 = vmatpush.bf16.msra.mxu0 %v472
        %482 = vmatpush.bf16.msra.mxu0 %v471
        %483 = vmatpush.bf16.msra.mxu0 %v470
        %484 = vmatpush.bf16.msra.mxu0 %v469
        %485 = vmatpush.bf16.msra.mxu0 %v468
        %486 = vmatpush.bf16.msra.mxu0 %v467
        %487 = vmatpush.bf16.msra.mxu0 %v466
        %488 = vmatpush.bf16.msra.mxu0 %v465
        %489 = vmatmul.bf16.gmra.mxu0 %v425
        %v490 = vpop.f32.mrf.mxu0
        %v491 = vadd.f32 %v401, %v490
        %v492 = vpop.f32.mrf.mxu0
        %v493 = vadd.f32 %v402, %v492
        %494 = vmatmul.bf16.gmra.mxu0 %v426
        %v495 = vpop.f32.mrf.mxu0
        %v496 = vadd.f32 %v403, %v495
        %v497 = vpop.f32.mrf.mxu0
        %v498 = vadd.f32 %v404, %v497
        %499 = vmatmul.bf16.gmra.mxu0 %v427
        %v500 = vpop.f32.mrf.mxu0
        %v501 = vadd.f32 %v405, %v500
        %v502 = vpop.f32.mrf.mxu0
        %v503 = vadd.f32 %v406, %v502
        %504 = vmatmul.bf16.gmra.mxu0 %v428
        %v505 = vpop.f32.mrf.mxu0
        %v506 = vadd.f32 %v407, %v505
        %v507 = vpop.f32.mrf.mxu0
        %v508 = vadd.f32 %v408, %v507
        %509 = vdwg.mxu0
        %v510 = vld [vmem:[%s3] sm:$0xff]
        %v511 = vld [vmem:[%s3 + $0x8] sm:$0xf]
        %v512 = vld [vmem:[%s3 + $0xc] sm:$0xff]
        %v513 = vld [vmem:[%s3 + $0x14] sm:$0xf]
        %v514 = vld [vmem:[%s3 + $0x18] sm:$0xff]
        %v515 = vld [vmem:[%s3 + $0x20] sm:$0xf]
        %v516 = vld [vmem:[%s3 + $0x24] sm:$0xff]
        %v517 = vld [vmem:[%s3 + $0x2c] sm:$0xf]
        %v518 = vld [vmem:[%s3 + $0x30] sm:$0xff]
        %v519 = vld [vmem:[%s3 + $0x38] sm:$0xf]
        %v520 = vld [vmem:[%s3 + $0x3c] sm:$0xff]
        %v521 = vld [vmem:[%s3 + $0x44] sm:$0xf]
        %v522 = vld [vmem:[%s3 + $0x48] sm:$0xff]
        %v523 = vld [vmem:[%s3 + $0x50] sm:$0xf]
        %v524 = vld [vmem:[%s3 + $0x54] sm:$0xff]
        %v525 = vld [vmem:[%s3 + $0x5c] sm:$0xf]
        %v526 = vld [vmem:[%s3 + $0x60] sm:$0xff]
        %v527 = vld [vmem:[%s3 + $0x68] sm:$0xf]
        %v528 = vld [vmem:[%s3 + $0x6c] sm:$0xff]
        %v529 = vld [vmem:[%s3 + $0x74] sm:$0xf]
        %v530 = vld [vmem:[%s3 + $0x78] sm:$0xff]
        %v531 = vld [vmem:[%s3 + $0x80] sm:$0xf]
        %v532 = vld [vmem:[%s3 + $0x84] sm:$0xff]
        %v533 = vld [vmem:[%s3 + $0x8c] sm:$0xf]
        %v534 = vld [vmem:[%s3 + $0x90] sm:$0xff]
        %v535 = vld [vmem:[%s3 + $0x98] sm:$0xf]
        %v536 = vld [vmem:[%s3 + $0x9c] sm:$0xff]
        %v537 = vld [vmem:[%s3 + $0xa4] sm:$0xf]
        %v538 = vld [vmem:[%s3 + $0xa8] sm:$0xff]
        %v539 = vld [vmem:[%s3 + $0xb0] sm:$0xf]
        %v540 = vld [vmem:[%s3 + $0xb4] sm:$0xff]
        %v541 = vld [vmem:[%s3 + $0xbc] sm:$0xf]
        %v542 = vld [vmem:[#allocation2] sm:$0xf]
        %v543 = vld [vmem:[#allocation2 + $0x4] sm:$0xf]
        %v544 = vld [vmem:[#allocation2 + $0x8] sm:$0xf]
        %v545 = vld [vmem:[#allocation2 + $0xc] sm:$0xf]
        %v546 = vld [vmem:[#allocation2 + $0x10] sm:$0xf]
        %v547 = vld [vmem:[#allocation2 + $0x14] sm:$0xf]
        %v548 = vld [vmem:[#allocation2 + $0x18] sm:$0xf]
        %v549 = vld [vmem:[#allocation2 + $0x1c] sm:$0xf]
        %v550 = vld [vmem:[#allocation2 + $0x20] sm:$0xf]
        %v551 = vld [vmem:[#allocation2 + $0x24] sm:$0xf]
        %v552 = vld [vmem:[#allocation2 + $0x28] sm:$0xf]
        %v553 = vld [vmem:[#allocation2 + $0x2c] sm:$0xf]
        %v554 = vld [vmem:[#allocation2 + $0x30] sm:$0xf]
        %v555 = vld [vmem:[#allocation2 + $0x34] sm:$0xf]
        %v556 = vld [vmem:[#allocation2 + $0x38] sm:$0xf]
        %v557 = vld [vmem:[#allocation2 + $0x3c] sm:$0xf]
        %v558 = vld [vmem:[#allocation5] sm:$0xff]
        %v559 = vld [vmem:[#allocation5 + $0x8] sm:$0xff]
        %v560 = vld [vmem:[#allocation5 + $0x10] sm:$0xff]
        %v561 = vld [vmem:[#allocation5 + $0x18] sm:$0xff]
        %v562 = vld [vmem:[#allocation5 + $0x20] sm:$0xff]
        %v563 = vld [vmem:[#allocation5 + $0x28] sm:$0xff]
        %v564 = vld [vmem:[#allocation5 + $0x30] sm:$0xff]
        %v565 = vld [vmem:[#allocation5 + $0x38] sm:$0xff]
        %v566 = vld [vmem:[#allocation5 + $0x40] sm:$0xff]
        %v567 = vld [vmem:[#allocation5 + $0x48] sm:$0xff]
        %v568 = vld [vmem:[#allocation5 + $0x50] sm:$0xff]
        %v569 = vld [vmem:[#allocation5 + $0x58] sm:$0xff]
        %v570 = vld [vmem:[#allocation5 + $0x60] sm:$0xff]
        %v571 = vld [vmem:[#allocation5 + $0x68] sm:$0xff]
        %v572 = vld [vmem:[#allocation5 + $0x70] sm:$0xff]
        %v573 = vld [vmem:[#allocation5 + $0x78] sm:$0xff]
        %v574 = vld [vmem:[#allocation7] sm:$0xf]
        %v575 = vld [vmem:[#allocation7 + $0x4] sm:$0xf]
        %v576 = vld [vmem:[#allocation7 + $0x8] sm:$0xf]
        %v577 = vld [vmem:[#allocation7 + $0xc] sm:$0xf]
        %v578 = vld [vmem:[#allocation7 + $0x10] sm:$0xf]
        %v579 = vld [vmem:[#allocation7 + $0x14] sm:$0xf]
        %v580 = vld [vmem:[#allocation7 + $0x18] sm:$0xf]
        %v581 = vld [vmem:[#allocation7 + $0x1c] sm:$0xf]
        %v582 = vld [vmem:[#allocation7 + $0x20] sm:$0xf]
        %v583 = vld [vmem:[#allocation7 + $0x24] sm:$0xf]
        %v584 = vld [vmem:[#allocation7 + $0x28] sm:$0xf]
        %v585 = vld [vmem:[#allocation7 + $0x2c] sm:$0xf]
        %v586 = vld [vmem:[#allocation7 + $0x30] sm:$0xf]
        %v587 = vld [vmem:[#allocation7 + $0x34] sm:$0xf]
        %v588 = vld [vmem:[#allocation7 + $0x38] sm:$0xf]
        %v589 = vld [vmem:[#allocation7 + $0x3c] sm:$0xf]
        %v590 = vld [vmem:[#allocation7 + $0x40] sm:$0xf]
        %v591 = vld [vmem:[#allocation7 + $0x44] sm:$0xf]
        %v592 = vld [vmem:[#allocation7 + $0x48] sm:$0xf]
        %v593 = vld [vmem:[#allocation7 + $0x4c] sm:$0xf]
        %v594 = vld [vmem:[#allocation7 + $0x50] sm:$0xf]
        %v595 = vld [vmem:[#allocation7 + $0x54] sm:$0xf]
        %v596 = vld [vmem:[#allocation7 + $0x58] sm:$0xf]
        %v597 = vld [vmem:[#allocation7 + $0x5c] sm:$0xf]
        %v598 = vld [vmem:[#allocation7 + $0x60] sm:$0xf]
        %v599 = vld [vmem:[#allocation7 + $0x64] sm:$0xf]
        %v600 = vld [vmem:[#allocation7 + $0x68] sm:$0xf]
        %v601 = vld [vmem:[#allocation7 + $0x6c] sm:$0xf]
        %v602 = vld [vmem:[#allocation7 + $0x70] sm:$0xf]
        %v603 = vld [vmem:[#allocation7 + $0x74] sm:$0xf]
        %v604 = vld [vmem:[#allocation7 + $0x78] sm:$0xf]
        %v605 = vld [vmem:[#allocation7 + $0x7c] sm:$0xf]
        %v606 = vpack.c.bf16 %v493, %v491
        %v607 = vpack.c.bf16 %v498, %v496
        %v608 = vpack.c.bf16 %v503, %v501
        %v609 = vpack.c.bf16 %v508, %v506
        %v642 = vunpack.c.l.b16 %v510
        %v643 = vunpack.c.h.b16 %v510
        %v644 = vunpack.c.l.b16 %v511
        %v645 = vunpack.c.l.b16 %v512
        %v646 = vunpack.c.h.b16 %v512
        %v647 = vunpack.c.l.b16 %v513
        %v648 = vunpack.c.l.b16 %v514
        %v649 = vunpack.c.h.b16 %v514
        %v650 = vunpack.c.l.b16 %v515
        %v651 = vunpack.c.l.b16 %v516
        %v652 = vunpack.c.h.b16 %v516
        %v653 = vunpack.c.l.b16 %v517
        %v654 = vunpack.c.l.b16 %v518
        %v655 = vunpack.c.h.b16 %v518
        %v656 = vunpack.c.l.b16 %v519
        %v657 = vunpack.c.l.b16 %v520
        %v658 = vunpack.c.h.b16 %v520
        %v659 = vunpack.c.l.b16 %v521
        %v660 = vunpack.c.l.b16 %v522
        %v661 = vunpack.c.h.b16 %v522
        %v662 = vunpack.c.l.b16 %v523
        %v663 = vunpack.c.l.b16 %v524
        %v664 = vunpack.c.h.b16 %v524
        %v665 = vunpack.c.l.b16 %v525
        %v666 = vunpack.c.l.b16 %v526
        %v667 = vunpack.c.h.b16 %v526
        %v668 = vunpack.c.l.b16 %v527
        %v669 = vunpack.c.l.b16 %v528
        %v670 = vunpack.c.h.b16 %v528
        %v671 = vunpack.c.l.b16 %v529
        %v672 = vunpack.c.l.b16 %v530
        %v673 = vunpack.c.h.b16 %v530
        %v674 = vunpack.c.l.b16 %v531
        %v675 = vunpack.c.l.b16 %v532
        %v676 = vunpack.c.h.b16 %v532
        %v677 = vunpack.c.l.b16 %v533
        %v678 = vunpack.c.l.b16 %v534
        %v679 = vunpack.c.h.b16 %v534
        %v680 = vunpack.c.l.b16 %v535
        %v681 = vunpack.c.l.b16 %v536
        %v682 = vunpack.c.h.b16 %v536
        %v683 = vunpack.c.l.b16 %v537
        %v684 = vunpack.c.l.b16 %v538
        %v685 = vunpack.c.h.b16 %v538
        %v686 = vunpack.c.l.b16 %v539
        %v687 = vunpack.c.l.b16 %v540
        %v688 = vunpack.c.h.b16 %v540
        %v689 = vunpack.c.l.b16 %v541
        %v690 = vpack.c.b16 %v645, %v642
        %v691 = vpack.c.b16 %v646, %v643
        %v692 = vpack.c.b16 %v647, %v644
        %v693 = vpack.c.b16 %v651, %v648
        %v694 = vpack.c.b16 %v652, %v649
        %v695 = vpack.c.b16 %v653, %v650
        %v696 = vpack.c.b16 %v657, %v654
        %v697 = vpack.c.b16 %v658, %v655
        %v698 = vpack.c.b16 %v659, %v656
        %v699 = vpack.c.b16 %v663, %v660
        %v700 = vpack.c.b16 %v664, %v661
        %v701 = vpack.c.b16 %v665, %v662
        %v702 = vpack.c.b16 %v669, %v666
        %v703 = vpack.c.b16 %v670, %v667
        %v704 = vpack.c.b16 %v671, %v668
        %v705 = vpack.c.b16 %v675, %v672
        %v706 = vpack.c.b16 %v676, %v673
        %v707 = vpack.c.b16 %v677, %v674
        %v708 = vpack.c.b16 %v681, %v678
        %v709 = vpack.c.b16 %v682, %v679
        %v710 = vpack.c.b16 %v683, %v680
        %v711 = vpack.c.b16 %v687, %v684
        %v712 = vpack.c.b16 %v688, %v685
        %v713 = vpack.c.b16 %v689, %v686
        %738 = vmatpush.bf16.msra.mxu0 %v711
        %739 = vmatpush.bf16.msra.mxu0 %v708
        %740 = vmatpush.bf16.msra.mxu0 %v705
        %741 = vmatpush.bf16.msra.mxu0 %v702
        %742 = vmatpush.bf16.msra.mxu0 %v699
        %743 = vmatpush.bf16.msra.mxu0 %v696
        %744 = vmatpush.bf16.msra.mxu0 %v693
        %745 = vmatpush.bf16.msra.mxu0 %v690
        %746 = vmatmul.bf16.gmra.mxu0 %v606
        %v747 = vpop.f32.mrf.mxu0
        %v748 = vadd.f32 0.0, %v747
        %v749 = vpop.f32.mrf.mxu0
        %v750 = vadd.f32 0.0, %v749
        %751 = vmatmul.bf16.gmra.mxu0 %v607
        %v752 = vpop.f32.mrf.mxu0
        %v753 = vadd.f32 0.0, %v752
        %v754 = vpop.f32.mrf.mxu0
        %v755 = vadd.f32 0.0, %v754
        %756 = vmatmul.bf16.gmra.mxu0 %v608
        %v757 = vpop.f32.mrf.mxu0
        %v758 = vadd.f32 0.0, %v757
        %v759 = vpop.f32.mrf.mxu0
        %v760 = vadd.f32 0.0, %v759
        %761 = vmatmul.bf16.gmra.mxu0 %v609
        %v762 = vpop.f32.mrf.mxu0
        %v763 = vadd.f32 0.0, %v762
        %v764 = vpop.f32.mrf.mxu0
        %v765 = vadd.f32 0.0, %v764
        %766 = vdwg.mxu0
        %767 = vmatpush.bf16.msra.mxu0 %v712
        %768 = vmatpush.bf16.msra.mxu0 %v709
        %769 = vmatpush.bf16.msra.mxu0 %v706
        %770 = vmatpush.bf16.msra.mxu0 %v703
        %771 = vmatpush.bf16.msra.mxu0 %v700
        %772 = vmatpush.bf16.msra.mxu0 %v697
        %773 = vmatpush.bf16.msra.mxu0 %v694
        %774 = vmatpush.bf16.msra.mxu0 %v691
        %775 = vmatmul.bf16.gmra.mxu0 %v606
        %v776 = vpop.f32.mrf.mxu0
        %v777 = vadd.f32 0.0, %v776
        %v778 = vpop.f32.mrf.mxu0
        %v779 = vadd.f32 0.0, %v778
        %780 = vmatmul.bf16.gmra.mxu0 %v607
        %v781 = vpop.f32.mrf.mxu0
        %v782 = vadd.f32 0.0, %v781
        %v783 = vpop.f32.mrf.mxu0
        %v784 = vadd.f32 0.0, %v783
        %785 = vmatmul.bf16.gmra.mxu0 %v608
        %v786 = vpop.f32.mrf.mxu0
        %v787 = vadd.f32 0.0, %v786
        %v788 = vpop.f32.mrf.mxu0
        %v789 = vadd.f32 0.0, %v788
        %790 = vmatmul.bf16.gmra.mxu0 %v609
        %v791 = vpop.f32.mrf.mxu0
        %v792 = vadd.f32 0.0, %v791
        %v793 = vpop.f32.mrf.mxu0
        %v794 = vadd.f32 0.0, %v793
        %795 = vdwg.mxu0
        %796 = vmatpush.bf16.msra.mxu0 %v713
        %797 = vmatpush.bf16.msra.mxu0 %v710
        %798 = vmatpush.bf16.msra.mxu0 %v707
        %799 = vmatpush.bf16.msra.mxu0 %v704
        %800 = vmatpush.bf16.msra.mxu0 %v701
        %801 = vmatpush.bf16.msra.mxu0 %v698
        %802 = vmatpush.bf16.msra.mxu0 %v695
        %803 = vmatpush.bf16.msra.mxu0 %v692
        %804 = vmatmul.bf16.gmra.mxu0 %v606
        %v805 = vpop.f32.mrf.mxu0
        %v806 = vadd.f32 0.0, %v805
        %v807 = vpop.f32.mrf.mxu0
        %v808 = vadd.f32 0.0, %v807
        %809 = vmatmul.bf16.gmra.mxu0 %v607
        %v810 = vpop.f32.mrf.mxu0
        %v811 = vadd.f32 0.0, %v810
        %v812 = vpop.f32.mrf.mxu0
        %v813 = vadd.f32 0.0, %v812
        %814 = vmatmul.bf16.gmra.mxu0 %v608
        %v815 = vpop.f32.mrf.mxu0
        %v816 = vadd.f32 0.0, %v815
        %v817 = vpop.f32.mrf.mxu0
        %v818 = vadd.f32 0.0, %v817
        %819 = vmatmul.bf16.gmra.mxu0 %v609
        %v820 = vpop.f32.mrf.mxu0
        %v821 = vadd.f32 0.0, %v820
        %v822 = vpop.f32.mrf.mxu0
        %v823 = vadd.f32 0.0, %v822
        %824 = vdwg.mxu0
        %v825 = vpack.c.bf16 %v777, %v748
        %v826 = vpack.c.bf16 %v806, %v806
        %v827 = vpack.c.bf16 %v779, %v750
        %v828 = vpack.c.bf16 %v808, %v808
        %v829 = vpack.c.bf16 %v782, %v753
        %v830 = vpack.c.bf16 %v811, %v811
        %v831 = vpack.c.bf16 %v784, %v755
        %v832 = vpack.c.bf16 %v813, %v813
        %v833 = vpack.c.bf16 %v787, %v758
        %v834 = vpack.c.bf16 %v816, %v816
        %v835 = vpack.c.bf16 %v789, %v760
        %v836 = vpack.c.bf16 %v818, %v818
        %v837 = vpack.c.bf16 %v792, %v763
        %v838 = vpack.c.bf16 %v821, %v821
        %v839 = vpack.c.bf16 %v794, %v765
        %v840 = vpack.c.bf16 %v823, %v823
        %v849 = vrot.slane %v825, 4
        %v850 = vrot.slane %v827, 4
        %v851 = vrot.slane %v829, 4
        %v852 = vrot.slane %v831, 4
        %v853 = vrot.slane %v833, 4
        %v854 = vrot.slane %v835, 4
        %v855 = vrot.slane %v837, 4
        %v856 = vrot.slane %v839, 4
        %v857 = vunpack.c.l.b16 %v825
        %v858 = vunpack.c.l.b16 %v827
        %v859 = vpack.c.b16 %v858, %v857
        %v860 = vunpack.c.l.b16 %v849
        %v861 = vunpack.c.l.b16 %v850
        %v862 = vpack.c.b16 %v861, %v860
        %vm863 = vcmask 261120
        %v865 = vsel %vm863, %v859, 0
        %v868 = vsel %vm863, %v862, 0
        %870 = vmatpush.bf16.xpose.msra.mxu0 0
        %871 = vmatpush.bf16.xpose.msra.mxu0 0
        %872 = vmatpush.bf16.xpose.msra.mxu0 0
        %873 = vmatpush.bf16.xpose.msra.mxu0 0
        %874 = vmatpush.bf16.xpose.msra.mxu0 0
        %875 = vmatpush.bf16.xpose.msra.mxu0 0
        %876 = vmatpush.bf16.xpose.msra.mxu0 0
        %877 = vmatpush.bf16.xpose.msra.mxu0 %v868
        %878 = vmatmul.bf16.gmra.mxu0 %v865
        %v879 = vpop.f32.mrf.mxu0
        %v880 = vadd.f32 0.0, %v879
        %v881 = vpop.f32.mrf.mxu0
        %v882 = vadd.f32 0.0, %v881
        %883 = vdwg.mxu0
        %v884 = vunpack.c.l.b16 %v829
        %v885 = vunpack.c.l.b16 %v831
        %v886 = vpack.c.b16 %v885, %v884
        %v887 = vunpack.c.l.b16 %v851
        %v888 = vunpack.c.l.b16 %v852
        %v889 = vpack.c.b16 %v888, %v887
        %v891 = vsel %vm863, %v886, 0
        %v894 = vsel %vm863, %v889, 0
        %896 = vmatpush.bf16.xpose.msra.mxu0 0
        %897 = vmatpush.bf16.xpose.msra.mxu0 0
        %898 = vmatpush.bf16.xpose.msra.mxu0 0
        %899 = vmatpush.bf16.xpose.msra.mxu0 0
        %900 = vmatpush.bf16.xpose.msra.mxu0 0
        %901 = vmatpush.bf16.xpose.msra.mxu0 0
        %902 = vmatpush.bf16.xpose.msra.mxu0 0
        %903 = vmatpush.bf16.xpose.msra.mxu0 %v894
        %904 = vmatmul.bf16.gmra.mxu0 %v891
        %v905 = vpop.f32.mrf.mxu0
        %v906 = vadd.f32 0.0, %v905
        %v907 = vpop.f32.mrf.mxu0
        %v908 = vadd.f32 0.0, %v907
        %909 = vdwg.mxu0
        %v910 = vunpack.c.l.b16 %v833
        %v911 = vunpack.c.l.b16 %v835
        %v912 = vpack.c.b16 %v911, %v910
        %v913 = vunpack.c.l.b16 %v853
        %v914 = vunpack.c.l.b16 %v854
        %v915 = vpack.c.b16 %v914, %v913
        %v917 = vsel %vm863, %v912, 0
        %v920 = vsel %vm863, %v915, 0
        %922 = vmatpush.bf16.xpose.msra.mxu0 0
        %923 = vmatpush.bf16.xpose.msra.mxu0 0
        %924 = vmatpush.bf16.xpose.msra.mxu0 0
        %925 = vmatpush.bf16.xpose.msra.mxu0 0
        %926 = vmatpush.bf16.xpose.msra.mxu0 0
        %927 = vmatpush.bf16.xpose.msra.mxu0 0
        %928 = vmatpush.bf16.xpose.msra.mxu0 0
        %929 = vmatpush.bf16.xpose.msra.mxu0 %v920
        %930 = vmatmul.bf16.gmra.mxu0 %v917
        %v931 = vpop.f32.mrf.mxu0
        %v932 = vadd.f32 0.0, %v931
        %v933 = vpop.f32.mrf.mxu0
        %v934 = vadd.f32 0.0, %v933
        %935 = vdwg.mxu0
        %v936 = vunpack.c.l.b16 %v837
        %v937 = vunpack.c.l.b16 %v839
        %v938 = vpack.c.b16 %v937, %v936
        %v939 = vunpack.c.l.b16 %v855
        %v940 = vunpack.c.l.b16 %v856
        %v941 = vpack.c.b16 %v940, %v939
        %v943 = vsel %vm863, %v938, 0
        %v946 = vsel %vm863, %v941, 0
        %948 = vmatpush.bf16.xpose.msra.mxu0 0
        %949 = vmatpush.bf16.xpose.msra.mxu0 0
        %950 = vmatpush.bf16.xpose.msra.mxu0 0
        %951 = vmatpush.bf16.xpose.msra.mxu0 0
        %952 = vmatpush.bf16.xpose.msra.mxu0 0
        %953 = vmatpush.bf16.xpose.msra.mxu0 0
        %954 = vmatpush.bf16.xpose.msra.mxu0 0
        %955 = vmatpush.bf16.xpose.msra.mxu0 %v946
        %956 = vmatmul.bf16.gmra.mxu0 %v943
        %v957 = vpop.f32.mrf.mxu0
        %v958 = vadd.f32 0.0, %v957
        %v959 = vpop.f32.mrf.mxu0
        %v960 = vadd.f32 0.0, %v959
        %961 = vdwg.mxu0
        %vm962 = vcmask 130048
        %v963 = vsel %vm962, %v880, -inf
        %964 = vmax.xlane.f32.xlu0 %v963
        %v965 = vpop.xlane.xlu0 %964
        %v966 = vsel %vm962, %v882, -inf
        %967 = vmax.xlane.f32.xlu0 %v966
        %v968 = vpop.xlane.xlu0 %967
        %v969 = vsel %vm962, %v906, -inf
        %970 = vmax.xlane.f32.xlu0 %v969
        %v971 = vpop.xlane.xlu0 %970
        %v972 = vsel %vm962, %v908, -inf
        %973 = vmax.xlane.f32.xlu0 %v972
        %v974 = vpop.xlane.xlu0 %973
        %v975 = vsel %vm962, %v932, -inf
        %976 = vmax.xlane.f32.xlu0 %v975
        %v977 = vpop.xlane.xlu0 %976
        %v978 = vsel %vm962, %v934, -inf
        %979 = vmax.xlane.f32.xlu0 %v978
        %v980 = vpop.xlane.xlu0 %979
        %v981 = vsel %vm962, %v958, -inf
        %982 = vmax.xlane.f32.xlu0 %v981
        %v983 = vpop.xlane.xlu0 %982
        %v984 = vsel %vm962, %v960, -inf
        %985 = vmax.xlane.f32.xlu0 %v984
        %v986 = vpop.xlane.xlu0 %985
        %v987 = vsub.f32 %v880, %v965
        %v988 = vsub.f32 %v882, %v968
        %v989 = vsub.f32 %v906, %v971
        %v990 = vsub.f32 %v908, %v974
        %v991 = vsub.f32 %v932, %v977
        %v992 = vsub.f32 %v934, %v980
        %v993 = vsub.f32 %v958, %v983
        %v994 = vsub.f32 %v960, %v986
        %v995 = vmul.f32 %v987, 1.442695
        %v996 = vpow.pop %v995
        %v997 = vmul.f32 %v988, 1.442695
        %v998 = vpow.pop %v997
        %v999 = vmul.f32 %v989, 1.442695
        %v1000 = vpow.pop %v999
        %v1001 = vmul.f32 %v990, 1.442695
        %v1002 = vpow.pop %v1001
        %v1003 = vmul.f32 %v991, 1.442695
        %v1004 = vpow.pop %v1003
        %v1005 = vmul.f32 %v992, 1.442695
        %v1006 = vpow.pop %v1005
        %v1007 = vmul.f32 %v993, 1.442695
        %v1008 = vpow.pop %v1007
        %v1009 = vmul.f32 %v994, 1.442695
        %v1010 = vpow.pop %v1009
        %v1011 = vsel %vm962, %v996, 0.0
        %1012 = vadd.xlane.f32.xlu0 %v1011
        %v1013 = vpop.xlane.xlu0 %1012
        %v1014 = vsel %vm962, %v998, 0.0
        %1015 = vadd.xlane.f32.xlu0 %v1014
        %v1016 = vpop.xlane.xlu0 %1015
        %v1017 = vsel %vm962, %v1000, 0.0
        %1018 = vadd.xlane.f32.xlu0 %v1017
        %v1019 = vpop.xlane.xlu0 %1018
        %v1020 = vsel %vm962, %v1002, 0.0
        %1021 = vadd.xlane.f32.xlu0 %v1020
        %v1022 = vpop.xlane.xlu0 %1021
        %v1023 = vsel %vm962, %v1004, 0.0
        %1024 = vadd.xlane.f32.xlu0 %v1023
        %v1025 = vpop.xlane.xlu0 %1024
        %v1026 = vsel %vm962, %v1006, 0.0
        %1027 = vadd.xlane.f32.xlu0 %v1026
        %v1028 = vpop.xlane.xlu0 %1027
        %v1029 = vsel %vm962, %v1008, 0.0
        %1030 = vadd.xlane.f32.xlu0 %v1029
        %v1031 = vpop.xlane.xlu0 %1030
        %v1032 = vsel %vm962, %v1010, 0.0
        %1033 = vadd.xlane.f32.xlu0 %v1032
        %v1034 = vpop.xlane.xlu0 %1033
        %v1035 = vrcp.pop %v1013
        %v1036 = vrcp.pop %v1016
        %v1037 = vrcp.pop %v1019
        %v1038 = vrcp.pop %v1022
        %v1039 = vrcp.pop %v1025
        %v1040 = vrcp.pop %v1028
        %v1041 = vrcp.pop %v1031
        %v1042 = vrcp.pop %v1034
        %v1043 = vmul.f32 %v996, %v1035
        %v1044 = vmul.f32 %v998, %v1036
        %v1045 = vmul.f32 %v1000, %v1037
        %v1046 = vmul.f32 %v1002, %v1038
        %v1047 = vmul.f32 %v1004, %v1039
        %v1048 = vmul.f32 %v1006, %v1040
        %v1049 = vmul.f32 %v1008, %v1041
        %v1050 = vmul.f32 %v1010, %v1042
        %v1051 = vpack.c.bf16 %v1043, %v1043
        %v1052 = vpack.c.bf16 %v1044, %v1044
        %v1053 = vpack.c.bf16 %v1045, %v1045
        %v1054 = vpack.c.bf16 %v1046, %v1046
        %v1055 = vpack.c.bf16 %v1047, %v1047
        %v1056 = vpack.c.bf16 %v1048, %v1048
        %v1057 = vpack.c.bf16 %v1049, %v1049
        %v1058 = vpack.c.bf16 %v1050, %v1050
        %v1061 = vunpack.c.l.b16 %v1051
        %v1062 = vunpack.c.l.b16 %v1052
        %v1063 = vpack.c.b16 %v1062, %v1061
        %v1066 = vunpack.c.l.b16 %v826
        %v1067 = vunpack.c.l.b16 %v828
        %v1068 = vpack.c.b16 %v1067, %v1066
        %v1071 = vsel %vm962, %v1063, 0
        %1073 = vmatpush.bf16.msra.mxu0 0
        %1074 = vmatpush.bf16.msra.mxu0 0
        %1075 = vmatpush.bf16.msra.mxu0 0
        %1076 = vmatpush.bf16.msra.mxu0 0
        %1077 = vmatpush.bf16.msra.mxu0 0
        %1078 = vmatpush.bf16.msra.mxu0 0
        %1079 = vmatpush.bf16.msra.mxu0 0
        %1080 = vmatpush.bf16.msra.mxu0 %v1068
        %1081 = vmatmul.bf16.gmra.mxu0 %v1071
        %v1082 = vpop.f32.mrf.mxu0
        %v1083 = vadd.f32 0.0, %v1082
        %v1084 = vpop.f32.mrf.mxu0
        %v1085 = vadd.f32 0.0, %v1084
        %1086 = vdwg.mxu0
        %v1089 = vunpack.c.l.b16 %v1053
        %v1090 = vunpack.c.l.b16 %v1054
        %v1091 = vpack.c.b16 %v1090, %v1089
        %v1094 = vunpack.c.l.b16 %v830
        %v1095 = vunpack.c.l.b16 %v832
        %v1096 = vpack.c.b16 %v1095, %v1094
        %v1099 = vsel %vm962, %v1091, 0
        %1101 = vmatpush.bf16.msra.mxu0 0
        %1102 = vmatpush.bf16.msra.mxu0 0
        %1103 = vmatpush.bf16.msra.mxu0 0
        %1104 = vmatpush.bf16.msra.mxu0 0
        %1105 = vmatpush.bf16.msra.mxu0 0
        %1106 = vmatpush.bf16.msra.mxu0 0
        %1107 = vmatpush.bf16.msra.mxu0 0
        %1108 = vmatpush.bf16.msra.mxu0 %v1096
        %1109 = vmatmul.bf16.gmra.mxu0 %v1099
        %v1110 = vpop.f32.mrf.mxu0
        %v1111 = vadd.f32 0.0, %v1110
        %v1112 = vpop.f32.mrf.mxu0
        %v1113 = vadd.f32 0.0, %v1112
        %1114 = vdwg.mxu0
        %v1117 = vunpack.c.l.b16 %v1055
        %v1118 = vunpack.c.l.b16 %v1056
        %v1119 = vpack.c.b16 %v1118, %v1117
        %v1122 = vunpack.c.l.b16 %v834
        %v1123 = vunpack.c.l.b16 %v836
        %v1124 = vpack.c.b16 %v1123, %v1122
        %v1127 = vsel %vm962, %v1119, 0
        %1129 = vmatpush.bf16.msra.mxu0 0
        %1130 = vmatpush.bf16.msra.mxu0 0
        %1131 = vmatpush.bf16.msra.mxu0 0
        %1132 = vmatpush.bf16.msra.mxu0 0
        %1133 = vmatpush.bf16.msra.mxu0 0
        %1134 = vmatpush.bf16.msra.mxu0 0
        %1135 = vmatpush.bf16.msra.mxu0 0
        %1136 = vmatpush.bf16.msra.mxu0 %v1124
        %1137 = vmatmul.bf16.gmra.mxu0 %v1127
        %v1138 = vpop.f32.mrf.mxu0
        %v1139 = vadd.f32 0.0, %v1138
        %v1140 = vpop.f32.mrf.mxu0
        %v1141 = vadd.f32 0.0, %v1140
        %1142 = vdwg.mxu0
        %v1145 = vunpack.c.l.b16 %v1057
        %v1146 = vunpack.c.l.b16 %v1058
        %v1147 = vpack.c.b16 %v1146, %v1145
        %v1150 = vunpack.c.l.b16 %v838
        %v1151 = vunpack.c.l.b16 %v840
        %v1152 = vpack.c.b16 %v1151, %v1150
        %v1155 = vsel %vm962, %v1147, 0
        %1157 = vmatpush.bf16.msra.mxu0 0
        %1158 = vmatpush.bf16.msra.mxu0 0
        %1159 = vmatpush.bf16.msra.mxu0 0
        %1160 = vmatpush.bf16.msra.mxu0 0
        %1161 = vmatpush.bf16.msra.mxu0 0
        %1162 = vmatpush.bf16.msra.mxu0 0
        %1163 = vmatpush.bf16.msra.mxu0 0
        %1164 = vmatpush.bf16.msra.mxu0 %v1152
        %1165 = vmatmul.bf16.gmra.mxu0 %v1155
        %v1166 = vpop.f32.mrf.mxu0
        %v1167 = vadd.f32 0.0, %v1166
        %v1168 = vpop.f32.mrf.mxu0
        %v1169 = vadd.f32 0.0, %v1168
        %1170 = vdwg.mxu0
        %1171 = vrot.lane.b32.xlu0 %v825, 96
        %v1172 = vpop.permute.xlu0 %1171
        %1173 = vrot.lane.b32.xlu0 %v827, 96
        %v1174 = vpop.permute.xlu0 %1173
        %1175 = vrot.lane.b32.xlu0 %v829, 96
        %v1176 = vpop.permute.xlu0 %1175
        %1177 = vrot.lane.b32.xlu0 %v831, 96
        %v1178 = vpop.permute.xlu0 %1177
        %1179 = vrot.lane.b32.xlu0 %v833, 96
        %v1180 = vpop.permute.xlu0 %1179
        %1181 = vrot.lane.b32.xlu0 %v835, 96
        %v1182 = vpop.permute.xlu0 %1181
        %1183 = vrot.lane.b32.xlu0 %v837, 96
        %v1184 = vpop.permute.xlu0 %1183
        %1185 = vrot.lane.b32.xlu0 %v839, 96
        %v1186 = vpop.permute.xlu0 %1185
        %v1187 = vrot.slane %v1172, 4
        %v1188 = vrot.slane %v1174, 4
        %v1189 = vrot.slane %v1176, 4
        %v1190 = vrot.slane %v1178, 4
        %v1191 = vrot.slane %v1180, 4
        %v1192 = vrot.slane %v1182, 4
        %v1193 = vrot.slane %v1184, 4
        %v1194 = vrot.slane %v1186, 4
        %1195 = vrot.lane.b32.xlu0 %v859, 96
        %v1196 = vpop.permute.xlu0 %1195
        %v1197 = vunpack.c.l.b16 %v1187
        %v1198 = vunpack.c.l.b16 %v1188
        %v1199 = vpack.c.b16 %v1198, %v1197
        %v1201 = vsel %vm863, %v1196, 0
        %v1204 = vsel %vm863, %v1199, 0
        %1206 = vmatpush.bf16.xpose.msra.mxu0 0
        %1207 = vmatpush.bf16.xpose.msra.mxu0 0
        %1208 = vmatpush.bf16.xpose.msra.mxu0 0
        %1209 = vmatpush.bf16.xpose.msra.mxu0 0
        %1210 = vmatpush.bf16.xpose.msra.mxu0 0
        %1211 = vmatpush.bf16.xpose.msra.mxu0 0
        %1212 = vmatpush.bf16.xpose.msra.mxu0 0
        %1213 = vmatpush.bf16.xpose.msra.mxu0 %v1204
        %1214 = vmatmul.bf16.gmra.mxu0 %v1201
        %v1215 = vpop.f32.mrf.mxu0
        %v1216 = vadd.f32 0.0, %v1215
        %v1217 = vpop.f32.mrf.mxu0
        %v1218 = vadd.f32 0.0, %v1217
        %1219 = vdwg.mxu0
        %1220 = vrot.lane.b32.xlu0 %v886, 96
        %v1221 = vpop.permute.xlu0 %1220
        %v1222 = vunpack.c.l.b16 %v1189
        %v1223 = vunpack.c.l.b16 %v1190
        %v1224 = vpack.c.b16 %v1223, %v1222
        %v1226 = vsel %vm863, %v1221, 0
        %v1229 = vsel %vm863, %v1224, 0
        %1231 = vmatpush.bf16.xpose.msra.mxu0 0
        %1232 = vmatpush.bf16.xpose.msra.mxu0 0
        %1233 = vmatpush.bf16.xpose.msra.mxu0 0
        %1234 = vmatpush.bf16.xpose.msra.mxu0 0
        %1235 = vmatpush.bf16.xpose.msra.mxu0 0
        %1236 = vmatpush.bf16.xpose.msra.mxu0 0
        %1237 = vmatpush.bf16.xpose.msra.mxu0 0
        %1238 = vmatpush.bf16.xpose.msra.mxu0 %v1229
        %1239 = vmatmul.bf16.gmra.mxu0 %v1226
        %v1240 = vpop.f32.mrf.mxu0
        %v1241 = vadd.f32 0.0, %v1240
        %v1242 = vpop.f32.mrf.mxu0
        %v1243 = vadd.f32 0.0, %v1242
        %1244 = vdwg.mxu0
        %1245 = vrot.lane.b32.xlu0 %v912, 96
        %v1246 = vpop.permute.xlu0 %1245
        %v1247 = vunpack.c.l.b16 %v1191
        %v1248 = vunpack.c.l.b16 %v1192
        %v1249 = vpack.c.b16 %v1248, %v1247
        %v1251 = vsel %vm863, %v1246, 0
        %v1254 = vsel %vm863, %v1249, 0
        %1256 = vmatpush.bf16.xpose.msra.mxu0 0
        %1257 = vmatpush.bf16.xpose.msra.mxu0 0
        %1258 = vmatpush.bf16.xpose.msra.mxu0 0
        %1259 = vmatpush.bf16.xpose.msra.mxu0 0
        %1260 = vmatpush.bf16.xpose.msra.mxu0 0
        %1261 = vmatpush.bf16.xpose.msra.mxu0 0
        %1262 = vmatpush.bf16.xpose.msra.mxu0 0
        %1263 = vmatpush.bf16.xpose.msra.mxu0 %v1254
        %1264 = vmatmul.bf16.gmra.mxu0 %v1251
        %v1265 = vpop.f32.mrf.mxu0
        %v1266 = vadd.f32 0.0, %v1265
        %v1267 = vpop.f32.mrf.mxu0
        %v1268 = vadd.f32 0.0, %v1267
        %1269 = vdwg.mxu0
        %1270 = vrot.lane.b32.xlu0 %v938, 96
        %v1271 = vpop.permute.xlu0 %1270
        %v1272 = vunpack.c.l.b16 %v1193
        %v1273 = vunpack.c.l.b16 %v1194
        %v1274 = vpack.c.b16 %v1273, %v1272
        %v1276 = vsel %vm863, %v1271, 0
        %v1279 = vsel %vm863, %v1274, 0
        %1281 = vmatpush.bf16.xpose.msra.mxu0 0
        %1282 = vmatpush.bf16.xpose.msra.mxu0 0
        %1283 = vmatpush.bf16.xpose.msra.mxu0 0
        %1284 = vmatpush.bf16.xpose.msra.mxu0 0
        %1285 = vmatpush.bf16.xpose.msra.mxu0 0
        %1286 = vmatpush.bf16.xpose.msra.mxu0 0
        %1287 = vmatpush.bf16.xpose.msra.mxu0 0
        %1288 = vmatpush.bf16.xpose.msra.mxu0 %v1279
        %1289 = vmatmul.bf16.gmra.mxu0 %v1276
        %v1290 = vpop.f32.mrf.mxu0
        %v1291 = vadd.f32 0.0, %v1290
        %v1292 = vpop.f32.mrf.mxu0
        %v1293 = vadd.f32 0.0, %v1292
        %1294 = vdwg.mxu0
        %v1295 = vsel %vm962, %v1216, -inf
        %1296 = vmax.xlane.f32.xlu0 %v1295
        %v1297 = vpop.xlane.xlu0 %1296
        %v1298 = vsel %vm962, %v1218, -inf
        %1299 = vmax.xlane.f32.xlu0 %v1298
        %v1300 = vpop.xlane.xlu0 %1299
        %v1301 = vsel %vm962, %v1241, -inf
        %1302 = vmax.xlane.f32.xlu0 %v1301
        %v1303 = vpop.xlane.xlu0 %1302
        %v1304 = vsel %vm962, %v1243, -inf
        %1305 = vmax.xlane.f32.xlu0 %v1304
        %v1306 = vpop.xlane.xlu0 %1305
        %v1307 = vsel %vm962, %v1266, -inf
        %1308 = vmax.xlane.f32.xlu0 %v1307
        %v1309 = vpop.xlane.xlu0 %1308
        %v1310 = vsel %vm962, %v1268, -inf
        %1311 = vmax.xlane.f32.xlu0 %v1310
        %v1312 = vpop.xlane.xlu0 %1311
        %v1313 = vsel %vm962, %v1291, -inf
        %1314 = vmax.xlane.f32.xlu0 %v1313
        %v1315 = vpop.xlane.xlu0 %1314
        %v1316 = vsel %vm962, %v1293, -inf
        %1317 = vmax.xlane.f32.xlu0 %v1316
        %v1318 = vpop.xlane.xlu0 %1317
        %v1319 = vsub.f32 %v1216, %v1297
        %v1320 = vsub.f32 %v1218, %v1300
        %v1321 = vsub.f32 %v1241, %v1303
        %v1322 = vsub.f32 %v1243, %v1306
        %v1323 = vsub.f32 %v1266, %v1309
        %v1324 = vsub.f32 %v1268, %v1312
        %v1325 = vsub.f32 %v1291, %v1315
        %v1326 = vsub.f32 %v1293, %v1318
        %v1327 = vmul.f32 %v1319, 1.442695
        %v1328 = vpow.pop %v1327
        %v1329 = vmul.f32 %v1320, 1.442695
        %v1330 = vpow.pop %v1329
        %v1331 = vmul.f32 %v1321, 1.442695
        %v1332 = vpow.pop %v1331
        %v1333 = vmul.f32 %v1322, 1.442695
        %v1334 = vpow.pop %v1333
        %v1335 = vmul.f32 %v1323, 1.442695
        %v1336 = vpow.pop %v1335
        %v1337 = vmul.f32 %v1324, 1.442695
        %v1338 = vpow.pop %v1337
        %v1339 = vmul.f32 %v1325, 1.442695
        %v1340 = vpow.pop %v1339
        %v1341 = vmul.f32 %v1326, 1.442695
        %v1342 = vpow.pop %v1341
        %v1343 = vsel %vm962, %v1328, 0.0
        %1344 = vadd.xlane.f32.xlu0 %v1343
        %v1345 = vpop.xlane.xlu0 %1344
        %v1346 = vsel %vm962, %v1330, 0.0
        %1347 = vadd.xlane.f32.xlu0 %v1346
        %v1348 = vpop.xlane.xlu0 %1347
        %v1349 = vsel %vm962, %v1332, 0.0
        %1350 = vadd.xlane.f32.xlu0 %v1349
        %v1351 = vpop.xlane.xlu0 %1350
        %v1352 = vsel %vm962, %v1334, 0.0
        %1353 = vadd.xlane.f32.xlu0 %v1352
        %v1354 = vpop.xlane.xlu0 %1353
        %v1355 = vsel %vm962, %v1336, 0.0
        %1356 = vadd.xlane.f32.xlu0 %v1355
        %v1357 = vpop.xlane.xlu0 %1356
        %v1358 = vsel %vm962, %v1338, 0.0
        %1359 = vadd.xlane.f32.xlu0 %v1358
        %v1360 = vpop.xlane.xlu0 %1359
        %v1361 = vsel %vm962, %v1340, 0.0
        %1362 = vadd.xlane.f32.xlu0 %v1361
        %v1363 = vpop.xlane.xlu0 %1362
        %v1364 = vsel %vm962, %v1342, 0.0
        %1365 = vadd.xlane.f32.xlu0 %v1364
        %v1366 = vpop.xlane.xlu0 %1365
        %v1367 = vrcp.pop %v1345
        %v1368 = vrcp.pop %v1348
        %v1369 = vrcp.pop %v1351
        %v1370 = vrcp.pop %v1354
        %v1371 = vrcp.pop %v1357
        %v1372 = vrcp.pop %v1360
        %v1373 = vrcp.pop %v1363
        %v1374 = vrcp.pop %v1366
        %v1375 = vmul.f32 %v1328, %v1367
        %v1376 = vmul.f32 %v1330, %v1368
        %v1377 = vmul.f32 %v1332, %v1369
        %v1378 = vmul.f32 %v1334, %v1370
        %v1379 = vmul.f32 %v1336, %v1371
        %v1380 = vmul.f32 %v1338, %v1372
        %v1381 = vmul.f32 %v1340, %v1373
        %v1382 = vmul.f32 %v1342, %v1374
        %v1383 = vpack.c.bf16 %v1375, %v1375
        %v1384 = vpack.c.bf16 %v1376, %v1376
        %v1385 = vpack.c.bf16 %v1377, %v1377
        %v1386 = vpack.c.bf16 %v1378, %v1378
        %v1387 = vpack.c.bf16 %v1379, %v1379
        %v1388 = vpack.c.bf16 %v1380, %v1380
        %v1389 = vpack.c.bf16 %v1381, %v1381
        %v1390 = vpack.c.bf16 %v1382, %v1382
        %v1393 = vunpack.c.l.b16 %v1383
        %v1394 = vunpack.c.l.b16 %v1384
        %v1395 = vpack.c.b16 %v1394, %v1393
        %1396 = vrot.lane.b32.xlu0 %v1068, 96
        %v1397 = vpop.permute.xlu0 %1396
        %v1400 = vsel %vm962, %v1395, 0
        %1402 = vmatpush.bf16.msra.mxu0 0
        %1403 = vmatpush.bf16.msra.mxu0 0
        %1404 = vmatpush.bf16.msra.mxu0 0
        %1405 = vmatpush.bf16.msra.mxu0 0
        %1406 = vmatpush.bf16.msra.mxu0 0
        %1407 = vmatpush.bf16.msra.mxu0 0
        %1408 = vmatpush.bf16.msra.mxu0 0
        %1409 = vmatpush.bf16.msra.mxu0 %v1397
        %1410 = vmatmul.bf16.gmra.mxu0 %v1400
        %v1411 = vpop.f32.mrf.mxu0
        %v1412 = vadd.f32 0.0, %v1411
        %v1413 = vpop.f32.mrf.mxu0
        %v1414 = vadd.f32 0.0, %v1413
        %1415 = vdwg.mxu0
        %v1418 = vunpack.c.l.b16 %v1385
        %v1419 = vunpack.c.l.b16 %v1386
        %v1420 = vpack.c.b16 %v1419, %v1418
        %1421 = vrot.lane.b32.xlu0 %v1096, 96
        %v1422 = vpop.permute.xlu0 %1421
        %v1425 = vsel %vm962, %v1420, 0
        %1427 = vmatpush.bf16.msra.mxu0 0
        %1428 = vmatpush.bf16.msra.mxu0 0
        %1429 = vmatpush.bf16.msra.mxu0 0
        %1430 = vmatpush.bf16.msra.mxu0 0
        %1431 = vmatpush.bf16.msra.mxu0 0
        %1432 = vmatpush.bf16.msra.mxu0 0
        %1433 = vmatpush.bf16.msra.mxu0 0
        %1434 = vmatpush.bf16.msra.mxu0 %v1422
        %1435 = vmatmul.bf16.gmra.mxu0 %v1425
        %v1436 = vpop.f32.mrf.mxu0
        %v1437 = vadd.f32 0.0, %v1436
        %v1438 = vpop.f32.mrf.mxu0
        %v1439 = vadd.f32 0.0, %v1438
        %1440 = vdwg.mxu0
        %v1443 = vunpack.c.l.b16 %v1387
        %v1444 = vunpack.c.l.b16 %v1388
        %v1445 = vpack.c.b16 %v1444, %v1443
        %1446 = vrot.lane.b32.xlu0 %v1124, 96
        %v1447 = vpop.permute.xlu0 %1446
        %v1450 = vsel %vm962, %v1445, 0
        %1452 = vmatpush.bf16.msra.mxu0 0
        %1453 = vmatpush.bf16.msra.mxu0 0
        %1454 = vmatpush.bf16.msra.mxu0 0
        %1455 = vmatpush.bf16.msra.mxu0 0
        %1456 = vmatpush.bf16.msra.mxu0 0
        %1457 = vmatpush.bf16.msra.mxu0 0
        %1458 = vmatpush.bf16.msra.mxu0 0
        %1459 = vmatpush.bf16.msra.mxu0 %v1447
        %1460 = vmatmul.bf16.gmra.mxu0 %v1450
        %v1461 = vpop.f32.mrf.mxu0
        %v1462 = vadd.f32 0.0, %v1461
        %v1463 = vpop.f32.mrf.mxu0
        %v1464 = vadd.f32 0.0, %v1463
        %1465 = vdwg.mxu0
        %v1468 = vunpack.c.l.b16 %v1389
        %v1469 = vunpack.c.l.b16 %v1390
        %v1470 = vpack.c.b16 %v1469, %v1468
        %1471 = vrot.lane.b32.xlu0 %v1152, 96
        %v1472 = vpop.permute.xlu0 %1471
        %v1475 = vsel %vm962, %v1470, 0
        %1477 = vmatpush.bf16.msra.mxu0 0
        %1478 = vmatpush.bf16.msra.mxu0 0
        %1479 = vmatpush.bf16.msra.mxu0 0
        %1480 = vmatpush.bf16.msra.mxu0 0
        %1481 = vmatpush.bf16.msra.mxu0 0
        %1482 = vmatpush.bf16.msra.mxu0 0
        %1483 = vmatpush.bf16.msra.mxu0 0
        %1484 = vmatpush.bf16.msra.mxu0 %v1472
        %1485 = vmatmul.bf16.gmra.mxu0 %v1475
        %v1486 = vpop.f32.mrf.mxu0
        %v1487 = vadd.f32 0.0, %v1486
        %v1488 = vpop.f32.mrf.mxu0
        %v1489 = vadd.f32 0.0, %v1488
        %1490 = vdwg.mxu0
        %1491 = vrot.lane.b32.xlu0 %v825, 64
        %v1492 = vpop.permute.xlu0 %1491
        %1493 = vrot.lane.b32.xlu0 %v827, 64
        %v1494 = vpop.permute.xlu0 %1493
        %1495 = vrot.lane.b32.xlu0 %v829, 64
        %v1496 = vpop.permute.xlu0 %1495
        %1497 = vrot.lane.b32.xlu0 %v831, 64
        %v1498 = vpop.permute.xlu0 %1497
        %1499 = vrot.lane.b32.xlu0 %v833, 64
        %v1500 = vpop.permute.xlu0 %1499
        %1501 = vrot.lane.b32.xlu0 %v835, 64
        %v1502 = vpop.permute.xlu0 %1501
        %1503 = vrot.lane.b32.xlu0 %v837, 64
        %v1504 = vpop.permute.xlu0 %1503
        %1505 = vrot.lane.b32.xlu0 %v839, 64
        %v1506 = vpop.permute.xlu0 %1505
        %v1507 = vrot.slane %v1492, 4
        %v1508 = vrot.slane %v1494, 4
        %v1509 = vrot.slane %v1496, 4
        %v1510 = vrot.slane %v1498, 4
        %v1511 = vrot.slane %v1500, 4
        %v1512 = vrot.slane %v1502, 4
        %v1513 = vrot.slane %v1504, 4
        %v1514 = vrot.slane %v1506, 4
        %1515 = vrot.lane.b32.xlu0 %v859, 64
        %v1516 = vpop.permute.xlu0 %1515
        %v1517 = vunpack.c.l.b16 %v1507
        %v1518 = vunpack.c.l.b16 %v1508
        %v1519 = vpack.c.b16 %v1518, %v1517
        %v1521 = vsel %vm863, %v1516, 0
        %v1524 = vsel %vm863, %v1519, 0
        %1526 = vmatpush.bf16.xpose.msra.mxu0 0
        %1527 = vmatpush.bf16.xpose.msra.mxu0 0
        %1528 = vmatpush.bf16.xpose.msra.mxu0 0
        %1529 = vmatpush.bf16.xpose.msra.mxu0 0
        %1530 = vmatpush.bf16.xpose.msra.mxu0 0
        %1531 = vmatpush.bf16.xpose.msra.mxu0 0
        %1532 = vmatpush.bf16.xpose.msra.mxu0 0
        %1533 = vmatpush.bf16.xpose.msra.mxu0 %v1524
        %1534 = vmatmul.bf16.gmra.mxu0 %v1521
        %v1535 = vpop.f32.mrf.mxu0
        %v1536 = vadd.f32 0.0, %v1535
        %v1537 = vpop.f32.mrf.mxu0
        %v1538 = vadd.f32 0.0, %v1537
        %1539 = vdwg.mxu0
        %1540 = vrot.lane.b32.xlu0 %v886, 64
        %v1541 = vpop.permute.xlu0 %1540
        %v1542 = vunpack.c.l.b16 %v1509
        %v1543 = vunpack.c.l.b16 %v1510
        %v1544 = vpack.c.b16 %v1543, %v1542
        %v1546 = vsel %vm863, %v1541, 0
        %v1549 = vsel %vm863, %v1544, 0
        %1551 = vmatpush.bf16.xpose.msra.mxu0 0
        %1552 = vmatpush.bf16.xpose.msra.mxu0 0
        %1553 = vmatpush.bf16.xpose.msra.mxu0 0
        %1554 = vmatpush.bf16.xpose.msra.mxu0 0
        %1555 = vmatpush.bf16.xpose.msra.mxu0 0
        %1556 = vmatpush.bf16.xpose.msra.mxu0 0
        %1557 = vmatpush.bf16.xpose.msra.mxu0 0
        %1558 = vmatpush.bf16.xpose.msra.mxu0 %v1549
        %1559 = vmatmul.bf16.gmra.mxu0 %v1546
        %v1560 = vpop.f32.mrf.mxu0
        %v1561 = vadd.f32 0.0, %v1560
        %v1562 = vpop.f32.mrf.mxu0
        %v1563 = vadd.f32 0.0, %v1562
        %1564 = vdwg.mxu0
        %1565 = vrot.lane.b32.xlu0 %v912, 64
        %v1566 = vpop.permute.xlu0 %1565
        %v1567 = vunpack.c.l.b16 %v1511
        %v1568 = vunpack.c.l.b16 %v1512
        %v1569 = vpack.c.b16 %v1568, %v1567
        %v1571 = vsel %vm863, %v1566, 0
        %v1574 = vsel %vm863, %v1569, 0
        %1576 = vmatpush.bf16.xpose.msra.mxu0 0
        %1577 = vmatpush.bf16.xpose.msra.mxu0 0
        %1578 = vmatpush.bf16.xpose.msra.mxu0 0
        %1579 = vmatpush.bf16.xpose.msra.mxu0 0
        %1580 = vmatpush.bf16.xpose.msra.mxu0 0
        %1581 = vmatpush.bf16.xpose.msra.mxu0 0
        %1582 = vmatpush.bf16.xpose.msra.mxu0 0
        %1583 = vmatpush.bf16.xpose.msra.mxu0 %v1574
        %1584 = vmatmul.bf16.gmra.mxu0 %v1571
        %v1585 = vpop.f32.mrf.mxu0
        %v1586 = vadd.f32 0.0, %v1585
        %v1587 = vpop.f32.mrf.mxu0
        %v1588 = vadd.f32 0.0, %v1587
        %1589 = vdwg.mxu0
        %1590 = vrot.lane.b32.xlu0 %v938, 64
        %v1591 = vpop.permute.xlu0 %1590
        %v1592 = vunpack.c.l.b16 %v1513
        %v1593 = vunpack.c.l.b16 %v1514
        %v1594 = vpack.c.b16 %v1593, %v1592
        %v1596 = vsel %vm863, %v1591, 0
        %v1599 = vsel %vm863, %v1594, 0
        %1601 = vmatpush.bf16.xpose.msra.mxu0 0
        %1602 = vmatpush.bf16.xpose.msra.mxu0 0
        %1603 = vmatpush.bf16.xpose.msra.mxu0 0
        %1604 = vmatpush.bf16.xpose.msra.mxu0 0
        %1605 = vmatpush.bf16.xpose.msra.mxu0 0
        %1606 = vmatpush.bf16.xpose.msra.mxu0 0
        %1607 = vmatpush.bf16.xpose.msra.mxu0 0
        %1608 = vmatpush.bf16.xpose.msra.mxu0 %v1599
        %1609 = vmatmul.bf16.gmra.mxu0 %v1596
        %v1610 = vpop.f32.mrf.mxu0
        %v1611 = vadd.f32 0.0, %v1610
        %v1612 = vpop.f32.mrf.mxu0
        %v1613 = vadd.f32 0.0, %v1612
        %1614 = vdwg.mxu0
        %v1615 = vsel %vm962, %v1536, -inf
        %1616 = vmax.xlane.f32.xlu0 %v1615
        %v1617 = vpop.xlane.xlu0 %1616
        %v1618 = vsel %vm962, %v1538, -inf
        %1619 = vmax.xlane.f32.xlu0 %v1618
        %v1620 = vpop.xlane.xlu0 %1619
        %v1621 = vsel %vm962, %v1561, -inf
        %1622 = vmax.xlane.f32.xlu0 %v1621
        %v1623 = vpop.xlane.xlu0 %1622
        %v1624 = vsel %vm962, %v1563, -inf
        %1625 = vmax.xlane.f32.xlu0 %v1624
        %v1626 = vpop.xlane.xlu0 %1625
        %v1627 = vsel %vm962, %v1586, -inf
        %1628 = vmax.xlane.f32.xlu0 %v1627
        %v1629 = vpop.xlane.xlu0 %1628
        %v1630 = vsel %vm962, %v1588, -inf
        %1631 = vmax.xlane.f32.xlu0 %v1630
        %v1632 = vpop.xlane.xlu0 %1631
        %v1633 = vsel %vm962, %v1611, -inf
        %1634 = vmax.xlane.f32.xlu0 %v1633
        %v1635 = vpop.xlane.xlu0 %1634
        %v1636 = vsel %vm962, %v1613, -inf
        %1637 = vmax.xlane.f32.xlu0 %v1636
        %v1638 = vpop.xlane.xlu0 %1637
        %v1639 = vsub.f32 %v1536, %v1617
        %v1640 = vsub.f32 %v1538, %v1620
        %v1641 = vsub.f32 %v1561, %v1623
        %v1642 = vsub.f32 %v1563, %v1626
        %v1643 = vsub.f32 %v1586, %v1629
        %v1644 = vsub.f32 %v1588, %v1632
        %v1645 = vsub.f32 %v1611, %v1635
        %v1646 = vsub.f32 %v1613, %v1638
        %v1647 = vmul.f32 %v1639, 1.442695
        %v1648 = vpow.pop %v1647
        %v1649 = vmul.f32 %v1640, 1.442695
        %v1650 = vpow.pop %v1649
        %v1651 = vmul.f32 %v1641, 1.442695
        %v1652 = vpow.pop %v1651
        %v1653 = vmul.f32 %v1642, 1.442695
        %v1654 = vpow.pop %v1653
        %v1655 = vmul.f32 %v1643, 1.442695
        %v1656 = vpow.pop %v1655
        %v1657 = vmul.f32 %v1644, 1.442695
        %v1658 = vpow.pop %v1657
        %v1659 = vmul.f32 %v1645, 1.442695
        %v1660 = vpow.pop %v1659
        %v1661 = vmul.f32 %v1646, 1.442695
        %v1662 = vpow.pop %v1661
        %v1663 = vsel %vm962, %v1648, 0.0
        %1664 = vadd.xlane.f32.xlu0 %v1663
        %v1665 = vpop.xlane.xlu0 %1664
        %v1666 = vsel %vm962, %v1650, 0.0
        %1667 = vadd.xlane.f32.xlu0 %v1666
        %v1668 = vpop.xlane.xlu0 %1667
        %v1669 = vsel %vm962, %v1652, 0.0
        %1670 = vadd.xlane.f32.xlu0 %v1669
        %v1671 = vpop.xlane.xlu0 %1670
        %v1672 = vsel %vm962, %v1654, 0.0
        %1673 = vadd.xlane.f32.xlu0 %v1672
        %v1674 = vpop.xlane.xlu0 %1673
        %v1675 = vsel %vm962, %v1656, 0.0
        %1676 = vadd.xlane.f32.xlu0 %v1675
        %v1677 = vpop.xlane.xlu0 %1676
        %v1678 = vsel %vm962, %v1658, 0.0
        %1679 = vadd.xlane.f32.xlu0 %v1678
        %v1680 = vpop.xlane.xlu0 %1679
        %v1681 = vsel %vm962, %v1660, 0.0
        %1682 = vadd.xlane.f32.xlu0 %v1681
        %v1683 = vpop.xlane.xlu0 %1682
        %v1684 = vsel %vm962, %v1662, 0.0
        %1685 = vadd.xlane.f32.xlu0 %v1684
        %v1686 = vpop.xlane.xlu0 %1685
        %v1687 = vrcp.pop %v1665
        %v1688 = vrcp.pop %v1668
        %v1689 = vrcp.pop %v1671
        %v1690 = vrcp.pop %v1674
        %v1691 = vrcp.pop %v1677
        %v1692 = vrcp.pop %v1680
        %v1693 = vrcp.pop %v1683
        %v1694 = vrcp.pop %v1686
        %v1695 = vmul.f32 %v1648, %v1687
        %v1696 = vmul.f32 %v1650, %v1688
        %v1697 = vmul.f32 %v1652, %v1689
        %v1698 = vmul.f32 %v1654, %v1690
        %v1699 = vmul.f32 %v1656, %v1691
        %v1700 = vmul.f32 %v1658, %v1692
        %v1701 = vmul.f32 %v1660, %v1693
        %v1702 = vmul.f32 %v1662, %v1694
        %v1703 = vpack.c.bf16 %v1695, %v1695
        %v1704 = vpack.c.bf16 %v1696, %v1696
        %v1705 = vpack.c.bf16 %v1697, %v1697
        %v1706 = vpack.c.bf16 %v1698, %v1698
        %v1707 = vpack.c.bf16 %v1699, %v1699
        %v1708 = vpack.c.bf16 %v1700, %v1700
        %v1709 = vpack.c.bf16 %v1701, %v1701
        %v1710 = vpack.c.bf16 %v1702, %v1702
        %v1713 = vunpack.c.l.b16 %v1703
        %v1714 = vunpack.c.l.b16 %v1704
        %v1715 = vpack.c.b16 %v1714, %v1713
        %1716 = vrot.lane.b32.xlu0 %v1068, 64
        %v1717 = vpop.permute.xlu0 %1716
        %v1720 = vsel %vm962, %v1715, 0
        %1722 = vmatpush.bf16.msra.mxu0 0
        %1723 = vmatpush.bf16.msra.mxu0 0
        %1724 = vmatpush.bf16.msra.mxu0 0
        %1725 = vmatpush.bf16.msra.mxu0 0
        %1726 = vmatpush.bf16.msra.mxu0 0
        %1727 = vmatpush.bf16.msra.mxu0 0
        %1728 = vmatpush.bf16.msra.mxu0 0
        %1729 = vmatpush.bf16.msra.mxu0 %v1717
        %1730 = vmatmul.bf16.gmra.mxu0 %v1720
        %v1731 = vpop.f32.mrf.mxu0
        %v1732 = vadd.f32 0.0, %v1731
        %v1733 = vpop.f32.mrf.mxu0
        %v1734 = vadd.f32 0.0, %v1733
        %1735 = vdwg.mxu0
        %v1738 = vunpack.c.l.b16 %v1705
        %v1739 = vunpack.c.l.b16 %v1706
        %v1740 = vpack.c.b16 %v1739, %v1738
        %1741 = vrot.lane.b32.xlu0 %v1096, 64
        %v1742 = vpop.permute.xlu0 %1741
        %v1745 = vsel %vm962, %v1740, 0
        %1747 = vmatpush.bf16.msra.mxu0 0
        %1748 = vmatpush.bf16.msra.mxu0 0
        %1749 = vmatpush.bf16.msra.mxu0 0
        %1750 = vmatpush.bf16.msra.mxu0 0
        %1751 = vmatpush.bf16.msra.mxu0 0
        %1752 = vmatpush.bf16.msra.mxu0 0
        %1753 = vmatpush.bf16.msra.mxu0 0
        %1754 = vmatpush.bf16.msra.mxu0 %v1742
        %1755 = vmatmul.bf16.gmra.mxu0 %v1745
        %v1756 = vpop.f32.mrf.mxu0
        %v1757 = vadd.f32 0.0, %v1756
        %v1758 = vpop.f32.mrf.mxu0
        %v1759 = vadd.f32 0.0, %v1758
        %1760 = vdwg.mxu0
        %v1763 = vunpack.c.l.b16 %v1707
        %v1764 = vunpack.c.l.b16 %v1708
        %v1765 = vpack.c.b16 %v1764, %v1763
        %1766 = vrot.lane.b32.xlu0 %v1124, 64
        %v1767 = vpop.permute.xlu0 %1766
        %v1770 = vsel %vm962, %v1765, 0
        %1772 = vmatpush.bf16.msra.mxu0 0
        %1773 = vmatpush.bf16.msra.mxu0 0
        %1774 = vmatpush.bf16.msra.mxu0 0
        %1775 = vmatpush.bf16.msra.mxu0 0
        %1776 = vmatpush.bf16.msra.mxu0 0
        %1777 = vmatpush.bf16.msra.mxu0 0
        %1778 = vmatpush.bf16.msra.mxu0 0
        %1779 = vmatpush.bf16.msra.mxu0 %v1767
        %1780 = vmatmul.bf16.gmra.mxu0 %v1770
        %v1781 = vpop.f32.mrf.mxu0
        %v1782 = vadd.f32 0.0, %v1781
        %v1783 = vpop.f32.mrf.mxu0
        %v1784 = vadd.f32 0.0, %v1783
        %1785 = vdwg.mxu0
        %v1788 = vunpack.c.l.b16 %v1709
        %v1789 = vunpack.c.l.b16 %v1710
        %v1790 = vpack.c.b16 %v1789, %v1788
        %1791 = vrot.lane.b32.xlu0 %v1152, 64
        %v1792 = vpop.permute.xlu0 %1791
        %v1795 = vsel %vm962, %v1790, 0
        %1797 = vmatpush.bf16.msra.mxu0 0
        %1798 = vmatpush.bf16.msra.mxu0 0
        %1799 = vmatpush.bf16.msra.mxu0 0
        %1800 = vmatpush.bf16.msra.mxu0 0
        %1801 = vmatpush.bf16.msra.mxu0 0
        %1802 = vmatpush.bf16.msra.mxu0 0
        %1803 = vmatpush.bf16.msra.mxu0 0
        %1804 = vmatpush.bf16.msra.mxu0 %v1792
        %1805 = vmatmul.bf16.gmra.mxu0 %v1795
        %v1806 = vpop.f32.mrf.mxu0
        %v1807 = vadd.f32 0.0, %v1806
        %v1808 = vpop.f32.mrf.mxu0
        %v1809 = vadd.f32 0.0, %v1808
        %1810 = vdwg.mxu0
        %1811 = vrot.lane.b32.xlu0 %v825, 32
        %v1812 = vpop.permute.xlu0 %1811
        %1813 = vrot.lane.b32.xlu0 %v827, 32
        %v1814 = vpop.permute.xlu0 %1813
        %1815 = vrot.lane.b32.xlu0 %v829, 32
        %v1816 = vpop.permute.xlu0 %1815
        %1817 = vrot.lane.b32.xlu0 %v831, 32
        %v1818 = vpop.permute.xlu0 %1817
        %1819 = vrot.lane.b32.xlu0 %v833, 32
        %v1820 = vpop.permute.xlu0 %1819
        %1821 = vrot.lane.b32.xlu0 %v835, 32
        %v1822 = vpop.permute.xlu0 %1821
        %1823 = vrot.lane.b32.xlu0 %v837, 32
        %v1824 = vpop.permute.xlu0 %1823
        %1825 = vrot.lane.b32.xlu0 %v839, 32
        %v1826 = vpop.permute.xlu0 %1825
        %v1827 = vrot.slane %v1812, 4
        %v1828 = vrot.slane %v1814, 4
        %v1829 = vrot.slane %v1816, 4
        %v1830 = vrot.slane %v1818, 4
        %v1831 = vrot.slane %v1820, 4
        %v1832 = vrot.slane %v1822, 4
        %v1833 = vrot.slane %v1824, 4
        %v1834 = vrot.slane %v1826, 4
        %1835 = vrot.lane.b32.xlu0 %v859, 32
        %v1836 = vpop.permute.xlu0 %1835
        %v1837 = vunpack.c.l.b16 %v1827
        %v1838 = vunpack.c.l.b16 %v1828
        %v1839 = vpack.c.b16 %v1838, %v1837
        %v1841 = vsel %vm863, %v1836, 0
        %v1844 = vsel %vm863, %v1839, 0
        %1846 = vmatpush.bf16.xpose.msra.mxu0 0
        %1847 = vmatpush.bf16.xpose.msra.mxu0 0
        %1848 = vmatpush.bf16.xpose.msra.mxu0 0
        %1849 = vmatpush.bf16.xpose.msra.mxu0 0
        %1850 = vmatpush.bf16.xpose.msra.mxu0 0
        %1851 = vmatpush.bf16.xpose.msra.mxu0 0
        %1852 = vmatpush.bf16.xpose.msra.mxu0 0
        %1853 = vmatpush.bf16.xpose.msra.mxu0 %v1844
        %1854 = vmatmul.bf16.gmra.mxu0 %v1841
        %v1855 = vpop.f32.mrf.mxu0
        %v1856 = vadd.f32 0.0, %v1855
        %v1857 = vpop.f32.mrf.mxu0
        %v1858 = vadd.f32 0.0, %v1857
        %1859 = vdwg.mxu0
        %1860 = vrot.lane.b32.xlu0 %v886, 32
        %v1861 = vpop.permute.xlu0 %1860
        %v1862 = vunpack.c.l.b16 %v1829
        %v1863 = vunpack.c.l.b16 %v1830
        %v1864 = vpack.c.b16 %v1863, %v1862
        %v1866 = vsel %vm863, %v1861, 0
        %v1869 = vsel %vm863, %v1864, 0
        %1871 = vmatpush.bf16.xpose.msra.mxu0 0
        %1872 = vmatpush.bf16.xpose.msra.mxu0 0
        %1873 = vmatpush.bf16.xpose.msra.mxu0 0
        %1874 = vmatpush.bf16.xpose.msra.mxu0 0
        %1875 = vmatpush.bf16.xpose.msra.mxu0 0
        %1876 = vmatpush.bf16.xpose.msra.mxu0 0
        %1877 = vmatpush.bf16.xpose.msra.mxu0 0
        %1878 = vmatpush.bf16.xpose.msra.mxu0 %v1869
        %1879 = vmatmul.bf16.gmra.mxu0 %v1866
        %v1880 = vpop.f32.mrf.mxu0
        %v1881 = vadd.f32 0.0, %v1880
        %v1882 = vpop.f32.mrf.mxu0
        %v1883 = vadd.f32 0.0, %v1882
        %1884 = vdwg.mxu0
        %1885 = vrot.lane.b32.xlu0 %v912, 32
        %v1886 = vpop.permute.xlu0 %1885
        %v1887 = vunpack.c.l.b16 %v1831
        %v1888 = vunpack.c.l.b16 %v1832
        %v1889 = vpack.c.b16 %v1888, %v1887
        %v1891 = vsel %vm863, %v1886, 0
        %v1894 = vsel %vm863, %v1889, 0
        %1896 = vmatpush.bf16.xpose.msra.mxu0 0
        %1897 = vmatpush.bf16.xpose.msra.mxu0 0
        %1898 = vmatpush.bf16.xpose.msra.mxu0 0
        %1899 = vmatpush.bf16.xpose.msra.mxu0 0
        %1900 = vmatpush.bf16.xpose.msra.mxu0 0
        %1901 = vmatpush.bf16.xpose.msra.mxu0 0
        %1902 = vmatpush.bf16.xpose.msra.mxu0 0
        %1903 = vmatpush.bf16.xpose.msra.mxu0 %v1894
        %1904 = vmatmul.bf16.gmra.mxu0 %v1891
        %v1905 = vpop.f32.mrf.mxu0
        %v1906 = vadd.f32 0.0, %v1905
        %v1907 = vpop.f32.mrf.mxu0
        %v1908 = vadd.f32 0.0, %v1907
        %1909 = vdwg.mxu0
        %1910 = vrot.lane.b32.xlu0 %v938, 32
        %v1911 = vpop.permute.xlu0 %1910
        %v1912 = vunpack.c.l.b16 %v1833
        %v1913 = vunpack.c.l.b16 %v1834
        %v1914 = vpack.c.b16 %v1913, %v1912
        %v1916 = vsel %vm863, %v1911, 0
        %v1919 = vsel %vm863, %v1914, 0
        %1921 = vmatpush.bf16.xpose.msra.mxu0 0
        %1922 = vmatpush.bf16.xpose.msra.mxu0 0
        %1923 = vmatpush.bf16.xpose.msra.mxu0 0
        %1924 = vmatpush.bf16.xpose.msra.mxu0 0
        %1925 = vmatpush.bf16.xpose.msra.mxu0 0
        %1926 = vmatpush.bf16.xpose.msra.mxu0 0
        %1927 = vmatpush.bf16.xpose.msra.mxu0 0
        %1928 = vmatpush.bf16.xpose.msra.mxu0 %v1919
        %1929 = vmatmul.bf16.gmra.mxu0 %v1916
        %v1930 = vpop.f32.mrf.mxu0
        %v1931 = vadd.f32 0.0, %v1930
        %v1932 = vpop.f32.mrf.mxu0
        %v1933 = vadd.f32 0.0, %v1932
        %1934 = vdwg.mxu0
        %v1935 = vsel %vm962, %v1856, -inf
        %1936 = vmax.xlane.f32.xlu0 %v1935
        %v1937 = vpop.xlane.xlu0 %1936
        %v1938 = vsel %vm962, %v1858, -inf
        %1939 = vmax.xlane.f32.xlu0 %v1938
        %v1940 = vpop.xlane.xlu0 %1939
        %v1941 = vsel %vm962, %v1881, -inf
        %1942 = vmax.xlane.f32.xlu0 %v1941
        %v1943 = vpop.xlane.xlu0 %1942
        %v1944 = vsel %vm962, %v1883, -inf
        %1945 = vmax.xlane.f32.xlu0 %v1944
        %v1946 = vpop.xlane.xlu0 %1945
        %v1947 = vsel %vm962, %v1906, -inf
        %1948 = vmax.xlane.f32.xlu0 %v1947
        %v1949 = vpop.xlane.xlu0 %1948
        %v1950 = vsel %vm962, %v1908, -inf
        %1951 = vmax.xlane.f32.xlu0 %v1950
        %v1952 = vpop.xlane.xlu0 %1951
        %v1953 = vsel %vm962, %v1931, -inf
        %1954 = vmax.xlane.f32.xlu0 %v1953
        %v1955 = vpop.xlane.xlu0 %1954
        %v1956 = vsel %vm962, %v1933, -inf
        %1957 = vmax.xlane.f32.xlu0 %v1956
        %v1958 = vpop.xlane.xlu0 %1957
        %v1959 = vsub.f32 %v1856, %v1937
        %v1960 = vsub.f32 %v1858, %v1940
        %v1961 = vsub.f32 %v1881, %v1943
        %v1962 = vsub.f32 %v1883, %v1946
        %v1963 = vsub.f32 %v1906, %v1949
        %v1964 = vsub.f32 %v1908, %v1952
        %v1965 = vsub.f32 %v1931, %v1955
        %v1966 = vsub.f32 %v1933, %v1958
        %v1967 = vmul.f32 %v1959, 1.442695
        %v1968 = vpow.pop %v1967
        %v1969 = vmul.f32 %v1960, 1.442695
        %v1970 = vpow.pop %v1969
        %v1971 = vmul.f32 %v1961, 1.442695
        %v1972 = vpow.pop %v1971
        %v1973 = vmul.f32 %v1962, 1.442695
        %v1974 = vpow.pop %v1973
        %v1975 = vmul.f32 %v1963, 1.442695
        %v1976 = vpow.pop %v1975
        %v1977 = vmul.f32 %v1964, 1.442695
        %v1978 = vpow.pop %v1977
        %v1979 = vmul.f32 %v1965, 1.442695
        %v1980 = vpow.pop %v1979
        %v1981 = vmul.f32 %v1966, 1.442695
        %v1982 = vpow.pop %v1981
        %v1983 = vsel %vm962, %v1968, 0.0
        %1984 = vadd.xlane.f32.xlu0 %v1983
        %v1985 = vpop.xlane.xlu0 %1984
        %v1986 = vsel %vm962, %v1970, 0.0
        %1987 = vadd.xlane.f32.xlu0 %v1986
        %v1988 = vpop.xlane.xlu0 %1987
        %v1989 = vsel %vm962, %v1972, 0.0
        %1990 = vadd.xlane.f32.xlu0 %v1989
        %v1991 = vpop.xlane.xlu0 %1990
        %v1992 = vsel %vm962, %v1974, 0.0
        %1993 = vadd.xlane.f32.xlu0 %v1992
        %v1994 = vpop.xlane.xlu0 %1993
        %v1995 = vsel %vm962, %v1976, 0.0
        %1996 = vadd.xlane.f32.xlu0 %v1995
        %v1997 = vpop.xlane.xlu0 %1996
        %v1998 = vsel %vm962, %v1978, 0.0
        %1999 = vadd.xlane.f32.xlu0 %v1998
        %v2000 = vpop.xlane.xlu0 %1999
        %v2001 = vsel %vm962, %v1980, 0.0
        %2002 = vadd.xlane.f32.xlu0 %v2001
        %v2003 = vpop.xlane.xlu0 %2002
        %v2004 = vsel %vm962, %v1982, 0.0
        %2005 = vadd.xlane.f32.xlu0 %v2004
        %v2006 = vpop.xlane.xlu0 %2005
        %v2007 = vrcp.pop %v1985
        %v2008 = vrcp.pop %v1988
        %v2009 = vrcp.pop %v1991
        %v2010 = vrcp.pop %v1994
        %v2011 = vrcp.pop %v1997
        %v2012 = vrcp.pop %v2000
        %v2013 = vrcp.pop %v2003
        %v2014 = vrcp.pop %v2006
        %v2015 = vmul.f32 %v1968, %v2007
        %v2016 = vmul.f32 %v1970, %v2008
        %v2017 = vmul.f32 %v1972, %v2009
        %v2018 = vmul.f32 %v1974, %v2010
        %v2019 = vmul.f32 %v1976, %v2011
        %v2020 = vmul.f32 %v1978, %v2012
        %v2021 = vmul.f32 %v1980, %v2013
        %v2022 = vmul.f32 %v1982, %v2014
        %v2023 = vpack.c.bf16 %v2015, %v2015
        %v2024 = vpack.c.bf16 %v2016, %v2016
        %v2025 = vpack.c.bf16 %v2017, %v2017
        %v2026 = vpack.c.bf16 %v2018, %v2018
        %v2027 = vpack.c.bf16 %v2019, %v2019
        %v2028 = vpack.c.bf16 %v2020, %v2020
        %v2029 = vpack.c.bf16 %v2021, %v2021
        %v2030 = vpack.c.bf16 %v2022, %v2022
        %v2033 = vunpack.c.l.b16 %v2023
        %v2034 = vunpack.c.l.b16 %v2024
        %v2035 = vpack.c.b16 %v2034, %v2033
        %2036 = vrot.lane.b32.xlu0 %v1068, 32
        %v2037 = vpop.permute.xlu0 %2036
        %v2040 = vsel %vm962, %v2035, 0
        %2042 = vmatpush.bf16.msra.mxu0 0
        %2043 = vmatpush.bf16.msra.mxu0 0
        %2044 = vmatpush.bf16.msra.mxu0 0
        %2045 = vmatpush.bf16.msra.mxu0 0
        %2046 = vmatpush.bf16.msra.mxu0 0
        %2047 = vmatpush.bf16.msra.mxu0 0
        %2048 = vmatpush.bf16.msra.mxu0 0
        %2049 = vmatpush.bf16.msra.mxu0 %v2037
        %2050 = vmatmul.bf16.gmra.mxu0 %v2040
        %v2051 = vpop.f32.mrf.mxu0
        %v2052 = vadd.f32 0.0, %v2051
        %v2053 = vpop.f32.mrf.mxu0
        %v2054 = vadd.f32 0.0, %v2053
        %2055 = vdwg.mxu0
        %v2058 = vunpack.c.l.b16 %v2025
        %v2059 = vunpack.c.l.b16 %v2026
        %v2060 = vpack.c.b16 %v2059, %v2058
        %2061 = vrot.lane.b32.xlu0 %v1096, 32
        %v2062 = vpop.permute.xlu0 %2061
        %v2065 = vsel %vm962, %v2060, 0
        %2067 = vmatpush.bf16.msra.mxu0 0
        %2068 = vmatpush.bf16.msra.mxu0 0
        %2069 = vmatpush.bf16.msra.mxu0 0
        %2070 = vmatpush.bf16.msra.mxu0 0
        %2071 = vmatpush.bf16.msra.mxu0 0
        %2072 = vmatpush.bf16.msra.mxu0 0
        %2073 = vmatpush.bf16.msra.mxu0 0
        %2074 = vmatpush.bf16.msra.mxu0 %v2062
        %2075 = vmatmul.bf16.gmra.mxu0 %v2065
        %v2076 = vpop.f32.mrf.mxu0
        %v2077 = vadd.f32 0.0, %v2076
        %v2078 = vpop.f32.mrf.mxu0
        %v2079 = vadd.f32 0.0, %v2078
        %2080 = vdwg.mxu0
        %v2083 = vunpack.c.l.b16 %v2027
        %v2084 = vunpack.c.l.b16 %v2028
        %v2085 = vpack.c.b16 %v2084, %v2083
        %2086 = vrot.lane.b32.xlu0 %v1124, 32
        %v2087 = vpop.permute.xlu0 %2086
        %v2090 = vsel %vm962, %v2085, 0
        %2092 = vmatpush.bf16.msra.mxu0 0
        %2093 = vmatpush.bf16.msra.mxu0 0
        %2094 = vmatpush.bf16.msra.mxu0 0
        %2095 = vmatpush.bf16.msra.mxu0 0
        %2096 = vmatpush.bf16.msra.mxu0 0
        %2097 = vmatpush.bf16.msra.mxu0 0
        %2098 = vmatpush.bf16.msra.mxu0 0
        %2099 = vmatpush.bf16.msra.mxu0 %v2087
        %2100 = vmatmul.bf16.gmra.mxu0 %v2090
        %v2101 = vpop.f32.mrf.mxu0
        %v2102 = vadd.f32 0.0, %v2101
        %v2103 = vpop.f32.mrf.mxu0
        %v2104 = vadd.f32 0.0, %v2103
        %2105 = vdwg.mxu0
        %v2108 = vunpack.c.l.b16 %v2029
        %v2109 = vunpack.c.l.b16 %v2030
        %v2110 = vpack.c.b16 %v2109, %v2108
        %2111 = vrot.lane.b32.xlu0 %v1152, 32
        %v2112 = vpop.permute.xlu0 %2111
        %v2115 = vsel %vm962, %v2110, 0
        %2117 = vmatpush.bf16.msra.mxu0 0
        %2118 = vmatpush.bf16.msra.mxu0 0
        %2119 = vmatpush.bf16.msra.mxu0 0
        %2120 = vmatpush.bf16.msra.mxu0 0
        %2121 = vmatpush.bf16.msra.mxu0 0
        %2122 = vmatpush.bf16.msra.mxu0 0
        %2123 = vmatpush.bf16.msra.mxu0 0
        %2124 = vmatpush.bf16.msra.mxu0 %v2112
        %2125 = vmatmul.bf16.gmra.mxu0 %v2115
        %v2126 = vpop.f32.mrf.mxu0
        %v2127 = vadd.f32 0.0, %v2126
        %v2128 = vpop.f32.mrf.mxu0
        %v2129 = vadd.f32 0.0, %v2128
        %2130 = vdwg.mxu0
        %2139 = vrot.lane.b32.xlu0 %v1412, 32
        %v2140 = vpop.permute.xlu0 %2139
        %2141 = vrot.lane.b32.xlu0 %v1414, 32
        %v2142 = vpop.permute.xlu0 %2141
        %2143 = vrot.lane.b32.xlu0 %v1437, 32
        %v2144 = vpop.permute.xlu0 %2143
        %2145 = vrot.lane.b32.xlu0 %v1439, 32
        %v2146 = vpop.permute.xlu0 %2145
        %2147 = vrot.lane.b32.xlu0 %v1462, 32
        %v2148 = vpop.permute.xlu0 %2147
        %2149 = vrot.lane.b32.xlu0 %v1464, 32
        %v2150 = vpop.permute.xlu0 %2149
        %2151 = vrot.lane.b32.xlu0 %v1487, 32
        %v2152 = vpop.permute.xlu0 %2151
        %2153 = vrot.lane.b32.xlu0 %v1489, 32
        %v2154 = vpop.permute.xlu0 %2153
        %2171 = vrot.lane.b32.xlu0 %v1732, 64
        %v2172 = vpop.permute.xlu0 %2171
        %2173 = vrot.lane.b32.xlu0 %v1734, 64
        %v2174 = vpop.permute.xlu0 %2173
        %2175 = vrot.lane.b32.xlu0 %v1757, 64
        %v2176 = vpop.permute.xlu0 %2175
        %2177 = vrot.lane.b32.xlu0 %v1759, 64
        %v2178 = vpop.permute.xlu0 %2177
        %2179 = vrot.lane.b32.xlu0 %v1782, 64
        %v2180 = vpop.permute.xlu0 %2179
        %2181 = vrot.lane.b32.xlu0 %v1784, 64
        %v2182 = vpop.permute.xlu0 %2181
        %2183 = vrot.lane.b32.xlu0 %v1807, 64
        %v2184 = vpop.permute.xlu0 %2183
        %2185 = vrot.lane.b32.xlu0 %v1809, 64
        %v2186 = vpop.permute.xlu0 %2185
        %2203 = vrot.lane.b32.xlu0 %v2052, 96
        %v2204 = vpop.permute.xlu0 %2203
        %2205 = vrot.lane.b32.xlu0 %v2054, 96
        %v2206 = vpop.permute.xlu0 %2205
        %2207 = vrot.lane.b32.xlu0 %v2077, 96
        %v2208 = vpop.permute.xlu0 %2207
        %2209 = vrot.lane.b32.xlu0 %v2079, 96
        %v2210 = vpop.permute.xlu0 %2209
        %2211 = vrot.lane.b32.xlu0 %v2102, 96
        %v2212 = vpop.permute.xlu0 %2211
        %2213 = vrot.lane.b32.xlu0 %v2104, 96
        %v2214 = vpop.permute.xlu0 %2213
        %2215 = vrot.lane.b32.xlu0 %v2127, 96
        %v2216 = vpop.permute.xlu0 %2215
        %2217 = vrot.lane.b32.xlu0 %v2129, 96
        %v2218 = vpop.permute.xlu0 %2217
        %v2227 = vsel %vm863, %v1083, %v2140
        %v2228 = vsel %vm863, %v1085, %v2142
        %v2229 = vsel %vm863, %v1111, %v2144
        %v2230 = vsel %vm863, %v1113, %v2146
        %v2231 = vsel %vm863, %v1139, %v2148
        %v2232 = vsel %vm863, %v1141, %v2150
        %v2233 = vsel %vm863, %v1167, %v2152
        %v2234 = vsel %vm863, %v1169, %v2154
        %vm2235 = vcmask 523264
        %v2236 = vsel %vm2235, %v2227, %v2172
        %v2237 = vsel %vm2235, %v2228, %v2174
        %v2238 = vsel %vm2235, %v2229, %v2176
        %v2239 = vsel %vm2235, %v2230, %v2178
        %v2240 = vsel %vm2235, %v2231, %v2180
        %v2241 = vsel %vm2235, %v2232, %v2182
        %v2242 = vsel %vm2235, %v2233, %v2184
        %v2243 = vsel %vm2235, %v2234, %v2186
        %vm2244 = vcmask 785408
        %v2245 = vsel %vm2244, %v2236, %v2204
        %v2246 = vsel %vm2244, %v2237, %v2206
        %v2247 = vsel %vm2244, %v2238, %v2208
        %v2248 = vsel %vm2244, %v2239, %v2210
        %v2249 = vsel %vm2244, %v2240, %v2212
        %v2250 = vsel %vm2244, %v2241, %v2214
        %v2251 = vsel %vm2244, %v2242, %v2216
        %v2252 = vsel %vm2244, %v2243, %v2218
        %v2253 = vpack.c.bf16 %v2246, %v2245
        %v2254 = vpack.c.bf16 %v2248, %v2247
        %v2255 = vpack.c.bf16 %v2250, %v2249
        %v2256 = vpack.c.bf16 %v2252, %v2251
        %v2273 = vunpack.c.l.b16 %v542
        %v2274 = vunpack.c.l.b16 %v543
        %v2275 = vunpack.c.l.b16 %v544
        %v2276 = vunpack.c.l.b16 %v545
        %v2277 = vunpack.c.l.b16 %v546
        %v2278 = vunpack.c.l.b16 %v547
        %v2279 = vunpack.c.l.b16 %v548
        %v2280 = vunpack.c.l.b16 %v549
        %v2281 = vunpack.c.l.b16 %v550
        %v2282 = vunpack.c.l.b16 %v551
        %v2283 = vunpack.c.l.b16 %v552
        %v2284 = vunpack.c.l.b16 %v553
        %v2285 = vunpack.c.l.b16 %v554
        %v2286 = vunpack.c.l.b16 %v555
        %v2287 = vunpack.c.l.b16 %v556
        %v2288 = vunpack.c.l.b16 %v557
        %v2289 = vpack.c.b16 %v2274, %v2273
        %v2290 = vpack.c.b16 %v2276, %v2275
        %v2291 = vpack.c.b16 %v2278, %v2277
        %v2292 = vpack.c.b16 %v2280, %v2279
        %v2293 = vpack.c.b16 %v2282, %v2281
        %v2294 = vpack.c.b16 %v2284, %v2283
        %v2295 = vpack.c.b16 %v2286, %v2285
        %v2296 = vpack.c.b16 %v2288, %v2287
        %2305 = vmatpush.bf16.msra.mxu0 %v2296
        %2306 = vmatpush.bf16.msra.mxu0 %v2295
        %2307 = vmatpush.bf16.msra.mxu0 %v2294
        %2308 = vmatpush.bf16.msra.mxu0 %v2293
        %2309 = vmatpush.bf16.msra.mxu0 %v2292
        %2310 = vmatpush.bf16.msra.mxu0 %v2291
        %2311 = vmatpush.bf16.msra.mxu0 %v2290
        %2312 = vmatpush.bf16.msra.mxu0 %v2289
        %2313 = vmatmul.bf16.gmra.mxu0 %v2253
        %v2314 = vpop.f32.mrf.mxu0
        %v2315 = vadd.f32 %v491, %v2314
        %v2316 = vpop.f32.mrf.mxu0
        %v2317 = vadd.f32 %v493, %v2316
        %2318 = vmatmul.bf16.gmra.mxu0 %v2254
        %v2319 = vpop.f32.mrf.mxu0
        %v2320 = vadd.f32 %v496, %v2319
        %v2321 = vpop.f32.mrf.mxu0
        %v2322 = vadd.f32 %v498, %v2321
        %2323 = vmatmul.bf16.gmra.mxu0 %v2255
        %v2324 = vpop.f32.mrf.mxu0
        %v2325 = vadd.f32 %v501, %v2324
        %v2326 = vpop.f32.mrf.mxu0
        %v2327 = vadd.f32 %v503, %v2326
        %2328 = vmatmul.bf16.gmra.mxu0 %v2256
        %v2329 = vpop.f32.mrf.mxu0
        %v2330 = vadd.f32 %v506, %v2329
        %v2331 = vpop.f32.mrf.mxu0
        %v2332 = vadd.f32 %v508, %v2331
        %2333 = vdwg.mxu0
        %2334 = vadd.xlane.f32.xlu0 %v2315
        %v2335 = vpop.xlane.xlu0 %2334
        %2336 = vadd.xlane.f32.xlu0 %v2317
        %v2337 = vpop.xlane.xlu0 %2336
        %2338 = vadd.xlane.f32.xlu0 %v2320
        %v2339 = vpop.xlane.xlu0 %2338
        %2340 = vadd.xlane.f32.xlu0 %v2322
        %v2341 = vpop.xlane.xlu0 %2340
        %2342 = vadd.xlane.f32.xlu0 %v2325
        %v2343 = vpop.xlane.xlu0 %2342
        %2344 = vadd.xlane.f32.xlu0 %v2327
        %v2345 = vpop.xlane.xlu0 %2344
        %2346 = vadd.xlane.f32.xlu0 %v2330
        %v2347 = vpop.xlane.xlu0 %2346
        %2348 = vadd.xlane.f32.xlu0 %v2332
        %v2349 = vpop.xlane.xlu0 %2348
        %v2350 = vrcp.pop 128.0
        %v2351 = vmul.f32 128.0, %v2350
        %v2352 = vsub.f32 1.0, %v2351
        %v2353 = vmul.f32 %v2350, %v2352
        %v2354 = vadd.f32 %v2350, %v2353
        %vm2355 = vweird.f32 %v2350
        %v2356 = vsel %vm2355, %v2350, %v2354
        %v2357 = vmul.f32 %v2335, %v2356
        %v2358 = vmul.f32 %v2337, %v2356
        %v2359 = vmul.f32 %v2339, %v2356
        %v2360 = vmul.f32 %v2341, %v2356
        %v2361 = vmul.f32 %v2343, %v2356
        %v2362 = vmul.f32 %v2345, %v2356
        %v2363 = vmul.f32 %v2347, %v2356
        %v2364 = vmul.f32 %v2349, %v2356
        %v2365 = vsub.f32 %v2315, %v2357
        %v2366 = vsub.f32 %v2317, %v2358
        %v2367 = vsub.f32 %v2320, %v2359
        %v2368 = vsub.f32 %v2322, %v2360
        %v2369 = vsub.f32 %v2325, %v2361
        %v2370 = vsub.f32 %v2327, %v2362
        %v2371 = vsub.f32 %v2330, %v2363
        %v2372 = vsub.f32 %v2332, %v2364
        %v2373 = vmul.f32 %v2365, %v2365
        %v2374 = vmul.f32 %v2366, %v2366
        %v2375 = vmul.f32 %v2367, %v2367
        %v2376 = vmul.f32 %v2368, %v2368
        %v2377 = vmul.f32 %v2369, %v2369
        %v2378 = vmul.f32 %v2370, %v2370
        %v2379 = vmul.f32 %v2371, %v2371
        %v2380 = vmul.f32 %v2372, %v2372
        %2381 = vadd.xlane.f32.xlu0 %v2373
        %v2382 = vpop.xlane.xlu0 %2381
        %2383 = vadd.xlane.f32.xlu0 %v2374
        %v2384 = vpop.xlane.xlu0 %2383
        %2385 = vadd.xlane.f32.xlu0 %v2375
        %v2386 = vpop.xlane.xlu0 %2385
        %2387 = vadd.xlane.f32.xlu0 %v2376
        %v2388 = vpop.xlane.xlu0 %2387
        %2389 = vadd.xlane.f32.xlu0 %v2377
        %v2390 = vpop.xlane.xlu0 %2389
        %2391 = vadd.xlane.f32.xlu0 %v2378
        %v2392 = vpop.xlane.xlu0 %2391
        %2393 = vadd.xlane.f32.xlu0 %v2379
        %v2394 = vpop.xlane.xlu0 %2393
        %2395 = vadd.xlane.f32.xlu0 %v2380
        %v2396 = vpop.xlane.xlu0 %2395
        %v2397 = vmul.f32 %v2382, %v2356
        %v2398 = vmul.f32 %v2384, %v2356
        %v2399 = vmul.f32 %v2386, %v2356
        %v2400 = vmul.f32 %v2388, %v2356
        %v2401 = vmul.f32 %v2390, %v2356
        %v2402 = vmul.f32 %v2392, %v2356
        %v2403 = vmul.f32 %v2394, %v2356
        %v2404 = vmul.f32 %v2396, %v2356
        %v2405 = vadd.f32 %v2397, 1e-05
        %v2406 = vadd.f32 %v2398, 1e-05
        %v2407 = vadd.f32 %v2399, 1e-05
        %v2408 = vadd.f32 %v2400, 1e-05
        %v2409 = vadd.f32 %v2401, 1e-05
        %v2410 = vadd.f32 %v2402, 1e-05
        %v2411 = vadd.f32 %v2403, 1e-05
        %v2412 = vadd.f32 %v2404, 1e-05
        %v2413 = vrsqrt.pop %v2405
        %v2414 = vmul.f32 %v2413, %v2405
        %v2415 = vmul.f32 %v2414, %v2413
        %v2416 = vmul.f32 0.5, %v2415
        %v2417 = vsub.f32 1.5, %v2416
        %v2418 = vmul.f32 %v2413, %v2417
        %vm2419 = vweird.f32 %v2405
        %vm2420 = vweird.f32 %v2413
        %vm2421 = vmor %vm2419, %vm2420
        %v2422 = vsel %vm2421, %v2413, %v2418
        %v2423 = vrsqrt.pop %v2406
        %v2424 = vmul.f32 %v2423, %v2406
        %v2425 = vmul.f32 %v2424, %v2423
        %v2426 = vmul.f32 0.5, %v2425
        %v2427 = vsub.f32 1.5, %v2426
        %v2428 = vmul.f32 %v2423, %v2427
        %vm2429 = vweird.f32 %v2406
        %vm2430 = vweird.f32 %v2423
        %vm2431 = vmor %vm2429, %vm2430
        %v2432 = vsel %vm2431, %v2423, %v2428
        %v2433 = vrsqrt.pop %v2407
        %v2434 = vmul.f32 %v2433, %v2407
        %v2435 = vmul.f32 %v2434, %v2433
        %v2436 = vmul.f32 0.5, %v2435
        %v2437 = vsub.f32 1.5, %v2436
        %v2438 = vmul.f32 %v2433, %v2437
        %vm2439 = vweird.f32 %v2407
        %vm2440 = vweird.f32 %v2433
        %vm2441 = vmor %vm2439, %vm2440
        %v2442 = vsel %vm2441, %v2433, %v2438
        %v2443 = vrsqrt.pop %v2408
        %v2444 = vmul.f32 %v2443, %v2408
        %v2445 = vmul.f32 %v2444, %v2443
        %v2446 = vmul.f32 0.5, %v2445
        %v2447 = vsub.f32 1.5, %v2446
        %v2448 = vmul.f32 %v2443, %v2447
        %vm2449 = vweird.f32 %v2408
        %vm2450 = vweird.f32 %v2443
        %vm2451 = vmor %vm2449, %vm2450
        %v2452 = vsel %vm2451, %v2443, %v2448
        %v2453 = vrsqrt.pop %v2409
        %v2454 = vmul.f32 %v2453, %v2409
        %v2455 = vmul.f32 %v2454, %v2453
        %v2456 = vmul.f32 0.5, %v2455
        %v2457 = vsub.f32 1.5, %v2456
        %v2458 = vmul.f32 %v2453, %v2457
        %vm2459 = vweird.f32 %v2409
        %vm2460 = vweird.f32 %v2453
        %vm2461 = vmor %vm2459, %vm2460
        %v2462 = vsel %vm2461, %v2453, %v2458
        %v2463 = vrsqrt.pop %v2410
        %v2464 = vmul.f32 %v2463, %v2410
        %v2465 = vmul.f32 %v2464, %v2463
        %v2466 = vmul.f32 0.5, %v2465
        %v2467 = vsub.f32 1.5, %v2466
        %v2468 = vmul.f32 %v2463, %v2467
        %vm2469 = vweird.f32 %v2410
        %vm2470 = vweird.f32 %v2463
        %vm2471 = vmor %vm2469, %vm2470
        %v2472 = vsel %vm2471, %v2463, %v2468
        %v2473 = vrsqrt.pop %v2411
        %v2474 = vmul.f32 %v2473, %v2411
        %v2475 = vmul.f32 %v2474, %v2473
        %v2476 = vmul.f32 0.5, %v2475
        %v2477 = vsub.f32 1.5, %v2476
        %v2478 = vmul.f32 %v2473, %v2477
        %vm2479 = vweird.f32 %v2411
        %vm2480 = vweird.f32 %v2473
        %vm2481 = vmor %vm2479, %vm2480
        %v2482 = vsel %vm2481, %v2473, %v2478
        %v2483 = vrsqrt.pop %v2412
        %v2484 = vmul.f32 %v2483, %v2412
        %v2485 = vmul.f32 %v2484, %v2483
        %v2486 = vmul.f32 0.5, %v2485
        %v2487 = vsub.f32 1.5, %v2486
        %v2488 = vmul.f32 %v2483, %v2487
        %vm2489 = vweird.f32 %v2412
        %vm2490 = vweird.f32 %v2483
        %vm2491 = vmor %vm2489, %vm2490
        %v2492 = vsel %vm2491, %v2483, %v2488
        %v2493 = vmul.f32 %v2365, %v2422
        %v2494 = vmul.f32 %v2366, %v2432
        %v2495 = vmul.f32 %v2367, %v2442
        %v2496 = vmul.f32 %v2368, %v2452
        %v2497 = vmul.f32 %v2369, %v2462
        %v2498 = vmul.f32 %v2370, %v2472
        %v2499 = vmul.f32 %v2371, %v2482
        %v2500 = vmul.f32 %v2372, %v2492
        %v2501 = vpack.c.bf16 %v2494, %v2493
        %v2502 = vpack.c.bf16 %v2496, %v2495
        %v2503 = vpack.c.bf16 %v2498, %v2497
        %v2504 = vpack.c.bf16 %v2500, %v2499
        %v2521 = vunpack.c.l.b16 %v558
        %v2522 = vunpack.c.h.b16 %v558
        %v2523 = vunpack.c.l.b16 %v559
        %v2524 = vunpack.c.h.b16 %v559
        %v2525 = vunpack.c.l.b16 %v560
        %v2526 = vunpack.c.h.b16 %v560
        %v2527 = vunpack.c.l.b16 %v561
        %v2528 = vunpack.c.h.b16 %v561
        %v2529 = vunpack.c.l.b16 %v562
        %v2530 = vunpack.c.h.b16 %v562
        %v2531 = vunpack.c.l.b16 %v563
        %v2532 = vunpack.c.h.b16 %v563
        %v2533 = vunpack.c.l.b16 %v564
        %v2534 = vunpack.c.h.b16 %v564
        %v2535 = vunpack.c.l.b16 %v565
        %v2536 = vunpack.c.h.b16 %v565
        %v2537 = vunpack.c.l.b16 %v566
        %v2538 = vunpack.c.h.b16 %v566
        %v2539 = vunpack.c.l.b16 %v567
        %v2540 = vunpack.c.h.b16 %v567
        %v2541 = vunpack.c.l.b16 %v568
        %v2542 = vunpack.c.h.b16 %v568
        %v2543 = vunpack.c.l.b16 %v569
        %v2544 = vunpack.c.h.b16 %v569
        %v2545 = vunpack.c.l.b16 %v570
        %v2546 = vunpack.c.h.b16 %v570
        %v2547 = vunpack.c.l.b16 %v571
        %v2548 = vunpack.c.h.b16 %v571
        %v2549 = vunpack.c.l.b16 %v572
        %v2550 = vunpack.c.h.b16 %v572
        %v2551 = vunpack.c.l.b16 %v573
        %v2552 = vunpack.c.h.b16 %v573
        %v2553 = vpack.c.b16 %v2523, %v2521
        %v2554 = vpack.c.b16 %v2524, %v2522
        %v2555 = vpack.c.b16 %v2527, %v2525
        %v2556 = vpack.c.b16 %v2528, %v2526
        %v2557 = vpack.c.b16 %v2531, %v2529
        %v2558 = vpack.c.b16 %v2532, %v2530
        %v2559 = vpack.c.b16 %v2535, %v2533
        %v2560 = vpack.c.b16 %v2536, %v2534
        %v2561 = vpack.c.b16 %v2539, %v2537
        %v2562 = vpack.c.b16 %v2540, %v2538
        %v2563 = vpack.c.b16 %v2543, %v2541
        %v2564 = vpack.c.b16 %v2544, %v2542
        %v2565 = vpack.c.b16 %v2547, %v2545
        %v2566 = vpack.c.b16 %v2548, %v2546
        %v2567 = vpack.c.b16 %v2551, %v2549
        %v2568 = vpack.c.b16 %v2552, %v2550
        %2585 = vmatpush.bf16.msra.mxu0 %v2567
        %2586 = vmatpush.bf16.msra.mxu0 %v2565
        %2587 = vmatpush.bf16.msra.mxu0 %v2563
        %2588 = vmatpush.bf16.msra.mxu0 %v2561
        %2589 = vmatpush.bf16.msra.mxu0 %v2559
        %2590 = vmatpush.bf16.msra.mxu0 %v2557
        %2591 = vmatpush.bf16.msra.mxu0 %v2555
        %2592 = vmatpush.bf16.msra.mxu0 %v2553
        %2593 = vmatmul.bf16.gmra.mxu0 %v2501
        %v2594 = vpop.f32.mrf.mxu0
        %v2595 = vadd.f32 0.0, %v2594
        %v2596 = vpop.f32.mrf.mxu0
        %v2597 = vadd.f32 0.0, %v2596
        %2598 = vmatmul.bf16.gmra.mxu0 %v2502
        %v2599 = vpop.f32.mrf.mxu0
        %v2600 = vadd.f32 0.0, %v2599
        %v2601 = vpop.f32.mrf.mxu0
        %v2602 = vadd.f32 0.0, %v2601
        %2603 = vmatmul.bf16.gmra.mxu0 %v2503
        %v2604 = vpop.f32.mrf.mxu0
        %v2605 = vadd.f32 0.0, %v2604
        %v2606 = vpop.f32.mrf.mxu0
        %v2607 = vadd.f32 0.0, %v2606
        %2608 = vmatmul.bf16.gmra.mxu0 %v2504
        %v2609 = vpop.f32.mrf.mxu0
        %v2610 = vadd.f32 0.0, %v2609
        %v2611 = vpop.f32.mrf.mxu0
        %v2612 = vadd.f32 0.0, %v2611
        %2613 = vdwg.mxu0
        %2614 = vmatpush.bf16.msra.mxu0 %v2568
        %2615 = vmatpush.bf16.msra.mxu0 %v2566
        %2616 = vmatpush.bf16.msra.mxu0 %v2564
        %2617 = vmatpush.bf16.msra.mxu0 %v2562
        %2618 = vmatpush.bf16.msra.mxu0 %v2560
        %2619 = vmatpush.bf16.msra.mxu0 %v2558
        %2620 = vmatpush.bf16.msra.mxu0 %v2556
        %2621 = vmatpush.bf16.msra.mxu0 %v2554
        %2622 = vmatmul.bf16.gmra.mxu0 %v2501
        %v2623 = vpop.f32.mrf.mxu0
        %v2624 = vadd.f32 0.0, %v2623
        %v2625 = vpop.f32.mrf.mxu0
        %v2626 = vadd.f32 0.0, %v2625
        %2627 = vmatmul.bf16.gmra.mxu0 %v2502
        %v2628 = vpop.f32.mrf.mxu0
        %v2629 = vadd.f32 0.0, %v2628
        %v2630 = vpop.f32.mrf.mxu0
        %v2631 = vadd.f32 0.0, %v2630
        %2632 = vmatmul.bf16.gmra.mxu0 %v2503
        %v2633 = vpop.f32.mrf.mxu0
        %v2634 = vadd.f32 0.0, %v2633
        %v2635 = vpop.f32.mrf.mxu0
        %v2636 = vadd.f32 0.0, %v2635
        %2637 = vmatmul.bf16.gmra.mxu0 %v2504
        %v2638 = vpop.f32.mrf.mxu0
        %v2639 = vadd.f32 0.0, %v2638
        %v2640 = vpop.f32.mrf.mxu0
        %v2641 = vadd.f32 0.0, %v2640
        %2642 = vdwg.mxu0
        %v2643 = vmul.f32 %v2595, 0.5
        %v2644 = vmul.f32 %v2624, 0.5
        %v2645 = vmul.f32 %v2597, 0.5
        %v2646 = vmul.f32 %v2626, 0.5
        %v2647 = vmul.f32 %v2600, 0.5
        %v2648 = vmul.f32 %v2629, 0.5
        %v2649 = vmul.f32 %v2602, 0.5
        %v2650 = vmul.f32 %v2631, 0.5
        %v2651 = vmul.f32 %v2605, 0.5
        %v2652 = vmul.f32 %v2634, 0.5
        %v2653 = vmul.f32 %v2607, 0.5
        %v2654 = vmul.f32 %v2636, 0.5
        %v2655 = vmul.f32 %v2610, 0.5
        %v2656 = vmul.f32 %v2639, 0.5
        %v2657 = vmul.f32 %v2612, 0.5
        %v2658 = vmul.f32 %v2641, 0.5
        %v2659 = vmul.f32 %v2595, 0.70710677
        %v2660 = vmul.f32 %v2624, 0.70710677
        %v2661 = vmul.f32 %v2597, 0.70710677
        %v2662 = vmul.f32 %v2626, 0.70710677
        %v2663 = vmul.f32 %v2600, 0.70710677
        %v2664 = vmul.f32 %v2629, 0.70710677
        %v2665 = vmul.f32 %v2602, 0.70710677
        %v2666 = vmul.f32 %v2631, 0.70710677
        %v2667 = vmul.f32 %v2605, 0.70710677
        %v2668 = vmul.f32 %v2634, 0.70710677
        %v2669 = vmul.f32 %v2607, 0.70710677
        %v2670 = vmul.f32 %v2636, 0.70710677
        %v2671 = vmul.f32 %v2610, 0.70710677
        %v2672 = vmul.f32 %v2639, 0.70710677
        %v2673 = vmul.f32 %v2612, 0.70710677
        %v2674 = vmul.f32 %v2641, 0.70710677
        %v2675 = vmul.f32 %v2659, %v2659
        %v2676 = vmin.f32 16.0, %v2675
        %v2677 = vmul.f32 %v2676, 2.1237322e-06
        %v2678 = vadd.f32 %v2677, 0.00028619796
        %v2679 = vmul.f32 %v2676, %v2678
        %v2680 = vadd.f32 %v2679, 0.0036580483
        %v2681 = vmul.f32 %v2676, %v2680
        %v2682 = vadd.f32 %v2681, 0.05243302
        %v2683 = vmul.f32 %v2676, %v2682
        %v2684 = vadd.f32 %v2683, 0.18741608
        %v2685 = vmul.f32 %v2676, %v2684
        %v2686 = vadd.f32 %v2685, 1.1283791
        %v2687 = vmul.f32 %v2659, %v2686
        %v2688 = vmul.f32 %v2676, 3.8918573e-05
        %v2689 = vadd.f32 %v2688, 0.001143296
        %v2690 = vmul.f32 %v2676, %v2689
        %v2691 = vadd.f32 %v2690, 0.014752088
        %v2692 = vmul.f32 %v2676, %v2691
        %v2693 = vadd.f32 %v2692, 0.112945676
        %v2694 = vmul.f32 %v2676, %v2693
        %v2695 = vadd.f32 %v2694, 0.4994258
        %v2696 = vmul.f32 %v2676, %v2695
        %v2697 = vadd.f32 %v2696, 1.0
        %v2698 = vrcp.pop %v2697
        %v2699 = vmul.f32 %v2697, %v2698
        %v2700 = vsub.f32 1.0, %v2699
        %v2701 = vmul.f32 %v2698, %v2700
        %v2702 = vadd.f32 %v2698, %v2701
        %vm2703 = vweird.f32 %v2697
        %vm2704 = vweird.f32 %v2698
        %vm2705 = vmor %vm2703, %vm2704
        %v2706 = vsel %vm2705, %v2698, %v2702
        %v2707 = vand.u32 2147483647, %v2697
        %vm2708 = vcmp.eq.f32.partialorder %v2707, 8.507059e+37
        %v2709 = vand.u32 %v2697, 2147483648
        %v2710 = vor.u32 1.1754944e-38, %v2709
        %v2711 = vsel %vm2708, %v2710, %v2706
        %v2712 = vmul.f32 %v2687, %v2711
        %v2713 = vmin.f32 %v2712, 1.0
        %v2714 = vmax.f32 %v2713, -1.0
        %v2715 = vmul.f32 %v2660, %v2660
        %v2716 = vmin.f32 16.0, %v2715
        %v2717 = vmul.f32 %v2716, 2.1237322e-06
        %v2718 = vadd.f32 %v2717, 0.00028619796
        %v2719 = vmul.f32 %v2716, %v2718
        %v2720 = vadd.f32 %v2719, 0.0036580483
        %v2721 = vmul.f32 %v2716, %v2720
        %v2722 = vadd.f32 %v2721, 0.05243302
        %v2723 = vmul.f32 %v2716, %v2722
        %v2724 = vadd.f32 %v2723, 0.18741608
        %v2725 = vmul.f32 %v2716, %v2724
        %v2726 = vadd.f32 %v2725, 1.1283791
        %v2727 = vmul.f32 %v2660, %v2726
        %v2728 = vmul.f32 %v2716, 3.8918573e-05
        %v2729 = vadd.f32 %v2728, 0.001143296
        %v2730 = vmul.f32 %v2716, %v2729
        %v2731 = vadd.f32 %v2730, 0.014752088
        %v2732 = vmul.f32 %v2716, %v2731
        %v2733 = vadd.f32 %v2732, 0.112945676
        %v2734 = vmul.f32 %v2716, %v2733
        %v2735 = vadd.f32 %v2734, 0.4994258
        %v2736 = vmul.f32 %v2716, %v2735
        %v2737 = vadd.f32 %v2736, 1.0
        %v2738 = vrcp.pop %v2737
        %v2739 = vmul.f32 %v2737, %v2738
        %v2740 = vsub.f32 1.0, %v2739
        %v2741 = vmul.f32 %v2738, %v2740
        %v2742 = vadd.f32 %v2738, %v2741
        %vm2743 = vweird.f32 %v2737
        %vm2744 = vweird.f32 %v2738
        %vm2745 = vmor %vm2743, %vm2744
        %v2746 = vsel %vm2745, %v2738, %v2742
        %v2747 = vand.u32 2147483647, %v2737
        %vm2748 = vcmp.eq.f32.partialorder %v2747, 8.507059e+37
        %v2749 = vand.u32 %v2737, 2147483648
        %v2750 = vor.u32 1.1754944e-38, %v2749
        %v2751 = vsel %vm2748, %v2750, %v2746
        %v2752 = vmul.f32 %v2727, %v2751
        %v2753 = vmin.f32 %v2752, 1.0
        %v2754 = vmax.f32 %v2753, -1.0
        %v2755 = vmul.f32 %v2661, %v2661
        %v2756 = vmin.f32 16.0, %v2755
        %v2757 = vmul.f32 %v2756, 2.1237322e-06
        %v2758 = vadd.f32 %v2757, 0.00028619796
        %v2759 = vmul.f32 %v2756, %v2758
        %v2760 = vadd.f32 %v2759, 0.0036580483
        %v2761 = vmul.f32 %v2756, %v2760
        %v2762 = vadd.f32 %v2761, 0.05243302
        %v2763 = vmul.f32 %v2756, %v2762
        %v2764 = vadd.f32 %v2763, 0.18741608
        %v2765 = vmul.f32 %v2756, %v2764
        %v2766 = vadd.f32 %v2765, 1.1283791
        %v2767 = vmul.f32 %v2661, %v2766
        %v2768 = vmul.f32 %v2756, 3.8918573e-05
        %v2769 = vadd.f32 %v2768, 0.001143296
        %v2770 = vmul.f32 %v2756, %v2769
        %v2771 = vadd.f32 %v2770, 0.014752088
        %v2772 = vmul.f32 %v2756, %v2771
        %v2773 = vadd.f32 %v2772, 0.112945676
        %v2774 = vmul.f32 %v2756, %v2773
        %v2775 = vadd.f32 %v2774, 0.4994258
        %v2776 = vmul.f32 %v2756, %v2775
        %v2777 = vadd.f32 %v2776, 1.0
        %v2778 = vrcp.pop %v2777
        %v2779 = vmul.f32 %v2777, %v2778
        %v2780 = vsub.f32 1.0, %v2779
        %v2781 = vmul.f32 %v2778, %v2780
        %v2782 = vadd.f32 %v2778, %v2781
        %vm2783 = vweird.f32 %v2777
        %vm2784 = vweird.f32 %v2778
        %vm2785 = vmor %vm2783, %vm2784
        %v2786 = vsel %vm2785, %v2778, %v2782
        %v2787 = vand.u32 2147483647, %v2777
        %vm2788 = vcmp.eq.f32.partialorder %v2787, 8.507059e+37
        %v2789 = vand.u32 %v2777, 2147483648
        %v2790 = vor.u32 1.1754944e-38, %v2789
        %v2791 = vsel %vm2788, %v2790, %v2786
        %v2792 = vmul.f32 %v2767, %v2791
        %v2793 = vmin.f32 %v2792, 1.0
        %v2794 = vmax.f32 %v2793, -1.0
        %v2795 = vmul.f32 %v2662, %v2662
        %v2796 = vmin.f32 16.0, %v2795
        %v2797 = vmul.f32 %v2796, 2.1237322e-06
        %v2798 = vadd.f32 %v2797, 0.00028619796
        %v2799 = vmul.f32 %v2796, %v2798
        %v2800 = vadd.f32 %v2799, 0.0036580483
        %v2801 = vmul.f32 %v2796, %v2800
        %v2802 = vadd.f32 %v2801, 0.05243302
        %v2803 = vmul.f32 %v2796, %v2802
        %v2804 = vadd.f32 %v2803, 0.18741608
        %v2805 = vmul.f32 %v2796, %v2804
        %v2806 = vadd.f32 %v2805, 1.1283791
        %v2807 = vmul.f32 %v2662, %v2806
        %v2808 = vmul.f32 %v2796, 3.8918573e-05
        %v2809 = vadd.f32 %v2808, 0.001143296
        %v2810 = vmul.f32 %v2796, %v2809
        %v2811 = vadd.f32 %v2810, 0.014752088
        %v2812 = vmul.f32 %v2796, %v2811
        %v2813 = vadd.f32 %v2812, 0.112945676
        %v2814 = vmul.f32 %v2796, %v2813
        %v2815 = vadd.f32 %v2814, 0.4994258
        %v2816 = vmul.f32 %v2796, %v2815
        %v2817 = vadd.f32 %v2816, 1.0
        %v2818 = vrcp.pop %v2817
        %v2819 = vmul.f32 %v2817, %v2818
        %v2820 = vsub.f32 1.0, %v2819
        %v2821 = vmul.f32 %v2818, %v2820
        %v2822 = vadd.f32 %v2818, %v2821
        %vm2823 = vweird.f32 %v2817
        %vm2824 = vweird.f32 %v2818
        %vm2825 = vmor %vm2823, %vm2824
        %v2826 = vsel %vm2825, %v2818, %v2822
        %v2827 = vand.u32 2147483647, %v2817
        %vm2828 = vcmp.eq.f32.partialorder %v2827, 8.507059e+37
        %v2829 = vand.u32 %v2817, 2147483648
        %v2830 = vor.u32 1.1754944e-38, %v2829
        %v2831 = vsel %vm2828, %v2830, %v2826
        %v2832 = vmul.f32 %v2807, %v2831
        %v2833 = vmin.f32 %v2832, 1.0
        %v2834 = vmax.f32 %v2833, -1.0
        %v2835 = vmul.f32 %v2663, %v2663
        %v2836 = vmin.f32 16.0, %v2835
        %v2837 = vmul.f32 %v2836, 2.1237322e-06
        %v2838 = vadd.f32 %v2837, 0.00028619796
        %v2839 = vmul.f32 %v2836, %v2838
        %v2840 = vadd.f32 %v2839, 0.0036580483
        %v2841 = vmul.f32 %v2836, %v2840
        %v2842 = vadd.f32 %v2841, 0.05243302
        %v2843 = vmul.f32 %v2836, %v2842
        %v2844 = vadd.f32 %v2843, 0.18741608
        %v2845 = vmul.f32 %v2836, %v2844
        %v2846 = vadd.f32 %v2845, 1.1283791
        %v2847 = vmul.f32 %v2663, %v2846
        %v2848 = vmul.f32 %v2836, 3.8918573e-05
        %v2849 = vadd.f32 %v2848, 0.001143296
        %v2850 = vmul.f32 %v2836, %v2849
        %v2851 = vadd.f32 %v2850, 0.014752088
        %v2852 = vmul.f32 %v2836, %v2851
        %v2853 = vadd.f32 %v2852, 0.112945676
        %v2854 = vmul.f32 %v2836, %v2853
        %v2855 = vadd.f32 %v2854, 0.4994258
        %v2856 = vmul.f32 %v2836, %v2855
        %v2857 = vadd.f32 %v2856, 1.0
        %v2858 = vrcp.pop %v2857
        %v2859 = vmul.f32 %v2857, %v2858
        %v2860 = vsub.f32 1.0, %v2859
        %v2861 = vmul.f32 %v2858, %v2860
        %v2862 = vadd.f32 %v2858, %v2861
        %vm2863 = vweird.f32 %v2857
        %vm2864 = vweird.f32 %v2858
        %vm2865 = vmor %vm2863, %vm2864
        %v2866 = vsel %vm2865, %v2858, %v2862
        %v2867 = vand.u32 2147483647, %v2857
        %vm2868 = vcmp.eq.f32.partialorder %v2867, 8.507059e+37
        %v2869 = vand.u32 %v2857, 2147483648
        %v2870 = vor.u32 1.1754944e-38, %v2869
        %v2871 = vsel %vm2868, %v2870, %v2866
        %v2872 = vmul.f32 %v2847, %v2871
        %v2873 = vmin.f32 %v2872, 1.0
        %v2874 = vmax.f32 %v2873, -1.0
        %v2875 = vmul.f32 %v2664, %v2664
        %v2876 = vmin.f32 16.0, %v2875
        %v2877 = vmul.f32 %v2876, 2.1237322e-06
        %v2878 = vadd.f32 %v2877, 0.00028619796
        %v2879 = vmul.f32 %v2876, %v2878
        %v2880 = vadd.f32 %v2879, 0.0036580483
        %v2881 = vmul.f32 %v2876, %v2880
        %v2882 = vadd.f32 %v2881, 0.05243302
        %v2883 = vmul.f32 %v2876, %v2882
        %v2884 = vadd.f32 %v2883, 0.18741608
        %v2885 = vmul.f32 %v2876, %v2884
        %v2886 = vadd.f32 %v2885, 1.1283791
        %v2887 = vmul.f32 %v2664, %v2886
        %v2888 = vmul.f32 %v2876, 3.8918573e-05
        %v2889 = vadd.f32 %v2888, 0.001143296
        %v2890 = vmul.f32 %v2876, %v2889
        %v2891 = vadd.f32 %v2890, 0.014752088
        %v2892 = vmul.f32 %v2876, %v2891
        %v2893 = vadd.f32 %v2892, 0.112945676
        %v2894 = vmul.f32 %v2876, %v2893
        %v2895 = vadd.f32 %v2894, 0.4994258
        %v2896 = vmul.f32 %v2876, %v2895
        %v2897 = vadd.f32 %v2896, 1.0
        %v2898 = vrcp.pop %v2897
        %v2899 = vmul.f32 %v2897, %v2898
        %v2900 = vsub.f32 1.0, %v2899
        %v2901 = vmul.f32 %v2898, %v2900
        %v2902 = vadd.f32 %v2898, %v2901
        %vm2903 = vweird.f32 %v2897
        %vm2904 = vweird.f32 %v2898
        %vm2905 = vmor %vm2903, %vm2904
        %v2906 = vsel %vm2905, %v2898, %v2902
        %v2907 = vand.u32 2147483647, %v2897
        %vm2908 = vcmp.eq.f32.partialorder %v2907, 8.507059e+37
        %v2909 = vand.u32 %v2897, 2147483648
        %v2910 = vor.u32 1.1754944e-38, %v2909
        %v2911 = vsel %vm2908, %v2910, %v2906
        %v2912 = vmul.f32 %v2887, %v2911
        %v2913 = vmin.f32 %v2912, 1.0
        %v2914 = vmax.f32 %v2913, -1.0
        %v2915 = vmul.f32 %v2665, %v2665
        %v2916 = vmin.f32 16.0, %v2915
        %v2917 = vmul.f32 %v2916, 2.1237322e-06
        %v2918 = vadd.f32 %v2917, 0.00028619796
        %v2919 = vmul.f32 %v2916, %v2918
        %v2920 = vadd.f32 %v2919, 0.0036580483
        %v2921 = vmul.f32 %v2916, %v2920
        %v2922 = vadd.f32 %v2921, 0.05243302
        %v2923 = vmul.f32 %v2916, %v2922
        %v2924 = vadd.f32 %v2923, 0.18741608
        %v2925 = vmul.f32 %v2916, %v2924
        %v2926 = vadd.f32 %v2925, 1.1283791
        %v2927 = vmul.f32 %v2665, %v2926
        %v2928 = vmul.f32 %v2916, 3.8918573e-05
        %v2929 = vadd.f32 %v2928, 0.001143296
        %v2930 = vmul.f32 %v2916, %v2929
        %v2931 = vadd.f32 %v2930, 0.014752088
        %v2932 = vmul.f32 %v2916, %v2931
        %v2933 = vadd.f32 %v2932, 0.112945676
        %v2934 = vmul.f32 %v2916, %v2933
        %v2935 = vadd.f32 %v2934, 0.4994258
        %v2936 = vmul.f32 %v2916, %v2935
        %v2937 = vadd.f32 %v2936, 1.0
        %v2938 = vrcp.pop %v2937
        %v2939 = vmul.f32 %v2937, %v2938
        %v2940 = vsub.f32 1.0, %v2939
        %v2941 = vmul.f32 %v2938, %v2940
        %v2942 = vadd.f32 %v2938, %v2941
        %vm2943 = vweird.f32 %v2937
        %vm2944 = vweird.f32 %v2938
        %vm2945 = vmor %vm2943, %vm2944
        %v2946 = vsel %vm2945, %v2938, %v2942
        %v2947 = vand.u32 2147483647, %v2937
        %vm2948 = vcmp.eq.f32.partialorder %v2947, 8.507059e+37
        %v2949 = vand.u32 %v2937, 2147483648
        %v2950 = vor.u32 1.1754944e-38, %v2949
        %v2951 = vsel %vm2948, %v2950, %v2946
        %v2952 = vmul.f32 %v2927, %v2951
        %v2953 = vmin.f32 %v2952, 1.0
        %v2954 = vmax.f32 %v2953, -1.0
        %v2955 = vmul.f32 %v2666, %v2666
        %v2956 = vmin.f32 16.0, %v2955
        %v2957 = vmul.f32 %v2956, 2.1237322e-06
        %v2958 = vadd.f32 %v2957, 0.00028619796
        %v2959 = vmul.f32 %v2956, %v2958
        %v2960 = vadd.f32 %v2959, 0.0036580483
        %v2961 = vmul.f32 %v2956, %v2960
        %v2962 = vadd.f32 %v2961, 0.05243302
        %v2963 = vmul.f32 %v2956, %v2962
        %v2964 = vadd.f32 %v2963, 0.18741608
        %v2965 = vmul.f32 %v2956, %v2964
        %v2966 = vadd.f32 %v2965, 1.1283791
        %v2967 = vmul.f32 %v2666, %v2966
        %v2968 = vmul.f32 %v2956, 3.8918573e-05
        %v2969 = vadd.f32 %v2968, 0.001143296
        %v2970 = vmul.f32 %v2956, %v2969
        %v2971 = vadd.f32 %v2970, 0.014752088
        %v2972 = vmul.f32 %v2956, %v2971
        %v2973 = vadd.f32 %v2972, 0.112945676
        %v2974 = vmul.f32 %v2956, %v2973
        %v2975 = vadd.f32 %v2974, 0.4994258
        %v2976 = vmul.f32 %v2956, %v2975
        %v2977 = vadd.f32 %v2976, 1.0
        %v2978 = vrcp.pop %v2977
        %v2979 = vmul.f32 %v2977, %v2978
        %v2980 = vsub.f32 1.0, %v2979
        %v2981 = vmul.f32 %v2978, %v2980
        %v2982 = vadd.f32 %v2978, %v2981
        %vm2983 = vweird.f32 %v2977
        %vm2984 = vweird.f32 %v2978
        %vm2985 = vmor %vm2983, %vm2984
        %v2986 = vsel %vm2985, %v2978, %v2982
        %v2987 = vand.u32 2147483647, %v2977
        %vm2988 = vcmp.eq.f32.partialorder %v2987, 8.507059e+37
        %v2989 = vand.u32 %v2977, 2147483648
        %v2990 = vor.u32 1.1754944e-38, %v2989
        %v2991 = vsel %vm2988, %v2990, %v2986
        %v2992 = vmul.f32 %v2967, %v2991
        %v2993 = vmin.f32 %v2992, 1.0
        %v2994 = vmax.f32 %v2993, -1.0
        %v2995 = vmul.f32 %v2667, %v2667
        %v2996 = vmin.f32 16.0, %v2995
        %v2997 = vmul.f32 %v2996, 2.1237322e-06
        %v2998 = vadd.f32 %v2997, 0.00028619796
        %v2999 = vmul.f32 %v2996, %v2998
        %v3000 = vadd.f32 %v2999, 0.0036580483
        %v3001 = vmul.f32 %v2996, %v3000
        %v3002 = vadd.f32 %v3001, 0.05243302
        %v3003 = vmul.f32 %v2996, %v3002
        %v3004 = vadd.f32 %v3003, 0.18741608
        %v3005 = vmul.f32 %v2996, %v3004
        %v3006 = vadd.f32 %v3005, 1.1283791
        %v3007 = vmul.f32 %v2667, %v3006
        %v3008 = vmul.f32 %v2996, 3.8918573e-05
        %v3009 = vadd.f32 %v3008, 0.001143296
        %v3010 = vmul.f32 %v2996, %v3009
        %v3011 = vadd.f32 %v3010, 0.014752088
        %v3012 = vmul.f32 %v2996, %v3011
        %v3013 = vadd.f32 %v3012, 0.112945676
        %v3014 = vmul.f32 %v2996, %v3013
        %v3015 = vadd.f32 %v3014, 0.4994258
        %v3016 = vmul.f32 %v2996, %v3015
        %v3017 = vadd.f32 %v3016, 1.0
        %v3018 = vrcp.pop %v3017
        %v3019 = vmul.f32 %v3017, %v3018
        %v3020 = vsub.f32 1.0, %v3019
        %v3021 = vmul.f32 %v3018, %v3020
        %v3022 = vadd.f32 %v3018, %v3021
        %vm3023 = vweird.f32 %v3017
        %vm3024 = vweird.f32 %v3018
        %vm3025 = vmor %vm3023, %vm3024
        %v3026 = vsel %vm3025, %v3018, %v3022
        %v3027 = vand.u32 2147483647, %v3017
        %vm3028 = vcmp.eq.f32.partialorder %v3027, 8.507059e+37
        %v3029 = vand.u32 %v3017, 2147483648
        %v3030 = vor.u32 1.1754944e-38, %v3029
        %v3031 = vsel %vm3028, %v3030, %v3026
        %v3032 = vmul.f32 %v3007, %v3031
        %v3033 = vmin.f32 %v3032, 1.0
        %v3034 = vmax.f32 %v3033, -1.0
        %v3035 = vmul.f32 %v2668, %v2668
        %v3036 = vmin.f32 16.0, %v3035
        %v3037 = vmul.f32 %v3036, 2.1237322e-06
        %v3038 = vadd.f32 %v3037, 0.00028619796
        %v3039 = vmul.f32 %v3036, %v3038
        %v3040 = vadd.f32 %v3039, 0.0036580483
        %v3041 = vmul.f32 %v3036, %v3040
        %v3042 = vadd.f32 %v3041, 0.05243302
        %v3043 = vmul.f32 %v3036, %v3042
        %v3044 = vadd.f32 %v3043, 0.18741608
        %v3045 = vmul.f32 %v3036, %v3044
        %v3046 = vadd.f32 %v3045, 1.1283791
        %v3047 = vmul.f32 %v2668, %v3046
        %v3048 = vmul.f32 %v3036, 3.8918573e-05
        %v3049 = vadd.f32 %v3048, 0.001143296
        %v3050 = vmul.f32 %v3036, %v3049
        %v3051 = vadd.f32 %v3050, 0.014752088
        %v3052 = vmul.f32 %v3036, %v3051
        %v3053 = vadd.f32 %v3052, 0.112945676
        %v3054 = vmul.f32 %v3036, %v3053
        %v3055 = vadd.f32 %v3054, 0.4994258
        %v3056 = vmul.f32 %v3036, %v3055
        %v3057 = vadd.f32 %v3056, 1.0
        %v3058 = vrcp.pop %v3057
        %v3059 = vmul.f32 %v3057, %v3058
        %v3060 = vsub.f32 1.0, %v3059
        %v3061 = vmul.f32 %v3058, %v3060
        %v3062 = vadd.f32 %v3058, %v3061
        %vm3063 = vweird.f32 %v3057
        %vm3064 = vweird.f32 %v3058
        %vm3065 = vmor %vm3063, %vm3064
        %v3066 = vsel %vm3065, %v3058, %v3062
        %v3067 = vand.u32 2147483647, %v3057
        %vm3068 = vcmp.eq.f32.partialorder %v3067, 8.507059e+37
        %v3069 = vand.u32 %v3057, 2147483648
        %v3070 = vor.u32 1.1754944e-38, %v3069
        %v3071 = vsel %vm3068, %v3070, %v3066
        %v3072 = vmul.f32 %v3047, %v3071
        %v3073 = vmin.f32 %v3072, 1.0
        %v3074 = vmax.f32 %v3073, -1.0
        %v3075 = vmul.f32 %v2669, %v2669
        %v3076 = vmin.f32 16.0, %v3075
        %v3077 = vmul.f32 %v3076, 2.1237322e-06
        %v3078 = vadd.f32 %v3077, 0.00028619796
        %v3079 = vmul.f32 %v3076, %v3078
        %v3080 = vadd.f32 %v3079, 0.0036580483
        %v3081 = vmul.f32 %v3076, %v3080
        %v3082 = vadd.f32 %v3081, 0.05243302
        %v3083 = vmul.f32 %v3076, %v3082
        %v3084 = vadd.f32 %v3083, 0.18741608
        %v3085 = vmul.f32 %v3076, %v3084
        %v3086 = vadd.f32 %v3085, 1.1283791
        %v3087 = vmul.f32 %v2669, %v3086
        %v3088 = vmul.f32 %v3076, 3.8918573e-05
        %v3089 = vadd.f32 %v3088, 0.001143296
        %v3090 = vmul.f32 %v3076, %v3089
        %v3091 = vadd.f32 %v3090, 0.014752088
        %v3092 = vmul.f32 %v3076, %v3091
        %v3093 = vadd.f32 %v3092, 0.112945676
        %v3094 = vmul.f32 %v3076, %v3093
        %v3095 = vadd.f32 %v3094, 0.4994258
        %v3096 = vmul.f32 %v3076, %v3095
        %v3097 = vadd.f32 %v3096, 1.0
        %v3098 = vrcp.pop %v3097
        %v3099 = vmul.f32 %v3097, %v3098
        %v3100 = vsub.f32 1.0, %v3099
        %v3101 = vmul.f32 %v3098, %v3100
        %v3102 = vadd.f32 %v3098, %v3101
        %vm3103 = vweird.f32 %v3097
        %vm3104 = vweird.f32 %v3098
        %vm3105 = vmor %vm3103, %vm3104
        %v3106 = vsel %vm3105, %v3098, %v3102
        %v3107 = vand.u32 2147483647, %v3097
        %vm3108 = vcmp.eq.f32.partialorder %v3107, 8.507059e+37
        %v3109 = vand.u32 %v3097, 2147483648
        %v3110 = vor.u32 1.1754944e-38, %v3109
        %v3111 = vsel %vm3108, %v3110, %v3106
        %v3112 = vmul.f32 %v3087, %v3111
        %v3113 = vmin.f32 %v3112, 1.0
        %v3114 = vmax.f32 %v3113, -1.0
        %v3115 = vmul.f32 %v2670, %v2670
        %v3116 = vmin.f32 16.0, %v3115
        %v3117 = vmul.f32 %v3116, 2.1237322e-06
        %v3118 = vadd.f32 %v3117, 0.00028619796
        %v3119 = vmul.f32 %v3116, %v3118
        %v3120 = vadd.f32 %v3119, 0.0036580483
        %v3121 = vmul.f32 %v3116, %v3120
        %v3122 = vadd.f32 %v3121, 0.05243302
        %v3123 = vmul.f32 %v3116, %v3122
        %v3124 = vadd.f32 %v3123, 0.18741608
        %v3125 = vmul.f32 %v3116, %v3124
        %v3126 = vadd.f32 %v3125, 1.1283791
        %v3127 = vmul.f32 %v2670, %v3126
        %v3128 = vmul.f32 %v3116, 3.8918573e-05
        %v3129 = vadd.f32 %v3128, 0.001143296
        %v3130 = vmul.f32 %v3116, %v3129
        %v3131 = vadd.f32 %v3130, 0.014752088
        %v3132 = vmul.f32 %v3116, %v3131
        %v3133 = vadd.f32 %v3132, 0.112945676
        %v3134 = vmul.f32 %v3116, %v3133
        %v3135 = vadd.f32 %v3134, 0.4994258
        %v3136 = vmul.f32 %v3116, %v3135
        %v3137 = vadd.f32 %v3136, 1.0
        %v3138 = vrcp.pop %v3137
        %v3139 = vmul.f32 %v3137, %v3138
        %v3140 = vsub.f32 1.0, %v3139
        %v3141 = vmul.f32 %v3138, %v3140
        %v3142 = vadd.f32 %v3138, %v3141
        %vm3143 = vweird.f32 %v3137
        %vm3144 = vweird.f32 %v3138
        %vm3145 = vmor %vm3143, %vm3144
        %v3146 = vsel %vm3145, %v3138, %v3142
        %v3147 = vand.u32 2147483647, %v3137
        %vm3148 = vcmp.eq.f32.partialorder %v3147, 8.507059e+37
        %v3149 = vand.u32 %v3137, 2147483648
        %v3150 = vor.u32 1.1754944e-38, %v3149
        %v3151 = vsel %vm3148, %v3150, %v3146
        %v3152 = vmul.f32 %v3127, %v3151
        %v3153 = vmin.f32 %v3152, 1.0
        %v3154 = vmax.f32 %v3153, -1.0
        %v3155 = vmul.f32 %v2671, %v2671
        %v3156 = vmin.f32 16.0, %v3155
        %v3157 = vmul.f32 %v3156, 2.1237322e-06
        %v3158 = vadd.f32 %v3157, 0.00028619796
        %v3159 = vmul.f32 %v3156, %v3158
        %v3160 = vadd.f32 %v3159, 0.0036580483
        %v3161 = vmul.f32 %v3156, %v3160
        %v3162 = vadd.f32 %v3161, 0.05243302
        %v3163 = vmul.f32 %v3156, %v3162
        %v3164 = vadd.f32 %v3163, 0.18741608
        %v3165 = vmul.f32 %v3156, %v3164
        %v3166 = vadd.f32 %v3165, 1.1283791
        %v3167 = vmul.f32 %v2671, %v3166
        %v3168 = vmul.f32 %v3156, 3.8918573e-05
        %v3169 = vadd.f32 %v3168, 0.001143296
        %v3170 = vmul.f32 %v3156, %v3169
        %v3171 = vadd.f32 %v3170, 0.014752088
        %v3172 = vmul.f32 %v3156, %v3171
        %v3173 = vadd.f32 %v3172, 0.112945676
        %v3174 = vmul.f32 %v3156, %v3173
        %v3175 = vadd.f32 %v3174, 0.4994258
        %v3176 = vmul.f32 %v3156, %v3175
        %v3177 = vadd.f32 %v3176, 1.0
        %v3178 = vrcp.pop %v3177
        %v3179 = vmul.f32 %v3177, %v3178
        %v3180 = vsub.f32 1.0, %v3179
        %v3181 = vmul.f32 %v3178, %v3180
        %v3182 = vadd.f32 %v3178, %v3181
        %vm3183 = vweird.f32 %v3177
        %vm3184 = vweird.f32 %v3178
        %vm3185 = vmor %vm3183, %vm3184
        %v3186 = vsel %vm3185, %v3178, %v3182
        %v3187 = vand.u32 2147483647, %v3177
        %vm3188 = vcmp.eq.f32.partialorder %v3187, 8.507059e+37
        %v3189 = vand.u32 %v3177, 2147483648
        %v3190 = vor.u32 1.1754944e-38, %v3189
        %v3191 = vsel %vm3188, %v3190, %v3186
        %v3192 = vmul.f32 %v3167, %v3191
        %v3193 = vmin.f32 %v3192, 1.0
        %v3194 = vmax.f32 %v3193, -1.0
        %v3195 = vmul.f32 %v2672, %v2672
        %v3196 = vmin.f32 16.0, %v3195
        %v3197 = vmul.f32 %v3196, 2.1237322e-06
        %v3198 = vadd.f32 %v3197, 0.00028619796
        %v3199 = vmul.f32 %v3196, %v3198
        %v3200 = vadd.f32 %v3199, 0.0036580483
        %v3201 = vmul.f32 %v3196, %v3200
        %v3202 = vadd.f32 %v3201, 0.05243302
        %v3203 = vmul.f32 %v3196, %v3202
        %v3204 = vadd.f32 %v3203, 0.18741608
        %v3205 = vmul.f32 %v3196, %v3204
        %v3206 = vadd.f32 %v3205, 1.1283791
        %v3207 = vmul.f32 %v2672, %v3206
        %v3208 = vmul.f32 %v3196, 3.8918573e-05
        %v3209 = vadd.f32 %v3208, 0.001143296
        %v3210 = vmul.f32 %v3196, %v3209
        %v3211 = vadd.f32 %v3210, 0.014752088
        %v3212 = vmul.f32 %v3196, %v3211
        %v3213 = vadd.f32 %v3212, 0.112945676
        %v3214 = vmul.f32 %v3196, %v3213
        %v3215 = vadd.f32 %v3214, 0.4994258
        %v3216 = vmul.f32 %v3196, %v3215
        %v3217 = vadd.f32 %v3216, 1.0
        %v3218 = vrcp.pop %v3217
        %v3219 = vmul.f32 %v3217, %v3218
        %v3220 = vsub.f32 1.0, %v3219
        %v3221 = vmul.f32 %v3218, %v3220
        %v3222 = vadd.f32 %v3218, %v3221
        %vm3223 = vweird.f32 %v3217
        %vm3224 = vweird.f32 %v3218
        %vm3225 = vmor %vm3223, %vm3224
        %v3226 = vsel %vm3225, %v3218, %v3222
        %v3227 = vand.u32 2147483647, %v3217
        %vm3228 = vcmp.eq.f32.partialorder %v3227, 8.507059e+37
        %v3229 = vand.u32 %v3217, 2147483648
        %v3230 = vor.u32 1.1754944e-38, %v3229
        %v3231 = vsel %vm3228, %v3230, %v3226
        %v3232 = vmul.f32 %v3207, %v3231
        %v3233 = vmin.f32 %v3232, 1.0
        %v3234 = vmax.f32 %v3233, -1.0
        %v3235 = vmul.f32 %v2673, %v2673
        %v3236 = vmin.f32 16.0, %v3235
        %v3237 = vmul.f32 %v3236, 2.1237322e-06
        %v3238 = vadd.f32 %v3237, 0.00028619796
        %v3239 = vmul.f32 %v3236, %v3238
        %v3240 = vadd.f32 %v3239, 0.0036580483
        %v3241 = vmul.f32 %v3236, %v3240
        %v3242 = vadd.f32 %v3241, 0.05243302
        %v3243 = vmul.f32 %v3236, %v3242
        %v3244 = vadd.f32 %v3243, 0.18741608
        %v3245 = vmul.f32 %v3236, %v3244
        %v3246 = vadd.f32 %v3245, 1.1283791
        %v3247 = vmul.f32 %v2673, %v3246
        %v3248 = vmul.f32 %v3236, 3.8918573e-05
        %v3249 = vadd.f32 %v3248, 0.001143296
        %v3250 = vmul.f32 %v3236, %v3249
        %v3251 = vadd.f32 %v3250, 0.014752088
        %v3252 = vmul.f32 %v3236, %v3251
        %v3253 = vadd.f32 %v3252, 0.112945676
        %v3254 = vmul.f32 %v3236, %v3253
        %v3255 = vadd.f32 %v3254, 0.4994258
        %v3256 = vmul.f32 %v3236, %v3255
        %v3257 = vadd.f32 %v3256, 1.0
        %v3258 = vrcp.pop %v3257
        %v3259 = vmul.f32 %v3257, %v3258
        %v3260 = vsub.f32 1.0, %v3259
        %v3261 = vmul.f32 %v3258, %v3260
        %v3262 = vadd.f32 %v3258, %v3261
        %vm3263 = vweird.f32 %v3257
        %vm3264 = vweird.f32 %v3258
        %vm3265 = vmor %vm3263, %vm3264
        %v3266 = vsel %vm3265, %v3258, %v3262
        %v3267 = vand.u32 2147483647, %v3257
        %vm3268 = vcmp.eq.f32.partialorder %v3267, 8.507059e+37
        %v3269 = vand.u32 %v3257, 2147483648
        %v3270 = vor.u32 1.1754944e-38, %v3269
        %v3271 = vsel %vm3268, %v3270, %v3266
        %v3272 = vmul.f32 %v3247, %v3271
        %v3273 = vmin.f32 %v3272, 1.0
        %v3274 = vmax.f32 %v3273, -1.0
        %v3275 = vmul.f32 %v2674, %v2674
        %v3276 = vmin.f32 16.0, %v3275
        %v3277 = vmul.f32 %v3276, 2.1237322e-06
        %v3278 = vadd.f32 %v3277, 0.00028619796
        %v3279 = vmul.f32 %v3276, %v3278
        %v3280 = vadd.f32 %v3279, 0.0036580483
        %v3281 = vmul.f32 %v3276, %v3280
        %v3282 = vadd.f32 %v3281, 0.05243302
        %v3283 = vmul.f32 %v3276, %v3282
        %v3284 = vadd.f32 %v3283, 0.18741608
        %v3285 = vmul.f32 %v3276, %v3284
        %v3286 = vadd.f32 %v3285, 1.1283791
        %v3287 = vmul.f32 %v2674, %v3286
        %v3288 = vmul.f32 %v3276, 3.8918573e-05
        %v3289 = vadd.f32 %v3288, 0.001143296
        %v3290 = vmul.f32 %v3276, %v3289
        %v3291 = vadd.f32 %v3290, 0.014752088
        %v3292 = vmul.f32 %v3276, %v3291
        %v3293 = vadd.f32 %v3292, 0.112945676
        %v3294 = vmul.f32 %v3276, %v3293
        %v3295 = vadd.f32 %v3294, 0.4994258
        %v3296 = vmul.f32 %v3276, %v3295
        %v3297 = vadd.f32 %v3296, 1.0
        %v3298 = vrcp.pop %v3297
        %v3299 = vmul.f32 %v3297, %v3298
        %v3300 = vsub.f32 1.0, %v3299
        %v3301 = vmul.f32 %v3298, %v3300
        %v3302 = vadd.f32 %v3298, %v3301
        %vm3303 = vweird.f32 %v3297
        %vm3304 = vweird.f32 %v3298
        %vm3305 = vmor %vm3303, %vm3304
        %v3306 = vsel %vm3305, %v3298, %v3302
        %v3307 = vand.u32 2147483647, %v3297
        %vm3308 = vcmp.eq.f32.partialorder %v3307, 8.507059e+37
        %v3309 = vand.u32 %v3297, 2147483648
        %v3310 = vor.u32 1.1754944e-38, %v3309
        %v3311 = vsel %vm3308, %v3310, %v3306
        %v3312 = vmul.f32 %v3287, %v3311
        %v3313 = vmin.f32 %v3312, 1.0
        %v3314 = vmax.f32 %v3313, -1.0
        %v3315 = vadd.f32 %v2714, 1.0
        %v3316 = vadd.f32 %v2754, 1.0
        %v3317 = vadd.f32 %v2794, 1.0
        %v3318 = vadd.f32 %v2834, 1.0
        %v3319 = vadd.f32 %v2874, 1.0
        %v3320 = vadd.f32 %v2914, 1.0
        %v3321 = vadd.f32 %v2954, 1.0
        %v3322 = vadd.f32 %v2994, 1.0
        %v3323 = vadd.f32 %v3034, 1.0
        %v3324 = vadd.f32 %v3074, 1.0
        %v3325 = vadd.f32 %v3114, 1.0
        %v3326 = vadd.f32 %v3154, 1.0
        %v3327 = vadd.f32 %v3194, 1.0
        %v3328 = vadd.f32 %v3234, 1.0
        %v3329 = vadd.f32 %v3274, 1.0
        %v3330 = vadd.f32 %v3314, 1.0
        %v3331 = vmul.f32 %v2643, %v3315
        %v3332 = vmul.f32 %v2644, %v3316
        %v3333 = vmul.f32 %v2645, %v3317
        %v3334 = vmul.f32 %v2646, %v3318
        %v3335 = vmul.f32 %v2647, %v3319
        %v3336 = vmul.f32 %v2648, %v3320
        %v3337 = vmul.f32 %v2649, %v3321
        %v3338 = vmul.f32 %v2650, %v3322
        %v3339 = vmul.f32 %v2651, %v3323
        %v3340 = vmul.f32 %v2652, %v3324
        %v3341 = vmul.f32 %v2653, %v3325
        %v3342 = vmul.f32 %v2654, %v3326
        %v3343 = vmul.f32 %v2655, %v3327
        %v3344 = vmul.f32 %v2656, %v3328
        %v3345 = vmul.f32 %v2657, %v3329
        %v3346 = vmul.f32 %v2658, %v3330
        %v3347 = vpack.c.bf16 %v3333, %v3331
        %v3348 = vpack.c.bf16 %v3334, %v3332
        %v3349 = vpack.c.bf16 %v3337, %v3335
        %v3350 = vpack.c.bf16 %v3338, %v3336
        %v3351 = vpack.c.bf16 %v3341, %v3339
        %v3352 = vpack.c.bf16 %v3342, %v3340
        %v3353 = vpack.c.bf16 %v3345, %v3343
        %v3354 = vpack.c.bf16 %v3346, %v3344
        %v3387 = vunpack.c.l.b16 %v574
        %v3388 = vunpack.c.l.b16 %v575
        %v3389 = vunpack.c.l.b16 %v576
        %v3390 = vunpack.c.l.b16 %v577
        %v3391 = vunpack.c.l.b16 %v578
        %v3392 = vunpack.c.l.b16 %v579
        %v3393 = vunpack.c.l.b16 %v580
        %v3394 = vunpack.c.l.b16 %v581
        %v3395 = vunpack.c.l.b16 %v582
        %v3396 = vunpack.c.l.b16 %v583
        %v3397 = vunpack.c.l.b16 %v584
        %v3398 = vunpack.c.l.b16 %v585
        %v3399 = vunpack.c.l.b16 %v586
        %v3400 = vunpack.c.l.b16 %v587
        %v3401 = vunpack.c.l.b16 %v588
        %v3402 = vunpack.c.l.b16 %v589
        %v3403 = vunpack.c.l.b16 %v590
        %v3404 = vunpack.c.l.b16 %v591
        %v3405 = vunpack.c.l.b16 %v592
        %v3406 = vunpack.c.l.b16 %v593
        %v3407 = vunpack.c.l.b16 %v594
        %v3408 = vunpack.c.l.b16 %v595
        %v3409 = vunpack.c.l.b16 %v596
        %v3410 = vunpack.c.l.b16 %v597
        %v3411 = vunpack.c.l.b16 %v598
        %v3412 = vunpack.c.l.b16 %v599
        %v3413 = vunpack.c.l.b16 %v600
        %v3414 = vunpack.c.l.b16 %v601
        %v3415 = vunpack.c.l.b16 %v602
        %v3416 = vunpack.c.l.b16 %v603
        %v3417 = vunpack.c.l.b16 %v604
        %v3418 = vunpack.c.l.b16 %v605
        %v3419 = vpack.c.b16 %v3388, %v3387
        %v3420 = vpack.c.b16 %v3390, %v3389
        %v3421 = vpack.c.b16 %v3392, %v3391
        %v3422 = vpack.c.b16 %v3394, %v3393
        %v3423 = vpack.c.b16 %v3396, %v3395
        %v3424 = vpack.c.b16 %v3398, %v3397
        %v3425 = vpack.c.b16 %v3400, %v3399
        %v3426 = vpack.c.b16 %v3402, %v3401
        %v3427 = vpack.c.b16 %v3404, %v3403
        %v3428 = vpack.c.b16 %v3406, %v3405
        %v3429 = vpack.c.b16 %v3408, %v3407
        %v3430 = vpack.c.b16 %v3410, %v3409
        %v3431 = vpack.c.b16 %v3412, %v3411
        %v3432 = vpack.c.b16 %v3414, %v3413
        %v3433 = vpack.c.b16 %v3416, %v3415
        %v3434 = vpack.c.b16 %v3418, %v3417
        %3451 = vmatpush.bf16.msra.mxu0 %v3426
        %3452 = vmatpush.bf16.msra.mxu0 %v3425
        %3453 = vmatpush.bf16.msra.mxu0 %v3424
        %3454 = vmatpush.bf16.msra.mxu0 %v3423
        %3455 = vmatpush.bf16.msra.mxu0 %v3422
        %3456 = vmatpush.bf16.msra.mxu0 %v3421
        %3457 = vmatpush.bf16.msra.mxu0 %v3420
        %3458 = vmatpush.bf16.msra.mxu0 %v3419
        %3459 = vmatmul.bf16.gmra.mxu0 %v3347
        %v3460 = vpop.f32.mrf.mxu0
        %v3461 = vadd.f32 %v2493, %v3460
        %v3462 = vpop.f32.mrf.mxu0
        %v3463 = vadd.f32 %v2494, %v3462
        %3464 = vmatmul.bf16.gmra.mxu0 %v3349
        %v3465 = vpop.f32.mrf.mxu0
        %v3466 = vadd.f32 %v2495, %v3465
        %v3467 = vpop.f32.mrf.mxu0
        %v3468 = vadd.f32 %v2496, %v3467
        %3469 = vmatmul.bf16.gmra.mxu0 %v3351
        %v3470 = vpop.f32.mrf.mxu0
        %v3471 = vadd.f32 %v2497, %v3470
        %v3472 = vpop.f32.mrf.mxu0
        %v3473 = vadd.f32 %v2498, %v3472
        %3474 = vmatmul.bf16.gmra.mxu0 %v3353
        %v3475 = vpop.f32.mrf.mxu0
        %v3476 = vadd.f32 %v2499, %v3475
        %v3477 = vpop.f32.mrf.mxu0
        %v3478 = vadd.f32 %v2500, %v3477
        %3479 = vdwg.mxu0
        %3480 = vmatpush.bf16.msra.mxu0 %v3434
        %3481 = vmatpush.bf16.msra.mxu0 %v3433
        %3482 = vmatpush.bf16.msra.mxu0 %v3432
        %3483 = vmatpush.bf16.msra.mxu0 %v3431
        %3484 = vmatpush.bf16.msra.mxu0 %v3430
        %3485 = vmatpush.bf16.msra.mxu0 %v3429
        %3486 = vmatpush.bf16.msra.mxu0 %v3428
        %3487 = vmatpush.bf16.msra.mxu0 %v3427
        %3488 = vmatmul.bf16.gmra.mxu0 %v3348
        %v3489 = vpop.f32.mrf.mxu0
        %v3490 = vadd.f32 %v3461, %v3489
        %v3491 = vpop.f32.mrf.mxu0
        %v3492 = vadd.f32 %v3463, %v3491
        %3493 = vmatmul.bf16.gmra.mxu0 %v3350
        %v3494 = vpop.f32.mrf.mxu0
        %v3495 = vadd.f32 %v3466, %v3494
        %v3496 = vpop.f32.mrf.mxu0
        %v3497 = vadd.f32 %v3468, %v3496
        %3498 = vmatmul.bf16.gmra.mxu0 %v3352
        %v3499 = vpop.f32.mrf.mxu0
        %v3500 = vadd.f32 %v3471, %v3499
        %v3501 = vpop.f32.mrf.mxu0
        %v3502 = vadd.f32 %v3473, %v3501
        %3503 = vmatmul.bf16.gmra.mxu0 %v3354
        %v3504 = vpop.f32.mrf.mxu0
        %v3505 = vadd.f32 %v3476, %v3504
        %v3506 = vpop.f32.mrf.mxu0
        %v3507 = vadd.f32 %v3478, %v3506
        %3508 = vdwg.mxu0
        %3509 = vadd.xlane.f32.xlu0 %v3490
        %v3510 = vpop.xlane.xlu0 %3509
        %3511 = vadd.xlane.f32.xlu0 %v3492
        %v3512 = vpop.xlane.xlu0 %3511
        %3513 = vadd.xlane.f32.xlu0 %v3495
        %v3514 = vpop.xlane.xlu0 %3513
        %3515 = vadd.xlane.f32.xlu0 %v3497
        %v3516 = vpop.xlane.xlu0 %3515
        %3517 = vadd.xlane.f32.xlu0 %v3500
        %v3518 = vpop.xlane.xlu0 %3517
        %3519 = vadd.xlane.f32.xlu0 %v3502
        %v3520 = vpop.xlane.xlu0 %3519
        %3521 = vadd.xlane.f32.xlu0 %v3505
        %v3522 = vpop.xlane.xlu0 %3521
        %3523 = vadd.xlane.f32.xlu0 %v3507
        %v3524 = vpop.xlane.xlu0 %3523
        %v3525 = vmul.f32 %v3510, %v2356
        %v3526 = vmul.f32 %v3512, %v2356
        %v3527 = vmul.f32 %v3514, %v2356
        %v3528 = vmul.f32 %v3516, %v2356
        %v3529 = vmul.f32 %v3518, %v2356
        %v3530 = vmul.f32 %v3520, %v2356
        %v3531 = vmul.f32 %v3522, %v2356
        %v3532 = vmul.f32 %v3524, %v2356
        %v3533 = vsub.f32 %v3490, %v3525
        %v3534 = vsub.f32 %v3492, %v3526
        %v3535 = vsub.f32 %v3495, %v3527
        %v3536 = vsub.f32 %v3497, %v3528
        %v3537 = vsub.f32 %v3500, %v3529
        %v3538 = vsub.f32 %v3502, %v3530
        %v3539 = vsub.f32 %v3505, %v3531
        %v3540 = vsub.f32 %v3507, %v3532
        %v3541 = vmul.f32 %v3533, %v3533
        %v3542 = vmul.f32 %v3534, %v3534
        %v3543 = vmul.f32 %v3535, %v3535
        %v3544 = vmul.f32 %v3536, %v3536
        %v3545 = vmul.f32 %v3537, %v3537
        %v3546 = vmul.f32 %v3538, %v3538
        %v3547 = vmul.f32 %v3539, %v3539
        %v3548 = vmul.f32 %v3540, %v3540
        %3549 = vadd.xlane.f32.xlu0 %v3541
        %v3550 = vpop.xlane.xlu0 %3549
        %3551 = vadd.xlane.f32.xlu0 %v3542
        %v3552 = vpop.xlane.xlu0 %3551
        %3553 = vadd.xlane.f32.xlu0 %v3543
        %v3554 = vpop.xlane.xlu0 %3553
        %3555 = vadd.xlane.f32.xlu0 %v3544
        %v3556 = vpop.xlane.xlu0 %3555
        %3557 = vadd.xlane.f32.xlu0 %v3545
        %v3558 = vpop.xlane.xlu0 %3557
        %3559 = vadd.xlane.f32.xlu0 %v3546
        %v3560 = vpop.xlane.xlu0 %3559
        %3561 = vadd.xlane.f32.xlu0 %v3547
        %v3562 = vpop.xlane.xlu0 %3561
        %3563 = vadd.xlane.f32.xlu0 %v3548
        %v3564 = vpop.xlane.xlu0 %3563
        %v3565 = vmul.f32 %v3550, %v2356
        %v3566 = vmul.f32 %v3552, %v2356
        %v3567 = vmul.f32 %v3554, %v2356
        %v3568 = vmul.f32 %v3556, %v2356
        %v3569 = vmul.f32 %v3558, %v2356
        %v3570 = vmul.f32 %v3560, %v2356
        %v3571 = vmul.f32 %v3562, %v2356
        %v3572 = vmul.f32 %v3564, %v2356
        %v3573 = vadd.f32 %v3565, 1e-05
        %v3574 = vadd.f32 %v3566, 1e-05
        %v3575 = vadd.f32 %v3567, 1e-05
        %v3576 = vadd.f32 %v3568, 1e-05
        %v3577 = vadd.f32 %v3569, 1e-05
        %v3578 = vadd.f32 %v3570, 1e-05
        %v3579 = vadd.f32 %v3571, 1e-05
        %v3580 = vadd.f32 %v3572, 1e-05
        %v3581 = vrsqrt.pop %v3573
        %v3582 = vmul.f32 %v3581, %v3573
        %v3583 = vmul.f32 %v3582, %v3581
        %v3584 = vmul.f32 0.5, %v3583
        %v3585 = vsub.f32 1.5, %v3584
        %v3586 = vmul.f32 %v3581, %v3585
        %vm3587 = vweird.f32 %v3573
        %vm3588 = vweird.f32 %v3581
        %vm3589 = vmor %vm3587, %vm3588
        %v3590 = vsel %vm3589, %v3581, %v3586
        %v3591 = vrsqrt.pop %v3574
        %v3592 = vmul.f32 %v3591, %v3574
        %v3593 = vmul.f32 %v3592, %v3591
        %v3594 = vmul.f32 0.5, %v3593
        %v3595 = vsub.f32 1.5, %v3594
        %v3596 = vmul.f32 %v3591, %v3595
        %vm3597 = vweird.f32 %v3574
        %vm3598 = vweird.f32 %v3591
        %vm3599 = vmor %vm3597, %vm3598
        %v3600 = vsel %vm3599, %v3591, %v3596
        %v3601 = vrsqrt.pop %v3575
        %v3602 = vmul.f32 %v3601, %v3575
        %v3603 = vmul.f32 %v3602, %v3601
        %v3604 = vmul.f32 0.5, %v3603
        %v3605 = vsub.f32 1.5, %v3604
        %v3606 = vmul.f32 %v3601, %v3605
        %vm3607 = vweird.f32 %v3575
        %vm3608 = vweird.f32 %v3601
        %vm3609 = vmor %vm3607, %vm3608
        %v3610 = vsel %vm3609, %v3601, %v3606
        %v3611 = vrsqrt.pop %v3576
        %v3612 = vmul.f32 %v3611, %v3576
        %v3613 = vmul.f32 %v3612, %v3611
        %v3614 = vmul.f32 0.5, %v3613
        %v3615 = vsub.f32 1.5, %v3614
        %v3616 = vmul.f32 %v3611, %v3615
        %vm3617 = vweird.f32 %v3576
        %vm3618 = vweird.f32 %v3611
        %vm3619 = vmor %vm3617, %vm3618
        %v3620 = vsel %vm3619, %v3611, %v3616
        %v3621 = vrsqrt.pop %v3577
        %v3622 = vmul.f32 %v3621, %v3577
        %v3623 = vmul.f32 %v3622, %v3621
        %v3624 = vmul.f32 0.5, %v3623
        %v3625 = vsub.f32 1.5, %v3624
        %v3626 = vmul.f32 %v3621, %v3625
        %vm3627 = vweird.f32 %v3577
        %vm3628 = vweird.f32 %v3621
        %vm3629 = vmor %vm3627, %vm3628
        %v3630 = vsel %vm3629, %v3621, %v3626
        %v3631 = vrsqrt.pop %v3578
        %v3632 = vmul.f32 %v3631, %v3578
        %v3633 = vmul.f32 %v3632, %v3631
        %v3634 = vmul.f32 0.5, %v3633
        %v3635 = vsub.f32 1.5, %v3634
        %v3636 = vmul.f32 %v3631, %v3635
        %vm3637 = vweird.f32 %v3578
        %vm3638 = vweird.f32 %v3631
        %vm3639 = vmor %vm3637, %vm3638
        %v3640 = vsel %vm3639, %v3631, %v3636
        %v3641 = vrsqrt.pop %v3579
        %v3642 = vmul.f32 %v3641, %v3579
        %v3643 = vmul.f32 %v3642, %v3641
        %v3644 = vmul.f32 0.5, %v3643
        %v3645 = vsub.f32 1.5, %v3644
        %v3646 = vmul.f32 %v3641, %v3645
        %vm3647 = vweird.f32 %v3579
        %vm3648 = vweird.f32 %v3641
        %vm3649 = vmor %vm3647, %vm3648
        %v3650 = vsel %vm3649, %v3641, %v3646
        %v3651 = vrsqrt.pop %v3580
        %v3652 = vmul.f32 %v3651, %v3580
        %v3653 = vmul.f32 %v3652, %v3651
        %v3654 = vmul.f32 0.5, %v3653
        %v3655 = vsub.f32 1.5, %v3654
        %v3656 = vmul.f32 %v3651, %v3655
        %vm3657 = vweird.f32 %v3580
        %vm3658 = vweird.f32 %v3651
        %vm3659 = vmor %vm3657, %vm3658
        %v3660 = vsel %vm3659, %v3651, %v3656
        %v3661 = vmul.f32 %v3533, %v3590
        %v3662 = vmul.f32 %v3534, %v3600
        %v3663 = vmul.f32 %v3535, %v3610
        %v3664 = vmul.f32 %v3536, %v3620
        %v3665 = vmul.f32 %v3537, %v3630
        %v3666 = vmul.f32 %v3538, %v3640
        %v3667 = vmul.f32 %v3539, %v3650
        %v3668 = vmul.f32 %v3540, %v3660
        %s3669 = scalar_lea.vmem %s3, 192
        %v3670 = vld [vmem:[%s3669] sm:$0xff]
        %v3671 = vld [vmem:[%s3669 + $0x8] sm:$0xf]
        %v3672 = vld [vmem:[%s3669 + $0xc] sm:$0xff]
        %v3673 = vld [vmem:[%s3669 + $0x14] sm:$0xf]
        %v3674 = vld [vmem:[%s3669 + $0x18] sm:$0xff]
        %v3675 = vld [vmem:[%s3669 + $0x20] sm:$0xf]
        %v3676 = vld [vmem:[%s3669 + $0x24] sm:$0xff]
        %v3677 = vld [vmem:[%s3669 + $0x2c] sm:$0xf]
        %v3678 = vld [vmem:[%s3669 + $0x30] sm:$0xff]
        %v3679 = vld [vmem:[%s3669 + $0x38] sm:$0xf]
        %v3680 = vld [vmem:[%s3669 + $0x3c] sm:$0xff]
        %v3681 = vld [vmem:[%s3669 + $0x44] sm:$0xf]
        %v3682 = vld [vmem:[%s3669 + $0x48] sm:$0xff]
        %v3683 = vld [vmem:[%s3669 + $0x50] sm:$0xf]
        %v3684 = vld [vmem:[%s3669 + $0x54] sm:$0xff]
        %v3685 = vld [vmem:[%s3669 + $0x5c] sm:$0xf]
        %v3686 = vld [vmem:[%s3669 + $0x60] sm:$0xff]
        %v3687 = vld [vmem:[%s3669 + $0x68] sm:$0xf]
        %v3688 = vld [vmem:[%s3669 + $0x6c] sm:$0xff]
        %v3689 = vld [vmem:[%s3669 + $0x74] sm:$0xf]
        %v3690 = vld [vmem:[%s3669 + $0x78] sm:$0xff]
        %v3691 = vld [vmem:[%s3669 + $0x80] sm:$0xf]
        %v3692 = vld [vmem:[%s3669 + $0x84] sm:$0xff]
        %v3693 = vld [vmem:[%s3669 + $0x8c] sm:$0xf]
        %v3694 = vld [vmem:[%s3669 + $0x90] sm:$0xff]
        %v3695 = vld [vmem:[%s3669 + $0x98] sm:$0xf]
        %v3696 = vld [vmem:[%s3669 + $0x9c] sm:$0xff]
        %v3697 = vld [vmem:[%s3669 + $0xa4] sm:$0xf]
        %v3698 = vld [vmem:[%s3669 + $0xa8] sm:$0xff]
        %v3699 = vld [vmem:[%s3669 + $0xb0] sm:$0xf]
        %v3700 = vld [vmem:[%s3669 + $0xb4] sm:$0xff]
        %v3701 = vld [vmem:[%s3669 + $0xbc] sm:$0xf]
        %s3702 = scalar_lea.vmem [#allocation2], 64
        %v3703 = vld [vmem:[%s3702] sm:$0xf]
        %v3704 = vld [vmem:[%s3702 + $0x4] sm:$0xf]
        %v3705 = vld [vmem:[%s3702 + $0x8] sm:$0xf]
        %v3706 = vld [vmem:[%s3702 + $0xc] sm:$0xf]
        %v3707 = vld [vmem:[%s3702 + $0x10] sm:$0xf]
        %v3708 = vld [vmem:[%s3702 + $0x14] sm:$0xf]
        %v3709 = vld [vmem:[%s3702 + $0x18] sm:$0xf]
        %v3710 = vld [vmem:[%s3702 + $0x1c] sm:$0xf]
        %v3711 = vld [vmem:[%s3702 + $0x20] sm:$0xf]
        %v3712 = vld [vmem:[%s3702 + $0x24] sm:$0xf]
        %v3713 = vld [vmem:[%s3702 + $0x28] sm:$0xf]
        %v3714 = vld [vmem:[%s3702 + $0x2c] sm:$0xf]
        %v3715 = vld [vmem:[%s3702 + $0x30] sm:$0xf]
        %v3716 = vld [vmem:[%s3702 + $0x34] sm:$0xf]
        %v3717 = vld [vmem:[%s3702 + $0x38] sm:$0xf]
        %v3718 = vld [vmem:[%s3702 + $0x3c] sm:$0xf]
        %s3719 = scalar_lea.vmem [#allocation5], 128
        %v3720 = vld [vmem:[%s3719] sm:$0xff]
        %v3721 = vld [vmem:[%s3719 + $0x8] sm:$0xff]
        %v3722 = vld [vmem:[%s3719 + $0x10] sm:$0xff]
        %v3723 = vld [vmem:[%s3719 + $0x18] sm:$0xff]
        %v3724 = vld [vmem:[%s3719 + $0x20] sm:$0xff]
        %v3725 = vld [vmem:[%s3719 + $0x28] sm:$0xff]
        %v3726 = vld [vmem:[%s3719 + $0x30] sm:$0xff]
        %v3727 = vld [vmem:[%s3719 + $0x38] sm:$0xff]
        %v3728 = vld [vmem:[%s3719 + $0x40] sm:$0xff]
        %v3729 = vld [vmem:[%s3719 + $0x48] sm:$0xff]
        %v3730 = vld [vmem:[%s3719 + $0x50] sm:$0xff]
        %v3731 = vld [vmem:[%s3719 + $0x58] sm:$0xff]
        %v3732 = vld [vmem:[%s3719 + $0x60] sm:$0xff]
        %v3733 = vld [vmem:[%s3719 + $0x68] sm:$0xff]
        %v3734 = vld [vmem:[%s3719 + $0x70] sm:$0xff]
        %v3735 = vld [vmem:[%s3719 + $0x78] sm:$0xff]
        %s3736 = scalar_lea.vmem [#allocation7], 128
        %v3737 = vld [vmem:[%s3736] sm:$0xf]
        %v3738 = vld [vmem:[%s3736 + $0x4] sm:$0xf]
        %v3739 = vld [vmem:[%s3736 + $0x8] sm:$0xf]
        %v3740 = vld [vmem:[%s3736 + $0xc] sm:$0xf]
        %v3741 = vld [vmem:[%s3736 + $0x10] sm:$0xf]
        %v3742 = vld [vmem:[%s3736 + $0x14] sm:$0xf]
        %v3743 = vld [vmem:[%s3736 + $0x18] sm:$0xf]
        %v3744 = vld [vmem:[%s3736 + $0x1c] sm:$0xf]
        %v3745 = vld [vmem:[%s3736 + $0x20] sm:$0xf]
        %v3746 = vld [vmem:[%s3736 + $0x24] sm:$0xf]
        %v3747 = vld [vmem:[%s3736 + $0x28] sm:$0xf]
        %v3748 = vld [vmem:[%s3736 + $0x2c] sm:$0xf]
        %v3749 = vld [vmem:[%s3736 + $0x30] sm:$0xf]
        %v3750 = vld [vmem:[%s3736 + $0x34] sm:$0xf]
        %v3751 = vld [vmem:[%s3736 + $0x38] sm:$0xf]
        %v3752 = vld [vmem:[%s3736 + $0x3c] sm:$0xf]
        %v3753 = vld [vmem:[%s3736 + $0x40] sm:$0xf]
        %v3754 = vld [vmem:[%s3736 + $0x44] sm:$0xf]
        %v3755 = vld [vmem:[%s3736 + $0x48] sm:$0xf]
        %v3756 = vld [vmem:[%s3736 + $0x4c] sm:$0xf]
        %v3757 = vld [vmem:[%s3736 + $0x50] sm:$0xf]
        %v3758 = vld [vmem:[%s3736 + $0x54] sm:$0xf]
        %v3759 = vld [vmem:[%s3736 + $0x58] sm:$0xf]
        %v3760 = vld [vmem:[%s3736 + $0x5c] sm:$0xf]
        %v3761 = vld [vmem:[%s3736 + $0x60] sm:$0xf]
        %v3762 = vld [vmem:[%s3736 + $0x64] sm:$0xf]
        %v3763 = vld [vmem:[%s3736 + $0x68] sm:$0xf]
        %v3764 = vld [vmem:[%s3736 + $0x6c] sm:$0xf]
        %v3765 = vld [vmem:[%s3736 + $0x70] sm:$0xf]
        %v3766 = vld [vmem:[%s3736 + $0x74] sm:$0xf]
        %v3767 = vld [vmem:[%s3736 + $0x78] sm:$0xf]
        %v3768 = vld [vmem:[%s3736 + $0x7c] sm:$0xf]
        %v3769 = vpack.c.bf16 %v3662, %v3661
        %v3770 = vpack.c.bf16 %v3664, %v3663
        %v3771 = vpack.c.bf16 %v3666, %v3665
        %v3772 = vpack.c.bf16 %v3668, %v3667
        %v3805 = vunpack.c.l.b16 %v3670
        %v3806 = vunpack.c.h.b16 %v3670
        %v3807 = vunpack.c.l.b16 %v3671
        %v3808 = vunpack.c.l.b16 %v3672
        %v3809 = vunpack.c.h.b16 %v3672
        %v3810 = vunpack.c.l.b16 %v3673
        %v3811 = vunpack.c.l.b16 %v3674
        %v3812 = vunpack.c.h.b16 %v3674
        %v3813 = vunpack.c.l.b16 %v3675
        %v3814 = vunpack.c.l.b16 %v3676
        %v3815 = vunpack.c.h.b16 %v3676
        %v3816 = vunpack.c.l.b16 %v3677
        %v3817 = vunpack.c.l.b16 %v3678
        %v3818 = vunpack.c.h.b16 %v3678
        %v3819 = vunpack.c.l.b16 %v3679
        %v3820 = vunpack.c.l.b16 %v3680
        %v3821 = vunpack.c.h.b16 %v3680
        %v3822 = vunpack.c.l.b16 %v3681
        %v3823 = vunpack.c.l.b16 %v3682
        %v3824 = vunpack.c.h.b16 %v3682
        %v3825 = vunpack.c.l.b16 %v3683
        %v3826 = vunpack.c.l.b16 %v3684
        %v3827 = vunpack.c.h.b16 %v3684
        %v3828 = vunpack.c.l.b16 %v3685
        %v3829 = vunpack.c.l.b16 %v3686
        %v3830 = vunpack.c.h.b16 %v3686
        %v3831 = vunpack.c.l.b16 %v3687
        %v3832 = vunpack.c.l.b16 %v3688
        %v3833 = vunpack.c.h.b16 %v3688
        %v3834 = vunpack.c.l.b16 %v3689
        %v3835 = vunpack.c.l.b16 %v3690
        %v3836 = vunpack.c.h.b16 %v3690
        %v3837 = vunpack.c.l.b16 %v3691
        %v3838 = vunpack.c.l.b16 %v3692
        %v3839 = vunpack.c.h.b16 %v3692
        %v3840 = vunpack.c.l.b16 %v3693
        %v3841 = vunpack.c.l.b16 %v3694
        %v3842 = vunpack.c.h.b16 %v3694
        %v3843 = vunpack.c.l.b16 %v3695
        %v3844 = vunpack.c.l.b16 %v3696
        %v3845 = vunpack.c.h.b16 %v3696
        %v3846 = vunpack.c.l.b16 %v3697
        %v3847 = vunpack.c.l.b16 %v3698
        %v3848 = vunpack.c.h.b16 %v3698
        %v3849 = vunpack.c.l.b16 %v3699
        %v3850 = vunpack.c.l.b16 %v3700
        %v3851 = vunpack.c.h.b16 %v3700
        %v3852 = vunpack.c.l.b16 %v3701
        %v3853 = vpack.c.b16 %v3808, %v3805
        %v3854 = vpack.c.b16 %v3809, %v3806
        %v3855 = vpack.c.b16 %v3810, %v3807
        %v3856 = vpack.c.b16 %v3814, %v3811
        %v3857 = vpack.c.b16 %v3815, %v3812
        %v3858 = vpack.c.b16 %v3816, %v3813
        %v3859 = vpack.c.b16 %v3820, %v3817
        %v3860 = vpack.c.b16 %v3821, %v3818
        %v3861 = vpack.c.b16 %v3822, %v3819
        %v3862 = vpack.c.b16 %v3826, %v3823
        %v3863 = vpack.c.b16 %v3827, %v3824
        %v3864 = vpack.c.b16 %v3828, %v3825
        %v3865 = vpack.c.b16 %v3832, %v3829
        %v3866 = vpack.c.b16 %v3833, %v3830
        %v3867 = vpack.c.b16 %v3834, %v3831
        %v3868 = vpack.c.b16 %v3838, %v3835
        %v3869 = vpack.c.b16 %v3839, %v3836
        %v3870 = vpack.c.b16 %v3840, %v3837
        %v3871 = vpack.c.b16 %v3844, %v3841
        %v3872 = vpack.c.b16 %v3845, %v3842
        %v3873 = vpack.c.b16 %v3846, %v3843
        %v3874 = vpack.c.b16 %v3850, %v3847
        %v3875 = vpack.c.b16 %v3851, %v3848
        %v3876 = vpack.c.b16 %v3852, %v3849
        %3901 = vmatpush.bf16.msra.mxu0 %v3874
        %3902 = vmatpush.bf16.msra.mxu0 %v3871
        %3903 = vmatpush.bf16.msra.mxu0 %v3868
        %3904 = vmatpush.bf16.msra.mxu0 %v3865
        %3905 = vmatpush.bf16.msra.mxu0 %v3862
        %3906 = vmatpush.bf16.msra.mxu0 %v3859
        %3907 = vmatpush.bf16.msra.mxu0 %v3856
        %3908 = vmatpush.bf16.msra.mxu0 %v3853
        %3909 = vmatmul.bf16.gmra.mxu0 %v3769
        %v3910 = vpop.f32.mrf.mxu0
        %v3911 = vadd.f32 0.0, %v3910
        %v3912 = vpop.f32.mrf.mxu0
        %v3913 = vadd.f32 0.0, %v3912
        %3914 = vmatmul.bf16.gmra.mxu0 %v3770
        %v3915 = vpop.f32.mrf.mxu0
        %v3916 = vadd.f32 0.0, %v3915
        %v3917 = vpop.f32.mrf.mxu0
        %v3918 = vadd.f32 0.0, %v3917
        %3919 = vmatmul.bf16.gmra.mxu0 %v3771
        %v3920 = vpop.f32.mrf.mxu0
        %v3921 = vadd.f32 0.0, %v3920
        %v3922 = vpop.f32.mrf.mxu0
        %v3923 = vadd.f32 0.0, %v3922
        %3924 = vmatmul.bf16.gmra.mxu0 %v3772
        %v3925 = vpop.f32.mrf.mxu0
        %v3926 = vadd.f32 0.0, %v3925
        %v3927 = vpop.f32.mrf.mxu0
        %v3928 = vadd.f32 0.0, %v3927
        %3929 = vdwg.mxu0
        %3930 = vmatpush.bf16.msra.mxu0 %v3875
        %3931 = vmatpush.bf16.msra.mxu0 %v3872
        %3932 = vmatpush.bf16.msra.mxu0 %v3869
        %3933 = vmatpush.bf16.msra.mxu0 %v3866
        %3934 = vmatpush.bf16.msra.mxu0 %v3863
        %3935 = vmatpush.bf16.msra.mxu0 %v3860
        %3936 = vmatpush.bf16.msra.mxu0 %v3857
        %3937 = vmatpush.bf16.msra.mxu0 %v3854
        %3938 = vmatmul.bf16.gmra.mxu0 %v3769
        %v3939 = vpop.f32.mrf.mxu0
        %v3940 = vadd.f32 0.0, %v3939
        %v3941 = vpop.f32.mrf.mxu0
        %v3942 = vadd.f32 0.0, %v3941
        %3943 = vmatmul.bf16.gmra.mxu0 %v3770
        %v3944 = vpop.f32.mrf.mxu0
        %v3945 = vadd.f32 0.0, %v3944
        %v3946 = vpop.f32.mrf.mxu0
        %v3947 = vadd.f32 0.0, %v3946
        %3948 = vmatmul.bf16.gmra.mxu0 %v3771
        %v3949 = vpop.f32.mrf.mxu0
        %v3950 = vadd.f32 0.0, %v3949
        %v3951 = vpop.f32.mrf.mxu0
        %v3952 = vadd.f32 0.0, %v3951
        %3953 = vmatmul.bf16.gmra.mxu0 %v3772
        %v3954 = vpop.f32.mrf.mxu0
        %v3955 = vadd.f32 0.0, %v3954
        %v3956 = vpop.f32.mrf.mxu0
        %v3957 = vadd.f32 0.0, %v3956
        %3958 = vdwg.mxu0
        %3959 = vmatpush.bf16.msra.mxu0 %v3876
        %3960 = vmatpush.bf16.msra.mxu0 %v3873
        %3961 = vmatpush.bf16.msra.mxu0 %v3870
        %3962 = vmatpush.bf16.msra.mxu0 %v3867
        %3963 = vmatpush.bf16.msra.mxu0 %v3864
        %3964 = vmatpush.bf16.msra.mxu0 %v3861
        %3965 = vmatpush.bf16.msra.mxu0 %v3858
        %3966 = vmatpush.bf16.msra.mxu0 %v3855
        %3967 = vmatmul.bf16.gmra.mxu0 %v3769
        %v3968 = vpop.f32.mrf.mxu0
        %v3969 = vadd.f32 0.0, %v3968
        %v3970 = vpop.f32.mrf.mxu0
        %v3971 = vadd.f32 0.0, %v3970
        %3972 = vmatmul.bf16.gmra.mxu0 %v3770
        %v3973 = vpop.f32.mrf.mxu0
        %v3974 = vadd.f32 0.0, %v3973
        %v3975 = vpop.f32.mrf.mxu0
        %v3976 = vadd.f32 0.0, %v3975
        %3977 = vmatmul.bf16.gmra.mxu0 %v3771
        %v3978 = vpop.f32.mrf.mxu0
        %v3979 = vadd.f32 0.0, %v3978
        %v3980 = vpop.f32.mrf.mxu0
        %v3981 = vadd.f32 0.0, %v3980
        %3982 = vmatmul.bf16.gmra.mxu0 %v3772
        %v3983 = vpop.f32.mrf.mxu0
        %v3984 = vadd.f32 0.0, %v3983
        %v3985 = vpop.f32.mrf.mxu0
        %v3986 = vadd.f32 0.0, %v3985
        %3987 = vdwg.mxu0
        %v3988 = vpack.c.bf16 %v3940, %v3911
        %v3989 = vpack.c.bf16 %v3969, %v3969
        %v3990 = vpack.c.bf16 %v3942, %v3913
        %v3991 = vpack.c.bf16 %v3971, %v3971
        %v3992 = vpack.c.bf16 %v3945, %v3916
        %v3993 = vpack.c.bf16 %v3974, %v3974
        %v3994 = vpack.c.bf16 %v3947, %v3918
        %v3995 = vpack.c.bf16 %v3976, %v3976
        %v3996 = vpack.c.bf16 %v3950, %v3921
        %v3997 = vpack.c.bf16 %v3979, %v3979
        %v3998 = vpack.c.bf16 %v3952, %v3923
        %v3999 = vpack.c.bf16 %v3981, %v3981
        %v4000 = vpack.c.bf16 %v3955, %v3926
        %v4001 = vpack.c.bf16 %v3984, %v3984
        %v4002 = vpack.c.bf16 %v3957, %v3928
        %v4003 = vpack.c.bf16 %v3986, %v3986
        %v4012 = vrot.slane %v3988, 4
        %v4013 = vrot.slane %v3990, 4
        %v4014 = vrot.slane %v3992, 4
        %v4015 = vrot.slane %v3994, 4
        %v4016 = vrot.slane %v3996, 4
        %v4017 = vrot.slane %v3998, 4
        %v4018 = vrot.slane %v4000, 4
        %v4019 = vrot.slane %v4002, 4
        %v4020 = vunpack.c.l.b16 %v3988
        %v4021 = vunpack.c.l.b16 %v3990
        %v4022 = vpack.c.b16 %v4021, %v4020
        %v4023 = vunpack.c.l.b16 %v4012
        %v4024 = vunpack.c.l.b16 %v4013
        %v4025 = vpack.c.b16 %v4024, %v4023
        %v4027 = vsel %vm863, %v4022, 0
        %v4030 = vsel %vm863, %v4025, 0
        %4032 = vmatpush.bf16.xpose.msra.mxu0 0
        %4033 = vmatpush.bf16.xpose.msra.mxu0 0
        %4034 = vmatpush.bf16.xpose.msra.mxu0 0
        %4035 = vmatpush.bf16.xpose.msra.mxu0 0
        %4036 = vmatpush.bf16.xpose.msra.mxu0 0
        %4037 = vmatpush.bf16.xpose.msra.mxu0 0
        %4038 = vmatpush.bf16.xpose.msra.mxu0 0
        %4039 = vmatpush.bf16.xpose.msra.mxu0 %v4030
        %4040 = vmatmul.bf16.gmra.mxu0 %v4027
        %v4041 = vpop.f32.mrf.mxu0
        %v4042 = vadd.f32 0.0, %v4041
        %v4043 = vpop.f32.mrf.mxu0
        %v4044 = vadd.f32 0.0, %v4043
        %4045 = vdwg.mxu0
        %v4046 = vunpack.c.l.b16 %v3992
        %v4047 = vunpack.c.l.b16 %v3994
        %v4048 = vpack.c.b16 %v4047, %v4046
        %v4049 = vunpack.c.l.b16 %v4014
        %v4050 = vunpack.c.l.b16 %v4015
        %v4051 = vpack.c.b16 %v4050, %v4049
        %v4053 = vsel %vm863, %v4048, 0
        %v4056 = vsel %vm863, %v4051, 0
        %4058 = vmatpush.bf16.xpose.msra.mxu0 0
        %4059 = vmatpush.bf16.xpose.msra.mxu0 0
        %4060 = vmatpush.bf16.xpose.msra.mxu0 0
        %4061 = vmatpush.bf16.xpose.msra.mxu0 0
        %4062 = vmatpush.bf16.xpose.msra.mxu0 0
        %4063 = vmatpush.bf16.xpose.msra.mxu0 0
        %4064 = vmatpush.bf16.xpose.msra.mxu0 0
        %4065 = vmatpush.bf16.xpose.msra.mxu0 %v4056
        %4066 = vmatmul.bf16.gmra.mxu0 %v4053
        %v4067 = vpop.f32.mrf.mxu0
        %v4068 = vadd.f32 0.0, %v4067
        %v4069 = vpop.f32.mrf.mxu0
        %v4070 = vadd.f32 0.0, %v4069
        %4071 = vdwg.mxu0
        %v4072 = vunpack.c.l.b16 %v3996
        %v4073 = vunpack.c.l.b16 %v3998
        %v4074 = vpack.c.b16 %v4073, %v4072
        %v4075 = vunpack.c.l.b16 %v4016
        %v4076 = vunpack.c.l.b16 %v4017
        %v4077 = vpack.c.b16 %v4076, %v4075
        %v4079 = vsel %vm863, %v4074, 0
        %v4082 = vsel %vm863, %v4077, 0
        %4084 = vmatpush.bf16.xpose.msra.mxu0 0
        %4085 = vmatpush.bf16.xpose.msra.mxu0 0
        %4086 = vmatpush.bf16.xpose.msra.mxu0 0
        %4087 = vmatpush.bf16.xpose.msra.mxu0 0
        %4088 = vmatpush.bf16.xpose.msra.mxu0 0
        %4089 = vmatpush.bf16.xpose.msra.mxu0 0
        %4090 = vmatpush.bf16.xpose.msra.mxu0 0
        %4091 = vmatpush.bf16.xpose.msra.mxu0 %v4082
        %4092 = vmatmul.bf16.gmra.mxu0 %v4079
        %v4093 = vpop.f32.mrf.mxu0
        %v4094 = vadd.f32 0.0, %v4093
        %v4095 = vpop.f32.mrf.mxu0
        %v4096 = vadd.f32 0.0, %v4095
        %4097 = vdwg.mxu0
        %v4098 = vunpack.c.l.b16 %v4000
        %v4099 = vunpack.c.l.b16 %v4002
        %v4100 = vpack.c.b16 %v4099, %v4098
        %v4101 = vunpack.c.l.b16 %v4018
        %v4102 = vunpack.c.l.b16 %v4019
        %v4103 = vpack.c.b16 %v4102, %v4101
        %v4105 = vsel %vm863, %v4100, 0
        %v4108 = vsel %vm863, %v4103, 0
        %4110 = vmatpush.bf16.xpose.msra.mxu0 0
        %4111 = vmatpush.bf16.xpose.msra.mxu0 0
        %4112 = vmatpush.bf16.xpose.msra.mxu0 0
        %4113 = vmatpush.bf16.xpose.msra.mxu0 0
        %4114 = vmatpush.bf16.xpose.msra.mxu0 0
        %4115 = vmatpush.bf16.xpose.msra.mxu0 0
        %4116 = vmatpush.bf16.xpose.msra.mxu0 0
        %4117 = vmatpush.bf16.xpose.msra.mxu0 %v4108
        %4118 = vmatmul.bf16.gmra.mxu0 %v4105
        %v4119 = vpop.f32.mrf.mxu0
        %v4120 = vadd.f32 0.0, %v4119
        %v4121 = vpop.f32.mrf.mxu0
        %v4122 = vadd.f32 0.0, %v4121
        %4123 = vdwg.mxu0
        %v4124 = vsel %vm962, %v4042, -inf
        %4125 = vmax.xlane.f32.xlu0 %v4124
        %v4126 = vpop.xlane.xlu0 %4125
        %v4127 = vsel %vm962, %v4044, -inf
        %4128 = vmax.xlane.f32.xlu0 %v4127
        %v4129 = vpop.xlane.xlu0 %4128
        %v4130 = vsel %vm962, %v4068, -inf
        %4131 = vmax.xlane.f32.xlu0 %v4130
        %v4132 = vpop.xlane.xlu0 %4131
        %v4133 = vsel %vm962, %v4070, -inf
        %4134 = vmax.xlane.f32.xlu0 %v4133
        %v4135 = vpop.xlane.xlu0 %4134
        %v4136 = vsel %vm962, %v4094, -inf
        %4137 = vmax.xlane.f32.xlu0 %v4136
        %v4138 = vpop.xlane.xlu0 %4137
        %v4139 = vsel %vm962, %v4096, -inf
        %4140 = vmax.xlane.f32.xlu0 %v4139
        %v4141 = vpop.xlane.xlu0 %4140
        %v4142 = vsel %vm962, %v4120, -inf
        %4143 = vmax.xlane.f32.xlu0 %v4142
        %v4144 = vpop.xlane.xlu0 %4143
        %v4145 = vsel %vm962, %v4122, -inf
        %4146 = vmax.xlane.f32.xlu0 %v4145
        %v4147 = vpop.xlane.xlu0 %4146
        %v4148 = vsub.f32 %v4042, %v4126
        %v4149 = vsub.f32 %v4044, %v4129
        %v4150 = vsub.f32 %v4068, %v4132
        %v4151 = vsub.f32 %v4070, %v4135
        %v4152 = vsub.f32 %v4094, %v4138
        %v4153 = vsub.f32 %v4096, %v4141
        %v4154 = vsub.f32 %v4120, %v4144
        %v4155 = vsub.f32 %v4122, %v4147
        %v4156 = vmul.f32 %v4148, 1.442695
        %v4157 = vpow.pop %v4156
        %v4158 = vmul.f32 %v4149, 1.442695
        %v4159 = vpow.pop %v4158
        %v4160 = vmul.f32 %v4150, 1.442695
        %v4161 = vpow.pop %v4160
        %v4162 = vmul.f32 %v4151, 1.442695
        %v4163 = vpow.pop %v4162
        %v4164 = vmul.f32 %v4152, 1.442695
        %v4165 = vpow.pop %v4164
        %v4166 = vmul.f32 %v4153, 1.442695
        %v4167 = vpow.pop %v4166
        %v4168 = vmul.f32 %v4154, 1.442695
        %v4169 = vpow.pop %v4168
        %v4170 = vmul.f32 %v4155, 1.442695
        %v4171 = vpow.pop %v4170
        %v4172 = vsel %vm962, %v4157, 0.0
        %4173 = vadd.xlane.f32.xlu0 %v4172
        %v4174 = vpop.xlane.xlu0 %4173
        %v4175 = vsel %vm962, %v4159, 0.0
        %4176 = vadd.xlane.f32.xlu0 %v4175
        %v4177 = vpop.xlane.xlu0 %4176
        %v4178 = vsel %vm962, %v4161, 0.0
        %4179 = vadd.xlane.f32.xlu0 %v4178
        %v4180 = vpop.xlane.xlu0 %4179
        %v4181 = vsel %vm962, %v4163, 0.0
        %4182 = vadd.xlane.f32.xlu0 %v4181
        %v4183 = vpop.xlane.xlu0 %4182
        %v4184 = vsel %vm962, %v4165, 0.0
        %4185 = vadd.xlane.f32.xlu0 %v4184
        %v4186 = vpop.xlane.xlu0 %4185
        %v4187 = vsel %vm962, %v4167, 0.0
        %4188 = vadd.xlane.f32.xlu0 %v4187
        %v4189 = vpop.xlane.xlu0 %4188
        %v4190 = vsel %vm962, %v4169, 0.0
        %4191 = vadd.xlane.f32.xlu0 %v4190
        %v4192 = vpop.xlane.xlu0 %4191
        %v4193 = vsel %vm962, %v4171, 0.0
        %4194 = vadd.xlane.f32.xlu0 %v4193
        %v4195 = vpop.xlane.xlu0 %4194
        %v4196 = vrcp.pop %v4174
        %v4197 = vrcp.pop %v4177
        %v4198 = vrcp.pop %v4180
        %v4199 = vrcp.pop %v4183
        %v4200 = vrcp.pop %v4186
        %v4201 = vrcp.pop %v4189
        %v4202 = vrcp.pop %v4192
        %v4203 = vrcp.pop %v4195
        %v4204 = vmul.f32 %v4157, %v4196
        %v4205 = vmul.f32 %v4159, %v4197
        %v4206 = vmul.f32 %v4161, %v4198
        %v4207 = vmul.f32 %v4163, %v4199
        %v4208 = vmul.f32 %v4165, %v4200
        %v4209 = vmul.f32 %v4167, %v4201
        %v4210 = vmul.f32 %v4169, %v4202
        %v4211 = vmul.f32 %v4171, %v4203
        %v4212 = vpack.c.bf16 %v4204, %v4204
        %v4213 = vpack.c.bf16 %v4205, %v4205
        %v4214 = vpack.c.bf16 %v4206, %v4206
        %v4215 = vpack.c.bf16 %v4207, %v4207
        %v4216 = vpack.c.bf16 %v4208, %v4208
        %v4217 = vpack.c.bf16 %v4209, %v4209
        %v4218 = vpack.c.bf16 %v4210, %v4210
        %v4219 = vpack.c.bf16 %v4211, %v4211
        %v4222 = vunpack.c.l.b16 %v4212
        %v4223 = vunpack.c.l.b16 %v4213
        %v4224 = vpack.c.b16 %v4223, %v4222
        %v4227 = vunpack.c.l.b16 %v3989
        %v4228 = vunpack.c.l.b16 %v3991
        %v4229 = vpack.c.b16 %v4228, %v4227
        %v4232 = vsel %vm962, %v4224, 0
        %4234 = vmatpush.bf16.msra.mxu0 0
        %4235 = vmatpush.bf16.msra.mxu0 0
        %4236 = vmatpush.bf16.msra.mxu0 0
        %4237 = vmatpush.bf16.msra.mxu0 0
        %4238 = vmatpush.bf16.msra.mxu0 0
        %4239 = vmatpush.bf16.msra.mxu0 0
        %4240 = vmatpush.bf16.msra.mxu0 0
        %4241 = vmatpush.bf16.msra.mxu0 %v4229
        %4242 = vmatmul.bf16.gmra.mxu0 %v4232
        %v4243 = vpop.f32.mrf.mxu0
        %v4244 = vadd.f32 0.0, %v4243
        %v4245 = vpop.f32.mrf.mxu0
        %v4246 = vadd.f32 0.0, %v4245
        %4247 = vdwg.mxu0
        %v4250 = vunpack.c.l.b16 %v4214
        %v4251 = vunpack.c.l.b16 %v4215
        %v4252 = vpack.c.b16 %v4251, %v4250
        %v4255 = vunpack.c.l.b16 %v3993
        %v4256 = vunpack.c.l.b16 %v3995
        %v4257 = vpack.c.b16 %v4256, %v4255
        %v4260 = vsel %vm962, %v4252, 0
        %4262 = vmatpush.bf16.msra.mxu0 0
        %4263 = vmatpush.bf16.msra.mxu0 0
        %4264 = vmatpush.bf16.msra.mxu0 0
        %4265 = vmatpush.bf16.msra.mxu0 0
        %4266 = vmatpush.bf16.msra.mxu0 0
        %4267 = vmatpush.bf16.msra.mxu0 0
        %4268 = vmatpush.bf16.msra.mxu0 0
        %4269 = vmatpush.bf16.msra.mxu0 %v4257
        %4270 = vmatmul.bf16.gmra.mxu0 %v4260
        %v4271 = vpop.f32.mrf.mxu0
        %v4272 = vadd.f32 0.0, %v4271
        %v4273 = vpop.f32.mrf.mxu0
        %v4274 = vadd.f32 0.0, %v4273
        %4275 = vdwg.mxu0
        %v4278 = vunpack.c.l.b16 %v4216
        %v4279 = vunpack.c.l.b16 %v4217
        %v4280 = vpack.c.b16 %v4279, %v4278
        %v4283 = vunpack.c.l.b16 %v3997
        %v4284 = vunpack.c.l.b16 %v3999
        %v4285 = vpack.c.b16 %v4284, %v4283
        %v4288 = vsel %vm962, %v4280, 0
        %4290 = vmatpush.bf16.msra.mxu0 0
        %4291 = vmatpush.bf16.msra.mxu0 0
        %4292 = vmatpush.bf16.msra.mxu0 0
        %4293 = vmatpush.bf16.msra.mxu0 0
        %4294 = vmatpush.bf16.msra.mxu0 0
        %4295 = vmatpush.bf16.msra.mxu0 0
        %4296 = vmatpush.bf16.msra.mxu0 0
        %4297 = vmatpush.bf16.msra.mxu0 %v4285
        %4298 = vmatmul.bf16.gmra.mxu0 %v4288
        %v4299 = vpop.f32.mrf.mxu0
        %v4300 = vadd.f32 0.0, %v4299
        %v4301 = vpop.f32.mrf.mxu0
        %v4302 = vadd.f32 0.0, %v4301
        %4303 = vdwg.mxu0
        %v4306 = vunpack.c.l.b16 %v4218
        %v4307 = vunpack.c.l.b16 %v4219
        %v4308 = vpack.c.b16 %v4307, %v4306
        %v4311 = vunpack.c.l.b16 %v4001
        %v4312 = vunpack.c.l.b16 %v4003
        %v4313 = vpack.c.b16 %v4312, %v4311
        %v4316 = vsel %vm962, %v4308, 0
        %4318 = vmatpush.bf16.msra.mxu0 0
        %4319 = vmatpush.bf16.msra.mxu0 0
        %4320 = vmatpush.bf16.msra.mxu0 0
        %4321 = vmatpush.bf16.msra.mxu0 0
        %4322 = vmatpush.bf16.msra.mxu0 0
        %4323 = vmatpush.bf16.msra.mxu0 0
        %4324 = vmatpush.bf16.msra.mxu0 0
        %4325 = vmatpush.bf16.msra.mxu0 %v4313
        %4326 = vmatmul.bf16.gmra.mxu0 %v4316
        %v4327 = vpop.f32.mrf.mxu0
        %v4328 = vadd.f32 0.0, %v4327
        %v4329 = vpop.f32.mrf.mxu0
        %v4330 = vadd.f32 0.0, %v4329
        %4331 = vdwg.mxu0
        %4332 = vrot.lane.b32.xlu0 %v3988, 96
        %v4333 = vpop.permute.xlu0 %4332
        %4334 = vrot.lane.b32.xlu0 %v3990, 96
        %v4335 = vpop.permute.xlu0 %4334
        %4336 = vrot.lane.b32.xlu0 %v3992, 96
        %v4337 = vpop.permute.xlu0 %4336
        %4338 = vrot.lane.b32.xlu0 %v3994, 96
        %v4339 = vpop.permute.xlu0 %4338
        %4340 = vrot.lane.b32.xlu0 %v3996, 96
        %v4341 = vpop.permute.xlu0 %4340
        %4342 = vrot.lane.b32.xlu0 %v3998, 96
        %v4343 = vpop.permute.xlu0 %4342
        %4344 = vrot.lane.b32.xlu0 %v4000, 96
        %v4345 = vpop.permute.xlu0 %4344
        %4346 = vrot.lane.b32.xlu0 %v4002, 96
        %v4347 = vpop.permute.xlu0 %4346
        %v4348 = vrot.slane %v4333, 4
        %v4349 = vrot.slane %v4335, 4
        %v4350 = vrot.slane %v4337, 4
        %v4351 = vrot.slane %v4339, 4
        %v4352 = vrot.slane %v4341, 4
        %v4353 = vrot.slane %v4343, 4
        %v4354 = vrot.slane %v4345, 4
        %v4355 = vrot.slane %v4347, 4
        %4356 = vrot.lane.b32.xlu0 %v4022, 96
        %v4357 = vpop.permute.xlu0 %4356
        %v4358 = vunpack.c.l.b16 %v4348
        %v4359 = vunpack.c.l.b16 %v4349
        %v4360 = vpack.c.b16 %v4359, %v4358
        %v4362 = vsel %vm863, %v4357, 0
        %v4365 = vsel %vm863, %v4360, 0
        %4367 = vmatpush.bf16.xpose.msra.mxu0 0
        %4368 = vmatpush.bf16.xpose.msra.mxu0 0
        %4369 = vmatpush.bf16.xpose.msra.mxu0 0
        %4370 = vmatpush.bf16.xpose.msra.mxu0 0
        %4371 = vmatpush.bf16.xpose.msra.mxu0 0
        %4372 = vmatpush.bf16.xpose.msra.mxu0 0
        %4373 = vmatpush.bf16.xpose.msra.mxu0 0
        %4374 = vmatpush.bf16.xpose.msra.mxu0 %v4365
        %4375 = vmatmul.bf16.gmra.mxu0 %v4362
        %v4376 = vpop.f32.mrf.mxu0
        %v4377 = vadd.f32 0.0, %v4376
        %v4378 = vpop.f32.mrf.mxu0
        %v4379 = vadd.f32 0.0, %v4378
        %4380 = vdwg.mxu0
        %4381 = vrot.lane.b32.xlu0 %v4048, 96
        %v4382 = vpop.permute.xlu0 %4381
        %v4383 = vunpack.c.l.b16 %v4350
        %v4384 = vunpack.c.l.b16 %v4351
        %v4385 = vpack.c.b16 %v4384, %v4383
        %v4387 = vsel %vm863, %v4382, 0
        %v4390 = vsel %vm863, %v4385, 0
        %4392 = vmatpush.bf16.xpose.msra.mxu0 0
        %4393 = vmatpush.bf16.xpose.msra.mxu0 0
        %4394 = vmatpush.bf16.xpose.msra.mxu0 0
        %4395 = vmatpush.bf16.xpose.msra.mxu0 0
        %4396 = vmatpush.bf16.xpose.msra.mxu0 0
        %4397 = vmatpush.bf16.xpose.msra.mxu0 0
        %4398 = vmatpush.bf16.xpose.msra.mxu0 0
        %4399 = vmatpush.bf16.xpose.msra.mxu0 %v4390
        %4400 = vmatmul.bf16.gmra.mxu0 %v4387
        %v4401 = vpop.f32.mrf.mxu0
        %v4402 = vadd.f32 0.0, %v4401
        %v4403 = vpop.f32.mrf.mxu0
        %v4404 = vadd.f32 0.0, %v4403
        %4405 = vdwg.mxu0
        %4406 = vrot.lane.b32.xlu0 %v4074, 96
        %v4407 = vpop.permute.xlu0 %4406
        %v4408 = vunpack.c.l.b16 %v4352
        %v4409 = vunpack.c.l.b16 %v4353
        %v4410 = vpack.c.b16 %v4409, %v4408
        %v4412 = vsel %vm863, %v4407, 0
        %v4415 = vsel %vm863, %v4410, 0
        %4417 = vmatpush.bf16.xpose.msra.mxu0 0
        %4418 = vmatpush.bf16.xpose.msra.mxu0 0
        %4419 = vmatpush.bf16.xpose.msra.mxu0 0
        %4420 = vmatpush.bf16.xpose.msra.mxu0 0
        %4421 = vmatpush.bf16.xpose.msra.mxu0 0
        %4422 = vmatpush.bf16.xpose.msra.mxu0 0
        %4423 = vmatpush.bf16.xpose.msra.mxu0 0
        %4424 = vmatpush.bf16.xpose.msra.mxu0 %v4415
        %4425 = vmatmul.bf16.gmra.mxu0 %v4412
        %v4426 = vpop.f32.mrf.mxu0
        %v4427 = vadd.f32 0.0, %v4426
        %v4428 = vpop.f32.mrf.mxu0
        %v4429 = vadd.f32 0.0, %v4428
        %4430 = vdwg.mxu0
        %4431 = vrot.lane.b32.xlu0 %v4100, 96
        %v4432 = vpop.permute.xlu0 %4431
        %v4433 = vunpack.c.l.b16 %v4354
        %v4434 = vunpack.c.l.b16 %v4355
        %v4435 = vpack.c.b16 %v4434, %v4433
        %v4437 = vsel %vm863, %v4432, 0
        %v4440 = vsel %vm863, %v4435, 0
        %4442 = vmatpush.bf16.xpose.msra.mxu0 0
        %4443 = vmatpush.bf16.xpose.msra.mxu0 0
        %4444 = vmatpush.bf16.xpose.msra.mxu0 0
        %4445 = vmatpush.bf16.xpose.msra.mxu0 0
        %4446 = vmatpush.bf16.xpose.msra.mxu0 0
        %4447 = vmatpush.bf16.xpose.msra.mxu0 0
        %4448 = vmatpush.bf16.xpose.msra.mxu0 0
        %4449 = vmatpush.bf16.xpose.msra.mxu0 %v4440
        %4450 = vmatmul.bf16.gmra.mxu0 %v4437
        %v4451 = vpop.f32.mrf.mxu0
        %v4452 = vadd.f32 0.0, %v4451
        %v4453 = vpop.f32.mrf.mxu0
        %v4454 = vadd.f32 0.0, %v4453
        %4455 = vdwg.mxu0
        %v4456 = vsel %vm962, %v4377, -inf
        %4457 = vmax.xlane.f32.xlu0 %v4456
        %v4458 = vpop.xlane.xlu0 %4457
        %v4459 = vsel %vm962, %v4379, -inf
        %4460 = vmax.xlane.f32.xlu0 %v4459
        %v4461 = vpop.xlane.xlu0 %4460
        %v4462 = vsel %vm962, %v4402, -inf
        %4463 = vmax.xlane.f32.xlu0 %v4462
        %v4464 = vpop.xlane.xlu0 %4463
        %v4465 = vsel %vm962, %v4404, -inf
        %4466 = vmax.xlane.f32.xlu0 %v4465
        %v4467 = vpop.xlane.xlu0 %4466
        %v4468 = vsel %vm962, %v4427, -inf
        %4469 = vmax.xlane.f32.xlu0 %v4468
        %v4470 = vpop.xlane.xlu0 %4469
        %v4471 = vsel %vm962, %v4429, -inf
        %4472 = vmax.xlane.f32.xlu0 %v4471
        %v4473 = vpop.xlane.xlu0 %4472
        %v4474 = vsel %vm962, %v4452, -inf
        %4475 = vmax.xlane.f32.xlu0 %v4474
        %v4476 = vpop.xlane.xlu0 %4475
        %v4477 = vsel %vm962, %v4454, -inf
        %4478 = vmax.xlane.f32.xlu0 %v4477
        %v4479 = vpop.xlane.xlu0 %4478
        %v4480 = vsub.f32 %v4377, %v4458
        %v4481 = vsub.f32 %v4379, %v4461
        %v4482 = vsub.f32 %v4402, %v4464
        %v4483 = vsub.f32 %v4404, %v4467
        %v4484 = vsub.f32 %v4427, %v4470
        %v4485 = vsub.f32 %v4429, %v4473
        %v4486 = vsub.f32 %v4452, %v4476
        %v4487 = vsub.f32 %v4454, %v4479
        %v4488 = vmul.f32 %v4480, 1.442695
        %v4489 = vpow.pop %v4488
        %v4490 = vmul.f32 %v4481, 1.442695
        %v4491 = vpow.pop %v4490
        %v4492 = vmul.f32 %v4482, 1.442695
        %v4493 = vpow.pop %v4492
        %v4494 = vmul.f32 %v4483, 1.442695
        %v4495 = vpow.pop %v4494
        %v4496 = vmul.f32 %v4484, 1.442695
        %v4497 = vpow.pop %v4496
        %v4498 = vmul.f32 %v4485, 1.442695
        %v4499 = vpow.pop %v4498
        %v4500 = vmul.f32 %v4486, 1.442695
        %v4501 = vpow.pop %v4500
        %v4502 = vmul.f32 %v4487, 1.442695
        %v4503 = vpow.pop %v4502
        %v4504 = vsel %vm962, %v4489, 0.0
        %4505 = vadd.xlane.f32.xlu0 %v4504
        %v4506 = vpop.xlane.xlu0 %4505
        %v4507 = vsel %vm962, %v4491, 0.0
        %4508 = vadd.xlane.f32.xlu0 %v4507
        %v4509 = vpop.xlane.xlu0 %4508
        %v4510 = vsel %vm962, %v4493, 0.0
        %4511 = vadd.xlane.f32.xlu0 %v4510
        %v4512 = vpop.xlane.xlu0 %4511
        %v4513 = vsel %vm962, %v4495, 0.0
        %4514 = vadd.xlane.f32.xlu0 %v4513
        %v4515 = vpop.xlane.xlu0 %4514
        %v4516 = vsel %vm962, %v4497, 0.0
        %4517 = vadd.xlane.f32.xlu0 %v4516
        %v4518 = vpop.xlane.xlu0 %4517
        %v4519 = vsel %vm962, %v4499, 0.0
        %4520 = vadd.xlane.f32.xlu0 %v4519
        %v4521 = vpop.xlane.xlu0 %4520
        %v4522 = vsel %vm962, %v4501, 0.0
        %4523 = vadd.xlane.f32.xlu0 %v4522
        %v4524 = vpop.xlane.xlu0 %4523
        %v4525 = vsel %vm962, %v4503, 0.0
        %4526 = vadd.xlane.f32.xlu0 %v4525
        %v4527 = vpop.xlane.xlu0 %4526
        %v4528 = vrcp.pop %v4506
        %v4529 = vrcp.pop %v4509
        %v4530 = vrcp.pop %v4512
        %v4531 = vrcp.pop %v4515
        %v4532 = vrcp.pop %v4518
        %v4533 = vrcp.pop %v4521
        %v4534 = vrcp.pop %v4524
        %v4535 = vrcp.pop %v4527
        %v4536 = vmul.f32 %v4489, %v4528
        %v4537 = vmul.f32 %v4491, %v4529
        %v4538 = vmul.f32 %v4493, %v4530
        %v4539 = vmul.f32 %v4495, %v4531
        %v4540 = vmul.f32 %v4497, %v4532
        %v4541 = vmul.f32 %v4499, %v4533
        %v4542 = vmul.f32 %v4501, %v4534
        %v4543 = vmul.f32 %v4503, %v4535
        %v4544 = vpack.c.bf16 %v4536, %v4536
        %v4545 = vpack.c.bf16 %v4537, %v4537
        %v4546 = vpack.c.bf16 %v4538, %v4538
        %v4547 = vpack.c.bf16 %v4539, %v4539
        %v4548 = vpack.c.bf16 %v4540, %v4540
        %v4549 = vpack.c.bf16 %v4541, %v4541
        %v4550 = vpack.c.bf16 %v4542, %v4542
        %v4551 = vpack.c.bf16 %v4543, %v4543
        %v4554 = vunpack.c.l.b16 %v4544
        %v4555 = vunpack.c.l.b16 %v4545
        %v4556 = vpack.c.b16 %v4555, %v4554
        %4557 = vrot.lane.b32.xlu0 %v4229, 96
        %v4558 = vpop.permute.xlu0 %4557
        %v4561 = vsel %vm962, %v4556, 0
        %4563 = vmatpush.bf16.msra.mxu0 0
        %4564 = vmatpush.bf16.msra.mxu0 0
        %4565 = vmatpush.bf16.msra.mxu0 0
        %4566 = vmatpush.bf16.msra.mxu0 0
        %4567 = vmatpush.bf16.msra.mxu0 0
        %4568 = vmatpush.bf16.msra.mxu0 0
        %4569 = vmatpush.bf16.msra.mxu0 0
        %4570 = vmatpush.bf16.msra.mxu0 %v4558
        %4571 = vmatmul.bf16.gmra.mxu0 %v4561
        %v4572 = vpop.f32.mrf.mxu0
        %v4573 = vadd.f32 0.0, %v4572
        %v4574 = vpop.f32.mrf.mxu0
        %v4575 = vadd.f32 0.0, %v4574
        %4576 = vdwg.mxu0
        %v4579 = vunpack.c.l.b16 %v4546
        %v4580 = vunpack.c.l.b16 %v4547
        %v4581 = vpack.c.b16 %v4580, %v4579
        %4582 = vrot.lane.b32.xlu0 %v4257, 96
        %v4583 = vpop.permute.xlu0 %4582
        %v4586 = vsel %vm962, %v4581, 0
        %4588 = vmatpush.bf16.msra.mxu0 0
        %4589 = vmatpush.bf16.msra.mxu0 0
        %4590 = vmatpush.bf16.msra.mxu0 0
        %4591 = vmatpush.bf16.msra.mxu0 0
        %4592 = vmatpush.bf16.msra.mxu0 0
        %4593 = vmatpush.bf16.msra.mxu0 0
        %4594 = vmatpush.bf16.msra.mxu0 0
        %4595 = vmatpush.bf16.msra.mxu0 %v4583
        %4596 = vmatmul.bf16.gmra.mxu0 %v4586
        %v4597 = vpop.f32.mrf.mxu0
        %v4598 = vadd.f32 0.0, %v4597
        %v4599 = vpop.f32.mrf.mxu0
        %v4600 = vadd.f32 0.0, %v4599
        %4601 = vdwg.mxu0
        %v4604 = vunpack.c.l.b16 %v4548
        %v4605 = vunpack.c.l.b16 %v4549
        %v4606 = vpack.c.b16 %v4605, %v4604
        %4607 = vrot.lane.b32.xlu0 %v4285, 96
        %v4608 = vpop.permute.xlu0 %4607
        %v4611 = vsel %vm962, %v4606, 0
        %4613 = vmatpush.bf16.msra.mxu0 0
        %4614 = vmatpush.bf16.msra.mxu0 0
        %4615 = vmatpush.bf16.msra.mxu0 0
        %4616 = vmatpush.bf16.msra.mxu0 0
        %4617 = vmatpush.bf16.msra.mxu0 0
        %4618 = vmatpush.bf16.msra.mxu0 0
        %4619 = vmatpush.bf16.msra.mxu0 0
        %4620 = vmatpush.bf16.msra.mxu0 %v4608
        %4621 = vmatmul.bf16.gmra.mxu0 %v4611
        %v4622 = vpop.f32.mrf.mxu0
        %v4623 = vadd.f32 0.0, %v4622
        %v4624 = vpop.f32.mrf.mxu0
        %v4625 = vadd.f32 0.0, %v4624
        %4626 = vdwg.mxu0
        %v4629 = vunpack.c.l.b16 %v4550
        %v4630 = vunpack.c.l.b16 %v4551
        %v4631 = vpack.c.b16 %v4630, %v4629
        %4632 = vrot.lane.b32.xlu0 %v4313, 96
        %v4633 = vpop.permute.xlu0 %4632
        %v4636 = vsel %vm962, %v4631, 0
        %4638 = vmatpush.bf16.msra.mxu0 0
        %4639 = vmatpush.bf16.msra.mxu0 0
        %4640 = vmatpush.bf16.msra.mxu0 0
        %4641 = vmatpush.bf16.msra.mxu0 0
        %4642 = vmatpush.bf16.msra.mxu0 0
        %4643 = vmatpush.bf16.msra.mxu0 0
        %4644 = vmatpush.bf16.msra.mxu0 0
        %4645 = vmatpush.bf16.msra.mxu0 %v4633
        %4646 = vmatmul.bf16.gmra.mxu0 %v4636
        %v4647 = vpop.f32.mrf.mxu0
        %v4648 = vadd.f32 0.0, %v4647
        %v4649 = vpop.f32.mrf.mxu0
        %v4650 = vadd.f32 0.0, %v4649
        %4651 = vdwg.mxu0
        %4652 = vrot.lane.b32.xlu0 %v3988, 64
        %v4653 = vpop.permute.xlu0 %4652
        %4654 = vrot.lane.b32.xlu0 %v3990, 64
        %v4655 = vpop.permute.xlu0 %4654
        %4656 = vrot.lane.b32.xlu0 %v3992, 64
        %v4657 = vpop.permute.xlu0 %4656
        %4658 = vrot.lane.b32.xlu0 %v3994, 64
        %v4659 = vpop.permute.xlu0 %4658
        %4660 = vrot.lane.b32.xlu0 %v3996, 64
        %v4661 = vpop.permute.xlu0 %4660
        %4662 = vrot.lane.b32.xlu0 %v3998, 64
        %v4663 = vpop.permute.xlu0 %4662
        %4664 = vrot.lane.b32.xlu0 %v4000, 64
        %v4665 = vpop.permute.xlu0 %4664
        %4666 = vrot.lane.b32.xlu0 %v4002, 64
        %v4667 = vpop.permute.xlu0 %4666
        %v4668 = vrot.slane %v4653, 4
        %v4669 = vrot.slane %v4655, 4
        %v4670 = vrot.slane %v4657, 4
        %v4671 = vrot.slane %v4659, 4
        %v4672 = vrot.slane %v4661, 4
        %v4673 = vrot.slane %v4663, 4
        %v4674 = vrot.slane %v4665, 4
        %v4675 = vrot.slane %v4667, 4
        %4676 = vrot.lane.b32.xlu0 %v4022, 64
        %v4677 = vpop.permute.xlu0 %4676
        %v4678 = vunpack.c.l.b16 %v4668
        %v4679 = vunpack.c.l.b16 %v4669
        %v4680 = vpack.c.b16 %v4679, %v4678
        %v4682 = vsel %vm863, %v4677, 0
        %v4685 = vsel %vm863, %v4680, 0
        %4687 = vmatpush.bf16.xpose.msra.mxu0 0
        %4688 = vmatpush.bf16.xpose.msra.mxu0 0
        %4689 = vmatpush.bf16.xpose.msra.mxu0 0
        %4690 = vmatpush.bf16.xpose.msra.mxu0 0
        %4691 = vmatpush.bf16.xpose.msra.mxu0 0
        %4692 = vmatpush.bf16.xpose.msra.mxu0 0
        %4693 = vmatpush.bf16.xpose.msra.mxu0 0
        %4694 = vmatpush.bf16.xpose.msra.mxu0 %v4685
        %4695 = vmatmul.bf16.gmra.mxu0 %v4682
        %v4696 = vpop.f32.mrf.mxu0
        %v4697 = vadd.f32 0.0, %v4696
        %v4698 = vpop.f32.mrf.mxu0
        %v4699 = vadd.f32 0.0, %v4698
        %4700 = vdwg.mxu0
        %4701 = vrot.lane.b32.xlu0 %v4048, 64
        %v4702 = vpop.permute.xlu0 %4701
        %v4703 = vunpack.c.l.b16 %v4670
        %v4704 = vunpack.c.l.b16 %v4671
        %v4705 = vpack.c.b16 %v4704, %v4703
        %v4707 = vsel %vm863, %v4702, 0
        %v4710 = vsel %vm863, %v4705, 0
        %4712 = vmatpush.bf16.xpose.msra.mxu0 0
        %4713 = vmatpush.bf16.xpose.msra.mxu0 0
        %4714 = vmatpush.bf16.xpose.msra.mxu0 0
        %4715 = vmatpush.bf16.xpose.msra.mxu0 0
        %4716 = vmatpush.bf16.xpose.msra.mxu0 0
        %4717 = vmatpush.bf16.xpose.msra.mxu0 0
        %4718 = vmatpush.bf16.xpose.msra.mxu0 0
        %4719 = vmatpush.bf16.xpose.msra.mxu0 %v4710
        %4720 = vmatmul.bf16.gmra.mxu0 %v4707
        %v4721 = vpop.f32.mrf.mxu0
        %v4722 = vadd.f32 0.0, %v4721
        %v4723 = vpop.f32.mrf.mxu0
        %v4724 = vadd.f32 0.0, %v4723
        %4725 = vdwg.mxu0
        %4726 = vrot.lane.b32.xlu0 %v4074, 64
        %v4727 = vpop.permute.xlu0 %4726
        %v4728 = vunpack.c.l.b16 %v4672
        %v4729 = vunpack.c.l.b16 %v4673
        %v4730 = vpack.c.b16 %v4729, %v4728
        %v4732 = vsel %vm863, %v4727, 0
        %v4735 = vsel %vm863, %v4730, 0
        %4737 = vmatpush.bf16.xpose.msra.mxu0 0
        %4738 = vmatpush.bf16.xpose.msra.mxu0 0
        %4739 = vmatpush.bf16.xpose.msra.mxu0 0
        %4740 = vmatpush.bf16.xpose.msra.mxu0 0
        %4741 = vmatpush.bf16.xpose.msra.mxu0 0
        %4742 = vmatpush.bf16.xpose.msra.mxu0 0
        %4743 = vmatpush.bf16.xpose.msra.mxu0 0
        %4744 = vmatpush.bf16.xpose.msra.mxu0 %v4735
        %4745 = vmatmul.bf16.gmra.mxu0 %v4732
        %v4746 = vpop.f32.mrf.mxu0
        %v4747 = vadd.f32 0.0, %v4746
        %v4748 = vpop.f32.mrf.mxu0
        %v4749 = vadd.f32 0.0, %v4748
        %4750 = vdwg.mxu0
        %4751 = vrot.lane.b32.xlu0 %v4100, 64
        %v4752 = vpop.permute.xlu0 %4751
        %v4753 = vunpack.c.l.b16 %v4674
        %v4754 = vunpack.c.l.b16 %v4675
        %v4755 = vpack.c.b16 %v4754, %v4753
        %v4757 = vsel %vm863, %v4752, 0
        %v4760 = vsel %vm863, %v4755, 0
        %4762 = vmatpush.bf16.xpose.msra.mxu0 0
        %4763 = vmatpush.bf16.xpose.msra.mxu0 0
        %4764 = vmatpush.bf16.xpose.msra.mxu0 0
        %4765 = vmatpush.bf16.xpose.msra.mxu0 0
        %4766 = vmatpush.bf16.xpose.msra.mxu0 0
        %4767 = vmatpush.bf16.xpose.msra.mxu0 0
        %4768 = vmatpush.bf16.xpose.msra.mxu0 0
        %4769 = vmatpush.bf16.xpose.msra.mxu0 %v4760
        %4770 = vmatmul.bf16.gmra.mxu0 %v4757
        %v4771 = vpop.f32.mrf.mxu0
        %v4772 = vadd.f32 0.0, %v4771
        %v4773 = vpop.f32.mrf.mxu0
        %v4774 = vadd.f32 0.0, %v4773
        %4775 = vdwg.mxu0
        %v4776 = vsel %vm962, %v4697, -inf
        %4777 = vmax.xlane.f32.xlu0 %v4776
        %v4778 = vpop.xlane.xlu0 %4777
        %v4779 = vsel %vm962, %v4699, -inf
        %4780 = vmax.xlane.f32.xlu0 %v4779
        %v4781 = vpop.xlane.xlu0 %4780
        %v4782 = vsel %vm962, %v4722, -inf
        %4783 = vmax.xlane.f32.xlu0 %v4782
        %v4784 = vpop.xlane.xlu0 %4783
        %v4785 = vsel %vm962, %v4724, -inf
        %4786 = vmax.xlane.f32.xlu0 %v4785
        %v4787 = vpop.xlane.xlu0 %4786
        %v4788 = vsel %vm962, %v4747, -inf
        %4789 = vmax.xlane.f32.xlu0 %v4788
        %v4790 = vpop.xlane.xlu0 %4789
        %v4791 = vsel %vm962, %v4749, -inf
        %4792 = vmax.xlane.f32.xlu0 %v4791
        %v4793 = vpop.xlane.xlu0 %4792
        %v4794 = vsel %vm962, %v4772, -inf
        %4795 = vmax.xlane.f32.xlu0 %v4794
        %v4796 = vpop.xlane.xlu0 %4795
        %v4797 = vsel %vm962, %v4774, -inf
        %4798 = vmax.xlane.f32.xlu0 %v4797
        %v4799 = vpop.xlane.xlu0 %4798
        %v4800 = vsub.f32 %v4697, %v4778
        %v4801 = vsub.f32 %v4699, %v4781
        %v4802 = vsub.f32 %v4722, %v4784
        %v4803 = vsub.f32 %v4724, %v4787
        %v4804 = vsub.f32 %v4747, %v4790
        %v4805 = vsub.f32 %v4749, %v4793
        %v4806 = vsub.f32 %v4772, %v4796
        %v4807 = vsub.f32 %v4774, %v4799
        %v4808 = vmul.f32 %v4800, 1.442695
        %v4809 = vpow.pop %v4808
        %v4810 = vmul.f32 %v4801, 1.442695
        %v4811 = vpow.pop %v4810
        %v4812 = vmul.f32 %v4802, 1.442695
        %v4813 = vpow.pop %v4812
        %v4814 = vmul.f32 %v4803, 1.442695
        %v4815 = vpow.pop %v4814
        %v4816 = vmul.f32 %v4804, 1.442695
        %v4817 = vpow.pop %v4816
        %v4818 = vmul.f32 %v4805, 1.442695
        %v4819 = vpow.pop %v4818
        %v4820 = vmul.f32 %v4806, 1.442695
        %v4821 = vpow.pop %v4820
        %v4822 = vmul.f32 %v4807, 1.442695
        %v4823 = vpow.pop %v4822
        %v4824 = vsel %vm962, %v4809, 0.0
        %4825 = vadd.xlane.f32.xlu0 %v4824
        %v4826 = vpop.xlane.xlu0 %4825
        %v4827 = vsel %vm962, %v4811, 0.0
        %4828 = vadd.xlane.f32.xlu0 %v4827
        %v4829 = vpop.xlane.xlu0 %4828
        %v4830 = vsel %vm962, %v4813, 0.0
        %4831 = vadd.xlane.f32.xlu0 %v4830
        %v4832 = vpop.xlane.xlu0 %4831
        %v4833 = vsel %vm962, %v4815, 0.0
        %4834 = vadd.xlane.f32.xlu0 %v4833
        %v4835 = vpop.xlane.xlu0 %4834
        %v4836 = vsel %vm962, %v4817, 0.0
        %4837 = vadd.xlane.f32.xlu0 %v4836
        %v4838 = vpop.xlane.xlu0 %4837
        %v4839 = vsel %vm962, %v4819, 0.0
        %4840 = vadd.xlane.f32.xlu0 %v4839
        %v4841 = vpop.xlane.xlu0 %4840
        %v4842 = vsel %vm962, %v4821, 0.0
        %4843 = vadd.xlane.f32.xlu0 %v4842
        %v4844 = vpop.xlane.xlu0 %4843
        %v4845 = vsel %vm962, %v4823, 0.0
        %4846 = vadd.xlane.f32.xlu0 %v4845
        %v4847 = vpop.xlane.xlu0 %4846
        %v4848 = vrcp.pop %v4826
        %v4849 = vrcp.pop %v4829
        %v4850 = vrcp.pop %v4832
        %v4851 = vrcp.pop %v4835
        %v4852 = vrcp.pop %v4838
        %v4853 = vrcp.pop %v4841
        %v4854 = vrcp.pop %v4844
        %v4855 = vrcp.pop %v4847
        %v4856 = vmul.f32 %v4809, %v4848
        %v4857 = vmul.f32 %v4811, %v4849
        %v4858 = vmul.f32 %v4813, %v4850
        %v4859 = vmul.f32 %v4815, %v4851
        %v4860 = vmul.f32 %v4817, %v4852
        %v4861 = vmul.f32 %v4819, %v4853
        %v4862 = vmul.f32 %v4821, %v4854
        %v4863 = vmul.f32 %v4823, %v4855
        %v4864 = vpack.c.bf16 %v4856, %v4856
        %v4865 = vpack.c.bf16 %v4857, %v4857
        %v4866 = vpack.c.bf16 %v4858, %v4858
        %v4867 = vpack.c.bf16 %v4859, %v4859
        %v4868 = vpack.c.bf16 %v4860, %v4860
        %v4869 = vpack.c.bf16 %v4861, %v4861
        %v4870 = vpack.c.bf16 %v4862, %v4862
        %v4871 = vpack.c.bf16 %v4863, %v4863
        %v4874 = vunpack.c.l.b16 %v4864
        %v4875 = vunpack.c.l.b16 %v4865
        %v4876 = vpack.c.b16 %v4875, %v4874
        %4877 = vrot.lane.b32.xlu0 %v4229, 64
        %v4878 = vpop.permute.xlu0 %4877
        %v4881 = vsel %vm962, %v4876, 0
        %4883 = vmatpush.bf16.msra.mxu0 0
        %4884 = vmatpush.bf16.msra.mxu0 0
        %4885 = vmatpush.bf16.msra.mxu0 0
        %4886 = vmatpush.bf16.msra.mxu0 0
        %4887 = vmatpush.bf16.msra.mxu0 0
        %4888 = vmatpush.bf16.msra.mxu0 0
        %4889 = vmatpush.bf16.msra.mxu0 0
        %4890 = vmatpush.bf16.msra.mxu0 %v4878
        %4891 = vmatmul.bf16.gmra.mxu0 %v4881
        %v4892 = vpop.f32.mrf.mxu0
        %v4893 = vadd.f32 0.0, %v4892
        %v4894 = vpop.f32.mrf.mxu0
        %v4895 = vadd.f32 0.0, %v4894
        %4896 = vdwg.mxu0
        %v4899 = vunpack.c.l.b16 %v4866
        %v4900 = vunpack.c.l.b16 %v4867
        %v4901 = vpack.c.b16 %v4900, %v4899
        %4902 = vrot.lane.b32.xlu0 %v4257, 64
        %v4903 = vpop.permute.xlu0 %4902
        %v4906 = vsel %vm962, %v4901, 0
        %4908 = vmatpush.bf16.msra.mxu0 0
        %4909 = vmatpush.bf16.msra.mxu0 0
        %4910 = vmatpush.bf16.msra.mxu0 0
        %4911 = vmatpush.bf16.msra.mxu0 0
        %4912 = vmatpush.bf16.msra.mxu0 0
        %4913 = vmatpush.bf16.msra.mxu0 0
        %4914 = vmatpush.bf16.msra.mxu0 0
        %4915 = vmatpush.bf16.msra.mxu0 %v4903
        %4916 = vmatmul.bf16.gmra.mxu0 %v4906
        %v4917 = vpop.f32.mrf.mxu0
        %v4918 = vadd.f32 0.0, %v4917
        %v4919 = vpop.f32.mrf.mxu0
        %v4920 = vadd.f32 0.0, %v4919
        %4921 = vdwg.mxu0
        %v4924 = vunpack.c.l.b16 %v4868
        %v4925 = vunpack.c.l.b16 %v4869
        %v4926 = vpack.c.b16 %v4925, %v4924
        %4927 = vrot.lane.b32.xlu0 %v4285, 64
        %v4928 = vpop.permute.xlu0 %4927
        %v4931 = vsel %vm962, %v4926, 0
        %4933 = vmatpush.bf16.msra.mxu0 0
        %4934 = vmatpush.bf16.msra.mxu0 0
        %4935 = vmatpush.bf16.msra.mxu0 0
        %4936 = vmatpush.bf16.msra.mxu0 0
        %4937 = vmatpush.bf16.msra.mxu0 0
        %4938 = vmatpush.bf16.msra.mxu0 0
        %4939 = vmatpush.bf16.msra.mxu0 0
        %4940 = vmatpush.bf16.msra.mxu0 %v4928
        %4941 = vmatmul.bf16.gmra.mxu0 %v4931
        %v4942 = vpop.f32.mrf.mxu0
        %v4943 = vadd.f32 0.0, %v4942
        %v4944 = vpop.f32.mrf.mxu0
        %v4945 = vadd.f32 0.0, %v4944
        %4946 = vdwg.mxu0
        %v4949 = vunpack.c.l.b16 %v4870
        %v4950 = vunpack.c.l.b16 %v4871
        %v4951 = vpack.c.b16 %v4950, %v4949
        %4952 = vrot.lane.b32.xlu0 %v4313, 64
        %v4953 = vpop.permute.xlu0 %4952
        %v4956 = vsel %vm962, %v4951, 0
        %4958 = vmatpush.bf16.msra.mxu0 0
        %4959 = vmatpush.bf16.msra.mxu0 0
        %4960 = vmatpush.bf16.msra.mxu0 0
        %4961 = vmatpush.bf16.msra.mxu0 0
        %4962 = vmatpush.bf16.msra.mxu0 0
        %4963 = vmatpush.bf16.msra.mxu0 0
        %4964 = vmatpush.bf16.msra.mxu0 0
        %4965 = vmatpush.bf16.msra.mxu0 %v4953
        %4966 = vmatmul.bf16.gmra.mxu0 %v4956
        %v4967 = vpop.f32.mrf.mxu0
        %v4968 = vadd.f32 0.0, %v4967
        %v4969 = vpop.f32.mrf.mxu0
        %v4970 = vadd.f32 0.0, %v4969
        %4971 = vdwg.mxu0
        %4972 = vrot.lane.b32.xlu0 %v3988, 32
        %v4973 = vpop.permute.xlu0 %4972
        %4974 = vrot.lane.b32.xlu0 %v3990, 32
        %v4975 = vpop.permute.xlu0 %4974
        %4976 = vrot.lane.b32.xlu0 %v3992, 32
        %v4977 = vpop.permute.xlu0 %4976
        %4978 = vrot.lane.b32.xlu0 %v3994, 32
        %v4979 = vpop.permute.xlu0 %4978
        %4980 = vrot.lane.b32.xlu0 %v3996, 32
        %v4981 = vpop.permute.xlu0 %4980
        %4982 = vrot.lane.b32.xlu0 %v3998, 32
        %v4983 = vpop.permute.xlu0 %4982
        %4984 = vrot.lane.b32.xlu0 %v4000, 32
        %v4985 = vpop.permute.xlu0 %4984
        %4986 = vrot.lane.b32.xlu0 %v4002, 32
        %v4987 = vpop.permute.xlu0 %4986
        %v4988 = vrot.slane %v4973, 4
        %v4989 = vrot.slane %v4975, 4
        %v4990 = vrot.slane %v4977, 4
        %v4991 = vrot.slane %v4979, 4
        %v4992 = vrot.slane %v4981, 4
        %v4993 = vrot.slane %v4983, 4
        %v4994 = vrot.slane %v4985, 4
        %v4995 = vrot.slane %v4987, 4
        %4996 = vrot.lane.b32.xlu0 %v4022, 32
        %v4997 = vpop.permute.xlu0 %4996
        %v4998 = vunpack.c.l.b16 %v4988
        %v4999 = vunpack.c.l.b16 %v4989
        %v5000 = vpack.c.b16 %v4999, %v4998
        %v5002 = vsel %vm863, %v4997, 0
        %v5005 = vsel %vm863, %v5000, 0
        %5007 = vmatpush.bf16.xpose.msra.mxu0 0
        %5008 = vmatpush.bf16.xpose.msra.mxu0 0
        %5009 = vmatpush.bf16.xpose.msra.mxu0 0
        %5010 = vmatpush.bf16.xpose.msra.mxu0 0
        %5011 = vmatpush.bf16.xpose.msra.mxu0 0
        %5012 = vmatpush.bf16.xpose.msra.mxu0 0
        %5013 = vmatpush.bf16.xpose.msra.mxu0 0
        %5014 = vmatpush.bf16.xpose.msra.mxu0 %v5005
        %5015 = vmatmul.bf16.gmra.mxu0 %v5002
        %v5016 = vpop.f32.mrf.mxu0
        %v5017 = vadd.f32 0.0, %v5016
        %v5018 = vpop.f32.mrf.mxu0
        %v5019 = vadd.f32 0.0, %v5018
        %5020 = vdwg.mxu0
        %5021 = vrot.lane.b32.xlu0 %v4048, 32
        %v5022 = vpop.permute.xlu0 %5021
        %v5023 = vunpack.c.l.b16 %v4990
        %v5024 = vunpack.c.l.b16 %v4991
        %v5025 = vpack.c.b16 %v5024, %v5023
        %v5027 = vsel %vm863, %v5022, 0
        %v5030 = vsel %vm863, %v5025, 0
        %5032 = vmatpush.bf16.xpose.msra.mxu0 0
        %5033 = vmatpush.bf16.xpose.msra.mxu0 0
        %5034 = vmatpush.bf16.xpose.msra.mxu0 0
        %5035 = vmatpush.bf16.xpose.msra.mxu0 0
        %5036 = vmatpush.bf16.xpose.msra.mxu0 0
        %5037 = vmatpush.bf16.xpose.msra.mxu0 0
        %5038 = vmatpush.bf16.xpose.msra.mxu0 0
        %5039 = vmatpush.bf16.xpose.msra.mxu0 %v5030
        %5040 = vmatmul.bf16.gmra.mxu0 %v5027
        %v5041 = vpop.f32.mrf.mxu0
        %v5042 = vadd.f32 0.0, %v5041
        %v5043 = vpop.f32.mrf.mxu0
        %v5044 = vadd.f32 0.0, %v5043
        %5045 = vdwg.mxu0
        %5046 = vrot.lane.b32.xlu0 %v4074, 32
        %v5047 = vpop.permute.xlu0 %5046
        %v5048 = vunpack.c.l.b16 %v4992
        %v5049 = vunpack.c.l.b16 %v4993
        %v5050 = vpack.c.b16 %v5049, %v5048
        %v5052 = vsel %vm863, %v5047, 0
        %v5055 = vsel %vm863, %v5050, 0
        %5057 = vmatpush.bf16.xpose.msra.mxu0 0
        %5058 = vmatpush.bf16.xpose.msra.mxu0 0
        %5059 = vmatpush.bf16.xpose.msra.mxu0 0
        %5060 = vmatpush.bf16.xpose.msra.mxu0 0
        %5061 = vmatpush.bf16.xpose.msra.mxu0 0
        %5062 = vmatpush.bf16.xpose.msra.mxu0 0
        %5063 = vmatpush.bf16.xpose.msra.mxu0 0
        %5064 = vmatpush.bf16.xpose.msra.mxu0 %v5055
        %5065 = vmatmul.bf16.gmra.mxu0 %v5052
        %v5066 = vpop.f32.mrf.mxu0
        %v5067 = vadd.f32 0.0, %v5066
        %v5068 = vpop.f32.mrf.mxu0
        %v5069 = vadd.f32 0.0, %v5068
        %5070 = vdwg.mxu0
        %5071 = vrot.lane.b32.xlu0 %v4100, 32
        %v5072 = vpop.permute.xlu0 %5071
        %v5073 = vunpack.c.l.b16 %v4994
        %v5074 = vunpack.c.l.b16 %v4995
        %v5075 = vpack.c.b16 %v5074, %v5073
        %v5077 = vsel %vm863, %v5072, 0
        %v5080 = vsel %vm863, %v5075, 0
        %5082 = vmatpush.bf16.xpose.msra.mxu0 0
        %5083 = vmatpush.bf16.xpose.msra.mxu0 0
        %5084 = vmatpush.bf16.xpose.msra.mxu0 0
        %5085 = vmatpush.bf16.xpose.msra.mxu0 0
        %5086 = vmatpush.bf16.xpose.msra.mxu0 0
        %5087 = vmatpush.bf16.xpose.msra.mxu0 0
        %5088 = vmatpush.bf16.xpose.msra.mxu0 0
        %5089 = vmatpush.bf16.xpose.msra.mxu0 %v5080
        %5090 = vmatmul.bf16.gmra.mxu0 %v5077
        %v5091 = vpop.f32.mrf.mxu0
        %v5092 = vadd.f32 0.0, %v5091
        %v5093 = vpop.f32.mrf.mxu0
        %v5094 = vadd.f32 0.0, %v5093
        %5095 = vdwg.mxu0
        %v5096 = vsel %vm962, %v5017, -inf
        %5097 = vmax.xlane.f32.xlu0 %v5096
        %v5098 = vpop.xlane.xlu0 %5097
        %v5099 = vsel %vm962, %v5019, -inf
        %5100 = vmax.xlane.f32.xlu0 %v5099
        %v5101 = vpop.xlane.xlu0 %5100
        %v5102 = vsel %vm962, %v5042, -inf
        %5103 = vmax.xlane.f32.xlu0 %v5102
        %v5104 = vpop.xlane.xlu0 %5103
        %v5105 = vsel %vm962, %v5044, -inf
        %5106 = vmax.xlane.f32.xlu0 %v5105
        %v5107 = vpop.xlane.xlu0 %5106
        %v5108 = vsel %vm962, %v5067, -inf
        %5109 = vmax.xlane.f32.xlu0 %v5108
        %v5110 = vpop.xlane.xlu0 %5109
        %v5111 = vsel %vm962, %v5069, -inf
        %5112 = vmax.xlane.f32.xlu0 %v5111
        %v5113 = vpop.xlane.xlu0 %5112
        %v5114 = vsel %vm962, %v5092, -inf
        %5115 = vmax.xlane.f32.xlu0 %v5114
        %v5116 = vpop.xlane.xlu0 %5115
        %v5117 = vsel %vm962, %v5094, -inf
        %5118 = vmax.xlane.f32.xlu0 %v5117
        %v5119 = vpop.xlane.xlu0 %5118
        %v5120 = vsub.f32 %v5017, %v5098
        %v5121 = vsub.f32 %v5019, %v5101
        %v5122 = vsub.f32 %v5042, %v5104
        %v5123 = vsub.f32 %v5044, %v5107
        %v5124 = vsub.f32 %v5067, %v5110
        %v5125 = vsub.f32 %v5069, %v5113
        %v5126 = vsub.f32 %v5092, %v5116
        %v5127 = vsub.f32 %v5094, %v5119
        %v5128 = vmul.f32 %v5120, 1.442695
        %v5129 = vpow.pop %v5128
        %v5130 = vmul.f32 %v5121, 1.442695
        %v5131 = vpow.pop %v5130
        %v5132 = vmul.f32 %v5122, 1.442695
        %v5133 = vpow.pop %v5132
        %v5134 = vmul.f32 %v5123, 1.442695
        %v5135 = vpow.pop %v5134
        %v5136 = vmul.f32 %v5124, 1.442695
        %v5137 = vpow.pop %v5136
        %v5138 = vmul.f32 %v5125, 1.442695
        %v5139 = vpow.pop %v5138
        %v5140 = vmul.f32 %v5126, 1.442695
        %v5141 = vpow.pop %v5140
        %v5142 = vmul.f32 %v5127, 1.442695
        %v5143 = vpow.pop %v5142
        %v5144 = vsel %vm962, %v5129, 0.0
        %5145 = vadd.xlane.f32.xlu0 %v5144
        %v5146 = vpop.xlane.xlu0 %5145
        %v5147 = vsel %vm962, %v5131, 0.0
        %5148 = vadd.xlane.f32.xlu0 %v5147
        %v5149 = vpop.xlane.xlu0 %5148
        %v5150 = vsel %vm962, %v5133, 0.0
        %5151 = vadd.xlane.f32.xlu0 %v5150
        %v5152 = vpop.xlane.xlu0 %5151
        %v5153 = vsel %vm962, %v5135, 0.0
        %5154 = vadd.xlane.f32.xlu0 %v5153
        %v5155 = vpop.xlane.xlu0 %5154
        %v5156 = vsel %vm962, %v5137, 0.0
        %5157 = vadd.xlane.f32.xlu0 %v5156
        %v5158 = vpop.xlane.xlu0 %5157
        %v5159 = vsel %vm962, %v5139, 0.0
        %5160 = vadd.xlane.f32.xlu0 %v5159
        %v5161 = vpop.xlane.xlu0 %5160
        %v5162 = vsel %vm962, %v5141, 0.0
        %5163 = vadd.xlane.f32.xlu0 %v5162
        %v5164 = vpop.xlane.xlu0 %5163
        %v5165 = vsel %vm962, %v5143, 0.0
        %5166 = vadd.xlane.f32.xlu0 %v5165
        %v5167 = vpop.xlane.xlu0 %5166
        %v5168 = vrcp.pop %v5146
        %v5169 = vrcp.pop %v5149
        %v5170 = vrcp.pop %v5152
        %v5171 = vrcp.pop %v5155
        %v5172 = vrcp.pop %v5158
        %v5173 = vrcp.pop %v5161
        %v5174 = vrcp.pop %v5164
        %v5175 = vrcp.pop %v5167
        %v5176 = vmul.f32 %v5129, %v5168
        %v5177 = vmul.f32 %v5131, %v5169
        %v5178 = vmul.f32 %v5133, %v5170
        %v5179 = vmul.f32 %v5135, %v5171
        %v5180 = vmul.f32 %v5137, %v5172
        %v5181 = vmul.f32 %v5139, %v5173
        %v5182 = vmul.f32 %v5141, %v5174
        %v5183 = vmul.f32 %v5143, %v5175
        %v5184 = vpack.c.bf16 %v5176, %v5176
        %v5185 = vpack.c.bf16 %v5177, %v5177
        %v5186 = vpack.c.bf16 %v5178, %v5178
        %v5187 = vpack.c.bf16 %v5179, %v5179
        %v5188 = vpack.c.bf16 %v5180, %v5180
        %v5189 = vpack.c.bf16 %v5181, %v5181
        %v5190 = vpack.c.bf16 %v5182, %v5182
        %v5191 = vpack.c.bf16 %v5183, %v5183
        %v5194 = vunpack.c.l.b16 %v5184
        %v5195 = vunpack.c.l.b16 %v5185
        %v5196 = vpack.c.b16 %v5195, %v5194
        %5197 = vrot.lane.b32.xlu0 %v4229, 32
        %v5198 = vpop.permute.xlu0 %5197
        %v5201 = vsel %vm962, %v5196, 0
        %5203 = vmatpush.bf16.msra.mxu0 0
        %5204 = vmatpush.bf16.msra.mxu0 0
        %5205 = vmatpush.bf16.msra.mxu0 0
        %5206 = vmatpush.bf16.msra.mxu0 0
        %5207 = vmatpush.bf16.msra.mxu0 0
        %5208 = vmatpush.bf16.msra.mxu0 0
        %5209 = vmatpush.bf16.msra.mxu0 0
        %5210 = vmatpush.bf16.msra.mxu0 %v5198
        %5211 = vmatmul.bf16.gmra.mxu0 %v5201
        %v5212 = vpop.f32.mrf.mxu0
        %v5213 = vadd.f32 0.0, %v5212
        %v5214 = vpop.f32.mrf.mxu0
        %v5215 = vadd.f32 0.0, %v5214
        %5216 = vdwg.mxu0
        %v5219 = vunpack.c.l.b16 %v5186
        %v5220 = vunpack.c.l.b16 %v5187
        %v5221 = vpack.c.b16 %v5220, %v5219
        %5222 = vrot.lane.b32.xlu0 %v4257, 32
        %v5223 = vpop.permute.xlu0 %5222
        %v5226 = vsel %vm962, %v5221, 0
        %5228 = vmatpush.bf16.msra.mxu0 0
        %5229 = vmatpush.bf16.msra.mxu0 0
        %5230 = vmatpush.bf16.msra.mxu0 0
        %5231 = vmatpush.bf16.msra.mxu0 0
        %5232 = vmatpush.bf16.msra.mxu0 0
        %5233 = vmatpush.bf16.msra.mxu0 0
        %5234 = vmatpush.bf16.msra.mxu0 0
        %5235 = vmatpush.bf16.msra.mxu0 %v5223
        %5236 = vmatmul.bf16.gmra.mxu0 %v5226
        %v5237 = vpop.f32.mrf.mxu0
        %v5238 = vadd.f32 0.0, %v5237
        %v5239 = vpop.f32.mrf.mxu0
        %v5240 = vadd.f32 0.0, %v5239
        %5241 = vdwg.mxu0
        %v5244 = vunpack.c.l.b16 %v5188
        %v5245 = vunpack.c.l.b16 %v5189
        %v5246 = vpack.c.b16 %v5245, %v5244
        %5247 = vrot.lane.b32.xlu0 %v4285, 32
        %v5248 = vpop.permute.xlu0 %5247
        %v5251 = vsel %vm962, %v5246, 0
        %5253 = vmatpush.bf16.msra.mxu0 0
        %5254 = vmatpush.bf16.msra.mxu0 0
        %5255 = vmatpush.bf16.msra.mxu0 0
        %5256 = vmatpush.bf16.msra.mxu0 0
        %5257 = vmatpush.bf16.msra.mxu0 0
        %5258 = vmatpush.bf16.msra.mxu0 0
        %5259 = vmatpush.bf16.msra.mxu0 0
        %5260 = vmatpush.bf16.msra.mxu0 %v5248
        %5261 = vmatmul.bf16.gmra.mxu0 %v5251
        %v5262 = vpop.f32.mrf.mxu0
        %v5263 = vadd.f32 0.0, %v5262
        %v5264 = vpop.f32.mrf.mxu0
        %v5265 = vadd.f32 0.0, %v5264
        %5266 = vdwg.mxu0
        %v5269 = vunpack.c.l.b16 %v5190
        %v5270 = vunpack.c.l.b16 %v5191
        %v5271 = vpack.c.b16 %v5270, %v5269
        %5272 = vrot.lane.b32.xlu0 %v4313, 32
        %v5273 = vpop.permute.xlu0 %5272
        %v5276 = vsel %vm962, %v5271, 0
        %5278 = vmatpush.bf16.msra.mxu0 0
        %5279 = vmatpush.bf16.msra.mxu0 0
        %5280 = vmatpush.bf16.msra.mxu0 0
        %5281 = vmatpush.bf16.msra.mxu0 0
        %5282 = vmatpush.bf16.msra.mxu0 0
        %5283 = vmatpush.bf16.msra.mxu0 0
        %5284 = vmatpush.bf16.msra.mxu0 0
        %5285 = vmatpush.bf16.msra.mxu0 %v5273
        %5286 = vmatmul.bf16.gmra.mxu0 %v5276
        %v5287 = vpop.f32.mrf.mxu0
        %v5288 = vadd.f32 0.0, %v5287
        %v5289 = vpop.f32.mrf.mxu0
        %v5290 = vadd.f32 0.0, %v5289
        %5291 = vdwg.mxu0
        %5300 = vrot.lane.b32.xlu0 %v4573, 32
        %v5301 = vpop.permute.xlu0 %5300
        %5302 = vrot.lane.b32.xlu0 %v4575, 32
        %v5303 = vpop.permute.xlu0 %5302
        %5304 = vrot.lane.b32.xlu0 %v4598, 32
        %v5305 = vpop.permute.xlu0 %5304
        %5306 = vrot.lane.b32.xlu0 %v4600, 32
        %v5307 = vpop.permute.xlu0 %5306
        %5308 = vrot.lane.b32.xlu0 %v4623, 32
        %v5309 = vpop.permute.xlu0 %5308
        %5310 = vrot.lane.b32.xlu0 %v4625, 32
        %v5311 = vpop.permute.xlu0 %5310
        %5312 = vrot.lane.b32.xlu0 %v4648, 32
        %v5313 = vpop.permute.xlu0 %5312
        %5314 = vrot.lane.b32.xlu0 %v4650, 32
        %v5315 = vpop.permute.xlu0 %5314
        %5332 = vrot.lane.b32.xlu0 %v4893, 64
        %v5333 = vpop.permute.xlu0 %5332
        %5334 = vrot.lane.b32.xlu0 %v4895, 64
        %v5335 = vpop.permute.xlu0 %5334
        %5336 = vrot.lane.b32.xlu0 %v4918, 64
        %v5337 = vpop.permute.xlu0 %5336
        %5338 = vrot.lane.b32.xlu0 %v4920, 64
        %v5339 = vpop.permute.xlu0 %5338
        %5340 = vrot.lane.b32.xlu0 %v4943, 64
        %v5341 = vpop.permute.xlu0 %5340
        %5342 = vrot.lane.b32.xlu0 %v4945, 64
        %v5343 = vpop.permute.xlu0 %5342
        %5344 = vrot.lane.b32.xlu0 %v4968, 64
        %v5345 = vpop.permute.xlu0 %5344
        %5346 = vrot.lane.b32.xlu0 %v4970, 64
        %v5347 = vpop.permute.xlu0 %5346
        %5364 = vrot.lane.b32.xlu0 %v5213, 96
        %v5365 = vpop.permute.xlu0 %5364
        %5366 = vrot.lane.b32.xlu0 %v5215, 96
        %v5367 = vpop.permute.xlu0 %5366
        %5368 = vrot.lane.b32.xlu0 %v5238, 96
        %v5369 = vpop.permute.xlu0 %5368
        %5370 = vrot.lane.b32.xlu0 %v5240, 96
        %v5371 = vpop.permute.xlu0 %5370
        %5372 = vrot.lane.b32.xlu0 %v5263, 96
        %v5373 = vpop.permute.xlu0 %5372
        %5374 = vrot.lane.b32.xlu0 %v5265, 96
        %v5375 = vpop.permute.xlu0 %5374
        %5376 = vrot.lane.b32.xlu0 %v5288, 96
        %v5377 = vpop.permute.xlu0 %5376
        %5378 = vrot.lane.b32.xlu0 %v5290, 96
        %v5379 = vpop.permute.xlu0 %5378
        %v5388 = vsel %vm863, %v4244, %v5301
        %v5389 = vsel %vm863, %v4246, %v5303
        %v5390 = vsel %vm863, %v4272, %v5305
        %v5391 = vsel %vm863, %v4274, %v5307
        %v5392 = vsel %vm863, %v4300, %v5309
        %v5393 = vsel %vm863, %v4302, %v5311
        %v5394 = vsel %vm863, %v4328, %v5313
        %v5395 = vsel %vm863, %v4330, %v5315
        %v5396 = vsel %vm2235, %v5388, %v5333
        %v5397 = vsel %vm2235, %v5389, %v5335
        %v5398 = vsel %vm2235, %v5390, %v5337
        %v5399 = vsel %vm2235, %v5391, %v5339
        %v5400 = vsel %vm2235, %v5392, %v5341
        %v5401 = vsel %vm2235, %v5393, %v5343
        %v5402 = vsel %vm2235, %v5394, %v5345
        %v5403 = vsel %vm2235, %v5395, %v5347
        %v5404 = vsel %vm2244, %v5396, %v5365
        %v5405 = vsel %vm2244, %v5397, %v5367
        %v5406 = vsel %vm2244, %v5398, %v5369
        %v5407 = vsel %vm2244, %v5399, %v5371
        %v5408 = vsel %vm2244, %v5400, %v5373
        %v5409 = vsel %vm2244, %v5401, %v5375
        %v5410 = vsel %vm2244, %v5402, %v5377
        %v5411 = vsel %vm2244, %v5403, %v5379
        %v5412 = vpack.c.bf16 %v5405, %v5404
        %v5413 = vpack.c.bf16 %v5407, %v5406
        %v5414 = vpack.c.bf16 %v5409, %v5408
        %v5415 = vpack.c.bf16 %v5411, %v5410
        %v5432 = vunpack.c.l.b16 %v3703
        %v5433 = vunpack.c.l.b16 %v3704
        %v5434 = vunpack.c.l.b16 %v3705
        %v5435 = vunpack.c.l.b16 %v3706
        %v5436 = vunpack.c.l.b16 %v3707
        %v5437 = vunpack.c.l.b16 %v3708
        %v5438 = vunpack.c.l.b16 %v3709
        %v5439 = vunpack.c.l.b16 %v3710
        %v5440 = vunpack.c.l.b16 %v3711
        %v5441 = vunpack.c.l.b16 %v3712
        %v5442 = vunpack.c.l.b16 %v3713
        %v5443 = vunpack.c.l.b16 %v3714
        %v5444 = vunpack.c.l.b16 %v3715
        %v5445 = vunpack.c.l.b16 %v3716
        %v5446 = vunpack.c.l.b16 %v3717
        %v5447 = vunpack.c.l.b16 %v3718
        %v5448 = vpack.c.b16 %v5433, %v5432
        %v5449 = vpack.c.b16 %v5435, %v5434
        %v5450 = vpack.c.b16 %v5437, %v5436
        %v5451 = vpack.c.b16 %v5439, %v5438
        %v5452 = vpack.c.b16 %v5441, %v5440
        %v5453 = vpack.c.b16 %v5443, %v5442
        %v5454 = vpack.c.b16 %v5445, %v5444
        %v5455 = vpack.c.b16 %v5447, %v5446
        %5464 = vmatpush.bf16.msra.mxu0 %v5455
        %5465 = vmatpush.bf16.msra.mxu0 %v5454
        %5466 = vmatpush.bf16.msra.mxu0 %v5453
        %5467 = vmatpush.bf16.msra.mxu0 %v5452
        %5468 = vmatpush.bf16.msra.mxu0 %v5451
        %5469 = vmatpush.bf16.msra.mxu0 %v5450
        %5470 = vmatpush.bf16.msra.mxu0 %v5449
        %5471 = vmatpush.bf16.msra.mxu0 %v5448
        %5472 = vmatmul.bf16.gmra.mxu0 %v5412
        %v5473 = vpop.f32.mrf.mxu0
        %v5474 = vadd.f32 %v3661, %v5473
        %v5475 = vpop.f32.mrf.mxu0
        %v5476 = vadd.f32 %v3662, %v5475
        %5477 = vmatmul.bf16.gmra.mxu0 %v5413
        %v5478 = vpop.f32.mrf.mxu0
        %v5479 = vadd.f32 %v3663, %v5478
        %v5480 = vpop.f32.mrf.mxu0
        %v5481 = vadd.f32 %v3664, %v5480
        %5482 = vmatmul.bf16.gmra.mxu0 %v5414
        %v5483 = vpop.f32.mrf.mxu0
        %v5484 = vadd.f32 %v3665, %v5483
        %v5485 = vpop.f32.mrf.mxu0
        %v5486 = vadd.f32 %v3666, %v5485
        %5487 = vmatmul.bf16.gmra.mxu0 %v5415
        %v5488 = vpop.f32.mrf.mxu0
        %v5489 = vadd.f32 %v3667, %v5488
        %v5490 = vpop.f32.mrf.mxu0
        %v5491 = vadd.f32 %v3668, %v5490
        %5492 = vdwg.mxu0
        %5493 = vadd.xlane.f32.xlu0 %v5474
        %v5494 = vpop.xlane.xlu0 %5493
        %5495 = vadd.xlane.f32.xlu0 %v5476
        %v5496 = vpop.xlane.xlu0 %5495
        %5497 = vadd.xlane.f32.xlu0 %v5479
        %v5498 = vpop.xlane.xlu0 %5497
        %5499 = vadd.xlane.f32.xlu0 %v5481
        %v5500 = vpop.xlane.xlu0 %5499
        %5501 = vadd.xlane.f32.xlu0 %v5484
        %v5502 = vpop.xlane.xlu0 %5501
        %5503 = vadd.xlane.f32.xlu0 %v5486
        %v5504 = vpop.xlane.xlu0 %5503
        %5505 = vadd.xlane.f32.xlu0 %v5489
        %v5506 = vpop.xlane.xlu0 %5505
        %5507 = vadd.xlane.f32.xlu0 %v5491
        %v5508 = vpop.xlane.xlu0 %5507
        %v5509 = vmul.f32 %v5494, %v2356
        %v5510 = vmul.f32 %v5496, %v2356
        %v5511 = vmul.f32 %v5498, %v2356
        %v5512 = vmul.f32 %v5500, %v2356
        %v5513 = vmul.f32 %v5502, %v2356
        %v5514 = vmul.f32 %v5504, %v2356
        %v5515 = vmul.f32 %v5506, %v2356
        %v5516 = vmul.f32 %v5508, %v2356
        %v5517 = vsub.f32 %v5474, %v5509
        %v5518 = vsub.f32 %v5476, %v5510
        %v5519 = vsub.f32 %v5479, %v5511
        %v5520 = vsub.f32 %v5481, %v5512
        %v5521 = vsub.f32 %v5484, %v5513
        %v5522 = vsub.f32 %v5486, %v5514
        %v5523 = vsub.f32 %v5489, %v5515
        %v5524 = vsub.f32 %v5491, %v5516
        %v5525 = vmul.f32 %v5517, %v5517
        %v5526 = vmul.f32 %v5518, %v5518
        %v5527 = vmul.f32 %v5519, %v5519
        %v5528 = vmul.f32 %v5520, %v5520
        %v5529 = vmul.f32 %v5521, %v5521
        %v5530 = vmul.f32 %v5522, %v5522
        %v5531 = vmul.f32 %v5523, %v5523
        %v5532 = vmul.f32 %v5524, %v5524
        %5533 = vadd.xlane.f32.xlu0 %v5525
        %v5534 = vpop.xlane.xlu0 %5533
        %5535 = vadd.xlane.f32.xlu0 %v5526
        %v5536 = vpop.xlane.xlu0 %5535
        %5537 = vadd.xlane.f32.xlu0 %v5527
        %v5538 = vpop.xlane.xlu0 %5537
        %5539 = vadd.xlane.f32.xlu0 %v5528
        %v5540 = vpop.xlane.xlu0 %5539
        %5541 = vadd.xlane.f32.xlu0 %v5529
        %v5542 = vpop.xlane.xlu0 %5541
        %5543 = vadd.xlane.f32.xlu0 %v5530
        %v5544 = vpop.xlane.xlu0 %5543
        %5545 = vadd.xlane.f32.xlu0 %v5531
        %v5546 = vpop.xlane.xlu0 %5545
        %5547 = vadd.xlane.f32.xlu0 %v5532
        %v5548 = vpop.xlane.xlu0 %5547
        %v5549 = vmul.f32 %v5534, %v2356
        %v5550 = vmul.f32 %v5536, %v2356
        %v5551 = vmul.f32 %v5538, %v2356
        %v5552 = vmul.f32 %v5540, %v2356
        %v5553 = vmul.f32 %v5542, %v2356
        %v5554 = vmul.f32 %v5544, %v2356
        %v5555 = vmul.f32 %v5546, %v2356
        %v5556 = vmul.f32 %v5548, %v2356
        %v5557 = vadd.f32 %v5549, 1e-05
        %v5558 = vadd.f32 %v5550, 1e-05
        %v5559 = vadd.f32 %v5551, 1e-05
        %v5560 = vadd.f32 %v5552, 1e-05
        %v5561 = vadd.f32 %v5553, 1e-05
        %v5562 = vadd.f32 %v5554, 1e-05
        %v5563 = vadd.f32 %v5555, 1e-05
        %v5564 = vadd.f32 %v5556, 1e-05
        %v5565 = vrsqrt.pop %v5557
        %v5566 = vmul.f32 %v5565, %v5557
        %v5567 = vmul.f32 %v5566, %v5565
        %v5568 = vmul.f32 0.5, %v5567
        %v5569 = vsub.f32 1.5, %v5568
        %v5570 = vmul.f32 %v5565, %v5569
        %vm5571 = vweird.f32 %v5557
        %vm5572 = vweird.f32 %v5565
        %vm5573 = vmor %vm5571, %vm5572
        %v5574 = vsel %vm5573, %v5565, %v5570
        %v5575 = vrsqrt.pop %v5558
        %v5576 = vmul.f32 %v5575, %v5558
        %v5577 = vmul.f32 %v5576, %v5575
        %v5578 = vmul.f32 0.5, %v5577
        %v5579 = vsub.f32 1.5, %v5578
        %v5580 = vmul.f32 %v5575, %v5579
        %vm5581 = vweird.f32 %v5558
        %vm5582 = vweird.f32 %v5575
        %vm5583 = vmor %vm5581, %vm5582
        %v5584 = vsel %vm5583, %v5575, %v5580
        %v5585 = vrsqrt.pop %v5559
        %v5586 = vmul.f32 %v5585, %v5559
        %v5587 = vmul.f32 %v5586, %v5585
        %v5588 = vmul.f32 0.5, %v5587
        %v5589 = vsub.f32 1.5, %v5588
        %v5590 = vmul.f32 %v5585, %v5589
        %vm5591 = vweird.f32 %v5559
        %vm5592 = vweird.f32 %v5585
        %vm5593 = vmor %vm5591, %vm5592
        %v5594 = vsel %vm5593, %v5585, %v5590
        %v5595 = vrsqrt.pop %v5560
        %v5596 = vmul.f32 %v5595, %v5560
        %v5597 = vmul.f32 %v5596, %v5595
        %v5598 = vmul.f32 0.5, %v5597
        %v5599 = vsub.f32 1.5, %v5598
        %v5600 = vmul.f32 %v5595, %v5599
        %vm5601 = vweird.f32 %v5560
        %vm5602 = vweird.f32 %v5595
        %vm5603 = vmor %vm5601, %vm5602
        %v5604 = vsel %vm5603, %v5595, %v5600
        %v5605 = vrsqrt.pop %v5561
        %v5606 = vmul.f32 %v5605, %v5561
        %v5607 = vmul.f32 %v5606, %v5605
        %v5608 = vmul.f32 0.5, %v5607
        %v5609 = vsub.f32 1.5, %v5608
        %v5610 = vmul.f32 %v5605, %v5609
        %vm5611 = vweird.f32 %v5561
        %vm5612 = vweird.f32 %v5605
        %vm5613 = vmor %vm5611, %vm5612
        %v5614 = vsel %vm5613, %v5605, %v5610
        %v5615 = vrsqrt.pop %v5562
        %v5616 = vmul.f32 %v5615, %v5562
        %v5617 = vmul.f32 %v5616, %v5615
        %v5618 = vmul.f32 0.5, %v5617
        %v5619 = vsub.f32 1.5, %v5618
        %v5620 = vmul.f32 %v5615, %v5619
        %vm5621 = vweird.f32 %v5562
        %vm5622 = vweird.f32 %v5615
        %vm5623 = vmor %vm5621, %vm5622
        %v5624 = vsel %vm5623, %v5615, %v5620
        %v5625 = vrsqrt.pop %v5563
        %v5626 = vmul.f32 %v5625, %v5563
        %v5627 = vmul.f32 %v5626, %v5625
        %v5628 = vmul.f32 0.5, %v5627
        %v5629 = vsub.f32 1.5, %v5628
        %v5630 = vmul.f32 %v5625, %v5629
        %vm5631 = vweird.f32 %v5563
        %vm5632 = vweird.f32 %v5625
        %vm5633 = vmor %vm5631, %vm5632
        %v5634 = vsel %vm5633, %v5625, %v5630
        %v5635 = vrsqrt.pop %v5564
        %v5636 = vmul.f32 %v5635, %v5564
        %v5637 = vmul.f32 %v5636, %v5635
        %v5638 = vmul.f32 0.5, %v5637
        %v5639 = vsub.f32 1.5, %v5638
        %v5640 = vmul.f32 %v5635, %v5639
        %vm5641 = vweird.f32 %v5564
        %vm5642 = vweird.f32 %v5635
        %vm5643 = vmor %vm5641, %vm5642
        %v5644 = vsel %vm5643, %v5635, %v5640
        %v5645 = vmul.f32 %v5517, %v5574
        %v5646 = vmul.f32 %v5518, %v5584
        %v5647 = vmul.f32 %v5519, %v5594
        %v5648 = vmul.f32 %v5520, %v5604
        %v5649 = vmul.f32 %v5521, %v5614
        %v5650 = vmul.f32 %v5522, %v5624
        %v5651 = vmul.f32 %v5523, %v5634
        %v5652 = vmul.f32 %v5524, %v5644
        %v5653 = vpack.c.bf16 %v5646, %v5645
        %v5654 = vpack.c.bf16 %v5648, %v5647
        %v5655 = vpack.c.bf16 %v5650, %v5649
        %v5656 = vpack.c.bf16 %v5652, %v5651
        %v5673 = vunpack.c.l.b16 %v3720
        %v5674 = vunpack.c.h.b16 %v3720
        %v5675 = vunpack.c.l.b16 %v3721
        %v5676 = vunpack.c.h.b16 %v3721
        %v5677 = vunpack.c.l.b16 %v3722
        %v5678 = vunpack.c.h.b16 %v3722
        %v5679 = vunpack.c.l.b16 %v3723
        %v5680 = vunpack.c.h.b16 %v3723
        %v5681 = vunpack.c.l.b16 %v3724
        %v5682 = vunpack.c.h.b16 %v3724
        %v5683 = vunpack.c.l.b16 %v3725
        %v5684 = vunpack.c.h.b16 %v3725
        %v5685 = vunpack.c.l.b16 %v3726
        %v5686 = vunpack.c.h.b16 %v3726
        %v5687 = vunpack.c.l.b16 %v3727
        %v5688 = vunpack.c.h.b16 %v3727
        %v5689 = vunpack.c.l.b16 %v3728
        %v5690 = vunpack.c.h.b16 %v3728
        %v5691 = vunpack.c.l.b16 %v3729
        %v5692 = vunpack.c.h.b16 %v3729
        %v5693 = vunpack.c.l.b16 %v3730
        %v5694 = vunpack.c.h.b16 %v3730
        %v5695 = vunpack.c.l.b16 %v3731
        %v5696 = vunpack.c.h.b16 %v3731
        %v5697 = vunpack.c.l.b16 %v3732
        %v5698 = vunpack.c.h.b16 %v3732
        %v5699 = vunpack.c.l.b16 %v3733
        %v5700 = vunpack.c.h.b16 %v3733
        %v5701 = vunpack.c.l.b16 %v3734
        %v5702 = vunpack.c.h.b16 %v3734
        %v5703 = vunpack.c.l.b16 %v3735
        %v5704 = vunpack.c.h.b16 %v3735
        %v5705 = vpack.c.b16 %v5675, %v5673
        %v5706 = vpack.c.b16 %v5676, %v5674
        %v5707 = vpack.c.b16 %v5679, %v5677
        %v5708 = vpack.c.b16 %v5680, %v5678
        %v5709 = vpack.c.b16 %v5683, %v5681
        %v5710 = vpack.c.b16 %v5684, %v5682
        %v5711 = vpack.c.b16 %v5687, %v5685
        %v5712 = vpack.c.b16 %v5688, %v5686
        %v5713 = vpack.c.b16 %v5691, %v5689
        %v5714 = vpack.c.b16 %v5692, %v5690
        %v5715 = vpack.c.b16 %v5695, %v5693
        %v5716 = vpack.c.b16 %v5696, %v5694
        %v5717 = vpack.c.b16 %v5699, %v5697
        %v5718 = vpack.c.b16 %v5700, %v5698
        %v5719 = vpack.c.b16 %v5703, %v5701
        %v5720 = vpack.c.b16 %v5704, %v5702
        %5737 = vmatpush.bf16.msra.mxu0 %v5719
        %5738 = vmatpush.bf16.msra.mxu0 %v5717
        %5739 = vmatpush.bf16.msra.mxu0 %v5715
        %5740 = vmatpush.bf16.msra.mxu0 %v5713
        %5741 = vmatpush.bf16.msra.mxu0 %v5711
        %5742 = vmatpush.bf16.msra.mxu0 %v5709
        %5743 = vmatpush.bf16.msra.mxu0 %v5707
        %5744 = vmatpush.bf16.msra.mxu0 %v5705
        %5745 = vmatmul.bf16.gmra.mxu0 %v5653
        %v5746 = vpop.f32.mrf.mxu0
        %v5747 = vadd.f32 0.0, %v5746
        %v5748 = vpop.f32.mrf.mxu0
        %v5749 = vadd.f32 0.0, %v5748
        %5750 = vmatmul.bf16.gmra.mxu0 %v5654
        %v5751 = vpop.f32.mrf.mxu0
        %v5752 = vadd.f32 0.0, %v5751
        %v5753 = vpop.f32.mrf.mxu0
        %v5754 = vadd.f32 0.0, %v5753
        %5755 = vmatmul.bf16.gmra.mxu0 %v5655
        %v5756 = vpop.f32.mrf.mxu0
        %v5757 = vadd.f32 0.0, %v5756
        %v5758 = vpop.f32.mrf.mxu0
        %v5759 = vadd.f32 0.0, %v5758
        %5760 = vmatmul.bf16.gmra.mxu0 %v5656
        %v5761 = vpop.f32.mrf.mxu0
        %v5762 = vadd.f32 0.0, %v5761
        %v5763 = vpop.f32.mrf.mxu0
        %v5764 = vadd.f32 0.0, %v5763
        %5765 = vdwg.mxu0
        %5766 = vmatpush.bf16.msra.mxu0 %v5720
        %5767 = vmatpush.bf16.msra.mxu0 %v5718
        %5768 = vmatpush.bf16.msra.mxu0 %v5716
        %5769 = vmatpush.bf16.msra.mxu0 %v5714
        %5770 = vmatpush.bf16.msra.mxu0 %v5712
        %5771 = vmatpush.bf16.msra.mxu0 %v5710
        %5772 = vmatpush.bf16.msra.mxu0 %v5708
        %5773 = vmatpush.bf16.msra.mxu0 %v5706
        %5774 = vmatmul.bf16.gmra.mxu0 %v5653
        %v5775 = vpop.f32.mrf.mxu0
        %v5776 = vadd.f32 0.0, %v5775
        %v5777 = vpop.f32.mrf.mxu0
        %v5778 = vadd.f32 0.0, %v5777
        %5779 = vmatmul.bf16.gmra.mxu0 %v5654
        %v5780 = vpop.f32.mrf.mxu0
        %v5781 = vadd.f32 0.0, %v5780
        %v5782 = vpop.f32.mrf.mxu0
        %v5783 = vadd.f32 0.0, %v5782
        %5784 = vmatmul.bf16.gmra.mxu0 %v5655
        %v5785 = vpop.f32.mrf.mxu0
        %v5786 = vadd.f32 0.0, %v5785
        %v5787 = vpop.f32.mrf.mxu0
        %v5788 = vadd.f32 0.0, %v5787
        %5789 = vmatmul.bf16.gmra.mxu0 %v5656
        %v5790 = vpop.f32.mrf.mxu0
        %v5791 = vadd.f32 0.0, %v5790
        %v5792 = vpop.f32.mrf.mxu0
        %v5793 = vadd.f32 0.0, %v5792
        %5794 = vdwg.mxu0
        %v5795 = vmul.f32 %v5747, 0.5
        %v5796 = vmul.f32 %v5776, 0.5
        %v5797 = vmul.f32 %v5749, 0.5
        %v5798 = vmul.f32 %v5778, 0.5
        %v5799 = vmul.f32 %v5752, 0.5
        %v5800 = vmul.f32 %v5781, 0.5
        %v5801 = vmul.f32 %v5754, 0.5
        %v5802 = vmul.f32 %v5783, 0.5
        %v5803 = vmul.f32 %v5757, 0.5
        %v5804 = vmul.f32 %v5786, 0.5
        %v5805 = vmul.f32 %v5759, 0.5
        %v5806 = vmul.f32 %v5788, 0.5
        %v5807 = vmul.f32 %v5762, 0.5
        %v5808 = vmul.f32 %v5791, 0.5
        %v5809 = vmul.f32 %v5764, 0.5
        %v5810 = vmul.f32 %v5793, 0.5
        %v5811 = vmul.f32 %v5747, 0.70710677
        %v5812 = vmul.f32 %v5776, 0.70710677
        %v5813 = vmul.f32 %v5749, 0.70710677
        %v5814 = vmul.f32 %v5778, 0.70710677
        %v5815 = vmul.f32 %v5752, 0.70710677
        %v5816 = vmul.f32 %v5781, 0.70710677
        %v5817 = vmul.f32 %v5754, 0.70710677
        %v5818 = vmul.f32 %v5783, 0.70710677
        %v5819 = vmul.f32 %v5757, 0.70710677
        %v5820 = vmul.f32 %v5786, 0.70710677
        %v5821 = vmul.f32 %v5759, 0.70710677
        %v5822 = vmul.f32 %v5788, 0.70710677
        %v5823 = vmul.f32 %v5762, 0.70710677
        %v5824 = vmul.f32 %v5791, 0.70710677
        %v5825 = vmul.f32 %v5764, 0.70710677
        %v5826 = vmul.f32 %v5793, 0.70710677
        %v5827 = vmul.f32 %v5811, %v5811
        %v5828 = vmin.f32 16.0, %v5827
        %v5829 = vmul.f32 %v5828, 2.1237322e-06
        %v5830 = vadd.f32 %v5829, 0.00028619796
        %v5831 = vmul.f32 %v5828, %v5830
        %v5832 = vadd.f32 %v5831, 0.0036580483
        %v5833 = vmul.f32 %v5828, %v5832
        %v5834 = vadd.f32 %v5833, 0.05243302
        %v5835 = vmul.f32 %v5828, %v5834
        %v5836 = vadd.f32 %v5835, 0.18741608
        %v5837 = vmul.f32 %v5828, %v5836
        %v5838 = vadd.f32 %v5837, 1.1283791
        %v5839 = vmul.f32 %v5811, %v5838
        %v5840 = vmul.f32 %v5828, 3.8918573e-05
        %v5841 = vadd.f32 %v5840, 0.001143296
        %v5842 = vmul.f32 %v5828, %v5841
        %v5843 = vadd.f32 %v5842, 0.014752088
        %v5844 = vmul.f32 %v5828, %v5843
        %v5845 = vadd.f32 %v5844, 0.112945676
        %v5846 = vmul.f32 %v5828, %v5845
        %v5847 = vadd.f32 %v5846, 0.4994258
        %v5848 = vmul.f32 %v5828, %v5847
        %v5849 = vadd.f32 %v5848, 1.0
        %v5850 = vrcp.pop %v5849
        %v5851 = vmul.f32 %v5849, %v5850
        %v5852 = vsub.f32 1.0, %v5851
        %v5853 = vmul.f32 %v5850, %v5852
        %v5854 = vadd.f32 %v5850, %v5853
        %vm5855 = vweird.f32 %v5849
        %vm5856 = vweird.f32 %v5850
        %vm5857 = vmor %vm5855, %vm5856
        %v5858 = vsel %vm5857, %v5850, %v5854
        %v5859 = vand.u32 2147483647, %v5849
        %vm5860 = vcmp.eq.f32.partialorder %v5859, 8.507059e+37
        %v5861 = vand.u32 %v5849, 2147483648
        %v5862 = vor.u32 1.1754944e-38, %v5861
        %v5863 = vsel %vm5860, %v5862, %v5858
        %v5864 = vmul.f32 %v5839, %v5863
        %v5865 = vmin.f32 %v5864, 1.0
        %v5866 = vmax.f32 %v5865, -1.0
        %v5867 = vmul.f32 %v5812, %v5812
        %v5868 = vmin.f32 16.0, %v5867
        %v5869 = vmul.f32 %v5868, 2.1237322e-06
        %v5870 = vadd.f32 %v5869, 0.00028619796
        %v5871 = vmul.f32 %v5868, %v5870
        %v5872 = vadd.f32 %v5871, 0.0036580483
        %v5873 = vmul.f32 %v5868, %v5872
        %v5874 = vadd.f32 %v5873, 0.05243302
        %v5875 = vmul.f32 %v5868, %v5874
        %v5876 = vadd.f32 %v5875, 0.18741608
        %v5877 = vmul.f32 %v5868, %v5876
        %v5878 = vadd.f32 %v5877, 1.1283791
        %v5879 = vmul.f32 %v5812, %v5878
        %v5880 = vmul.f32 %v5868, 3.8918573e-05
        %v5881 = vadd.f32 %v5880, 0.001143296
        %v5882 = vmul.f32 %v5868, %v5881
        %v5883 = vadd.f32 %v5882, 0.014752088
        %v5884 = vmul.f32 %v5868, %v5883
        %v5885 = vadd.f32 %v5884, 0.112945676
        %v5886 = vmul.f32 %v5868, %v5885
        %v5887 = vadd.f32 %v5886, 0.4994258
        %v5888 = vmul.f32 %v5868, %v5887
        %v5889 = vadd.f32 %v5888, 1.0
        %v5890 = vrcp.pop %v5889
        %v5891 = vmul.f32 %v5889, %v5890
        %v5892 = vsub.f32 1.0, %v5891
        %v5893 = vmul.f32 %v5890, %v5892
        %v5894 = vadd.f32 %v5890, %v5893
        %vm5895 = vweird.f32 %v5889
        %vm5896 = vweird.f32 %v5890
        %vm5897 = vmor %vm5895, %vm5896
        %v5898 = vsel %vm5897, %v5890, %v5894
        %v5899 = vand.u32 2147483647, %v5889
        %vm5900 = vcmp.eq.f32.partialorder %v5899, 8.507059e+37
        %v5901 = vand.u32 %v5889, 2147483648
        %v5902 = vor.u32 1.1754944e-38, %v5901
        %v5903 = vsel %vm5900, %v5902, %v5898
        %v5904 = vmul.f32 %v5879, %v5903
        %v5905 = vmin.f32 %v5904, 1.0
        %v5906 = vmax.f32 %v5905, -1.0
        %v5907 = vmul.f32 %v5813, %v5813
        %v5908 = vmin.f32 16.0, %v5907
        %v5909 = vmul.f32 %v5908, 2.1237322e-06
        %v5910 = vadd.f32 %v5909, 0.00028619796
        %v5911 = vmul.f32 %v5908, %v5910
        %v5912 = vadd.f32 %v5911, 0.0036580483
        %v5913 = vmul.f32 %v5908, %v5912
        %v5914 = vadd.f32 %v5913, 0.05243302
        %v5915 = vmul.f32 %v5908, %v5914
        %v5916 = vadd.f32 %v5915, 0.18741608
        %v5917 = vmul.f32 %v5908, %v5916
        %v5918 = vadd.f32 %v5917, 1.1283791
        %v5919 = vmul.f32 %v5813, %v5918
        %v5920 = vmul.f32 %v5908, 3.8918573e-05
        %v5921 = vadd.f32 %v5920, 0.001143296
        %v5922 = vmul.f32 %v5908, %v5921
        %v5923 = vadd.f32 %v5922, 0.014752088
        %v5924 = vmul.f32 %v5908, %v5923
        %v5925 = vadd.f32 %v5924, 0.112945676
        %v5926 = vmul.f32 %v5908, %v5925
        %v5927 = vadd.f32 %v5926, 0.4994258
        %v5928 = vmul.f32 %v5908, %v5927
        %v5929 = vadd.f32 %v5928, 1.0
        %v5930 = vrcp.pop %v5929
        %v5931 = vmul.f32 %v5929, %v5930
        %v5932 = vsub.f32 1.0, %v5931
        %v5933 = vmul.f32 %v5930, %v5932
        %v5934 = vadd.f32 %v5930, %v5933
        %vm5935 = vweird.f32 %v5929
        %vm5936 = vweird.f32 %v5930
        %vm5937 = vmor %vm5935, %vm5936
        %v5938 = vsel %vm5937, %v5930, %v5934
        %v5939 = vand.u32 2147483647, %v5929
        %vm5940 = vcmp.eq.f32.partialorder %v5939, 8.507059e+37
        %v5941 = vand.u32 %v5929, 2147483648
        %v5942 = vor.u32 1.1754944e-38, %v5941
        %v5943 = vsel %vm5940, %v5942, %v5938
        %v5944 = vmul.f32 %v5919, %v5943
        %v5945 = vmin.f32 %v5944, 1.0
        %v5946 = vmax.f32 %v5945, -1.0
        %v5947 = vmul.f32 %v5814, %v5814
        %v5948 = vmin.f32 16.0, %v5947
        %v5949 = vmul.f32 %v5948, 2.1237322e-06
        %v5950 = vadd.f32 %v5949, 0.00028619796
        %v5951 = vmul.f32 %v5948, %v5950
        %v5952 = vadd.f32 %v5951, 0.0036580483
        %v5953 = vmul.f32 %v5948, %v5952
        %v5954 = vadd.f32 %v5953, 0.05243302
        %v5955 = vmul.f32 %v5948, %v5954
        %v5956 = vadd.f32 %v5955, 0.18741608
        %v5957 = vmul.f32 %v5948, %v5956
        %v5958 = vadd.f32 %v5957, 1.1283791
        %v5959 = vmul.f32 %v5814, %v5958
        %v5960 = vmul.f32 %v5948, 3.8918573e-05
        %v5961 = vadd.f32 %v5960, 0.001143296
        %v5962 = vmul.f32 %v5948, %v5961
        %v5963 = vadd.f32 %v5962, 0.014752088
        %v5964 = vmul.f32 %v5948, %v5963
        %v5965 = vadd.f32 %v5964, 0.112945676
        %v5966 = vmul.f32 %v5948, %v5965
        %v5967 = vadd.f32 %v5966, 0.4994258
        %v5968 = vmul.f32 %v5948, %v5967
        %v5969 = vadd.f32 %v5968, 1.0
        %v5970 = vrcp.pop %v5969
        %v5971 = vmul.f32 %v5969, %v5970
        %v5972 = vsub.f32 1.0, %v5971
        %v5973 = vmul.f32 %v5970, %v5972
        %v5974 = vadd.f32 %v5970, %v5973
        %vm5975 = vweird.f32 %v5969
        %vm5976 = vweird.f32 %v5970
        %vm5977 = vmor %vm5975, %vm5976
        %v5978 = vsel %vm5977, %v5970, %v5974
        %v5979 = vand.u32 2147483647, %v5969
        %vm5980 = vcmp.eq.f32.partialorder %v5979, 8.507059e+37
        %v5981 = vand.u32 %v5969, 2147483648
        %v5982 = vor.u32 1.1754944e-38, %v5981
        %v5983 = vsel %vm5980, %v5982, %v5978
        %v5984 = vmul.f32 %v5959, %v5983
        %v5985 = vmin.f32 %v5984, 1.0
        %v5986 = vmax.f32 %v5985, -1.0
        %v5987 = vmul.f32 %v5815, %v5815
        %v5988 = vmin.f32 16.0, %v5987
        %v5989 = vmul.f32 %v5988, 2.1237322e-06
        %v5990 = vadd.f32 %v5989, 0.00028619796
        %v5991 = vmul.f32 %v5988, %v5990
        %v5992 = vadd.f32 %v5991, 0.0036580483
        %v5993 = vmul.f32 %v5988, %v5992
        %v5994 = vadd.f32 %v5993, 0.05243302
        %v5995 = vmul.f32 %v5988, %v5994
        %v5996 = vadd.f32 %v5995, 0.18741608
        %v5997 = vmul.f32 %v5988, %v5996
        %v5998 = vadd.f32 %v5997, 1.1283791
        %v5999 = vmul.f32 %v5815, %v5998
        %v6000 = vmul.f32 %v5988, 3.8918573e-05
        %v6001 = vadd.f32 %v6000, 0.001143296
        %v6002 = vmul.f32 %v5988, %v6001
        %v6003 = vadd.f32 %v6002, 0.014752088
        %v6004 = vmul.f32 %v5988, %v6003
        %v6005 = vadd.f32 %v6004, 0.112945676
        %v6006 = vmul.f32 %v5988, %v6005
        %v6007 = vadd.f32 %v6006, 0.4994258
        %v6008 = vmul.f32 %v5988, %v6007
        %v6009 = vadd.f32 %v6008, 1.0
        %v6010 = vrcp.pop %v6009
        %v6011 = vmul.f32 %v6009, %v6010
        %v6012 = vsub.f32 1.0, %v6011
        %v6013 = vmul.f32 %v6010, %v6012
        %v6014 = vadd.f32 %v6010, %v6013
        %vm6015 = vweird.f32 %v6009
        %vm6016 = vweird.f32 %v6010
        %vm6017 = vmor %vm6015, %vm6016
        %v6018 = vsel %vm6017, %v6010, %v6014
        %v6019 = vand.u32 2147483647, %v6009
        %vm6020 = vcmp.eq.f32.partialorder %v6019, 8.507059e+37
        %v6021 = vand.u32 %v6009, 2147483648
        %v6022 = vor.u32 1.1754944e-38, %v6021
        %v6023 = vsel %vm6020, %v6022, %v6018
        %v6024 = vmul.f32 %v5999, %v6023
        %v6025 = vmin.f32 %v6024, 1.0
        %v6026 = vmax.f32 %v6025, -1.0
        %v6027 = vmul.f32 %v5816, %v5816
        %v6028 = vmin.f32 16.0, %v6027
        %v6029 = vmul.f32 %v6028, 2.1237322e-06
        %v6030 = vadd.f32 %v6029, 0.00028619796
        %v6031 = vmul.f32 %v6028, %v6030
        %v6032 = vadd.f32 %v6031, 0.0036580483
        %v6033 = vmul.f32 %v6028, %v6032
        %v6034 = vadd.f32 %v6033, 0.05243302
        %v6035 = vmul.f32 %v6028, %v6034
        %v6036 = vadd.f32 %v6035, 0.18741608
        %v6037 = vmul.f32 %v6028, %v6036
        %v6038 = vadd.f32 %v6037, 1.1283791
        %v6039 = vmul.f32 %v5816, %v6038
        %v6040 = vmul.f32 %v6028, 3.8918573e-05
        %v6041 = vadd.f32 %v6040, 0.001143296
        %v6042 = vmul.f32 %v6028, %v6041
        %v6043 = vadd.f32 %v6042, 0.014752088
        %v6044 = vmul.f32 %v6028, %v6043
        %v6045 = vadd.f32 %v6044, 0.112945676
        %v6046 = vmul.f32 %v6028, %v6045
        %v6047 = vadd.f32 %v6046, 0.4994258
        %v6048 = vmul.f32 %v6028, %v6047
        %v6049 = vadd.f32 %v6048, 1.0
        %v6050 = vrcp.pop %v6049
        %v6051 = vmul.f32 %v6049, %v6050
        %v6052 = vsub.f32 1.0, %v6051
        %v6053 = vmul.f32 %v6050, %v6052
        %v6054 = vadd.f32 %v6050, %v6053
        %vm6055 = vweird.f32 %v6049
        %vm6056 = vweird.f32 %v6050
        %vm6057 = vmor %vm6055, %vm6056
        %v6058 = vsel %vm6057, %v6050, %v6054
        %v6059 = vand.u32 2147483647, %v6049
        %vm6060 = vcmp.eq.f32.partialorder %v6059, 8.507059e+37
        %v6061 = vand.u32 %v6049, 2147483648
        %v6062 = vor.u32 1.1754944e-38, %v6061
        %v6063 = vsel %vm6060, %v6062, %v6058
        %v6064 = vmul.f32 %v6039, %v6063
        %v6065 = vmin.f32 %v6064, 1.0
        %v6066 = vmax.f32 %v6065, -1.0
        %v6067 = vmul.f32 %v5817, %v5817
        %v6068 = vmin.f32 16.0, %v6067
        %v6069 = vmul.f32 %v6068, 2.1237322e-06
        %v6070 = vadd.f32 %v6069, 0.00028619796
        %v6071 = vmul.f32 %v6068, %v6070
        %v6072 = vadd.f32 %v6071, 0.0036580483
        %v6073 = vmul.f32 %v6068, %v6072
        %v6074 = vadd.f32 %v6073, 0.05243302
        %v6075 = vmul.f32 %v6068, %v6074
        %v6076 = vadd.f32 %v6075, 0.18741608
        %v6077 = vmul.f32 %v6068, %v6076
        %v6078 = vadd.f32 %v6077, 1.1283791
        %v6079 = vmul.f32 %v5817, %v6078
        %v6080 = vmul.f32 %v6068, 3.8918573e-05
        %v6081 = vadd.f32 %v6080, 0.001143296
        %v6082 = vmul.f32 %v6068, %v6081
        %v6083 = vadd.f32 %v6082, 0.014752088
        %v6084 = vmul.f32 %v6068, %v6083
        %v6085 = vadd.f32 %v6084, 0.112945676
        %v6086 = vmul.f32 %v6068, %v6085
        %v6087 = vadd.f32 %v6086, 0.4994258
        %v6088 = vmul.f32 %v6068, %v6087
        %v6089 = vadd.f32 %v6088, 1.0
        %v6090 = vrcp.pop %v6089
        %v6091 = vmul.f32 %v6089, %v6090
        %v6092 = vsub.f32 1.0, %v6091
        %v6093 = vmul.f32 %v6090, %v6092
        %v6094 = vadd.f32 %v6090, %v6093
        %vm6095 = vweird.f32 %v6089
        %vm6096 = vweird.f32 %v6090
        %vm6097 = vmor %vm6095, %vm6096
        %v6098 = vsel %vm6097, %v6090, %v6094
        %v6099 = vand.u32 2147483647, %v6089
        %vm6100 = vcmp.eq.f32.partialorder %v6099, 8.507059e+37
        %v6101 = vand.u32 %v6089, 2147483648
        %v6102 = vor.u32 1.1754944e-38, %v6101
        %v6103 = vsel %vm6100, %v6102, %v6098
        %v6104 = vmul.f32 %v6079, %v6103
        %v6105 = vmin.f32 %v6104, 1.0
        %v6106 = vmax.f32 %v6105, -1.0
        %v6107 = vmul.f32 %v5818, %v5818
        %v6108 = vmin.f32 16.0, %v6107
        %v6109 = vmul.f32 %v6108, 2.1237322e-06
        %v6110 = vadd.f32 %v6109, 0.00028619796
        %v6111 = vmul.f32 %v6108, %v6110
        %v6112 = vadd.f32 %v6111, 0.0036580483
        %v6113 = vmul.f32 %v6108, %v6112
        %v6114 = vadd.f32 %v6113, 0.05243302
        %v6115 = vmul.f32 %v6108, %v6114
        %v6116 = vadd.f32 %v6115, 0.18741608
        %v6117 = vmul.f32 %v6108, %v6116
        %v6118 = vadd.f32 %v6117, 1.1283791
        %v6119 = vmul.f32 %v5818, %v6118
        %v6120 = vmul.f32 %v6108, 3.8918573e-05
        %v6121 = vadd.f32 %v6120, 0.001143296
        %v6122 = vmul.f32 %v6108, %v6121
        %v6123 = vadd.f32 %v6122, 0.014752088
        %v6124 = vmul.f32 %v6108, %v6123
        %v6125 = vadd.f32 %v6124, 0.112945676
        %v6126 = vmul.f32 %v6108, %v6125
        %v6127 = vadd.f32 %v6126, 0.4994258
        %v6128 = vmul.f32 %v6108, %v6127
        %v6129 = vadd.f32 %v6128, 1.0
        %v6130 = vrcp.pop %v6129
        %v6131 = vmul.f32 %v6129, %v6130
        %v6132 = vsub.f32 1.0, %v6131
        %v6133 = vmul.f32 %v6130, %v6132
        %v6134 = vadd.f32 %v6130, %v6133
        %vm6135 = vweird.f32 %v6129
        %vm6136 = vweird.f32 %v6130
        %vm6137 = vmor %vm6135, %vm6136
        %v6138 = vsel %vm6137, %v6130, %v6134
        %v6139 = vand.u32 2147483647, %v6129
        %vm6140 = vcmp.eq.f32.partialorder %v6139, 8.507059e+37
        %v6141 = vand.u32 %v6129, 2147483648
        %v6142 = vor.u32 1.1754944e-38, %v6141
        %v6143 = vsel %vm6140, %v6142, %v6138
        %v6144 = vmul.f32 %v6119, %v6143
        %v6145 = vmin.f32 %v6144, 1.0
        %v6146 = vmax.f32 %v6145, -1.0
        %v6147 = vmul.f32 %v5819, %v5819
        %v6148 = vmin.f32 16.0, %v6147
        %v6149 = vmul.f32 %v6148, 2.1237322e-06
        %v6150 = vadd.f32 %v6149, 0.00028619796
        %v6151 = vmul.f32 %v6148, %v6150
        %v6152 = vadd.f32 %v6151, 0.0036580483
        %v6153 = vmul.f32 %v6148, %v6152
        %v6154 = vadd.f32 %v6153, 0.05243302
        %v6155 = vmul.f32 %v6148, %v6154
        %v6156 = vadd.f32 %v6155, 0.18741608
        %v6157 = vmul.f32 %v6148, %v6156
        %v6158 = vadd.f32 %v6157, 1.1283791
        %v6159 = vmul.f32 %v5819, %v6158
        %v6160 = vmul.f32 %v6148, 3.8918573e-05
        %v6161 = vadd.f32 %v6160, 0.001143296
        %v6162 = vmul.f32 %v6148, %v6161
        %v6163 = vadd.f32 %v6162, 0.014752088
        %v6164 = vmul.f32 %v6148, %v6163
        %v6165 = vadd.f32 %v6164, 0.112945676
        %v6166 = vmul.f32 %v6148, %v6165
        %v6167 = vadd.f32 %v6166, 0.4994258
        %v6168 = vmul.f32 %v6148, %v6167
        %v6169 = vadd.f32 %v6168, 1.0
        %v6170 = vrcp.pop %v6169
        %v6171 = vmul.f32 %v6169, %v6170
        %v6172 = vsub.f32 1.0, %v6171
        %v6173 = vmul.f32 %v6170, %v6172
        %v6174 = vadd.f32 %v6170, %v6173
        %vm6175 = vweird.f32 %v6169
        %vm6176 = vweird.f32 %v6170
        %vm6177 = vmor %vm6175, %vm6176
        %v6178 = vsel %vm6177, %v6170, %v6174
        %v6179 = vand.u32 2147483647, %v6169
        %vm6180 = vcmp.eq.f32.partialorder %v6179, 8.507059e+37
        %v6181 = vand.u32 %v6169, 2147483648
        %v6182 = vor.u32 1.1754944e-38, %v6181
        %v6183 = vsel %vm6180, %v6182, %v6178
        %v6184 = vmul.f32 %v6159, %v6183
        %v6185 = vmin.f32 %v6184, 1.0
        %v6186 = vmax.f32 %v6185, -1.0
        %v6187 = vmul.f32 %v5820, %v5820
        %v6188 = vmin.f32 16.0, %v6187
        %v6189 = vmul.f32 %v6188, 2.1237322e-06
        %v6190 = vadd.f32 %v6189, 0.00028619796
        %v6191 = vmul.f32 %v6188, %v6190
        %v6192 = vadd.f32 %v6191, 0.0036580483
        %v6193 = vmul.f32 %v6188, %v6192
        %v6194 = vadd.f32 %v6193, 0.05243302
        %v6195 = vmul.f32 %v6188, %v6194
        %v6196 = vadd.f32 %v6195, 0.18741608
        %v6197 = vmul.f32 %v6188, %v6196
        %v6198 = vadd.f32 %v6197, 1.1283791
        %v6199 = vmul.f32 %v5820, %v6198
        %v6200 = vmul.f32 %v6188, 3.8918573e-05
        %v6201 = vadd.f32 %v6200, 0.001143296
        %v6202 = vmul.f32 %v6188, %v6201
        %v6203 = vadd.f32 %v6202, 0.014752088
        %v6204 = vmul.f32 %v6188, %v6203
        %v6205 = vadd.f32 %v6204, 0.112945676
        %v6206 = vmul.f32 %v6188, %v6205
        %v6207 = vadd.f32 %v6206, 0.4994258
        %v6208 = vmul.f32 %v6188, %v6207
        %v6209 = vadd.f32 %v6208, 1.0
        %v6210 = vrcp.pop %v6209
        %v6211 = vmul.f32 %v6209, %v6210
        %v6212 = vsub.f32 1.0, %v6211
        %v6213 = vmul.f32 %v6210, %v6212
        %v6214 = vadd.f32 %v6210, %v6213
        %vm6215 = vweird.f32 %v6209
        %vm6216 = vweird.f32 %v6210
        %vm6217 = vmor %vm6215, %vm6216
        %v6218 = vsel %vm6217, %v6210, %v6214
        %v6219 = vand.u32 2147483647, %v6209
        %vm6220 = vcmp.eq.f32.partialorder %v6219, 8.507059e+37
        %v6221 = vand.u32 %v6209, 2147483648
        %v6222 = vor.u32 1.1754944e-38, %v6221
        %v6223 = vsel %vm6220, %v6222, %v6218
        %v6224 = vmul.f32 %v6199, %v6223
        %v6225 = vmin.f32 %v6224, 1.0
        %v6226 = vmax.f32 %v6225, -1.0
        %v6227 = vmul.f32 %v5821, %v5821
        %v6228 = vmin.f32 16.0, %v6227
        %v6229 = vmul.f32 %v6228, 2.1237322e-06
        %v6230 = vadd.f32 %v6229, 0.00028619796
        %v6231 = vmul.f32 %v6228, %v6230
        %v6232 = vadd.f32 %v6231, 0.0036580483
        %v6233 = vmul.f32 %v6228, %v6232
        %v6234 = vadd.f32 %v6233, 0.05243302
        %v6235 = vmul.f32 %v6228, %v6234
        %v6236 = vadd.f32 %v6235, 0.18741608
        %v6237 = vmul.f32 %v6228, %v6236
        %v6238 = vadd.f32 %v6237, 1.1283791
        %v6239 = vmul.f32 %v5821, %v6238
        %v6240 = vmul.f32 %v6228, 3.8918573e-05
        %v6241 = vadd.f32 %v6240, 0.001143296
        %v6242 = vmul.f32 %v6228, %v6241
        %v6243 = vadd.f32 %v6242, 0.014752088
        %v6244 = vmul.f32 %v6228, %v6243
        %v6245 = vadd.f32 %v6244, 0.112945676
        %v6246 = vmul.f32 %v6228, %v6245
        %v6247 = vadd.f32 %v6246, 0.4994258
        %v6248 = vmul.f32 %v6228, %v6247
        %v6249 = vadd.f32 %v6248, 1.0
        %v6250 = vrcp.pop %v6249
        %v6251 = vmul.f32 %v6249, %v6250
        %v6252 = vsub.f32 1.0, %v6251
        %v6253 = vmul.f32 %v6250, %v6252
        %v6254 = vadd.f32 %v6250, %v6253
        %vm6255 = vweird.f32 %v6249
        %vm6256 = vweird.f32 %v6250
        %vm6257 = vmor %vm6255, %vm6256
        %v6258 = vsel %vm6257, %v6250, %v6254
        %v6259 = vand.u32 2147483647, %v6249
        %vm6260 = vcmp.eq.f32.partialorder %v6259, 8.507059e+37
        %v6261 = vand.u32 %v6249, 2147483648
        %v6262 = vor.u32 1.1754944e-38, %v6261
        %v6263 = vsel %vm6260, %v6262, %v6258
        %v6264 = vmul.f32 %v6239, %v6263
        %v6265 = vmin.f32 %v6264, 1.0
        %v6266 = vmax.f32 %v6265, -1.0
        %v6267 = vmul.f32 %v5822, %v5822
        %v6268 = vmin.f32 16.0, %v6267
        %v6269 = vmul.f32 %v6268, 2.1237322e-06
        %v6270 = vadd.f32 %v6269, 0.00028619796
        %v6271 = vmul.f32 %v6268, %v6270
        %v6272 = vadd.f32 %v6271, 0.0036580483
        %v6273 = vmul.f32 %v6268, %v6272
        %v6274 = vadd.f32 %v6273, 0.05243302
        %v6275 = vmul.f32 %v6268, %v6274
        %v6276 = vadd.f32 %v6275, 0.18741608
        %v6277 = vmul.f32 %v6268, %v6276
        %v6278 = vadd.f32 %v6277, 1.1283791
        %v6279 = vmul.f32 %v5822, %v6278
        %v6280 = vmul.f32 %v6268, 3.8918573e-05
        %v6281 = vadd.f32 %v6280, 0.001143296
        %v6282 = vmul.f32 %v6268, %v6281
        %v6283 = vadd.f32 %v6282, 0.014752088
        %v6284 = vmul.f32 %v6268, %v6283
        %v6285 = vadd.f32 %v6284, 0.112945676
        %v6286 = vmul.f32 %v6268, %v6285
        %v6287 = vadd.f32 %v6286, 0.4994258
        %v6288 = vmul.f32 %v6268, %v6287
        %v6289 = vadd.f32 %v6288, 1.0
        %v6290 = vrcp.pop %v6289
        %v6291 = vmul.f32 %v6289, %v6290
        %v6292 = vsub.f32 1.0, %v6291
        %v6293 = vmul.f32 %v6290, %v6292
        %v6294 = vadd.f32 %v6290, %v6293
        %vm6295 = vweird.f32 %v6289
        %vm6296 = vweird.f32 %v6290
        %vm6297 = vmor %vm6295, %vm6296
        %v6298 = vsel %vm6297, %v6290, %v6294
        %v6299 = vand.u32 2147483647, %v6289
        %vm6300 = vcmp.eq.f32.partialorder %v6299, 8.507059e+37
        %v6301 = vand.u32 %v6289, 2147483648
        %v6302 = vor.u32 1.1754944e-38, %v6301
        %v6303 = vsel %vm6300, %v6302, %v6298
        %v6304 = vmul.f32 %v6279, %v6303
        %v6305 = vmin.f32 %v6304, 1.0
        %v6306 = vmax.f32 %v6305, -1.0
        %v6307 = vmul.f32 %v5823, %v5823
        %v6308 = vmin.f32 16.0, %v6307
        %v6309 = vmul.f32 %v6308, 2.1237322e-06
        %v6310 = vadd.f32 %v6309, 0.00028619796
        %v6311 = vmul.f32 %v6308, %v6310
        %v6312 = vadd.f32 %v6311, 0.0036580483
        %v6313 = vmul.f32 %v6308, %v6312
        %v6314 = vadd.f32 %v6313, 0.05243302
        %v6315 = vmul.f32 %v6308, %v6314
        %v6316 = vadd.f32 %v6315, 0.18741608
        %v6317 = vmul.f32 %v6308, %v6316
        %v6318 = vadd.f32 %v6317, 1.1283791
        %v6319 = vmul.f32 %v5823, %v6318
        %v6320 = vmul.f32 %v6308, 3.8918573e-05
        %v6321 = vadd.f32 %v6320, 0.001143296
        %v6322 = vmul.f32 %v6308, %v6321
        %v6323 = vadd.f32 %v6322, 0.014752088
        %v6324 = vmul.f32 %v6308, %v6323
        %v6325 = vadd.f32 %v6324, 0.112945676
        %v6326 = vmul.f32 %v6308, %v6325
        %v6327 = vadd.f32 %v6326, 0.4994258
        %v6328 = vmul.f32 %v6308, %v6327
        %v6329 = vadd.f32 %v6328, 1.0
        %v6330 = vrcp.pop %v6329
        %v6331 = vmul.f32 %v6329, %v6330
        %v6332 = vsub.f32 1.0, %v6331
        %v6333 = vmul.f32 %v6330, %v6332
        %v6334 = vadd.f32 %v6330, %v6333
        %vm6335 = vweird.f32 %v6329
        %vm6336 = vweird.f32 %v6330
        %vm6337 = vmor %vm6335, %vm6336
        %v6338 = vsel %vm6337, %v6330, %v6334
        %v6339 = vand.u32 2147483647, %v6329
        %vm6340 = vcmp.eq.f32.partialorder %v6339, 8.507059e+37
        %v6341 = vand.u32 %v6329, 2147483648
        %v6342 = vor.u32 1.1754944e-38, %v6341
        %v6343 = vsel %vm6340, %v6342, %v6338
        %v6344 = vmul.f32 %v6319, %v6343
        %v6345 = vmin.f32 %v6344, 1.0
        %v6346 = vmax.f32 %v6345, -1.0
        %v6347 = vmul.f32 %v5824, %v5824
        %v6348 = vmin.f32 16.0, %v6347
        %v6349 = vmul.f32 %v6348, 2.1237322e-06
        %v6350 = vadd.f32 %v6349, 0.00028619796
        %v6351 = vmul.f32 %v6348, %v6350
        %v6352 = vadd.f32 %v6351, 0.0036580483
        %v6353 = vmul.f32 %v6348, %v6352
        %v6354 = vadd.f32 %v6353, 0.05243302
        %v6355 = vmul.f32 %v6348, %v6354
        %v6356 = vadd.f32 %v6355, 0.18741608
        %v6357 = vmul.f32 %v6348, %v6356
        %v6358 = vadd.f32 %v6357, 1.1283791
        %v6359 = vmul.f32 %v5824, %v6358
        %v6360 = vmul.f32 %v6348, 3.8918573e-05
        %v6361 = vadd.f32 %v6360, 0.001143296
        %v6362 = vmul.f32 %v6348, %v6361
        %v6363 = vadd.f32 %v6362, 0.014752088
        %v6364 = vmul.f32 %v6348, %v6363
        %v6365 = vadd.f32 %v6364, 0.112945676
        %v6366 = vmul.f32 %v6348, %v6365
        %v6367 = vadd.f32 %v6366, 0.4994258
        %v6368 = vmul.f32 %v6348, %v6367
        %v6369 = vadd.f32 %v6368, 1.0
        %v6370 = vrcp.pop %v6369
        %v6371 = vmul.f32 %v6369, %v6370
        %v6372 = vsub.f32 1.0, %v6371
        %v6373 = vmul.f32 %v6370, %v6372
        %v6374 = vadd.f32 %v6370, %v6373
        %vm6375 = vweird.f32 %v6369
        %vm6376 = vweird.f32 %v6370
        %vm6377 = vmor %vm6375, %vm6376
        %v6378 = vsel %vm6377, %v6370, %v6374
        %v6379 = vand.u32 2147483647, %v6369
        %vm6380 = vcmp.eq.f32.partialorder %v6379, 8.507059e+37
        %v6381 = vand.u32 %v6369, 2147483648
        %v6382 = vor.u32 1.1754944e-38, %v6381
        %v6383 = vsel %vm6380, %v6382, %v6378
        %v6384 = vmul.f32 %v6359, %v6383
        %v6385 = vmin.f32 %v6384, 1.0
        %v6386 = vmax.f32 %v6385, -1.0
        %v6387 = vmul.f32 %v5825, %v5825
        %v6388 = vmin.f32 16.0, %v6387
        %v6389 = vmul.f32 %v6388, 2.1237322e-06
        %v6390 = vadd.f32 %v6389, 0.00028619796
        %v6391 = vmul.f32 %v6388, %v6390
        %v6392 = vadd.f32 %v6391, 0.0036580483
        %v6393 = vmul.f32 %v6388, %v6392
        %v6394 = vadd.f32 %v6393, 0.05243302
        %v6395 = vmul.f32 %v6388, %v6394
        %v6396 = vadd.f32 %v6395, 0.18741608
        %v6397 = vmul.f32 %v6388, %v6396
        %v6398 = vadd.f32 %v6397, 1.1283791
        %v6399 = vmul.f32 %v5825, %v6398
        %v6400 = vmul.f32 %v6388, 3.8918573e-05
        %v6401 = vadd.f32 %v6400, 0.001143296
        %v6402 = vmul.f32 %v6388, %v6401
        %v6403 = vadd.f32 %v6402, 0.014752088
        %v6404 = vmul.f32 %v6388, %v6403
        %v6405 = vadd.f32 %v6404, 0.112945676
        %v6406 = vmul.f32 %v6388, %v6405
        %v6407 = vadd.f32 %v6406, 0.4994258
        %v6408 = vmul.f32 %v6388, %v6407
        %v6409 = vadd.f32 %v6408, 1.0
        %v6410 = vrcp.pop %v6409
        %v6411 = vmul.f32 %v6409, %v6410
        %v6412 = vsub.f32 1.0, %v6411
        %v6413 = vmul.f32 %v6410, %v6412
        %v6414 = vadd.f32 %v6410, %v6413
        %vm6415 = vweird.f32 %v6409
        %vm6416 = vweird.f32 %v6410
        %vm6417 = vmor %vm6415, %vm6416
        %v6418 = vsel %vm6417, %v6410, %v6414
        %v6419 = vand.u32 2147483647, %v6409
        %vm6420 = vcmp.eq.f32.partialorder %v6419, 8.507059e+37
        %v6421 = vand.u32 %v6409, 2147483648
        %v6422 = vor.u32 1.1754944e-38, %v6421
        %v6423 = vsel %vm6420, %v6422, %v6418
        %v6424 = vmul.f32 %v6399, %v6423
        %v6425 = vmin.f32 %v6424, 1.0
        %v6426 = vmax.f32 %v6425, -1.0
        %v6427 = vmul.f32 %v5826, %v5826
        %v6428 = vmin.f32 16.0, %v6427
        %v6429 = vmul.f32 %v6428, 2.1237322e-06
        %v6430 = vadd.f32 %v6429, 0.00028619796
        %v6431 = vmul.f32 %v6428, %v6430
        %v6432 = vadd.f32 %v6431, 0.0036580483
        %v6433 = vmul.f32 %v6428, %v6432
        %v6434 = vadd.f32 %v6433, 0.05243302
        %v6435 = vmul.f32 %v6428, %v6434
        %v6436 = vadd.f32 %v6435, 0.18741608
        %v6437 = vmul.f32 %v6428, %v6436
        %v6438 = vadd.f32 %v6437, 1.1283791
        %v6439 = vmul.f32 %v5826, %v6438
        %v6440 = vmul.f32 %v6428, 3.8918573e-05
        %v6441 = vadd.f32 %v6440, 0.001143296
        %v6442 = vmul.f32 %v6428, %v6441
        %v6443 = vadd.f32 %v6442, 0.014752088
        %v6444 = vmul.f32 %v6428, %v6443
        %v6445 = vadd.f32 %v6444, 0.112945676
        %v6446 = vmul.f32 %v6428, %v6445
        %v6447 = vadd.f32 %v6446, 0.4994258
        %v6448 = vmul.f32 %v6428, %v6447
        %v6449 = vadd.f32 %v6448, 1.0
        %v6450 = vrcp.pop %v6449
        %v6451 = vmul.f32 %v6449, %v6450
        %v6452 = vsub.f32 1.0, %v6451
        %v6453 = vmul.f32 %v6450, %v6452
        %v6454 = vadd.f32 %v6450, %v6453
        %vm6455 = vweird.f32 %v6449
        %vm6456 = vweird.f32 %v6450
        %vm6457 = vmor %vm6455, %vm6456
        %v6458 = vsel %vm6457, %v6450, %v6454
        %v6459 = vand.u32 2147483647, %v6449
        %vm6460 = vcmp.eq.f32.partialorder %v6459, 8.507059e+37
        %v6461 = vand.u32 %v6449, 2147483648
        %v6462 = vor.u32 1.1754944e-38, %v6461
        %v6463 = vsel %vm6460, %v6462, %v6458
        %v6464 = vmul.f32 %v6439, %v6463
        %v6465 = vmin.f32 %v6464, 1.0
        %v6466 = vmax.f32 %v6465, -1.0
        %v6467 = vadd.f32 %v5866, 1.0
        %v6468 = vadd.f32 %v5906, 1.0
        %v6469 = vadd.f32 %v5946, 1.0
        %v6470 = vadd.f32 %v5986, 1.0
        %v6471 = vadd.f32 %v6026, 1.0
        %v6472 = vadd.f32 %v6066, 1.0
        %v6473 = vadd.f32 %v6106, 1.0
        %v6474 = vadd.f32 %v6146, 1.0
        %v6475 = vadd.f32 %v6186, 1.0
        %v6476 = vadd.f32 %v6226, 1.0
        %v6477 = vadd.f32 %v6266, 1.0
        %v6478 = vadd.f32 %v6306, 1.0
        %v6479 = vadd.f32 %v6346, 1.0
        %v6480 = vadd.f32 %v6386, 1.0
        %v6481 = vadd.f32 %v6426, 1.0
        %v6482 = vadd.f32 %v6466, 1.0
        %v6483 = vmul.f32 %v5795, %v6467
        %v6484 = vmul.f32 %v5796, %v6468
        %v6485 = vmul.f32 %v5797, %v6469
        %v6486 = vmul.f32 %v5798, %v6470
        %v6487 = vmul.f32 %v5799, %v6471
        %v6488 = vmul.f32 %v5800, %v6472
        %v6489 = vmul.f32 %v5801, %v6473
        %v6490 = vmul.f32 %v5802, %v6474
        %v6491 = vmul.f32 %v5803, %v6475
        %v6492 = vmul.f32 %v5804, %v6476
        %v6493 = vmul.f32 %v5805, %v6477
        %v6494 = vmul.f32 %v5806, %v6478
        %v6495 = vmul.f32 %v5807, %v6479
        %v6496 = vmul.f32 %v5808, %v6480
        %v6497 = vmul.f32 %v5809, %v6481
        %v6498 = vmul.f32 %v5810, %v6482
        %v6499 = vpack.c.bf16 %v6485, %v6483
        %v6500 = vpack.c.bf16 %v6486, %v6484
        %v6501 = vpack.c.bf16 %v6489, %v6487
        %v6502 = vpack.c.bf16 %v6490, %v6488
        %v6503 = vpack.c.bf16 %v6493, %v6491
        %v6504 = vpack.c.bf16 %v6494, %v6492
        %v6505 = vpack.c.bf16 %v6497, %v6495
        %v6506 = vpack.c.bf16 %v6498, %v6496
        %v6539 = vunpack.c.l.b16 %v3737
        %v6540 = vunpack.c.l.b16 %v3738
        %v6541 = vunpack.c.l.b16 %v3739
        %v6542 = vunpack.c.l.b16 %v3740
        %v6543 = vunpack.c.l.b16 %v3741
        %v6544 = vunpack.c.l.b16 %v3742
        %v6545 = vunpack.c.l.b16 %v3743
        %v6546 = vunpack.c.l.b16 %v3744
        %v6547 = vunpack.c.l.b16 %v3745
        %v6548 = vunpack.c.l.b16 %v3746
        %v6549 = vunpack.c.l.b16 %v3747
        %v6550 = vunpack.c.l.b16 %v3748
        %v6551 = vunpack.c.l.b16 %v3749
        %v6552 = vunpack.c.l.b16 %v3750
        %v6553 = vunpack.c.l.b16 %v3751
        %v6554 = vunpack.c.l.b16 %v3752
        %v6555 = vunpack.c.l.b16 %v3753
        %v6556 = vunpack.c.l.b16 %v3754
        %v6557 = vunpack.c.l.b16 %v3755
        %v6558 = vunpack.c.l.b16 %v3756
        %v6559 = vunpack.c.l.b16 %v3757
        %v6560 = vunpack.c.l.b16 %v3758
        %v6561 = vunpack.c.l.b16 %v3759
        %v6562 = vunpack.c.l.b16 %v3760
        %v6563 = vunpack.c.l.b16 %v3761
        %v6564 = vunpack.c.l.b16 %v3762
        %v6565 = vunpack.c.l.b16 %v3763
        %v6566 = vunpack.c.l.b16 %v3764
        %v6567 = vunpack.c.l.b16 %v3765
        %v6568 = vunpack.c.l.b16 %v3766
        %v6569 = vunpack.c.l.b16 %v3767
        %v6570 = vunpack.c.l.b16 %v3768
        %v6571 = vpack.c.b16 %v6540, %v6539
        %v6572 = vpack.c.b16 %v6542, %v6541
        %v6573 = vpack.c.b16 %v6544, %v6543
        %v6574 = vpack.c.b16 %v6546, %v6545
        %v6575 = vpack.c.b16 %v6548, %v6547
        %v6576 = vpack.c.b16 %v6550, %v6549
        %v6577 = vpack.c.b16 %v6552, %v6551
        %v6578 = vpack.c.b16 %v6554, %v6553
        %v6579 = vpack.c.b16 %v6556, %v6555
        %v6580 = vpack.c.b16 %v6558, %v6557
        %v6581 = vpack.c.b16 %v6560, %v6559
        %v6582 = vpack.c.b16 %v6562, %v6561
        %v6583 = vpack.c.b16 %v6564, %v6563
        %v6584 = vpack.c.b16 %v6566, %v6565
        %v6585 = vpack.c.b16 %v6568, %v6567
        %v6586 = vpack.c.b16 %v6570, %v6569
        %6603 = vmatpush.bf16.msra.mxu0 %v6578
        %6604 = vmatpush.bf16.msra.mxu0 %v6577
        %6605 = vmatpush.bf16.msra.mxu0 %v6576
        %6606 = vmatpush.bf16.msra.mxu0 %v6575
        %6607 = vmatpush.bf16.msra.mxu0 %v6574
        %6608 = vmatpush.bf16.msra.mxu0 %v6573
        %6609 = vmatpush.bf16.msra.mxu0 %v6572
        %6610 = vmatpush.bf16.msra.mxu0 %v6571
        %6611 = vmatmul.bf16.gmra.mxu0 %v6499
        %v6612 = vpop.f32.mrf.mxu0
        %v6613 = vadd.f32 %v5645, %v6612
        %v6614 = vpop.f32.mrf.mxu0
        %v6615 = vadd.f32 %v5646, %v6614
        %6616 = vmatmul.bf16.gmra.mxu0 %v6501
        %v6617 = vpop.f32.mrf.mxu0
        %v6618 = vadd.f32 %v5647, %v6617
        %v6619 = vpop.f32.mrf.mxu0
        %v6620 = vadd.f32 %v5648, %v6619
        %6621 = vmatmul.bf16.gmra.mxu0 %v6503
        %v6622 = vpop.f32.mrf.mxu0
        %v6623 = vadd.f32 %v5649, %v6622
        %v6624 = vpop.f32.mrf.mxu0
        %v6625 = vadd.f32 %v5650, %v6624
        %6626 = vmatmul.bf16.gmra.mxu0 %v6505
        %v6627 = vpop.f32.mrf.mxu0
        %v6628 = vadd.f32 %v5651, %v6627
        %v6629 = vpop.f32.mrf.mxu0
        %v6630 = vadd.f32 %v5652, %v6629
        %6631 = vdwg.mxu0
        %6632 = vmatpush.bf16.msra.mxu0 %v6586
        %6633 = vmatpush.bf16.msra.mxu0 %v6585
        %6634 = vmatpush.bf16.msra.mxu0 %v6584
        %6635 = vmatpush.bf16.msra.mxu0 %v6583
        %6636 = vmatpush.bf16.msra.mxu0 %v6582
        %6637 = vmatpush.bf16.msra.mxu0 %v6581
        %6638 = vmatpush.bf16.msra.mxu0 %v6580
        %6639 = vmatpush.bf16.msra.mxu0 %v6579
        %6640 = vmatmul.bf16.gmra.mxu0 %v6500
        %v6641 = vpop.f32.mrf.mxu0
        %v6642 = vadd.f32 %v6613, %v6641
        %v6643 = vpop.f32.mrf.mxu0
        %v6644 = vadd.f32 %v6615, %v6643
        %6645 = vmatmul.bf16.gmra.mxu0 %v6502
        %v6646 = vpop.f32.mrf.mxu0
        %v6647 = vadd.f32 %v6618, %v6646
        %v6648 = vpop.f32.mrf.mxu0
        %v6649 = vadd.f32 %v6620, %v6648
        %6650 = vmatmul.bf16.gmra.mxu0 %v6504
        %v6651 = vpop.f32.mrf.mxu0
        %v6652 = vadd.f32 %v6623, %v6651
        %v6653 = vpop.f32.mrf.mxu0
        %v6654 = vadd.f32 %v6625, %v6653
        %6655 = vmatmul.bf16.gmra.mxu0 %v6506
        %v6656 = vpop.f32.mrf.mxu0
        %v6657 = vadd.f32 %v6628, %v6656
        %v6658 = vpop.f32.mrf.mxu0
        %v6659 = vadd.f32 %v6630, %v6658
        %6660 = vdwg.mxu0
        %6661 = vadd.xlane.f32.xlu0 %v6642
        %v6662 = vpop.xlane.xlu0 %6661
        %6663 = vadd.xlane.f32.xlu0 %v6644
        %v6664 = vpop.xlane.xlu0 %6663
        %6665 = vadd.xlane.f32.xlu0 %v6647
        %v6666 = vpop.xlane.xlu0 %6665
        %6667 = vadd.xlane.f32.xlu0 %v6649
        %v6668 = vpop.xlane.xlu0 %6667
        %6669 = vadd.xlane.f32.xlu0 %v6652
        %v6670 = vpop.xlane.xlu0 %6669
        %6671 = vadd.xlane.f32.xlu0 %v6654
        %v6672 = vpop.xlane.xlu0 %6671
        %6673 = vadd.xlane.f32.xlu0 %v6657
        %v6674 = vpop.xlane.xlu0 %6673
        %6675 = vadd.xlane.f32.xlu0 %v6659
        %v6676 = vpop.xlane.xlu0 %6675
        %v6677 = vmul.f32 %v6662, %v2356
        %v6678 = vmul.f32 %v6664, %v2356
        %v6679 = vmul.f32 %v6666, %v2356
        %v6680 = vmul.f32 %v6668, %v2356
        %v6681 = vmul.f32 %v6670, %v2356
        %v6682 = vmul.f32 %v6672, %v2356
        %v6683 = vmul.f32 %v6674, %v2356
        %v6684 = vmul.f32 %v6676, %v2356
        %v6685 = vsub.f32 %v6642, %v6677
        %v6686 = vsub.f32 %v6644, %v6678
        %v6687 = vsub.f32 %v6647, %v6679
        %v6688 = vsub.f32 %v6649, %v6680
        %v6689 = vsub.f32 %v6652, %v6681
        %v6690 = vsub.f32 %v6654, %v6682
        %v6691 = vsub.f32 %v6657, %v6683
        %v6692 = vsub.f32 %v6659, %v6684
        %v6693 = vmul.f32 %v6685, %v6685
        %v6694 = vmul.f32 %v6686, %v6686
        %v6695 = vmul.f32 %v6687, %v6687
        %v6696 = vmul.f32 %v6688, %v6688
        %v6697 = vmul.f32 %v6689, %v6689
        %v6698 = vmul.f32 %v6690, %v6690
        %v6699 = vmul.f32 %v6691, %v6691
        %v6700 = vmul.f32 %v6692, %v6692
        %6701 = vadd.xlane.f32.xlu0 %v6693
        %v6702 = vpop.xlane.xlu0 %6701
        %6703 = vadd.xlane.f32.xlu0 %v6694
        %v6704 = vpop.xlane.xlu0 %6703
        %6705 = vadd.xlane.f32.xlu0 %v6695
        %v6706 = vpop.xlane.xlu0 %6705
        %6707 = vadd.xlane.f32.xlu0 %v6696
        %v6708 = vpop.xlane.xlu0 %6707
        %6709 = vadd.xlane.f32.xlu0 %v6697
        %v6710 = vpop.xlane.xlu0 %6709
        %6711 = vadd.xlane.f32.xlu0 %v6698
        %v6712 = vpop.xlane.xlu0 %6711
        %6713 = vadd.xlane.f32.xlu0 %v6699
        %v6714 = vpop.xlane.xlu0 %6713
        %6715 = vadd.xlane.f32.xlu0 %v6700
        %v6716 = vpop.xlane.xlu0 %6715
        %v6717 = vmul.f32 %v6702, %v2356
        %v6718 = vmul.f32 %v6704, %v2356
        %v6719 = vmul.f32 %v6706, %v2356
        %v6720 = vmul.f32 %v6708, %v2356
        %v6721 = vmul.f32 %v6710, %v2356
        %v6722 = vmul.f32 %v6712, %v2356
        %v6723 = vmul.f32 %v6714, %v2356
        %v6724 = vmul.f32 %v6716, %v2356
        %v6725 = vadd.f32 %v6717, 1e-05
        %v6726 = vadd.f32 %v6718, 1e-05
        %v6727 = vadd.f32 %v6719, 1e-05
        %v6728 = vadd.f32 %v6720, 1e-05
        %v6729 = vadd.f32 %v6721, 1e-05
        %v6730 = vadd.f32 %v6722, 1e-05
        %v6731 = vadd.f32 %v6723, 1e-05
        %v6732 = vadd.f32 %v6724, 1e-05
        %v6733 = vrsqrt.pop %v6725
        %v6734 = vmul.f32 %v6733, %v6725
        %v6735 = vmul.f32 %v6734, %v6733
        %v6736 = vmul.f32 0.5, %v6735
        %v6737 = vsub.f32 1.5, %v6736
        %v6738 = vmul.f32 %v6733, %v6737
        %vm6739 = vweird.f32 %v6725
        %vm6740 = vweird.f32 %v6733
        %vm6741 = vmor %vm6739, %vm6740
        %v6742 = vsel %vm6741, %v6733, %v6738
        %v6743 = vrsqrt.pop %v6726
        %v6744 = vmul.f32 %v6743, %v6726
        %v6745 = vmul.f32 %v6744, %v6743
        %v6746 = vmul.f32 0.5, %v6745
        %v6747 = vsub.f32 1.5, %v6746
        %v6748 = vmul.f32 %v6743, %v6747
        %vm6749 = vweird.f32 %v6726
        %vm6750 = vweird.f32 %v6743
        %vm6751 = vmor %vm6749, %vm6750
        %v6752 = vsel %vm6751, %v6743, %v6748
        %v6753 = vrsqrt.pop %v6727
        %v6754 = vmul.f32 %v6753, %v6727
        %v6755 = vmul.f32 %v6754, %v6753
        %v6756 = vmul.f32 0.5, %v6755
        %v6757 = vsub.f32 1.5, %v6756
        %v6758 = vmul.f32 %v6753, %v6757
        %vm6759 = vweird.f32 %v6727
        %vm6760 = vweird.f32 %v6753
        %vm6761 = vmor %vm6759, %vm6760
        %v6762 = vsel %vm6761, %v6753, %v6758
        %v6763 = vrsqrt.pop %v6728
        %v6764 = vmul.f32 %v6763, %v6728
        %v6765 = vmul.f32 %v6764, %v6763
        %v6766 = vmul.f32 0.5, %v6765
        %v6767 = vsub.f32 1.5, %v6766
        %v6768 = vmul.f32 %v6763, %v6767
        %vm6769 = vweird.f32 %v6728
        %vm6770 = vweird.f32 %v6763
        %vm6771 = vmor %vm6769, %vm6770
        %v6772 = vsel %vm6771, %v6763, %v6768
        %v6773 = vrsqrt.pop %v6729
        %v6774 = vmul.f32 %v6773, %v6729
        %v6775 = vmul.f32 %v6774, %v6773
        %v6776 = vmul.f32 0.5, %v6775
        %v6777 = vsub.f32 1.5, %v6776
        %v6778 = vmul.f32 %v6773, %v6777
        %vm6779 = vweird.f32 %v6729
        %vm6780 = vweird.f32 %v6773
        %vm6781 = vmor %vm6779, %vm6780
        %v6782 = vsel %vm6781, %v6773, %v6778
        %v6783 = vrsqrt.pop %v6730
        %v6784 = vmul.f32 %v6783, %v6730
        %v6785 = vmul.f32 %v6784, %v6783
        %v6786 = vmul.f32 0.5, %v6785
        %v6787 = vsub.f32 1.5, %v6786
        %v6788 = vmul.f32 %v6783, %v6787
        %vm6789 = vweird.f32 %v6730
        %vm6790 = vweird.f32 %v6783
        %vm6791 = vmor %vm6789, %vm6790
        %v6792 = vsel %vm6791, %v6783, %v6788
        %v6793 = vrsqrt.pop %v6731
        %v6794 = vmul.f32 %v6793, %v6731
        %v6795 = vmul.f32 %v6794, %v6793
        %v6796 = vmul.f32 0.5, %v6795
        %v6797 = vsub.f32 1.5, %v6796
        %v6798 = vmul.f32 %v6793, %v6797
        %vm6799 = vweird.f32 %v6731
        %vm6800 = vweird.f32 %v6793
        %vm6801 = vmor %vm6799, %vm6800
        %v6802 = vsel %vm6801, %v6793, %v6798
        %v6803 = vrsqrt.pop %v6732
        %v6804 = vmul.f32 %v6803, %v6732
        %v6805 = vmul.f32 %v6804, %v6803
        %v6806 = vmul.f32 0.5, %v6805
        %v6807 = vsub.f32 1.5, %v6806
        %v6808 = vmul.f32 %v6803, %v6807
        %vm6809 = vweird.f32 %v6732
        %vm6810 = vweird.f32 %v6803
        %vm6811 = vmor %vm6809, %vm6810
        %v6812 = vsel %vm6811, %v6803, %v6808
        %v6813 = vmul.f32 %v6685, %v6742
        %v6814 = vmul.f32 %v6686, %v6752
        %v6815 = vmul.f32 %v6687, %v6762
        %v6816 = vmul.f32 %v6688, %v6772
        %v6817 = vmul.f32 %v6689, %v6782
        %v6818 = vmul.f32 %v6690, %v6792
        %v6819 = vmul.f32 %v6691, %v6802
        %v6820 = vmul.f32 %v6692, %v6812
        %6821 = vst [vmem:[%s352] sm:$0xff] %v6813
        %6822 = vst [vmem:[%s352 + $0x8] sm:$0xff] %v6814
        %6823 = vst [vmem:[%s352 + $0x10] sm:$0xff] %v6815
        %6824 = vst [vmem:[%s352 + $0x18] sm:$0xff] %v6816
        %6825 = vst [vmem:[%s352 + $0x20] sm:$0xff] %v6817
        %6826 = vst [vmem:[%s352 + $0x28] sm:$0xff] %v6818
        %6827 = vst [vmem:[%s352 + $0x30] sm:$0xff] %v6819
        %6828 = vst [vmem:[%s352 + $0x38] sm:$0xff] %v6820
        %6837 = vrot.lane.b32.xlu0 %v1375, 16
        %v6838 = vpop.permute.xlu0 %6837
        %6839 = vrot.lane.b32.xlu0 %v1376, 16
        %v6840 = vpop.permute.xlu0 %6839
        %6841 = vrot.lane.b32.xlu0 %v1377, 16
        %v6842 = vpop.permute.xlu0 %6841
        %6843 = vrot.lane.b32.xlu0 %v1378, 16
        %v6844 = vpop.permute.xlu0 %6843
        %6845 = vrot.lane.b32.xlu0 %v1379, 16
        %v6846 = vpop.permute.xlu0 %6845
        %6847 = vrot.lane.b32.xlu0 %v1380, 16
        %v6848 = vpop.permute.xlu0 %6847
        %6849 = vrot.lane.b32.xlu0 %v1381, 16
        %v6850 = vpop.permute.xlu0 %6849
        %6851 = vrot.lane.b32.xlu0 %v1382, 16
        %v6852 = vpop.permute.xlu0 %6851
        %6869 = vrot.lane.b32.xlu0 %v1695, 32
        %v6870 = vpop.permute.xlu0 %6869
        %6871 = vrot.lane.b32.xlu0 %v1696, 32
        %v6872 = vpop.permute.xlu0 %6871
        %6873 = vrot.lane.b32.xlu0 %v1697, 32
        %v6874 = vpop.permute.xlu0 %6873
        %6875 = vrot.lane.b32.xlu0 %v1698, 32
        %v6876 = vpop.permute.xlu0 %6875
        %6877 = vrot.lane.b32.xlu0 %v1699, 32
        %v6878 = vpop.permute.xlu0 %6877
        %6879 = vrot.lane.b32.xlu0 %v1700, 32
        %v6880 = vpop.permute.xlu0 %6879
        %6881 = vrot.lane.b32.xlu0 %v1701, 32
        %v6882 = vpop.permute.xlu0 %6881
        %6883 = vrot.lane.b32.xlu0 %v1702, 32
        %v6884 = vpop.permute.xlu0 %6883
        %6901 = vrot.lane.b32.xlu0 %v2015, 48
        %v6902 = vpop.permute.xlu0 %6901
        %6903 = vrot.lane.b32.xlu0 %v2016, 48
        %v6904 = vpop.permute.xlu0 %6903
        %6905 = vrot.lane.b32.xlu0 %v2017, 48
        %v6906 = vpop.permute.xlu0 %6905
        %6907 = vrot.lane.b32.xlu0 %v2018, 48
        %v6908 = vpop.permute.xlu0 %6907
        %6909 = vrot.lane.b32.xlu0 %v2019, 48
        %v6910 = vpop.permute.xlu0 %6909
        %6911 = vrot.lane.b32.xlu0 %v2020, 48
        %v6912 = vpop.permute.xlu0 %6911
        %6913 = vrot.lane.b32.xlu0 %v2021, 48
        %v6914 = vpop.permute.xlu0 %6913
        %6915 = vrot.lane.b32.xlu0 %v2022, 48
        %v6916 = vpop.permute.xlu0 %6915
        %6933 = vrot.lane.b32.xlu0 %v4204, 64
        %v6934 = vpop.permute.xlu0 %6933
        %6935 = vrot.lane.b32.xlu0 %v4205, 64
        %v6936 = vpop.permute.xlu0 %6935
        %6937 = vrot.lane.b32.xlu0 %v4206, 64
        %v6938 = vpop.permute.xlu0 %6937
        %6939 = vrot.lane.b32.xlu0 %v4207, 64
        %v6940 = vpop.permute.xlu0 %6939
        %6941 = vrot.lane.b32.xlu0 %v4208, 64
        %v6942 = vpop.permute.xlu0 %6941
        %6943 = vrot.lane.b32.xlu0 %v4209, 64
        %v6944 = vpop.permute.xlu0 %6943
        %6945 = vrot.lane.b32.xlu0 %v4210, 64
        %v6946 = vpop.permute.xlu0 %6945
        %6947 = vrot.lane.b32.xlu0 %v4211, 64
        %v6948 = vpop.permute.xlu0 %6947
        %6965 = vrot.lane.b32.xlu0 %v4536, 80
        %v6966 = vpop.permute.xlu0 %6965
        %6967 = vrot.lane.b32.xlu0 %v4537, 80
        %v6968 = vpop.permute.xlu0 %6967
        %6969 = vrot.lane.b32.xlu0 %v4538, 80
        %v6970 = vpop.permute.xlu0 %6969
        %6971 = vrot.lane.b32.xlu0 %v4539, 80
        %v6972 = vpop.permute.xlu0 %6971
        %6973 = vrot.lane.b32.xlu0 %v4540, 80
        %v6974 = vpop.permute.xlu0 %6973
        %6975 = vrot.lane.b32.xlu0 %v4541, 80
        %v6976 = vpop.permute.xlu0 %6975
        %6977 = vrot.lane.b32.xlu0 %v4542, 80
        %v6978 = vpop.permute.xlu0 %6977
        %6979 = vrot.lane.b32.xlu0 %v4543, 80
        %v6980 = vpop.permute.xlu0 %6979
        %6997 = vrot.lane.b32.xlu0 %v4856, 96
        %v6998 = vpop.permute.xlu0 %6997
        %6999 = vrot.lane.b32.xlu0 %v4857, 96
        %v7000 = vpop.permute.xlu0 %6999
        %7001 = vrot.lane.b32.xlu0 %v4858, 96
        %v7002 = vpop.permute.xlu0 %7001
        %7003 = vrot.lane.b32.xlu0 %v4859, 96
        %v7004 = vpop.permute.xlu0 %7003
        %7005 = vrot.lane.b32.xlu0 %v4860, 96
        %v7006 = vpop.permute.xlu0 %7005
        %7007 = vrot.lane.b32.xlu0 %v4861, 96
        %v7008 = vpop.permute.xlu0 %7007
        %7009 = vrot.lane.b32.xlu0 %v4862, 96
        %v7010 = vpop.permute.xlu0 %7009
        %7011 = vrot.lane.b32.xlu0 %v4863, 96
        %v7012 = vpop.permute.xlu0 %7011
        %7029 = vrot.lane.b32.xlu0 %v5176, 112
        %v7030 = vpop.permute.xlu0 %7029
        %7031 = vrot.lane.b32.xlu0 %v5177, 112
        %v7032 = vpop.permute.xlu0 %7031
        %7033 = vrot.lane.b32.xlu0 %v5178, 112
        %v7034 = vpop.permute.xlu0 %7033
        %7035 = vrot.lane.b32.xlu0 %v5179, 112
        %v7036 = vpop.permute.xlu0 %7035
        %7037 = vrot.lane.b32.xlu0 %v5180, 112
        %v7038 = vpop.permute.xlu0 %7037
        %7039 = vrot.lane.b32.xlu0 %v5181, 112
        %v7040 = vpop.permute.xlu0 %7039
        %7041 = vrot.lane.b32.xlu0 %v5182, 112
        %v7042 = vpop.permute.xlu0 %7041
        %7043 = vrot.lane.b32.xlu0 %v5183, 112
        %v7044 = vpop.permute.xlu0 %7043
        %v7053 = vsel %vm962, %v1043, %v6838
        %v7054 = vsel %vm962, %v1044, %v6840
        %v7055 = vsel %vm962, %v1045, %v6842
        %v7056 = vsel %vm962, %v1046, %v6844
        %v7057 = vsel %vm962, %v1047, %v6846
        %v7058 = vsel %vm962, %v1048, %v6848
        %v7059 = vsel %vm962, %v1049, %v6850
        %v7060 = vsel %vm962, %v1050, %v6852
        %v7061 = vsel %vm863, %v7053, %v6870
        %v7062 = vsel %vm863, %v7054, %v6872
        %v7063 = vsel %vm863, %v7055, %v6874
        %v7064 = vsel %vm863, %v7056, %v6876
        %v7065 = vsel %vm863, %v7057, %v6878
        %v7066 = vsel %vm863, %v7058, %v6880
        %v7067 = vsel %vm863, %v7059, %v6882
        %v7068 = vsel %vm863, %v7060, %v6884
        %vm7069 = vcmask 392192
        %v7070 = vsel %vm7069, %v7061, %v6902
        %v7071 = vsel %vm7069, %v7062, %v6904
        %v7072 = vsel %vm7069, %v7063, %v6906
        %v7073 = vsel %vm7069, %v7064, %v6908
        %v7074 = vsel %vm7069, %v7065, %v6910
        %v7075 = vsel %vm7069, %v7066, %v6912
        %v7076 = vsel %vm7069, %v7067, %v6914
        %v7077 = vsel %vm7069, %v7068, %v6916
        %v7078 = vsel %vm2235, %v7070, %v6934
        %v7079 = vsel %vm2235, %v7071, %v6936
        %v7080 = vsel %vm2235, %v7072, %v6938
        %v7081 = vsel %vm2235, %v7073, %v6940
        %v7082 = vsel %vm2235, %v7074, %v6942
        %v7083 = vsel %vm2235, %v7075, %v6944
        %v7084 = vsel %vm2235, %v7076, %v6946
        %v7085 = vsel %vm2235, %v7077, %v6948
        %vm7086 = vcmask 654336
        %v7087 = vsel %vm7086, %v7078, %v6966
        %v7088 = vsel %vm7086, %v7079, %v6968
        %v7089 = vsel %vm7086, %v7080, %v6970
        %v7090 = vsel %vm7086, %v7081, %v6972
        %v7091 = vsel %vm7086, %v7082, %v6974
        %v7092 = vsel %vm7086, %v7083, %v6976
        %v7093 = vsel %vm7086, %v7084, %v6978
        %v7094 = vsel %vm7086, %v7085, %v6980
        %v7095 = vsel %vm2244, %v7087, %v6998
        %v7096 = vsel %vm2244, %v7088, %v7000
        %v7097 = vsel %vm2244, %v7089, %v7002
        %v7098 = vsel %vm2244, %v7090, %v7004
        %v7099 = vsel %vm2244, %v7091, %v7006
        %v7100 = vsel %vm2244, %v7092, %v7008
        %v7101 = vsel %vm2244, %v7093, %v7010
        %v7102 = vsel %vm2244, %v7094, %v7012
        %vm7103 = vcmask 916480
        %v7104 = vsel %vm7103, %v7095, %v7030
        %v7105 = vsel %vm7103, %v7096, %v7032
        %v7106 = vsel %vm7103, %v7097, %v7034
        %v7107 = vsel %vm7103, %v7098, %v7036
        %v7108 = vsel %vm7103, %v7099, %v7038
        %v7109 = vsel %vm7103, %v7100, %v7040
        %v7110 = vsel %vm7103, %v7101, %v7042
        %v7111 = vsel %vm7103, %v7102, %v7044
        %v7112 = vpack.c.bf16 %v7104, %v7104
        %v7113 = vpack.c.bf16 %v7105, %v7105
        %v7114 = vpack.c.bf16 %v7106, %v7106
        %v7115 = vpack.c.bf16 %v7107, %v7107
        %v7116 = vpack.c.bf16 %v7108, %v7108
        %v7117 = vpack.c.bf16 %v7109, %v7109
        %v7118 = vpack.c.bf16 %v7110, %v7110
        %v7119 = vpack.c.bf16 %v7111, %v7111
        %7120 = vst [vmem:[%s374] sm:$0xf] %v7112
        %7121 = vst [vmem:[%s374 + $0x4] sm:$0xf] %v7113
        %7122 = vst [vmem:[%s374 + $0x8] sm:$0xf] %v7114
        %7123 = vst [vmem:[%s374 + $0xc] sm:$0xf] %v7115
        %7124 = vst [vmem:[%s374 + $0x10] sm:$0xf] %v7116
        %7125 = vst [vmem:[%s374 + $0x14] sm:$0xf] %v7117
        %7126 = vst [vmem:[%s374 + $0x18] sm:$0xf] %v7118
        %7127 = vst [vmem:[%s374 + $0x1c] sm:$0xf] %v7119
        %s7128 = sand.u32 %s185, 1
        %s7129 = scalar_lea.sflag [#allocation4], %s7128
        %s7130 = sand.u32 %s185, 1
        %s7131 = smul.addr %s7130, 64
        %s7132 = scalar_lea.vmem [#allocation8], %s7131
        %s7133 = smul.u32 4, %s25
        %p7134 = scmp.lt.s32.totalorder %s7133, 7
        %s7135 = scalar_select %p7134, %s7133, 7
        %s7136 = smul.addr %s7135, 2
        %s7137 = smul.addr %s7136, 4
        %s7138 = scalar_lea.vmem %s8, %s7137
        // Predicated region
        $region61: #{encoder_forward.1} parent=47 // pred_check
          %p7139 = pneg %p195
        $region62: #{encoder_forward.1} parent=47 // pred_check_branch
          %7141 = sbr.rel (%p7139) target = $region64
        $region63: #{encoder_forward.1} parent=47 // pred_region
          %s7142 = smul.u32 4, %s25
          %7144 = vsyncadd %s7129, 0
          %s7145 = smul.addr %s7142, 2
          %s7146 = smul.addr %s7145, 8
          %s7147 = scalar_lea.hbm %s7, %s7146
          %s7148 = sshll.u32 %s7132, 4
          %s7149 = int_to_ptr.vmem [resolvable:$true] %s7148
          %s7150 = sshll.u32 %s7147, 4
          %s7151 = int_to_ptr.hbm [resolvable:$true] %s7150
          %7156 = dma.vmem_to_hbm [thread:$0]  %s7149, 1024, %s7151, %s7129, 128, 128, 8
        $region64: #{encoder_forward.1} parent=47 // pred_fallthru
          _
        // Predicated region
        $region65: #{encoder_forward.1} parent=47 // pred_check
          %p7157 = pneg %p221
        $region66: #{encoder_forward.1} parent=47 // pred_check_branch
          %7159 = sbr.rel (%p7157) target = $region68
        $region67: #{encoder_forward.1} parent=47 // pred_region
          %s7160 = smul.u32 4, %s25
        $region68: #{encoder_forward.1} parent=47 // pred_fallthru
          _
      $region48: #{encoder_forward.1} parent=5 // pred_fallthru
        _
      %p7161 = scmp.le.s32.totalorder 2, %s20
      // Predicated region
      $region69: #{encoder_forward.1} parent=5 // pred_check
        %p7162 = pneg %p7161
      $region70: #{encoder_forward.1} parent=5 // pred_check_branch
        %7164 = sbr.rel (%p7162) target = $region72
      $region71: #{encoder_forward.1} parent=5 // pred_region
        %s7165 = ssub.s32 %s20, 2
        // Predicated region
        $region73: #{encoder_forward.1} parent=71 // pred_check
          %p7166 = pneg %p201
        $region74: #{encoder_forward.1} parent=71 // pred_check_branch
          %7168 = sbr.rel (%p7166) target = $region76
        $region75: #{encoder_forward.1} parent=71 // pred_region
          %s7169 = sand.u32 %s186, 1
          %s7170 = scalar_lea.sflag [#allocation4], %s7169
          %s7171 = sand.u32 %s186, 1
          %s7172 = smul.addr %s7171, 64
          %s7173 = scalar_lea.vmem [#allocation8], %s7172
          %7175 = dma.done %s7170, 1024
        $region76: #{encoder_forward.1} parent=71 // pred_fallthru
          _
        // Predicated region
        $region77: #{encoder_forward.1} parent=71 // pred_check
          %p7176 = pneg %p227
        $region78: #{encoder_forward.1} parent=71 // pred_check_branch
          %7178 = sbr.rel (%p7176) target = $region80
        $region79: #{encoder_forward.1} parent=71 // pred_region
          %s7179 = smul.u32 4, %s26
          %p7180 = scmp.lt.s32.totalorder %s7179, 7
          %s7181 = scalar_select %p7180, %s7179, 7
          %s7182 = smul.addr %s7181, 2
          %s7183 = smul.addr %s7182, 4
          %s7184 = scalar_lea.vmem %s8, %s7183
        $region80: #{encoder_forward.1} parent=71 // pred_fallthru
          _
      $region72: #{encoder_forward.1} parent=5 // pred_fallthru
        _
    $region6: #{encoder_forward.1} parent=1 // loop_footer
      %s24 = sadd.s32 1, %s20
    $region7: #{encoder_forward.1} parent=1 // loop_footer_branch
      %19 = sbr.rel target = $region3
    $region8: #{encoder_forward.1} parent=1 // loop_exit
      _
    %7185 = vsyncpa [#allocation3], 1
    %s7186 = scalar_lea.sflag [#allocation3], 1
    %7187 = vsyncpa %s7186, 1
    %7188 = vsyncpa [#allocation6], 1
    %7189 = vsyncpa [#allocation4], 1
    %s7190 = scalar_lea.sflag [#allocation4], 1
    %7191 = vsyncpa %s7190, 1

</llo_original>
